<compile_context>
chip_gen: v7x
topology: tpu7x:2x2x1
jax: 0.10.0
libtpu: 0.0.40
codegen_flags: <defaults>
</compile_context>

<pallas_src>
import jax
import jax.numpy as jnp
from jax import lax
from jax.experimental import pallas as pl
from jax.experimental.pallas import tpu as pltpu

EPS = 1e-5
LRELU_SLOPE = 0.2
SOFTMAX_ALPHA = 100.0
NORM_EPS = 1e-12   # guards L2-normalize against an all-zero column (torch would NaN)


# ---------------------------------------------------------------------------
# helpers (JAX glue, trace-time / tiny tensors)
# ---------------------------------------------------------------------------
def nchw_to_hwc(x):
    """(N, C, H, W) -> (N, H*W, C) channels-last, spatial flattened row-major."""
    N, C, H, W = x.shape
    return x.transpose(0, 2, 3, 1).reshape(N, H * W, C)


def _resize_matrix(in_size, out_size):
    """1-D bilinear weights, PyTorch F.interpolate(mode='bilinear',
    align_corners=False): M (out, in) with rows summing to 1."""
    scale = in_size / out_size
    o = jnp.arange(out_size, dtype=jnp.float32)
    src = jnp.maximum((o + 0.5) * scale - 0.5, 0.0)
    i0 = jnp.clip(jnp.floor(src).astype(jnp.int32), 0, in_size - 1)
    i1 = jnp.clip(i0 + 1, 0, in_size - 1)
    w1 = src - i0.astype(jnp.float32)
    w0 = 1.0 - w1
    cols = jnp.arange(in_size)
    M = (w0[:, None] * (cols[None, :] == i0[:, None])
         + w1[:, None] * (cols[None, :] == i1[:, None]))
    return M.astype(jnp.float32)


def resize_matrix_2d(h, w, scale):
    """Flattened separable bilinear resize:  out_flat = M @ in_flat, with
    spatial positions flattened row-major.  M = kron(Wy, Wx)."""
    hout, wout = int(h * scale), int(w * scale)
    return jnp.kron(_resize_matrix(h, hout), _resize_matrix(w, wout))


def _in_lrelu(y):
    """InstanceNorm2d(affine=False) over spatial rows (axis=0) + LeakyReLU."""
    mean = jnp.mean(y, axis=0, keepdims=True)
    var = jnp.mean((y - mean) ** 2, axis=0, keepdims=True)   # biased, like PyTorch
    yn = (y - mean) * lax.rsqrt(var + EPS)
    return jnp.where(yn > 0, yn, LRELU_SLOPE * yn)


# ---------------------------------------------------------------------------
# Kernel 1: full FeatureFusion for one sample
#   patches : (1, HWc, K)  bf16  im2col rows of [c3, y_sem] (reflect-pad, s=2)
#   w       : (K, 512)     bf16  conv3x3 weight (tap-major, cin inner)
#   b       : (1, 512)     f32
#   c1/c2/c3/ysem : (1, HWin, C) f32 channels-last content/semantic maps
#   m1/m2/m4      : (HWo, HWin)  f32 flattened bilinear resize matrices
#   o       : (1, HWo, 1088) f32 fused feature map (channels-last)
# ---------------------------------------------------------------------------
def _fusion_kernel(patches_ref, w_ref, b_ref, c1_ref, c2_ref, c3_ref, ysem_ref,
                   m1_ref, m2_ref, m4_ref, o_ref):
    # conv3x3 stride-2 as matmul (+ bias + InstanceNorm + LeakyReLU)
    y = jnp.dot(patches_ref[0], w_ref[...],
                preferred_element_type=jnp.float32) + b_ref[...]
    fused = _in_lrelu(y)                                            # (HWc, 512)

    # bilinear resizes as single lane-dense matmuls
    fm1 = jnp.dot(m1_ref[...], c1_ref[0], preferred_element_type=jnp.float32)
    fm2 = jnp.dot(m2_ref[...], c2_ref[0], preferred_element_type=jnp.float32)
    fm4 = jnp.dot(m4_ref[...], fused, preferred_element_type=jnp.float32)
    # fm3 / fm5 (scale=1, align_corners=False) are identities.
    o_ref[0] = jnp.concatenate(
        [fm1, fm2, c3_ref[0], fm4, ysem_ref[0]], axis=-1)


def feature_fusion(params, x_list, y_sem):
    c1, c2, c3 = x_list
    N = c1.shape[0]

    c1_hwc = nchw_to_hwc(c1).astype(jnp.float32)     # (N, 256, 64)
    c2_hwc = nchw_to_hwc(c2).astype(jnp.float32)     # (N,  64, 128)
    c3_hwc = nchw_to_hwc(c3).astype(jnp.float32)     # (N,  16, 128)
    ys_hwc = nchw_to_hwc(y_sem).astype(jnp.float32)  # (N,  16, 256)

    # --- ReflectionPad2d(1) + im2col for Conv2d(k=3, stride=2), channels-last
    # TODO(synk): im2col could be moved in-kernel via pl.ANY + static VMEM views;
    #             at these shapes the intermediate is ~100 KB so it stays in JAX.
    x_nhwc = jnp.concatenate(
        [c3.transpose(0, 2, 3, 1), y_sem.transpose(0, 2, 3, 1)], axis=-1)
    _, H, W, Cin = x_nhwc.shape
    xp = jnp.pad(x_nhwc, ((0, 0), (1, 1), (1, 1), (0, 0)), mode="reflect")
    Hc = (H + 2 - 3) // 2 + 1
    Wc = (W + 2 - 3) // 2 + 1
    taps = [xp[:, ky:ky + 2 * Hc - 1:2, kx:kx + 2 * Wc - 1:2, :]
            for ky in range(3) for kx in range(3)]
    patches = jnp.stack(taps, axis=3).reshape(N, Hc * Wc, 9 * Cin)
    patches = patches.astype(jnp.bfloat16)
    K = 9 * Cin

    w = params["fusion_w"]                                   # (Cout, Cin, 3, 3)
    Cout = w.shape[0]
    w2 = w.transpose(2, 3, 1, 0).reshape(K, Cout).astype(jnp.bfloat16)
    b2 = params["fusion_b"].reshape(1, Cout).astype(jnp.float32)

    M1 = resize_matrix_2d(c1.shape[2], c1.shape[3], 0.25)    # (16, 256)
    M2 = resize_matrix_2d(c2.shape[2], c2.shape[3], 0.5)     # (16, 64)
    M4 = resize_matrix_2d(Hc, Wc, 2.0)                       # (16, 4)

    HWo = c3.shape[2] * c3.shape[3]
    Ctot = c1.shape[1] + c2.shape[1] + c3.shape[1] + Cout + y_sem.shape[1]

    return pl.pallas_call(
        _fusion_kernel,
        out_shape=jax.ShapeDtypeStruct((N, HWo, Ctot), jnp.float32),
        grid=(N,),
        in_specs=[
            pl.BlockSpec((1, Hc * Wc, K), lambda n: (n, 0, 0)),
            pl.BlockSpec((K, Cout), lambda n: (0, 0)),
            pl.BlockSpec((1, Cout), lambda n: (0, 0)),
            pl.BlockSpec((1,) + c1_hwc.shape[1:], lambda n: (n, 0, 0)),
            pl.BlockSpec((1,) + c2_hwc.shape[1:], lambda n: (n, 0, 0)),
            pl.BlockSpec((1,) + c3_hwc.shape[1:], lambda n: (n, 0, 0)),
            pl.BlockSpec((1,) + ys_hwc.shape[1:], lambda n: (n, 0, 0)),
            pl.BlockSpec(M1.shape, lambda n: (0, 0)),
            pl.BlockSpec(M2.shape, lambda n: (0, 0)),
            pl.BlockSpec(M4.shape, lambda n: (0, 0)),
        ],
        out_specs=pl.BlockSpec((1, HWo, Ctot), lambda n: (n, 0, 0)),
        compiler_params=pltpu.CompilerParams(
            dimension_semantics=("parallel",)),
    )(patches, w2, b2, c1_hwc, c2_hwc, c3_hwc, ys_hwc, M1, M2, M4)


# ---------------------------------------------------------------------------
# Kernel 2: fused SymmetryAttention for one sample
#   (1x1 conv + IN + LeakyReLU for fa/fb, mean-center, L2-normalize,
#    correlation matmuls, softmax, warp matmuls) — all in VMEM.
#   xf/yf : (1, HW, 1088)   wfa/wfb : (1088, 136)   bfa/bfb : (1, 136)
#   araw/braw : (1, HW, RC) channels-last raw maps
#   outputs: corr_ab_T, corr_ba_T : (1, HW, HW); a_warp, b_warp : (1, HW, RC)
# ---------------------------------------------------------------------------
def _attention_kernel(xf_ref, yf_ref, wfa_ref, bfa_ref, wfb_ref, bfb_ref,
                      araw_ref, braw_ref,
                      cab_ref, cba_ref, awarp_ref, bwarp_ref):
    def conv_in_lrelu(x, w, b):
        y = jnp.dot(x, w, preferred_element_type=jnp.float32) + b
        return _in_lrelu(y)

    fa = conv_in_lrelu(xf_ref[0], wfa_ref[...], bfa_ref[...])   # (HW, 136)
    fb = conv_in_lrelu(yf_ref[0], wfb_ref[...], bfb_ref[...])

    # subtract per-channel spatial mean
    fa = fa - jnp.mean(fa, axis=0, keepdims=True)
    fb = fb - jnp.mean(fb, axis=0, keepdims=True)
    # L2-normalize over channels (per spatial position); eps avoids NaN
    fa = fa * lax.rsqrt(jnp.sum(fa * fa, axis=1, keepdims=True) + NORM_EPS)
    fb = fb * lax.rsqrt(jnp.sum(fb * fb, axis=1, keepdims=True) + NORM_EPS)

    dn_lane = (((1,), (1,)), ((), ()))   # contract over channel (lane) axis

    def softmax_rows(e):
        e = e - jnp.max(e, axis=1, keepdims=True)
        p = jnp.exp(e)
        return p * pl.reciprocal(jnp.sum(p, axis=1, keepdims=True), approx=True)

    # e_ab[i, j] = sum_c fb[i, c] * fa[j, c]   (== fb^T @ fa in NCHW terms)
    corr_ab = softmax_rows(
        SOFTMAX_ALPHA * lax.dot_general(fb, fa, dn_lane,
                                        preferred_element_type=jnp.float32))
    corr_ba = softmax_rows(
        SOFTMAX_ALPHA * lax.dot_general(fa, fb, dn_lane,
                                        preferred_element_type=jnp.float32))

    cab_ref[0] = corr_ab
    cba_ref[0] = corr_ba

    dn_row = (((0,), (0,)), ((), ()))    # contract over source spatial index i
    # warp[j, rc] = sum_i corr[i, j] * raw[i, rc]
    bwarp_ref[0] = lax.dot_general(corr_ab, braw_ref[0], dn_row,
                                   preferred_element_type=jnp.float32)
    awarp_ref[0] = lax.dot_general(corr_ba, araw_ref[0], dn_row,
                                   preferred_element_type=jnp.float32)


def symmetry_attention(params, x_f, y_f, x_m, y_m):
    """x_f/y_f: (N, HW, 1088) channels-last; x_m/y_m: (N, RC, H, W) NCHW."""
    N, HW, Cin = x_f.shape
    RC, H, W = x_m.shape[1], x_m.shape[2], x_m.shape[3]
    Cmid = params["fa_w"].shape[0]

    wfa = params["fa_w"].reshape(Cmid, Cin).T.astype(jnp.float32)   # (Cin, Cmid)
    bfa = params["fa_b"].reshape(1, Cmid).astype(jnp.float32)
    wfb = params["fb_w"].reshape(Cmid, Cin).T.astype(jnp.float32)
    bfb = params["fb_b"].reshape(1, Cmid).astype(jnp.float32)
    xm_hwc = nchw_to_hwc(x_m).astype(jnp.float32)                   # (N, HW, RC)
    ym_hwc = nchw_to_hwc(y_m).astype(jnp.float32)

    corr_ab, corr_ba, a_warp, b_warp = pl.pallas_call(
        _attention_kernel,
        out_shape=(
            jax.ShapeDtypeStruct((N, HW, HW), jnp.float32),
            jax.ShapeDtypeStruct((N, HW, HW), jnp.float32),
            jax.ShapeDtypeStruct((N, HW, RC), jnp.float32),
            jax.ShapeDtypeStruct((N, HW, RC), jnp.float32),
        ),
        grid=(N,),
        in_specs=[
            pl.BlockSpec((1, HW, Cin), lambda n: (n, 0, 0)),
            pl.BlockSpec((1, HW, Cin), lambda n: (n, 0, 0)),
            pl.BlockSpec((Cin, Cmid), lambda n: (0, 0)),
            pl.BlockSpec((1, Cmid), lambda n: (0, 0)),
            pl.BlockSpec((Cin, Cmid), lambda n: (0, 0)),
            pl.BlockSpec((1, Cmid), lambda n: (0, 0)),
            pl.BlockSpec((1, HW, RC), lambda n: (n, 0, 0)),
            pl.BlockSpec((1, HW, RC), lambda n: (n, 0, 0)),
        ],
        out_specs=[
            pl.BlockSpec((1, HW, HW), lambda n: (n, 0, 0)),
            pl.BlockSpec((1, HW, HW), lambda n: (n, 0, 0)),
            pl.BlockSpec((1, HW, RC), lambda n: (n, 0, 0)),
            pl.BlockSpec((1, HW, RC), lambda n: (n, 0, 0)),
        ],
        compiler_params=pltpu.CompilerParams(
            dimension_semantics=("parallel",)),
    )(x_f, y_f, wfa, bfa, wfb, bfb, xm_hwc, ym_hwc)

    a_warp = a_warp.transpose(0, 2, 1).reshape(N, RC, H, W)
    b_warp = b_warp.transpose(0, 2, 1).reshape(N, RC, H, W)
    return corr_ab, corr_ba, a_warp, b_warp


# ---------------------------------------------------------------------------
# Module-level forward
# ---------------------------------------------------------------------------
def transformer_forward(params, x_c, y_c, x_s, y_s, x_m, y_m):
    x_f = feature_fusion(params, x_c, x_s)     # (N, HW, 1088) channels-last
    y_f = feature_fusion(params, y_c, y_s)
    attention_x, attention_y, x_m_warp, y_m_warp = symmetry_attention(
        params, x_f, y_f, x_m, y_m)
    return attention_x, attention_y, x_m_warp, y_m_warp


# ---------------------------------------------------------------------------
# main
# ---------------------------------------------------------------------------
if __name__ == "__main__":
    key = jax.random.PRNGKey(0)
    keys = jax.random.split(key, 16)

    N = 2
    H = W = 4          # base spatial size of content_feature_map3 / semantic map
    RC = 8             # raw (x_m / y_m) channel count

    # Channel plan (consistent with the module's hard-coded dims):
    #   content maps: 64 @ 4H, 128 @ 2H, 128 @ H ; semantic: 256 @ H
    #   layer_1 in : 128 + 256 = 384 ;  out : 512
    #   fusion out : 64 + 128 + 128 + 512 + 256 = 1088 = 64*17
    x_c = [
        0.1 * jax.random.normal(keys[0], (N, 64, 4 * H, 4 * W), jnp.float32),
        0.1 * jax.random.normal(keys[1], (N, 128, 2 * H, 2 * W), jnp.float32),
        0.1 * jax.random.normal(keys[2], (N, 128, H, W), jnp.float32),
    ]
    y_c = [
        0.1 * jax.random.normal(keys[3], (N, 64, 4 * H, 4 * W), jnp.float32),
        0.1 * jax.random.normal(keys[4], (N, 128, 2 * H, 2 * W), jnp.float32),
        0.1 * jax.random.normal(keys[5], (N, 128, H, W), jnp.float32),
    ]
    x_s = 0.1 * jax.random.normal(keys[6], (N, 256, H, W), jnp.float32)
    y_s = 0.1 * jax.random.normal(keys[7], (N, 256, H, W), jnp.float32)
    x_m = 0.1 * jax.random.normal(keys[8], (N, RC, H, W), jnp.float32)
    y_m = 0.1 * jax.random.normal(keys[9], (N, RC, H, W), jnp.float32)

    in_dim = 64 * 17   # 1088
    params = {
        "fusion_w": 0.05 * jax.random.normal(keys[10], (512, 384, 3, 3), jnp.float32),
        "fusion_b": 0.05 * jax.random.normal(keys[11], (512,), jnp.float32),
        "fa_w": 0.05 * jax.random.normal(keys[12], (in_dim // 8, in_dim, 1, 1), jnp.float32),
        "fa_b": 0.05 * jax.random.normal(keys[13], (in_dim // 8,), jnp.float32),
        "fb_w": 0.05 * jax.random.normal(keys[14], (in_dim // 8, in_dim, 1, 1), jnp.float32),
        "fb_b": 0.05 * jax.random.normal(keys[15], (in_dim // 8,), jnp.float32),
    }

    attention_x, attention_y, x_m_warp, y_m_warp = transformer_forward(
        params, x_c, y_c, x_s, y_s, x_m, y_m)

    jax.block_until_ready((attention_x, attention_y, x_m_warp, y_m_warp))

    assert attention_x.shape == (N, H * W, H * W)
    assert attention_y.shape == (N, H * W, H * W)
    assert x_m_warp.shape == (N, RC, H, W)
    assert y_m_warp.shape == (N, RC, H, W)

    print("KERNEL_OK")
</pallas_src>

<mosaic_0001>
module attributes {stable_mosaic.version = 11 : i64} {
  func.func @_fusion_kernel(%arg0: i32, %arg1: memref<1x4x3456xbf16, #tpu.memory_space<vmem>>, %arg2: memref<3456x512xbf16, #tpu.memory_space<vmem>>, %arg3: memref<1x512xf32, #tpu.memory_space<vmem>>, %arg4: memref<1x256x64xf32, #tpu.memory_space<vmem>>, %arg5: memref<1x64x128xf32, #tpu.memory_space<vmem>>, %arg6: memref<1x16x128xf32, #tpu.memory_space<vmem>>, %arg7: memref<1x16x256xf32, #tpu.memory_space<vmem>>, %arg8: memref<16x256xf32, #tpu.memory_space<vmem>>, %arg9: memref<16x64xf32, #tpu.memory_space<vmem>>, %arg10: memref<16x4xf32, #tpu.memory_space<vmem>>, %arg11: memref<1x16x1088xf32, #tpu.memory_space<vmem>>) attributes {dimension_semantics = [#tpu.dimension_semantics<parallel>], iteration_bounds = array<i64: 2>, scalar_prefetch = 0 : i64, scratch_operands = 0 : i64, tpu.core_type = #tpu.core_type<tc>, window_params = [{transform_indices = @transform_0, window_bounds = array<i64: 1, 4, 3456>}, {pipeline_mode = #tpu.pipeline_mode<synchronous>, transform_indices = @transform_1, window_bounds = array<i64: 3456, 512>}, {pipeline_mode = #tpu.pipeline_mode<synchronous>, transform_indices = @transform_2, window_bounds = array<i64: 1, 512>}, {transform_indices = @transform_3, window_bounds = array<i64: 1, 256, 64>}, {transform_indices = @transform_4, window_bounds = array<i64: 1, 64, 128>}, {transform_indices = @transform_5, window_bounds = array<i64: 1, 16, 128>}, {transform_indices = @transform_6, window_bounds = array<i64: 1, 16, 256>}, {pipeline_mode = #tpu.pipeline_mode<synchronous>, transform_indices = @transform_7, window_bounds = array<i64: 16, 256>}, {pipeline_mode = #tpu.pipeline_mode<synchronous>, transform_indices = @transform_8, window_bounds = array<i64: 16, 64>}, {pipeline_mode = #tpu.pipeline_mode<synchronous>, transform_indices = @transform_9, window_bounds = array<i64: 16, 4>}, {transform_indices = @transform_10, window_bounds = array<i64: 1, 16, 1088>}]} {
    %c0 = arith.constant 0 : index
    %c0_0 = arith.constant 0 : index
    %c0_1 = arith.constant 0 : index
    %0 = vector.load %arg1[%c0, %c0_0, %c0_1] : memref<1x4x3456xbf16, #tpu.memory_space<vmem>>, vector<1x4x3456xbf16>
    %1 = vector.shape_cast %0 : vector<1x4x3456xbf16> to vector<4x3456xbf16>
    %c0_2 = arith.constant 0 : index
    %c0_3 = arith.constant 0 : index
    %2 = vector.load %arg2[%c0_2, %c0_3] : memref<3456x512xbf16, #tpu.memory_space<vmem>>, vector<3456x512xbf16>
    %cst = arith.constant dense<0.000000e+00> : vector<4x512xf32>
    %3 = tpu.matmul %1, %2, %cst {dimension_numbers = #tpu.dot_dimension_numbers<[1], [0], [0], [1], [0, 0, 1, 1], [], []>} : vector<4x3456xbf16>, vector<3456x512xbf16>, vector<4x512xf32> -> vector<4x512xf32>
    %c0_4 = arith.constant 0 : index
    %c0_5 = arith.constant 0 : index
    %4 = vector.load %arg3[%c0_4, %c0_5] : memref<1x512xf32, #tpu.memory_space<vmem>>, vector<1x512xf32>
    %5 = vector.broadcast %4 : vector<1x512xf32> to vector<4x512xf32>
    %6 = arith.addf %3, %5 : vector<4x512xf32>
    %cst_6 = arith.constant dense<0.000000e+00> : vector<512xf32>
    %7 = vector.multi_reduction <add>, %6, %cst_6 [0] : vector<4x512xf32> to vector<512xf32>
    %8 = vector.shape_cast %7 : vector<512xf32> to vector<1x512xf32>
    %cst_7 = arith.constant 4.000000e+00 : f32
    %9 = vector.broadcast %cst_7 : f32 to vector<1x512xf32>
    %10 = arith.divf %8, %9 : vector<1x512xf32>
    %11 = vector.broadcast %10 : vector<1x512xf32> to vector<4x512xf32>
    %12 = arith.subf %6, %11 : vector<4x512xf32>
    %13 = arith.mulf %12, %12 : vector<4x512xf32>
    %cst_8 = arith.constant dense<0.000000e+00> : vector<512xf32>
    %14 = vector.multi_reduction <add>, %13, %cst_8 [0] : vector<4x512xf32> to vector<512xf32>
    %15 = vector.shape_cast %14 : vector<512xf32> to vector<1x512xf32>
    %cst_9 = arith.constant 4.000000e+00 : f32
    %16 = vector.broadcast %cst_9 : f32 to vector<1x512xf32>
    %17 = arith.divf %15, %16 : vector<1x512xf32>
    %18 = vector.broadcast %10 : vector<1x512xf32> to vector<4x512xf32>
    %19 = arith.subf %6, %18 : vector<4x512xf32>
    %cst_10 = arith.constant 9.99999974E-6 : f32
    %20 = vector.broadcast %cst_10 : f32 to vector<1x512xf32>
    %21 = arith.addf %17, %20 : vector<1x512xf32>
    %22 = math.rsqrt %21 : vector<1x512xf32>
    %23 = vector.broadcast %22 : vector<1x512xf32> to vector<4x512xf32>
    %24 = arith.mulf %19, %23 : vector<4x512xf32>
    %cst_11 = arith.constant 0.000000e+00 : f32
    %25 = vector.broadcast %cst_11 : f32 to vector<4x512xf32>
    %26 = arith.cmpf ogt, %24, %25 : vector<4x512xf32>
    %cst_12 = arith.constant 2.000000e-01 : f32
    %27 = vector.broadcast %cst_12 : f32 to vector<4x512xf32>
    %28 = arith.mulf %27, %24 : vector<4x512xf32>
    %29 = arith.select %26, %24, %28 : vector<4x512xi1>, vector<4x512xf32>
    %c0_13 = arith.constant 0 : index
    %c0_14 = arith.constant 0 : index
    %30 = vector.load %arg8[%c0_13, %c0_14] : memref<16x256xf32, #tpu.memory_space<vmem>>, vector<16x256xf32>
    %c0_15 = arith.constant 0 : index
    %c0_16 = arith.constant 0 : index
    %c0_17 = arith.constant 0 : index
    %31 = vector.load %arg4[%c0_15, %c0_16, %c0_17] : memref<1x256x64xf32, #tpu.memory_space<vmem>>, vector<1x256x64xf32>
    %32 = vector.shape_cast %31 : vector<1x256x64xf32> to vector<256x64xf32>
    %cst_18 = arith.constant dense<0.000000e+00> : vector<16x64xf32>
    %33 = tpu.matmul %30, %32, %cst_18 {dimension_numbers = #tpu.dot_dimension_numbers<[1], [0], [0], [1], [0, 0, 1, 1], [], []>} : vector<16x256xf32>, vector<256x64xf32>, vector<16x64xf32> -> vector<16x64xf32>
    %c0_19 = arith.constant 0 : index
    %c0_20 = arith.constant 0 : index
    %34 = vector.load %arg9[%c0_19, %c0_20] : memref<16x64xf32, #tpu.memory_space<vmem>>, vector<16x64xf32>
    %c0_21 = arith.constant 0 : index
    %c0_22 = arith.constant 0 : index
    %c0_23 = arith.constant 0 : index
    %35 = vector.load %arg5[%c0_21, %c0_22, %c0_23] : memref<1x64x128xf32, #tpu.memory_space<vmem>>, vector<1x64x128xf32>
    %36 = vector.shape_cast %35 : vector<1x64x128xf32> to vector<64x128xf32>
    %cst_24 = arith.constant dense<0.000000e+00> : vector<16x128xf32>
    %37 = tpu.matmul %34, %36, %cst_24 {dimension_numbers = #tpu.dot_dimension_numbers<[1], [0], [0], [1], [0, 0, 1, 1], [], []>} : vector<16x64xf32>, vector<64x128xf32>, vector<16x128xf32> -> vector<16x128xf32>
    %c0_25 = arith.constant 0 : index
    %c0_26 = arith.constant 0 : index
    %38 = vector.load %arg10[%c0_25, %c0_26] : memref<16x4xf32, #tpu.memory_space<vmem>>, vector<16x4xf32>
    %cst_27 = arith.constant dense<0.000000e+00> : vector<16x512xf32>
    %39 = tpu.matmul %38, %29, %cst_27 {dimension_numbers = #tpu.dot_dimension_numbers<[1], [0], [0], [1], [0, 0, 1, 1], [], []>} : vector<16x4xf32>, vector<4x512xf32>, vector<16x512xf32> -> vector<16x512xf32>
    %c0_28 = arith.constant 0 : index
    %c0_29 = arith.constant 0 : index
    %c0_30 = arith.constant 0 : index
    %40 = vector.load %arg6[%c0_28, %c0_29, %c0_30] : memref<1x16x128xf32, #tpu.memory_space<vmem>>, vector<1x16x128xf32>
    %41 = vector.shape_cast %40 : vector<1x16x128xf32> to vector<16x128xf32>
    %c0_31 = arith.constant 0 : index
    %c0_32 = arith.constant 0 : index
    %c0_33 = arith.constant 0 : index
    %42 = vector.load %arg7[%c0_31, %c0_32, %c0_33] : memref<1x16x256xf32, #tpu.memory_space<vmem>>, vector<1x16x256xf32>
    %43 = vector.shape_cast %42 : vector<1x16x256xf32> to vector<16x256xf32>
    %44 = tpu.concatenate %33, %37, %41, %39, %43 in 1 : vector<16x64xf32>, vector<16x128xf32>, vector<16x128xf32>, vector<16x512xf32>, vector<16x256xf32> -> vector<16x1088xf32>
    %c0_34 = arith.constant 0 : index
    %c0_35 = arith.constant 0 : index
    %c0_36 = arith.constant 0 : index
    %45 = vector.load %arg11[%c0_34, %c0_35, %c0_36] : memref<1x16x1088xf32, #tpu.memory_space<vmem>>, vector<1x16x1088xf32>
    %46 = vector.shape_cast %45 : vector<1x16x1088xf32> to vector<16x1088xf32>
    %47 = vector.shape_cast %44 : vector<16x1088xf32> to vector<1x16x1088xf32>
    tpu.vector_store %arg11[%c0_34, %c0_35, %c0_36], %47 {strides = array<i32>} : memref<1x16x1088xf32, #tpu.memory_space<vmem>>, vector<1x16x1088xf32>,
    return
  }
  func.func @transform_0(%arg0: i32) -> (i32, i32, i32) {
    %c0_i32 = arith.constant 0 : i32
    %c0_i32_0 = arith.constant 0 : i32
    %c0_i32_1 = arith.constant 0 : i32
    return %arg0, %c0_i32, %c0_i32_0 : i32, i32, i32
  }
  func.func @transform_1(%arg0: i32) -> (i32, i32) {
    %c0_i32 = arith.constant 0 : i32
    %c0_i32_0 = arith.constant 0 : i32
    %c0_i32_1 = arith.constant 0 : i32
    return %c0_i32, %c0_i32_0 : i32, i32
  }
  func.func @transform_2(%arg0: i32) -> (i32, i32) {
    %c0_i32 = arith.constant 0 : i32
    %c0_i32_0 = arith.constant 0 : i32
    %c0_i32_1 = arith.constant 0 : i32
    return %c0_i32, %c0_i32_0 : i32, i32
  }
  func.func @transform_3(%arg0: i32) -> (i32, i32, i32) {
    %c0_i32 = arith.constant 0 : i32
    %c0_i32_0 = arith.constant 0 : i32
    %c0_i32_1 = arith.constant 0 : i32
    return %arg0, %c0_i32, %c0_i32_0 : i32, i32, i32
  }
  func.func @transform_4(%arg0: i32) -> (i32, i32, i32) {
    %c0_i32 = arith.constant 0 : i32
    %c0_i32_0 = arith.constant 0 : i32
    %c0_i32_1 = arith.constant 0 : i32
    return %arg0, %c0_i32, %c0_i32_0 : i32, i32, i32
  }
  func.func @transform_5(%arg0: i32) -> (i32, i32, i32) {
    %c0_i32 = arith.constant 0 : i32
    %c0_i32_0 = arith.constant 0 : i32
    %c0_i32_1 = arith.constant 0 : i32
    return %arg0, %c0_i32, %c0_i32_0 : i32, i32, i32
  }
  func.func @transform_6(%arg0: i32) -> (i32, i32, i32) {
    %c0_i32 = arith.constant 0 : i32
    %c0_i32_0 = arith.constant 0 : i32
    %c0_i32_1 = arith.constant 0 : i32
    return %arg0, %c0_i32, %c0_i32_0 : i32, i32, i32
  }
  func.func @transform_7(%arg0: i32) -> (i32, i32) {
    %c0_i32 = arith.constant 0 : i32
    %c0_i32_0 = arith.constant 0 : i32
    %c0_i32_1 = arith.constant 0 : i32
    return %c0_i32, %c0_i32_0 : i32, i32
  }
  func.func @transform_8(%arg0: i32) -> (i32, i32) {
    %c0_i32 = arith.constant 0 : i32
    %c0_i32_0 = arith.constant 0 : i32
    %c0_i32_1 = arith.constant 0 : i32
    return %c0_i32, %c0_i32_0 : i32, i32
  }
  func.func @transform_9(%arg0: i32) -> (i32, i32) {
    %c0_i32 = arith.constant 0 : i32
    %c0_i32_0 = arith.constant 0 : i32
    %c0_i32_1 = arith.constant 0 : i32
    return %c0_i32, %c0_i32_0 : i32, i32
  }
  func.func @transform_10(%arg0: i32) -> (i32, i32, i32) {
    %c0_i32 = arith.constant 0 : i32
    %c0_i32_0 = arith.constant 0 : i32
    %c0_i32_1 = arith.constant 0 : i32
    return %arg0, %c0_i32, %c0_i32_0 : i32, i32, i32
  }
}

</mosaic_0001>

<llo_original>
// kernel: tpu_custom_call.1
$region0: #{tpu_custom_call.1}
  #allocation0 [shape = 'u32[]', space=smem, size = 0x4, offset = 0x4, fixed_abs, tag = 'smem constant byte address 0x4 - core index']
  #allocation1 [shape = 'u32[144,128]{1,0:T(1,128)}', space=vmem, size = 0x12000, scoped, tag = 'internal scratch']
  %s0 = inlined_call_operand.hbm [shape: bf16[2,4,3456], index: 0, kind: input, shape index: {}]
  %s1 = inlined_call_operand.hbm [shape: bf16[3456,512], index: 1, kind: input, shape index: {}]
  %s2 = inlined_call_operand.hbm [shape: f32[1,512], index: 2, kind: input, shape index: {}]
  %s3 = inlined_call_operand.vmem [shape: f32[2,256,64], index: 3, kind: input, shape index: {}]
  %s4 = inlined_call_operand.hbm [shape: f32[2,64,128], index: 4, kind: input, shape index: {}]
  %s5 = inlined_call_operand.hbm [shape: f32[2,16,128], index: 5, kind: input, shape index: {}]
  %s6 = inlined_call_operand.hbm [shape: f32[2,16,256], index: 6, kind: input, shape index: {}]
  %s7 = inlined_call_operand.hbm [shape: f32[16,256], index: 7, kind: input, shape index: {}]
  %s8 = inlined_call_operand.hbm [shape: f32[16,64], index: 8, kind: input, shape index: {}]
  %s9 = inlined_call_operand.vmem [shape: f32[16,4], index: 9, kind: input, shape index: {}]
  %s10 = inlined_call_operand.hbm [shape: f32[2,16,1088], index: 10, kind: output, shape index: {}]
  %s11 = sld [smem:[#allocation0]]
  $region105: #{tpu_custom_call.1} parent=0
    _
  %s13 = ssub.s32 1, %s11
  %s14 = scalar_select 0, %s13, %s11
  $region1: #{tpu_custom_call.1} parent=0
    #allocation2 [shape = 'u8[55296]{0}', space=vmem, size = 0xd800, scoped, tag = 'input window, operand 0']
    #allocation3 [shape = 's32[2]{0}', space=sflag, size = 0x8, scoped, tag = 'scoped memory for tpu_custom_call.1']
    #allocation4 [shape = 's32[2]{0}', space=sflag, size = 0x8, scoped, tag = 'scoped memory for tpu_custom_call.1']
    #allocation5 [shape = 'u8[3538944]{0}', space=vmem, size = 0x360000, scoped, tag = 'input window, operand 1, single buffered']
    #allocation6 [shape = 's32[1]{0}', space=sflag, size = 0x4, scoped, tag = 'scoped memory for tpu_custom_call.1']
    #allocation7 [shape = 'u8[2048]{0}', space=vmem, size = 0x800, scoped, tag = 'input window, operand 2, single buffered']
    #allocation8 [shape = 'u8[65536]{0}', space=vmem, size = 0x10000, scoped, tag = 'input window, operand 4']
    #allocation9 [shape = 's32[2]{0}', space=sflag, size = 0x8, scoped, tag = 'scoped memory for tpu_custom_call.1']
    #allocation10 [shape = 'u8[16384]{0}', space=vmem, size = 0x4000, scoped, tag = 'input window, operand 5']
    #allocation11 [shape = 'u8[32768]{0}', space=vmem, size = 0x8000, scoped, tag = 'input window, operand 6']
    #allocation12 [shape = 's32[2]{0}', space=sflag, size = 0x8, scoped, tag = 'scoped memory for tpu_custom_call.1']
    #allocation13 [shape = 'u8[16384]{0}', space=vmem, size = 0x4000, scoped, tag = 'input window, operand 7, single buffered']
    #allocation14 [shape = 'u8[8192]{0}', space=vmem, size = 0x2000, scoped, tag = 'input window, operand 8, single buffered']
    #allocation15 [shape = 's32[1]{0}', space=sflag, size = 0x4, scoped, tag = 'scoped memory for tpu_custom_call.1']
    #allocation16 [shape = 'u8[147456]{0}', space=vmem, size = 0x24000, scoped, tag = 'output window, operand 0']
    %15 = vsyncpa [#allocation3], 0
    %s16 = scalar_lea.sflag [#allocation3], 1
    %17 = vsyncpa %s16, 0
    %18 = vsyncpa [#allocation6], 0
    %19 = vsyncpa [#allocation9], 0
    %s20 = scalar_lea.sflag [#allocation9], 1
    %21 = vsyncpa %s20, 0
    %22 = vsyncpa [#allocation12], 0
    %s23 = scalar_lea.sflag [#allocation12], 1
    %24 = vsyncpa %s23, 0
    %25 = vsyncpa [#allocation15], 0
    %26 = vsyncpa [#allocation4], 0
    %s27 = scalar_lea.sflag [#allocation4], 1
    %28 = vsyncpa %s27, 0
    loop: start=0, step=1, limit=4
    $region2: #{tpu_custom_call.1} parent=1 // loop_pre_header
      _
    $region3: #{tpu_custom_call.1} parent=1 // loop_header
      %s30 = sphi 0, %s34
      %p31 = scmp.ge.s32.totalorder %s30, 4
      %s40 = sphi 0, %s42
      %s43 = sphi 0, %s40
      %s44 = sphi 0, %s43
      %s60 = sphi 0, %s44
      %s64 = sphi 0, %s64
      %s66 = sphi 0, %s64
      %s67 = sphi 0, %s66
      %s81 = sphi 0, %s67
      %s85 = sphi 0, %s85
      %s87 = sphi 0, %s85
      %s88 = sphi 0, %s87
      %s102 = sphi 0, %s88
      %s108 = sphi 0, %s110
      %s111 = sphi 0, %s108
      %s112 = sphi 0, %s111
      %s128 = sphi 0, %s112
      %s134 = sphi 0, %s136
      %s137 = sphi 0, %s134
      %s138 = sphi 0, %s137
      %s154 = sphi 0, %s138
      %s160 = sphi 0, %s162
      %s163 = sphi 0, %s160
      %s164 = sphi 0, %s163
      %s180 = sphi 0, %s164
      %s186 = sphi 0, %s188
      %s189 = sphi 0, %s186
      %s190 = sphi 0, %s189
      %s206 = sphi 0, %s190
      %s210 = sphi 0, %s210
      %s212 = sphi 0, %s210
      %s213 = sphi 0, %s212
      %s227 = sphi 0, %s213
      %s231 = sphi 0, %s231
      %s233 = sphi 0, %s231
      %s234 = sphi 0, %s233
      %s248 = sphi 0, %s234
      %s252 = sphi 0, %s252
      %s254 = sphi 0, %s252
      %s255 = sphi 0, %s254
      %s269 = sphi 0, %s255
      %s275 = sphi 0, %s277
      %s278 = sphi 0, %s275
      %s279 = sphi 0, %s278
      %s295 = sphi 0, %s279
    $region4: #{tpu_custom_call.1} parent=1 // loop_header_branch
      %33 = sbr.rel (%p31) target = $region8
    $region5: #{tpu_custom_call.1} parent=1 // loop_body
      %s35 = ssub.s32 %s30, 1
      %s36 = ssub.s32 %s30, 2
      %s37 = sadd.s32 %s30, 1
      %s38 = ssub.s32 %s30, %s37
      %p39 = scmp.eq.s32.totalorder %s38, 0
      %s41 = sadd.s32 %s40, 1
      %s42 = scalar_select %p39, %s40, %s41
      %p45 = pneg %p39
      %p46 = scmp.eq.s32.totalorder %s30, 1
      %p47 = por %p45, %p46
      %p48 = scmp.ne.s32.totalorder %s40, %s43
      %p49 = scmp.eq.s32.totalorder %s30, 0
      %p50 = por %p48, %p49
      %p51 = scmp.ne.s32.totalorder %s40, %s43
      %p52 = scmp.eq.s32.totalorder %s35, 1
      %p53 = por %p51, %p52
      %p54 = scmp.ne.s32.totalorder %s43, %s44
      %p55 = scmp.eq.s32.totalorder %s35, 0
      %p56 = por %p54, %p55
      %p57 = scmp.ne.s32.totalorder %s43, %s44
      %p58 = scmp.eq.s32.totalorder %s36, 1
      %p59 = por %p57, %p58
      %p61 = scmp.ne.s32.totalorder %s44, %s60
      %p62 = scmp.eq.s32.totalorder %s36, 0
      %p63 = por %p61, %p62
      %s65 = sadd.s32 %s64, 1
      %p68 = scmp.eq.s32.totalorder %s30, 1
      %p69 = scmp.ne.s32.totalorder %s64, %s66
      %p70 = scmp.eq.s32.totalorder %s30, 0
      %p71 = por %p69, %p70
      %p72 = scmp.ne.s32.totalorder %s64, %s66
      %p73 = scmp.eq.s32.totalorder %s35, 1
      %p74 = por %p72, %p73
      %p75 = scmp.ne.s32.totalorder %s66, %s67
      %p76 = scmp.eq.s32.totalorder %s35, 0
      %p77 = por %p75, %p76
      %p78 = scmp.ne.s32.totalorder %s66, %s67
      %p79 = scmp.eq.s32.totalorder %s36, 1
      %p80 = por %p78, %p79
      %p82 = scmp.ne.s32.totalorder %s67, %s81
      %p83 = scmp.eq.s32.totalorder %s36, 0
      %p84 = por %p82, %p83
      %s86 = sadd.s32 %s85, 1
      %p89 = scmp.eq.s32.totalorder %s30, 1
      %p90 = scmp.ne.s32.totalorder %s85, %s87
      %p91 = scmp.eq.s32.totalorder %s30, 0
      %p92 = por %p90, %p91
      %p93 = scmp.ne.s32.totalorder %s85, %s87
      %p94 = scmp.eq.s32.totalorder %s35, 1
      %p95 = por %p93, %p94
      %p96 = scmp.ne.s32.totalorder %s87, %s88
      %p97 = scmp.eq.s32.totalorder %s35, 0
      %p98 = por %p96, %p97
      %p99 = scmp.ne.s32.totalorder %s87, %s88
      %p100 = scmp.eq.s32.totalorder %s36, 1
      %p101 = por %p99, %p100
      %p103 = scmp.ne.s32.totalorder %s88, %s102
      %p104 = scmp.eq.s32.totalorder %s36, 0
      %p105 = por %p103, %p104
      %s106 = ssub.s32 %s30, %s37
      %p107 = scmp.eq.s32.totalorder %s106, 0
      %s109 = sadd.s32 %s108, 1
      %s110 = scalar_select %p107, %s108, %s109
      %p113 = pneg %p107
      %p114 = scmp.eq.s32.totalorder %s30, 1
      %p115 = por %p113, %p114
      %p116 = scmp.ne.s32.totalorder %s108, %s111
      %p117 = scmp.eq.s32.totalorder %s30, 0
      %p118 = por %p116, %p117
      %p119 = scmp.ne.s32.totalorder %s108, %s111
      %p120 = scmp.eq.s32.totalorder %s35, 1
      %p121 = por %p119, %p120
      %p122 = scmp.ne.s32.totalorder %s111, %s112
      %p123 = scmp.eq.s32.totalorder %s35, 0
      %p124 = por %p122, %p123
      %p125 = scmp.ne.s32.totalorder %s111, %s112
      %p126 = scmp.eq.s32.totalorder %s36, 1
      %p127 = por %p125, %p126
      %p129 = scmp.ne.s32.totalorder %s112, %s128
      %p130 = scmp.eq.s32.totalorder %s36, 0
      %p131 = por %p129, %p130
      %s132 = ssub.s32 %s30, %s37
      %p133 = scmp.eq.s32.totalorder %s132, 0
      %s135 = sadd.s32 %s134, 1
      %s136 = scalar_select %p133, %s134, %s135
      %p139 = pneg %p133
      %p140 = scmp.eq.s32.totalorder %s30, 1
      %p141 = por %p139, %p140
      %p142 = scmp.ne.s32.totalorder %s134, %s137
      %p143 = scmp.eq.s32.totalorder %s30, 0
      %p144 = por %p142, %p143
      %p145 = scmp.ne.s32.totalorder %s134, %s137
      %p146 = scmp.eq.s32.totalorder %s35, 1
      %p147 = por %p145, %p146
      %p148 = scmp.ne.s32.totalorder %s137, %s138
      %p149 = scmp.eq.s32.totalorder %s35, 0
      %p150 = por %p148, %p149
      %p151 = scmp.ne.s32.totalorder %s137, %s138
      %p152 = scmp.eq.s32.totalorder %s36, 1
      %p153 = por %p151, %p152
      %p155 = scmp.ne.s32.totalorder %s138, %s154
      %p156 = scmp.eq.s32.totalorder %s36, 0
      %p157 = por %p155, %p156
      %s158 = ssub.s32 %s30, %s37
      %p159 = scmp.eq.s32.totalorder %s158, 0
      %s161 = sadd.s32 %s160, 1
      %s162 = scalar_select %p159, %s160, %s161
      %p165 = pneg %p159
      %p166 = scmp.eq.s32.totalorder %s30, 1
      %p167 = por %p165, %p166
      %p168 = scmp.ne.s32.totalorder %s160, %s163
      %p169 = scmp.eq.s32.totalorder %s30, 0
      %p170 = por %p168, %p169
      %p171 = scmp.ne.s32.totalorder %s160, %s163
      %p172 = scmp.eq.s32.totalorder %s35, 1
      %p173 = por %p171, %p172
      %p174 = scmp.ne.s32.totalorder %s163, %s164
      %p175 = scmp.eq.s32.totalorder %s35, 0
      %p176 = por %p174, %p175
      %p177 = scmp.ne.s32.totalorder %s163, %s164
      %p178 = scmp.eq.s32.totalorder %s36, 1
      %p179 = por %p177, %p178
      %p181 = scmp.ne.s32.totalorder %s164, %s180
      %p182 = scmp.eq.s32.totalorder %s36, 0
      %p183 = por %p181, %p182
      %s184 = ssub.s32 %s30, %s37
      %p185 = scmp.eq.s32.totalorder %s184, 0
      %s187 = sadd.s32 %s186, 1
      %s188 = scalar_select %p185, %s186, %s187
      %p191 = pneg %p185
      %p192 = scmp.eq.s32.totalorder %s30, 1
      %p193 = por %p191, %p192
      %p194 = scmp.ne.s32.totalorder %s186, %s189
      %p195 = scmp.eq.s32.totalorder %s30, 0
      %p196 = por %p194, %p195
      %p197 = scmp.ne.s32.totalorder %s186, %s189
      %p198 = scmp.eq.s32.totalorder %s35, 1
      %p199 = por %p197, %p198
      %p200 = scmp.ne.s32.totalorder %s189, %s190
      %p201 = scmp.eq.s32.totalorder %s35, 0
      %p202 = por %p200, %p201
      %p203 = scmp.ne.s32.totalorder %s189, %s190
      %p204 = scmp.eq.s32.totalorder %s36, 1
      %p205 = por %p203, %p204
      %p207 = scmp.ne.s32.totalorder %s190, %s206
      %p208 = scmp.eq.s32.totalorder %s36, 0
      %p209 = por %p207, %p208
      %s211 = sadd.s32 %s210, 1
      %p214 = scmp.eq.s32.totalorder %s30, 1
      %p215 = scmp.ne.s32.totalorder %s210, %s212
      %p216 = scmp.eq.s32.totalorder %s30, 0
      %p217 = por %p215, %p216
      %p218 = scmp.ne.s32.totalorder %s210, %s212
      %p219 = scmp.eq.s32.totalorder %s35, 1
      %p220 = por %p218, %p219
      %p221 = scmp.ne.s32.totalorder %s212, %s213
      %p222 = scmp.eq.s32.totalorder %s35, 0
      %p223 = por %p221, %p222
      %p224 = scmp.ne.s32.totalorder %s212, %s213
      %p225 = scmp.eq.s32.totalorder %s36, 1
      %p226 = por %p224, %p225
      %p228 = scmp.ne.s32.totalorder %s213, %s227
      %p229 = scmp.eq.s32.totalorder %s36, 0
      %p230 = por %p228, %p229
      %s232 = sadd.s32 %s231, 1
      %p235 = scmp.eq.s32.totalorder %s30, 1
      %p236 = scmp.ne.s32.totalorder %s231, %s233
      %p237 = scmp.eq.s32.totalorder %s30, 0
      %p238 = por %p236, %p237
      %p239 = scmp.ne.s32.totalorder %s231, %s233
      %p240 = scmp.eq.s32.totalorder %s35, 1
      %p241 = por %p239, %p240
      %p242 = scmp.ne.s32.totalorder %s233, %s234
      %p243 = scmp.eq.s32.totalorder %s35, 0
      %p244 = por %p242, %p243
      %p245 = scmp.ne.s32.totalorder %s233, %s234
      %p246 = scmp.eq.s32.totalorder %s36, 1
      %p247 = por %p245, %p246
      %p249 = scmp.ne.s32.totalorder %s234, %s248
      %p250 = scmp.eq.s32.totalorder %s36, 0
      %p251 = por %p249, %p250
      %s253 = sadd.s32 %s252, 1
      %p256 = scmp.eq.s32.totalorder %s30, 1
      %p257 = scmp.ne.s32.totalorder %s252, %s254
      %p258 = scmp.eq.s32.totalorder %s30, 0
      %p259 = por %p257, %p258
      %p260 = scmp.ne.s32.totalorder %s252, %s254
      %p261 = scmp.eq.s32.totalorder %s35, 1
      %p262 = por %p260, %p261
      %p263 = scmp.ne.s32.totalorder %s254, %s255
      %p264 = scmp.eq.s32.totalorder %s35, 0
      %p265 = por %p263, %p264
      %p266 = scmp.ne.s32.totalorder %s254, %s255
      %p267 = scmp.eq.s32.totalorder %s36, 1
      %p268 = por %p266, %p267
      %p270 = scmp.ne.s32.totalorder %s255, %s269
      %p271 = scmp.eq.s32.totalorder %s36, 0
      %p272 = por %p270, %p271
      %s273 = ssub.s32 %s30, %s37
      %p274 = scmp.eq.s32.totalorder %s273, 0
      %s276 = sadd.s32 %s275, 1
      %s277 = scalar_select %p274, %s275, %s276
      %p280 = pneg %p274
      %p281 = scmp.eq.s32.totalorder %s30, 1
      %p282 = por %p280, %p281
      %p283 = scmp.ne.s32.totalorder %s275, %s278
      %p284 = scmp.eq.s32.totalorder %s30, 0
      %p285 = por %p283, %p284
      %p286 = scmp.ne.s32.totalorder %s275, %s278
      %p287 = scmp.eq.s32.totalorder %s35, 1
      %p288 = por %p286, %p287
      %p289 = scmp.ne.s32.totalorder %s278, %s279
      %p290 = scmp.eq.s32.totalorder %s35, 0
      %p291 = por %p289, %p290
      %p292 = scmp.ne.s32.totalorder %s278, %s279
      %p293 = scmp.eq.s32.totalorder %s36, 1
      %p294 = por %p292, %p293
      %p296 = scmp.ne.s32.totalorder %s279, %s295
      %p297 = scmp.eq.s32.totalorder %s36, 0
      %p298 = por %p296, %p297
      %p299 = scmp.le.s32.totalorder 1, %s30
      %p300 = scmp.lt.s32.totalorder %s30, 3
      %p301 = pnand %p299, %p300
      %p302 = pneg %p301
      // Predicated region
      $region9: #{tpu_custom_call.1} parent=5 // pred_check
        _
      $region10: #{tpu_custom_call.1} parent=5 // pred_check_branch
        %304 = sbr.rel (%p301) target = $region12
      $region11: #{tpu_custom_call.1} parent=5 // pred_region
        %s305 = ssub.s32 %s30, 1
        // Predicated region
        $region13: #{tpu_custom_call.1} parent=11 // pred_check
          %p306 = pneg %p77
        $region14: #{tpu_custom_call.1} parent=11 // pred_check_branch
          %308 = sbr.rel (%p306) target = $region16
        $region15: #{tpu_custom_call.1} parent=11 // pred_region
          %s310 = ssub.s32 110592, 110592
          %311 = vsyncadd [#allocation6], %s310
          %s312 = sshll.u32 [#allocation5], 4
          %s313 = int_to_ptr.vmem [resolvable:$true] %s312
          %318 = dma.hbm_to_vmem [thread:$0]  %s1, 110592, %s313, [#allocation6], 256, 256, 16
        $region16: #{tpu_custom_call.1} parent=11 // pred_fallthru
          _
        // Predicated region
        $region17: #{tpu_custom_call.1} parent=11 // pred_check
          %p319 = pneg %p98
        $region18: #{tpu_custom_call.1} parent=11 // pred_check_branch
          %321 = sbr.rel (%p319) target = $region20
        $region19: #{tpu_custom_call.1} parent=11 // pred_region
          %s323 = ssub.s32 64, 64
          %324 = vsyncadd [#allocation6], %s323
          %s326 = sshll.u32 [#allocation7], 4
          %s327 = int_to_ptr.vmem [resolvable:$true] %s326
          %329 = dma.hbm_to_vmem [thread:$0]  %s2, 64, %s327, [#allocation6]
        $region20: #{tpu_custom_call.1} parent=11 // pred_fallthru
          _
        // Predicated region
        $region21: #{tpu_custom_call.1} parent=11 // pred_check
          %p330 = pneg %p223
        $region22: #{tpu_custom_call.1} parent=11 // pred_check_branch
          %332 = sbr.rel (%p330) target = $region24
        $region23: #{tpu_custom_call.1} parent=11 // pred_region
          %s334 = ssub.s32 512, 512
          %335 = vsyncadd [#allocation12], %s334
          %s336 = sshll.u32 [#allocation13], 4
          %s337 = int_to_ptr.vmem [resolvable:$true] %s336
          %342 = dma.hbm_to_vmem [thread:$0]  %s7, 512, %s337, [#allocation12], 256, 256, 16
        $region24: #{tpu_custom_call.1} parent=11 // pred_fallthru
          _
        // Predicated region
        $region25: #{tpu_custom_call.1} parent=11 // pred_check
          %p343 = pneg %p244
        $region26: #{tpu_custom_call.1} parent=11 // pred_check_branch
          %345 = sbr.rel (%p343) target = $region28
        $region27: #{tpu_custom_call.1} parent=11 // pred_region
          %s347 = ssub.s32 256, 256
          %348 = vsyncadd [#allocation15], %s347
          %s349 = sshll.u32 [#allocation14], 4
          %s350 = int_to_ptr.vmem [resolvable:$true] %s349
          %355 = dma.hbm_to_vmem [thread:$0]  %s8, 256, %s350, [#allocation15], 128, 128, 8
        $region28: #{tpu_custom_call.1} parent=11 // pred_fallthru
          _
        // Predicated region
        $region29: #{tpu_custom_call.1} parent=11 // pred_check
          %p356 = pneg %p265
        $region30: #{tpu_custom_call.1} parent=11 // pred_check_branch
          %358 = sbr.rel (%p356) target = $region32
        $region31: #{tpu_custom_call.1} parent=11 // pred_region
          _
        $region32: #{tpu_custom_call.1} parent=11 // pred_fallthru
          _
      $region12: #{tpu_custom_call.1} parent=5 // pred_fallthru
        _
      %p359 = scmp.lt.s32.totalorder %s30, 2
      // Predicated region
      $region33: #{tpu_custom_call.1} parent=5 // pred_check
        %p360 = pneg %p359
      $region34: #{tpu_custom_call.1} parent=5 // pred_check_branch
        %362 = sbr.rel (%p360) target = $region36
      $region35: #{tpu_custom_call.1} parent=5 // pred_region
        // Predicated region
        $region37: #{tpu_custom_call.1} parent=35 // pred_check
          %p363 = pneg %p50
        $region38: #{tpu_custom_call.1} parent=35 // pred_check_branch
          %365 = sbr.rel (%p363) target = $region40
        $region39: #{tpu_custom_call.1} parent=35 // pred_region
          %s366 = sand.u32 %s40, 1
          %s367 = scalar_lea.sflag [#allocation3], %s366
          %s368 = sand.u32 %s40, 1
          %s369 = smul.addr %s368, 54
          %s370 = scalar_lea.vmem [#allocation2], %s369
          %s372 = ssub.s32 864, 864
          %373 = vsyncadd %s367, %s372
          %s374 = smul.addr %s30, 27
          %s375 = smul.addr %s374, 32
          %s376 = scalar_lea.hbm %s0, %s375
          %s378 = sshll.u32 %s370, 4
          %s379 = int_to_ptr.vmem [resolvable:$true] %s378
          %381 = dma.hbm_to_vmem [thread:$0]  %s376, 864, %s379, %s367
        $region40: #{tpu_custom_call.1} parent=35 // pred_fallthru
          _
        // Predicated region
        $region41: #{tpu_custom_call.1} parent=35 // pred_check
          %p382 = pneg %p118
        $region42: #{tpu_custom_call.1} parent=35 // pred_check_branch
          %384 = sbr.rel (%p382) target = $region44
        $region43: #{tpu_custom_call.1} parent=35 // pred_region
          %p385 = scmp.lt.s32.totalorder %s30, 1
          %s386 = scalar_select %p385, %s30, 1
          %s387 = smul.addr %s386, 32
          %s388 = smul.addr %s387, 8
          %s389 = scalar_lea.vmem %s3, %s388
        $region44: #{tpu_custom_call.1} parent=35 // pred_fallthru
          _
        // Predicated region
        $region45: #{tpu_custom_call.1} parent=35 // pred_check
          %p390 = pneg %p144
        $region46: #{tpu_custom_call.1} parent=35 // pred_check_branch
          %392 = sbr.rel (%p390) target = $region48
        $region47: #{tpu_custom_call.1} parent=35 // pred_region
          %s393 = sand.u32 %s30, 1
          %s394 = scalar_lea.sflag [#allocation9], %s393
          %s395 = sand.u32 %s134, 1
          %s396 = smul.addr %s395, 64
          %s397 = scalar_lea.vmem [#allocation8], %s396
          %s399 = ssub.s32 1024, 1024
          %400 = vsyncadd %s394, %s399
          %s401 = smul.addr %s30, 8
          %s402 = smul.addr %s401, 128
          %s403 = scalar_lea.hbm %s4, %s402
          %s404 = sshll.u32 %s397, 4
          %s405 = int_to_ptr.vmem [resolvable:$true] %s404
          %410 = dma.hbm_to_vmem [thread:$0]  %s403, 1024, %s405, %s394, 128, 128, 8
        $region48: #{tpu_custom_call.1} parent=35 // pred_fallthru
          _
        // Predicated region
        $region49: #{tpu_custom_call.1} parent=35 // pred_check
          %p411 = pneg %p170
        $region50: #{tpu_custom_call.1} parent=35 // pred_check_branch
          %413 = sbr.rel (%p411) target = $region52
        $region51: #{tpu_custom_call.1} parent=35 // pred_region
          %s414 = sand.u32 %s30, 1
          %s415 = scalar_lea.sflag [#allocation9], %s414
          %s416 = sand.u32 %s160, 1
          %s417 = smul.addr %s416, 16
          %s418 = scalar_lea.vmem [#allocation10], %s417
          %s420 = ssub.s32 256, 256
          %421 = vsyncadd %s415, %s420
          %s422 = smul.addr %s30, 2
          %s423 = smul.addr %s422, 128
          %s424 = scalar_lea.hbm %s5, %s423
          %s425 = sshll.u32 %s418, 4
          %s426 = int_to_ptr.vmem [resolvable:$true] %s425
          %431 = dma.hbm_to_vmem [thread:$0]  %s424, 256, %s426, %s415, 128, 128, 8
        $region52: #{tpu_custom_call.1} parent=35 // pred_fallthru
          _
        // Predicated region
        $region53: #{tpu_custom_call.1} parent=35 // pred_check
          %p432 = pneg %p196
        $region54: #{tpu_custom_call.1} parent=35 // pred_check_branch
          %434 = sbr.rel (%p432) target = $region56
        $region55: #{tpu_custom_call.1} parent=35 // pred_region
          %s435 = sand.u32 %s30, 1
          %s436 = scalar_lea.sflag [#allocation12], %s435
          %s437 = sand.u32 %s186, 1
          %s438 = smul.addr %s437, 32
          %s439 = scalar_lea.vmem [#allocation11], %s438
          %s441 = ssub.s32 512, 512
          %442 = vsyncadd %s436, %s441
          %s443 = smul.addr %s30, 4
          %s444 = smul.addr %s443, 128
          %s445 = scalar_lea.hbm %s6, %s444
          %s446 = sshll.u32 %s439, 4
          %s447 = int_to_ptr.vmem [resolvable:$true] %s446
          %452 = dma.hbm_to_vmem [thread:$0]  %s445, 512, %s447, %s436, 256, 256, 16
        $region56: #{tpu_custom_call.1} parent=35 // pred_fallthru
          _
      $region36: #{tpu_custom_call.1} parent=5 // pred_fallthru
        _
      %p453 = scmp.le.s32.totalorder 1, %s30
      %p454 = scmp.lt.s32.totalorder %s30, 3
      %p455 = pnand %p453, %p454
      %p456 = pneg %p455
      // Predicated region
      $region57: #{tpu_custom_call.1} parent=5 // pred_check
        _
      $region58: #{tpu_custom_call.1} parent=5 // pred_check_branch
        %458 = sbr.rel (%p455) target = $region60
      $region59: #{tpu_custom_call.1} parent=5 // pred_region
        %s459 = ssub.s32 %s30, 1
        %s460 = sand.u32 %s43, 1
        %s461 = scalar_lea.sflag [#allocation3], %s460
        %s462 = sand.u32 %s43, 1
        %s463 = smul.addr %s462, 54
        %s464 = scalar_lea.vmem [#allocation2], %s463
        // Predicated region
        $region61: #{tpu_custom_call.1} parent=59 // pred_check
          %p465 = pneg %p56
        $region62: #{tpu_custom_call.1} parent=59 // pred_check_branch
          %467 = sbr.rel (%p465) target = $region64
        $region63: #{tpu_custom_call.1} parent=59 // pred_region
          %468 = dma.done %s461, 864
        $region64: #{tpu_custom_call.1} parent=59 // pred_fallthru
          _
        // Predicated region
        $region65: #{tpu_custom_call.1} parent=59 // pred_check
          %p469 = pneg %p77
        $region66: #{tpu_custom_call.1} parent=59 // pred_check_branch
          %471 = sbr.rel (%p469) target = $region68
        $region67: #{tpu_custom_call.1} parent=59 // pred_region
          %472 = dma.done [#allocation6], 110592
        $region68: #{tpu_custom_call.1} parent=59 // pred_fallthru
          _
        // Predicated region
        $region69: #{tpu_custom_call.1} parent=59 // pred_check
          %p473 = pneg %p98
        $region70: #{tpu_custom_call.1} parent=59 // pred_check_branch
          %475 = sbr.rel (%p473) target = $region72
        $region71: #{tpu_custom_call.1} parent=59 // pred_region
          %476 = dma.done [#allocation6], 64
        $region72: #{tpu_custom_call.1} parent=59 // pred_fallthru
          _
        %s477 = sand.u32 %s35, 1
        %s478 = scalar_lea.sflag [#allocation9], %s477
        %s479 = sand.u32 %s137, 1
        %s480 = smul.addr %s479, 64
        %s481 = scalar_lea.vmem [#allocation8], %s480
        // Predicated region
        $region73: #{tpu_custom_call.1} parent=59 // pred_check
          %p482 = pneg %p150
        $region74: #{tpu_custom_call.1} parent=59 // pred_check_branch
          %484 = sbr.rel (%p482) target = $region76
        $region75: #{tpu_custom_call.1} parent=59 // pred_region
          %485 = dma.done %s478, 1024
        $region76: #{tpu_custom_call.1} parent=59 // pred_fallthru
          _
        %s486 = sand.u32 %s35, 1
        %s487 = scalar_lea.sflag [#allocation9], %s486
        %s488 = sand.u32 %s163, 1
        %s489 = smul.addr %s488, 16
        %s490 = scalar_lea.vmem [#allocation10], %s489
        // Predicated region
        $region77: #{tpu_custom_call.1} parent=59 // pred_check
          %p491 = pneg %p176
        $region78: #{tpu_custom_call.1} parent=59 // pred_check_branch
          %493 = sbr.rel (%p491) target = $region80
        $region79: #{tpu_custom_call.1} parent=59 // pred_region
          %494 = dma.done %s487, 256
        $region80: #{tpu_custom_call.1} parent=59 // pred_fallthru
          _
        %s495 = sand.u32 %s35, 1
        %s496 = scalar_lea.sflag [#allocation12], %s495
        %s497 = sand.u32 %s189, 1
        %s498 = smul.addr %s497, 32
        %s499 = scalar_lea.vmem [#allocation11], %s498
        // Predicated region
        $region81: #{tpu_custom_call.1} parent=59 // pred_check
          %p500 = pneg %p202
        $region82: #{tpu_custom_call.1} parent=59 // pred_check_branch
          %502 = sbr.rel (%p500) target = $region84
        $region83: #{tpu_custom_call.1} parent=59 // pred_region
          %503 = dma.done %s496, 512
        $region84: #{tpu_custom_call.1} parent=59 // pred_fallthru
          _
        // Predicated region
        $region85: #{tpu_custom_call.1} parent=59 // pred_check
          %p504 = pneg %p223
        $region86: #{tpu_custom_call.1} parent=59 // pred_check_branch
          %506 = sbr.rel (%p504) target = $region88
        $region87: #{tpu_custom_call.1} parent=59 // pred_region
          %507 = dma.done [#allocation12], 512
        $region88: #{tpu_custom_call.1} parent=59 // pred_fallthru
          _
        // Predicated region
        $region89: #{tpu_custom_call.1} parent=59 // pred_check
          %p508 = pneg %p244
        $region90: #{tpu_custom_call.1} parent=59 // pred_check_branch
          %510 = sbr.rel (%p508) target = $region92
        $region91: #{tpu_custom_call.1} parent=59 // pred_region
          %511 = dma.done [#allocation15], 256
        $region92: #{tpu_custom_call.1} parent=59 // pred_fallthru
          _
        %s512 = sand.u32 %s43, 1
        %s513 = scalar_lea.sflag [#allocation3], %s512
        %s514 = sand.u32 %s43, 1
        %s515 = smul.addr %s514, 54
        %s516 = scalar_lea.vmem [#allocation2], %s515
        %p517 = pneg %p56
        %p518 = pneg %p53
        %p519 = pneg %p77
        %p520 = pneg %p74
        %p521 = pneg %p98
        %p522 = pneg %p95
        %p523 = scmp.lt.s32.totalorder %s35, 1
        %s524 = scalar_select %p523, %s35, 1
        %s525 = smul.addr %s524, 32
        %s526 = smul.addr %s525, 8
        %s527 = scalar_lea.vmem %s3, %s526
        %p528 = pneg %p124
        %p529 = pneg %p121
        %s530 = sand.u32 %s35, 1
        %s531 = scalar_lea.sflag [#allocation9], %s530
        %s532 = sand.u32 %s137, 1
        %s533 = smul.addr %s532, 64
        %s534 = scalar_lea.vmem [#allocation8], %s533
        %p535 = pneg %p150
        %p536 = pneg %p147
        %s537 = sand.u32 %s35, 1
        %s538 = scalar_lea.sflag [#allocation9], %s537
        %s539 = sand.u32 %s163, 1
        %s540 = smul.addr %s539, 16
        %s541 = scalar_lea.vmem [#allocation10], %s540
        %p542 = pneg %p176
        %p543 = pneg %p173
        %s544 = sand.u32 %s35, 1
        %s545 = scalar_lea.sflag [#allocation12], %s544
        %s546 = sand.u32 %s189, 1
        %s547 = smul.addr %s546, 32
        %s548 = scalar_lea.vmem [#allocation11], %s547
        %p549 = pneg %p202
        %p550 = pneg %p199
        %p551 = pneg %p223
        %p552 = pneg %p220
        %p553 = pneg %p244
        %p554 = pneg %p241
        %p555 = pneg %p265
        %p556 = pneg %p262
        %p557 = pneg %p291
        %p558 = pneg %p288
        %s559 = sand.u32 %s278, 1
        %s560 = scalar_lea.sflag [#allocation4], %s559
        %s561 = sand.u32 %s278, 1
        %s562 = smul.addr %s561, 144
        %s563 = scalar_lea.vmem [#allocation16], %s562
        %p564 = scmp.lt.s32.totalorder %s35, 1
        %s565 = scalar_select %p564, %s35, 1
        %s566 = smul.addr %s565, 32
        %s567 = smul.addr %s566, 8
        %s568 = scalar_lea.vmem %s3, %s567
        %v570 = vld [vmem:[%s464] sm:$0xff]
        %v571 = vld [vmem:[%s464 + $0x8] sm:$0xff]
        %v572 = vld [vmem:[%s464 + $0x10] sm:$0xff]
        %v573 = vld [vmem:[%s464 + $0x18] sm:$0xff]
        %v574 = vld [vmem:[%s464 + $0x20] sm:$0xff]
        %v575 = vld [vmem:[%s464 + $0x28] sm:$0xff]
        %v576 = vld [vmem:[%s464 + $0x30] sm:$0x3f]
        %v577 = vld [vmem:[#allocation5] sm:$0xff]
        %v578 = vld [vmem:[#allocation5 + $0x8] sm:$0xff]
        %v579 = vld [vmem:[#allocation5 + $0x10] sm:$0xff]
        %v580 = vld [vmem:[#allocation5 + $0x18] sm:$0xff]
        %v581 = vld [vmem:[#allocation5 + $0x20] sm:$0xff]
        %v582 = vld [vmem:[#allocation5 + $0x28] sm:$0xff]
        %v583 = vld [vmem:[#allocation5 + $0x30] sm:$0xff]
        %v584 = vld [vmem:[#allocation5 + $0x38] sm:$0xff]
        %v585 = vld [vmem:[#allocation5 + $0x40] sm:$0xff]
        %v586 = vld [vmem:[#allocation5 + $0x48] sm:$0xff]
        %v587 = vld [vmem:[#allocation5 + $0x50] sm:$0xff]
        %v588 = vld [vmem:[#allocation5 + $0x58] sm:$0xff]
        %v589 = vld [vmem:[#allocation5 + $0x60] sm:$0xff]
        %v590 = vld [vmem:[#allocation5 + $0x68] sm:$0xff]
        %v591 = vld [vmem:[#allocation5 + $0x70] sm:$0xff]
        %v592 = vld [vmem:[#allocation5 + $0x78] sm:$0xff]
        %v593 = vld [vmem:[#allocation5 + $0x80] sm:$0xff]
        %v594 = vld [vmem:[#allocation5 + $0x88] sm:$0xff]
        %v595 = vld [vmem:[#allocation5 + $0x90] sm:$0xff]
        %v596 = vld [vmem:[#allocation5 + $0x98] sm:$0xff]
        %v597 = vld [vmem:[#allocation5 + $0xa0] sm:$0xff]
        %v598 = vld [vmem:[#allocation5 + $0xa8] sm:$0xff]
        %v599 = vld [vmem:[#allocation5 + $0xb0] sm:$0xff]
        %v600 = vld [vmem:[#allocation5 + $0xb8] sm:$0xff]
        %v601 = vld [vmem:[#allocation5 + $0xc0] sm:$0xff]
        %v602 = vld [vmem:[#allocation5 + $0xc8] sm:$0xff]
        %v603 = vld [vmem:[#allocation5 + $0xd0] sm:$0xff]
        %v604 = vld [vmem:[#allocation5 + $0xd8] sm:$0xff]
        %v605 = vld [vmem:[#allocation5 + $0xe0] sm:$0xff]
        %v606 = vld [vmem:[#allocation5 + $0xe8] sm:$0xff]
        %v607 = vld [vmem:[#allocation5 + $0xf0] sm:$0xff]
        %v608 = vld [vmem:[#allocation5 + $0xf8] sm:$0xff]
        %v609 = vld [vmem:[#allocation5 + $0x100] sm:$0xff]
        %v610 = vld [vmem:[#allocation5 + $0x108] sm:$0xff]
        %v611 = vld [vmem:[#allocation5 + $0x110] sm:$0xff]
        %v612 = vld [vmem:[#allocation5 + $0x118] sm:$0xff]
        %v613 = vld [vmem:[#allocation5 + $0x120] sm:$0xff]
        %v614 = vld [vmem:[#allocation5 + $0x128] sm:$0xff]
        %v615 = vld [vmem:[#allocation5 + $0x130] sm:$0xff]
        %v616 = vld [vmem:[#allocation5 + $0x138] sm:$0xff]
        %v617 = vld [vmem:[#allocation5 + $0x140] sm:$0xff]
        %v618 = vld [vmem:[#allocation5 + $0x148] sm:$0xff]
        %v619 = vld [vmem:[#allocation5 + $0x150] sm:$0xff]
        %v620 = vld [vmem:[#allocation5 + $0x158] sm:$0xff]
        %v621 = vld [vmem:[#allocation5 + $0x160] sm:$0xff]
        %v622 = vld [vmem:[#allocation5 + $0x168] sm:$0xff]
        %v623 = vld [vmem:[#allocation5 + $0x170] sm:$0xff]
        %v624 = vld [vmem:[#allocation5 + $0x178] sm:$0xff]
        %v625 = vld [vmem:[#allocation5 + $0x180] sm:$0xff]
        %v626 = vld [vmem:[#allocation5 + $0x188] sm:$0xff]
        %v627 = vld [vmem:[#allocation5 + $0x190] sm:$0xff]
        %v628 = vld [vmem:[#allocation5 + $0x198] sm:$0xff]
        %v629 = vld [vmem:[#allocation5 + $0x1a0] sm:$0xff]
        %v630 = vld [vmem:[#allocation5 + $0x1a8] sm:$0xff]
        %v631 = vld [vmem:[#allocation5 + $0x1b0] sm:$0xff]
        %v632 = vld [vmem:[#allocation5 + $0x1b8] sm:$0xff]
        %v633 = vld [vmem:[#allocation5 + $0x1c0] sm:$0xff]
        %v634 = vld [vmem:[#allocation5 + $0x1c8] sm:$0xff]
        %v635 = vld [vmem:[#allocation5 + $0x1d0] sm:$0xff]
        %v636 = vld [vmem:[#allocation5 + $0x1d8] sm:$0xff]
        %v637 = vld [vmem:[#allocation5 + $0x1e0] sm:$0xff]
        %v638 = vld [vmem:[#allocation5 + $0x1e8] sm:$0xff]
        %v639 = vld [vmem:[#allocation5 + $0x1f0] sm:$0xff]
        %v640 = vld [vmem:[#allocation5 + $0x1f8] sm:$0xff]
        %v641 = vld [vmem:[#allocation5 + $0x200] sm:$0xff]
        %v642 = vld [vmem:[#allocation5 + $0x208] sm:$0xff]
        %v643 = vld [vmem:[#allocation5 + $0x210] sm:$0xff]
        %v644 = vld [vmem:[#allocation5 + $0x218] sm:$0xff]
        %v645 = vld [vmem:[#allocation5 + $0x220] sm:$0xff]
        %v646 = vld [vmem:[#allocation5 + $0x228] sm:$0xff]
        %v647 = vld [vmem:[#allocation5 + $0x230] sm:$0xff]
        %v648 = vld [vmem:[#allocation5 + $0x238] sm:$0xff]
        %v649 = vld [vmem:[#allocation5 + $0x240] sm:$0xff]
        %v650 = vld [vmem:[#allocation5 + $0x248] sm:$0xff]
        %v651 = vld [vmem:[#allocation5 + $0x250] sm:$0xff]
        %v652 = vld [vmem:[#allocation5 + $0x258] sm:$0xff]
        %v653 = vld [vmem:[#allocation5 + $0x260] sm:$0xff]
        %v654 = vld [vmem:[#allocation5 + $0x268] sm:$0xff]
        %v655 = vld [vmem:[#allocation5 + $0x270] sm:$0xff]
        %v656 = vld [vmem:[#allocation5 + $0x278] sm:$0xff]
        %v657 = vld [vmem:[#allocation5 + $0x280] sm:$0xff]
        %v658 = vld [vmem:[#allocation5 + $0x288] sm:$0xff]
        %v659 = vld [vmem:[#allocation5 + $0x290] sm:$0xff]
        %v660 = vld [vmem:[#allocation5 + $0x298] sm:$0xff]
        %v661 = vld [vmem:[#allocation5 + $0x2a0] sm:$0xff]
        %v662 = vld [vmem:[#allocation5 + $0x2a8] sm:$0xff]
        %v663 = vld [vmem:[#allocation5 + $0x2b0] sm:$0xff]
        %v664 = vld [vmem:[#allocation5 + $0x2b8] sm:$0xff]
        %v665 = vld [vmem:[#allocation5 + $0x2c0] sm:$0xff]
        %v666 = vld [vmem:[#allocation5 + $0x2c8] sm:$0xff]
        %v667 = vld [vmem:[#allocation5 + $0x2d0] sm:$0xff]
        %v668 = vld [vmem:[#allocation5 + $0x2d8] sm:$0xff]
        %v669 = vld [vmem:[#allocation5 + $0x2e0] sm:$0xff]
        %v670 = vld [vmem:[#allocation5 + $0x2e8] sm:$0xff]
        %v671 = vld [vmem:[#allocation5 + $0x2f0] sm:$0xff]
        %v672 = vld [vmem:[#allocation5 + $0x2f8] sm:$0xff]
        %v673 = vld [vmem:[#allocation5 + $0x300] sm:$0xff]
        %v674 = vld [vmem:[#allocation5 + $0x308] sm:$0xff]
        %v675 = vld [vmem:[#allocation5 + $0x310] sm:$0xff]
        %v676 = vld [vmem:[#allocation5 + $0x318] sm:$0xff]
        %v677 = vld [vmem:[#allocation5 + $0x320] sm:$0xff]
        %v678 = vld [vmem:[#allocation5 + $0x328] sm:$0xff]
        %v679 = vld [vmem:[#allocation5 + $0x330] sm:$0xff]
        %v680 = vld [vmem:[#allocation5 + $0x338] sm:$0xff]
        %v681 = vld [vmem:[#allocation5 + $0x340] sm:$0xff]
        %v682 = vld [vmem:[#allocation5 + $0x348] sm:$0xff]
        %v683 = vld [vmem:[#allocation5 + $0x350] sm:$0xff]
        %v684 = vld [vmem:[#allocation5 + $0x358] sm:$0xff]
        %v685 = vld [vmem:[#allocation5 + $0x360] sm:$0xff]
        %v686 = vld [vmem:[#allocation5 + $0x368] sm:$0xff]
        %v687 = vld [vmem:[#allocation5 + $0x370] sm:$0xff]
        %v688 = vld [vmem:[#allocation5 + $0x378] sm:$0xff]
        %v689 = vld [vmem:[#allocation5 + $0x380] sm:$0xff]
        %v690 = vld [vmem:[#allocation5 + $0x388] sm:$0xff]
        %v691 = vld [vmem:[#allocation5 + $0x390] sm:$0xff]
        %v692 = vld [vmem:[#allocation5 + $0x398] sm:$0xff]
        %v693 = vld [vmem:[#allocation5 + $0x3a0] sm:$0xff]
        %v694 = vld [vmem:[#allocation5 + $0x3a8] sm:$0xff]
        %v695 = vld [vmem:[#allocation5 + $0x3b0] sm:$0xff]
        %v696 = vld [vmem:[#allocation5 + $0x3b8] sm:$0xff]
        %v697 = vld [vmem:[#allocation5 + $0x3c0] sm:$0xff]
        %v698 = vld [vmem:[#allocation5 + $0x3c8] sm:$0xff]
        %v699 = vld [vmem:[#allocation5 + $0x3d0] sm:$0xff]
        %v700 = vld [vmem:[#allocation5 + $0x3d8] sm:$0xff]
        %v701 = vld [vmem:[#allocation5 + $0x3e0] sm:$0xff]
        %v702 = vld [vmem:[#allocation5 + $0x3e8] sm:$0xff]
        %v703 = vld [vmem:[#allocation5 + $0x3f0] sm:$0xff]
        %v704 = vld [vmem:[#allocation5 + $0x3f8] sm:$0xff]
        %v705 = vld [vmem:[#allocation5 + $0x400] sm:$0xff]
        %v706 = vld [vmem:[#allocation5 + $0x408] sm:$0xff]
        %v707 = vld [vmem:[#allocation5 + $0x410] sm:$0xff]
        %v708 = vld [vmem:[#allocation5 + $0x418] sm:$0xff]
        %v709 = vld [vmem:[#allocation5 + $0x420] sm:$0xff]
        %v710 = vld [vmem:[#allocation5 + $0x428] sm:$0xff]
        %v711 = vld [vmem:[#allocation5 + $0x430] sm:$0xff]
        %v712 = vld [vmem:[#allocation5 + $0x438] sm:$0xff]
        %v713 = vld [vmem:[#allocation5 + $0x440] sm:$0xff]
        %v714 = vld [vmem:[#allocation5 + $0x448] sm:$0xff]
        %v715 = vld [vmem:[#allocation5 + $0x450] sm:$0xff]
        %v716 = vld [vmem:[#allocation5 + $0x458] sm:$0xff]
        %v717 = vld [vmem:[#allocation5 + $0x460] sm:$0xff]
        %v718 = vld [vmem:[#allocation5 + $0x468] sm:$0xff]
        %v719 = vld [vmem:[#allocation5 + $0x470] sm:$0xff]
        %v720 = vld [vmem:[#allocation5 + $0x478] sm:$0xff]
        %v721 = vld [vmem:[#allocation5 + $0x480] sm:$0xff]
        %v722 = vld [vmem:[#allocation5 + $0x488] sm:$0xff]
        %v723 = vld [vmem:[#allocation5 + $0x490] sm:$0xff]
        %v724 = vld [vmem:[#allocation5 + $0x498] sm:$0xff]
        %v725 = vld [vmem:[#allocation5 + $0x4a0] sm:$0xff]
        %v726 = vld [vmem:[#allocation5 + $0x4a8] sm:$0xff]
        %v727 = vld [vmem:[#allocation5 + $0x4b0] sm:$0xff]
        %v728 = vld [vmem:[#allocation5 + $0x4b8] sm:$0xff]
        %v729 = vld [vmem:[#allocation5 + $0x4c0] sm:$0xff]
        %v730 = vld [vmem:[#allocation5 + $0x4c8] sm:$0xff]
        %v731 = vld [vmem:[#allocation5 + $0x4d0] sm:$0xff]
        %v732 = vld [vmem:[#allocation5 + $0x4d8] sm:$0xff]
        %v733 = vld [vmem:[#allocation5 + $0x4e0] sm:$0xff]
        %v734 = vld [vmem:[#allocation5 + $0x4e8] sm:$0xff]
        %v735 = vld [vmem:[#allocation5 + $0x4f0] sm:$0xff]
        %v736 = vld [vmem:[#allocation5 + $0x4f8] sm:$0xff]
        %v737 = vld [vmem:[#allocation5 + $0x500] sm:$0xff]
        %v738 = vld [vmem:[#allocation5 + $0x508] sm:$0xff]
        %v739 = vld [vmem:[#allocation5 + $0x510] sm:$0xff]
        %v740 = vld [vmem:[#allocation5 + $0x518] sm:$0xff]
        %v741 = vld [vmem:[#allocation5 + $0x520] sm:$0xff]
        %v742 = vld [vmem:[#allocation5 + $0x528] sm:$0xff]
        %v743 = vld [vmem:[#allocation5 + $0x530] sm:$0xff]
        %v744 = vld [vmem:[#allocation5 + $0x538] sm:$0xff]
        %v745 = vld [vmem:[#allocation5 + $0x540] sm:$0xff]
        %v746 = vld [vmem:[#allocation5 + $0x548] sm:$0xff]
        %v747 = vld [vmem:[#allocation5 + $0x550] sm:$0xff]
        %v748 = vld [vmem:[#allocation5 + $0x558] sm:$0xff]
        %v749 = vld [vmem:[#allocation5 + $0x560] sm:$0xff]
        %v750 = vld [vmem:[#allocation5 + $0x568] sm:$0xff]
        %v751 = vld [vmem:[#allocation5 + $0x570] sm:$0xff]
        %v752 = vld [vmem:[#allocation5 + $0x578] sm:$0xff]
        %v753 = vld [vmem:[#allocation5 + $0x580] sm:$0xff]
        %v754 = vld [vmem:[#allocation5 + $0x588] sm:$0xff]
        %v755 = vld [vmem:[#allocation5 + $0x590] sm:$0xff]
        %v756 = vld [vmem:[#allocation5 + $0x598] sm:$0xff]
        %v757 = vld [vmem:[#allocation5 + $0x5a0] sm:$0xff]
        %v758 = vld [vmem:[#allocation5 + $0x5a8] sm:$0xff]
        %v759 = vld [vmem:[#allocation5 + $0x5b0] sm:$0xff]
        %v760 = vld [vmem:[#allocation5 + $0x5b8] sm:$0xff]
        %v761 = vld [vmem:[#allocation5 + $0x5c0] sm:$0xff]
        %v762 = vld [vmem:[#allocation5 + $0x5c8] sm:$0xff]
        %v763 = vld [vmem:[#allocation5 + $0x5d0] sm:$0xff]
        %v764 = vld [vmem:[#allocation5 + $0x5d8] sm:$0xff]
        %v765 = vld [vmem:[#allocation5 + $0x5e0] sm:$0xff]
        %v766 = vld [vmem:[#allocation5 + $0x5e8] sm:$0xff]
        %v767 = vld [vmem:[#allocation5 + $0x5f0] sm:$0xff]
        %v768 = vld [vmem:[#allocation5 + $0x5f8] sm:$0xff]
        %v769 = vld [vmem:[#allocation5 + $0x600] sm:$0xff]
        %v770 = vld [vmem:[#allocation5 + $0x608] sm:$0xff]
        %v771 = vld [vmem:[#allocation5 + $0x610] sm:$0xff]
        %v772 = vld [vmem:[#allocation5 + $0x618] sm:$0xff]
        %v773 = vld [vmem:[#allocation5 + $0x620] sm:$0xff]
        %v774 = vld [vmem:[#allocation5 + $0x628] sm:$0xff]
        %v775 = vld [vmem:[#allocation5 + $0x630] sm:$0xff]
        %v776 = vld [vmem:[#allocation5 + $0x638] sm:$0xff]
        %v777 = vld [vmem:[#allocation5 + $0x640] sm:$0xff]
        %v778 = vld [vmem:[#allocation5 + $0x648] sm:$0xff]
        %v779 = vld [vmem:[#allocation5 + $0x650] sm:$0xff]
        %v780 = vld [vmem:[#allocation5 + $0x658] sm:$0xff]
        %v781 = vld [vmem:[#allocation5 + $0x660] sm:$0xff]
        %v782 = vld [vmem:[#allocation5 + $0x668] sm:$0xff]
        %v783 = vld [vmem:[#allocation5 + $0x670] sm:$0xff]
        %v784 = vld [vmem:[#allocation5 + $0x678] sm:$0xff]
        %v785 = vld [vmem:[#allocation5 + $0x680] sm:$0xff]
        %v786 = vld [vmem:[#allocation5 + $0x688] sm:$0xff]
        %v787 = vld [vmem:[#allocation5 + $0x690] sm:$0xff]
        %v788 = vld [vmem:[#allocation5 + $0x698] sm:$0xff]
        %v789 = vld [vmem:[#allocation5 + $0x6a0] sm:$0xff]
        %v790 = vld [vmem:[#allocation5 + $0x6a8] sm:$0xff]
        %v791 = vld [vmem:[#allocation5 + $0x6b0] sm:$0xff]
        %v792 = vld [vmem:[#allocation5 + $0x6b8] sm:$0xff]
        %v793 = vld [vmem:[#allocation5 + $0x6c0] sm:$0xff]
        %v794 = vld [vmem:[#allocation5 + $0x6c8] sm:$0xff]
        %v795 = vld [vmem:[#allocation5 + $0x6d0] sm:$0xff]
        %v796 = vld [vmem:[#allocation5 + $0x6d8] sm:$0xff]
        %v797 = vld [vmem:[#allocation5 + $0x6e0] sm:$0xff]
        %v798 = vld [vmem:[#allocation5 + $0x6e8] sm:$0xff]
        %v799 = vld [vmem:[#allocation5 + $0x6f0] sm:$0xff]
        %v800 = vld [vmem:[#allocation5 + $0x6f8] sm:$0xff]
        %v801 = vld [vmem:[#allocation5 + $0x700] sm:$0xff]
        %v802 = vld [vmem:[#allocation5 + $0x708] sm:$0xff]
        %v803 = vld [vmem:[#allocation5 + $0x710] sm:$0xff]
        %v804 = vld [vmem:[#allocation5 + $0x718] sm:$0xff]
        %v805 = vld [vmem:[#allocation5 + $0x720] sm:$0xff]
        %v806 = vld [vmem:[#allocation5 + $0x728] sm:$0xff]
        %v807 = vld [vmem:[#allocation5 + $0x730] sm:$0xff]
        %v808 = vld [vmem:[#allocation5 + $0x738] sm:$0xff]
        %v809 = vld [vmem:[#allocation5 + $0x740] sm:$0xff]
        %v810 = vld [vmem:[#allocation5 + $0x748] sm:$0xff]
        %v811 = vld [vmem:[#allocation5 + $0x750] sm:$0xff]
        %v812 = vld [vmem:[#allocation5 + $0x758] sm:$0xff]
        %v813 = vld [vmem:[#allocation5 + $0x760] sm:$0xff]
        %v814 = vld [vmem:[#allocation5 + $0x768] sm:$0xff]
        %v815 = vld [vmem:[#allocation5 + $0x770] sm:$0xff]
        %v816 = vld [vmem:[#allocation5 + $0x778] sm:$0xff]
        %v817 = vld [vmem:[#allocation5 + $0x780] sm:$0xff]
        %v818 = vld [vmem:[#allocation5 + $0x788] sm:$0xff]
        %v819 = vld [vmem:[#allocation5 + $0x790] sm:$0xff]
        %v820 = vld [vmem:[#allocation5 + $0x798] sm:$0xff]
        %v821 = vld [vmem:[#allocation5 + $0x7a0] sm:$0xff]
        %v822 = vld [vmem:[#allocation5 + $0x7a8] sm:$0xff]
        %v823 = vld [vmem:[#allocation5 + $0x7b0] sm:$0xff]
        %v824 = vld [vmem:[#allocation5 + $0x7b8] sm:$0xff]
        %v825 = vld [vmem:[#allocation5 + $0x7c0] sm:$0xff]
        %v826 = vld [vmem:[#allocation5 + $0x7c8] sm:$0xff]
        %v827 = vld [vmem:[#allocation5 + $0x7d0] sm:$0xff]
        %v828 = vld [vmem:[#allocation5 + $0x7d8] sm:$0xff]
        %v829 = vld [vmem:[#allocation5 + $0x7e0] sm:$0xff]
        %v830 = vld [vmem:[#allocation5 + $0x7e8] sm:$0xff]
        %v831 = vld [vmem:[#allocation5 + $0x7f0] sm:$0xff]
        %v832 = vld [vmem:[#allocation5 + $0x7f8] sm:$0xff]
        %v833 = vld [vmem:[#allocation5 + $0x800] sm:$0xff]
        %v834 = vld [vmem:[#allocation5 + $0x808] sm:$0xff]
        %v835 = vld [vmem:[#allocation5 + $0x810] sm:$0xff]
        %v836 = vld [vmem:[#allocation5 + $0x818] sm:$0xff]
        %v837 = vld [vmem:[#allocation5 + $0x820] sm:$0xff]
        %v838 = vld [vmem:[#allocation5 + $0x828] sm:$0xff]
        %v839 = vld [vmem:[#allocation5 + $0x830] sm:$0xff]
        %v840 = vld [vmem:[#allocation5 + $0x838] sm:$0xff]
        %v841 = vld [vmem:[#allocation5 + $0x840] sm:$0xff]
        %v842 = vld [vmem:[#allocation5 + $0x848] sm:$0xff]
        %v843 = vld [vmem:[#allocation5 + $0x850] sm:$0xff]
        %v844 = vld [vmem:[#allocation5 + $0x858] sm:$0xff]
        %v845 = vld [vmem:[#allocation5 + $0x860] sm:$0xff]
        %v846 = vld [vmem:[#allocation5 + $0x868] sm:$0xff]
        %v847 = vld [vmem:[#allocation5 + $0x870] sm:$0xff]
        %v848 = vld [vmem:[#allocation5 + $0x878] sm:$0xff]
        %v849 = vld [vmem:[#allocation5 + $0x880] sm:$0xff]
        %v850 = vld [vmem:[#allocation5 + $0x888] sm:$0xff]
        %v851 = vld [vmem:[#allocation5 + $0x890] sm:$0xff]
        %v852 = vld [vmem:[#allocation5 + $0x898] sm:$0xff]
        %v853 = vld [vmem:[#allocation5 + $0x8a0] sm:$0xff]
        %v854 = vld [vmem:[#allocation5 + $0x8a8] sm:$0xff]
        %v855 = vld [vmem:[#allocation5 + $0x8b0] sm:$0xff]
        %v856 = vld [vmem:[#allocation5 + $0x8b8] sm:$0xff]
        %v857 = vld [vmem:[#allocation5 + $0x8c0] sm:$0xff]
        %v858 = vld [vmem:[#allocation5 + $0x8c8] sm:$0xff]
        %v859 = vld [vmem:[#allocation5 + $0x8d0] sm:$0xff]
        %v860 = vld [vmem:[#allocation5 + $0x8d8] sm:$0xff]
        %v861 = vld [vmem:[#allocation5 + $0x8e0] sm:$0xff]
        %v862 = vld [vmem:[#allocation5 + $0x8e8] sm:$0xff]
        %v863 = vld [vmem:[#allocation5 + $0x8f0] sm:$0xff]
        %v864 = vld [vmem:[#allocation5 + $0x8f8] sm:$0xff]
        %v865 = vld [vmem:[#allocation5 + $0x900] sm:$0xff]
        %v866 = vld [vmem:[#allocation5 + $0x908] sm:$0xff]
        %v867 = vld [vmem:[#allocation5 + $0x910] sm:$0xff]
        %v868 = vld [vmem:[#allocation5 + $0x918] sm:$0xff]
        %v869 = vld [vmem:[#allocation5 + $0x920] sm:$0xff]
        %v870 = vld [vmem:[#allocation5 + $0x928] sm:$0xff]
        %v871 = vld [vmem:[#allocation5 + $0x930] sm:$0xff]
        %v872 = vld [vmem:[#allocation5 + $0x938] sm:$0xff]
        %v873 = vld [vmem:[#allocation5 + $0x940] sm:$0xff]
        %v874 = vld [vmem:[#allocation5 + $0x948] sm:$0xff]
        %v875 = vld [vmem:[#allocation5 + $0x950] sm:$0xff]
        %v876 = vld [vmem:[#allocation5 + $0x958] sm:$0xff]
        %v877 = vld [vmem:[#allocation5 + $0x960] sm:$0xff]
        %v878 = vld [vmem:[#allocation5 + $0x968] sm:$0xff]
        %v879 = vld [vmem:[#allocation5 + $0x970] sm:$0xff]
        %v880 = vld [vmem:[#allocation5 + $0x978] sm:$0xff]
        %v881 = vld [vmem:[#allocation5 + $0x980] sm:$0xff]
        %v882 = vld [vmem:[#allocation5 + $0x988] sm:$0xff]
        %v883 = vld [vmem:[#allocation5 + $0x990] sm:$0xff]
        %v884 = vld [vmem:[#allocation5 + $0x998] sm:$0xff]
        %v885 = vld [vmem:[#allocation5 + $0x9a0] sm:$0xff]
        %v886 = vld [vmem:[#allocation5 + $0x9a8] sm:$0xff]
        %v887 = vld [vmem:[#allocation5 + $0x9b0] sm:$0xff]
        %v888 = vld [vmem:[#allocation5 + $0x9b8] sm:$0xff]
        %v889 = vld [vmem:[#allocation5 + $0x9c0] sm:$0xff]
        %v890 = vld [vmem:[#allocation5 + $0x9c8] sm:$0xff]
        %v891 = vld [vmem:[#allocation5 + $0x9d0] sm:$0xff]
        %v892 = vld [vmem:[#allocation5 + $0x9d8] sm:$0xff]
        %v893 = vld [vmem:[#allocation5 + $0x9e0] sm:$0xff]
        %v894 = vld [vmem:[#allocation5 + $0x9e8] sm:$0xff]
        %v895 = vld [vmem:[#allocation5 + $0x9f0] sm:$0xff]
        %v896 = vld [vmem:[#allocation5 + $0x9f8] sm:$0xff]
        %v897 = vld [vmem:[#allocation5 + $0xa00] sm:$0xff]
        %v898 = vld [vmem:[#allocation5 + $0xa08] sm:$0xff]
        %v899 = vld [vmem:[#allocation5 + $0xa10] sm:$0xff]
        %v900 = vld [vmem:[#allocation5 + $0xa18] sm:$0xff]
        %v901 = vld [vmem:[#allocation5 + $0xa20] sm:$0xff]
        %v902 = vld [vmem:[#allocation5 + $0xa28] sm:$0xff]
        %v903 = vld [vmem:[#allocation5 + $0xa30] sm:$0xff]
        %v904 = vld [vmem:[#allocation5 + $0xa38] sm:$0xff]
        %v905 = vld [vmem:[#allocation5 + $0xa40] sm:$0xff]
        %v906 = vld [vmem:[#allocation5 + $0xa48] sm:$0xff]
        %v907 = vld [vmem:[#allocation5 + $0xa50] sm:$0xff]
        %v908 = vld [vmem:[#allocation5 + $0xa58] sm:$0xff]
        %v909 = vld [vmem:[#allocation5 + $0xa60] sm:$0xff]
        %v910 = vld [vmem:[#allocation5 + $0xa68] sm:$0xff]
        %v911 = vld [vmem:[#allocation5 + $0xa70] sm:$0xff]
        %v912 = vld [vmem:[#allocation5 + $0xa78] sm:$0xff]
        %v913 = vld [vmem:[#allocation5 + $0xa80] sm:$0xff]
        %v914 = vld [vmem:[#allocation5 + $0xa88] sm:$0xff]
        %v915 = vld [vmem:[#allocation5 + $0xa90] sm:$0xff]
        %v916 = vld [vmem:[#allocation5 + $0xa98] sm:$0xff]
        %v917 = vld [vmem:[#allocation5 + $0xaa0] sm:$0xff]
        %v918 = vld [vmem:[#allocation5 + $0xaa8] sm:$0xff]
        %v919 = vld [vmem:[#allocation5 + $0xab0] sm:$0xff]
        %v920 = vld [vmem:[#allocation5 + $0xab8] sm:$0xff]
        %v921 = vld [vmem:[#allocation5 + $0xac0] sm:$0xff]
        %v922 = vld [vmem:[#allocation5 + $0xac8] sm:$0xff]
        %v923 = vld [vmem:[#allocation5 + $0xad0] sm:$0xff]
        %v924 = vld [vmem:[#allocation5 + $0xad8] sm:$0xff]
        %v925 = vld [vmem:[#allocation5 + $0xae0] sm:$0xff]
        %v926 = vld [vmem:[#allocation5 + $0xae8] sm:$0xff]
        %v927 = vld [vmem:[#allocation5 + $0xaf0] sm:$0xff]
        %v928 = vld [vmem:[#allocation5 + $0xaf8] sm:$0xff]
        %v929 = vld [vmem:[#allocation5 + $0xb00] sm:$0xff]
        %v930 = vld [vmem:[#allocation5 + $0xb08] sm:$0xff]
        %v931 = vld [vmem:[#allocation5 + $0xb10] sm:$0xff]
        %v932 = vld [vmem:[#allocation5 + $0xb18] sm:$0xff]
        %v933 = vld [vmem:[#allocation5 + $0xb20] sm:$0xff]
        %v934 = vld [vmem:[#allocation5 + $0xb28] sm:$0xff]
        %v935 = vld [vmem:[#allocation5 + $0xb30] sm:$0xff]
        %v936 = vld [vmem:[#allocation5 + $0xb38] sm:$0xff]
        %v937 = vld [vmem:[#allocation5 + $0xb40] sm:$0xff]
        %v938 = vld [vmem:[#allocation5 + $0xb48] sm:$0xff]
        %v939 = vld [vmem:[#allocation5 + $0xb50] sm:$0xff]
        %v940 = vld [vmem:[#allocation5 + $0xb58] sm:$0xff]
        %v941 = vld [vmem:[#allocation5 + $0xb60] sm:$0xff]
        %v942 = vld [vmem:[#allocation5 + $0xb68] sm:$0xff]
        %v943 = vld [vmem:[#allocation5 + $0xb70] sm:$0xff]
        %v944 = vld [vmem:[#allocation5 + $0xb78] sm:$0xff]
        %v945 = vld [vmem:[#allocation5 + $0xb80] sm:$0xff]
        %v946 = vld [vmem:[#allocation5 + $0xb88] sm:$0xff]
        %v947 = vld [vmem:[#allocation5 + $0xb90] sm:$0xff]
        %v948 = vld [vmem:[#allocation5 + $0xb98] sm:$0xff]
        %v949 = vld [vmem:[#allocation5 + $0xba0] sm:$0xff]
        %v950 = vld [vmem:[#allocation5 + $0xba8] sm:$0xff]
        %v951 = vld [vmem:[#allocation5 + $0xbb0] sm:$0xff]
        %v952 = vld [vmem:[#allocation5 + $0xbb8] sm:$0xff]
        %v953 = vld [vmem:[#allocation5 + $0xbc0] sm:$0xff]
        %v954 = vld [vmem:[#allocation5 + $0xbc8] sm:$0xff]
        %v955 = vld [vmem:[#allocation5 + $0xbd0] sm:$0xff]
        %v956 = vld [vmem:[#allocation5 + $0xbd8] sm:$0xff]
        %v957 = vld [vmem:[#allocation5 + $0xbe0] sm:$0xff]
        %v958 = vld [vmem:[#allocation5 + $0xbe8] sm:$0xff]
        %v959 = vld [vmem:[#allocation5 + $0xbf0] sm:$0xff]
        %v960 = vld [vmem:[#allocation5 + $0xbf8] sm:$0xff]
        %v961 = vld [vmem:[#allocation5 + $0xc00] sm:$0xff]
        %v962 = vld [vmem:[#allocation5 + $0xc08] sm:$0xff]
        %v963 = vld [vmem:[#allocation5 + $0xc10] sm:$0xff]
        %v964 = vld [vmem:[#allocation5 + $0xc18] sm:$0xff]
        %v965 = vld [vmem:[#allocation5 + $0xc20] sm:$0xff]
        %v966 = vld [vmem:[#allocation5 + $0xc28] sm:$0xff]
        %v967 = vld [vmem:[#allocation5 + $0xc30] sm:$0xff]
        %v968 = vld [vmem:[#allocation5 + $0xc38] sm:$0xff]
        %v969 = vld [vmem:[#allocation5 + $0xc40] sm:$0xff]
        %v970 = vld [vmem:[#allocation5 + $0xc48] sm:$0xff]
        %v971 = vld [vmem:[#allocation5 + $0xc50] sm:$0xff]
        %v972 = vld [vmem:[#allocation5 + $0xc58] sm:$0xff]
        %v973 = vld [vmem:[#allocation5 + $0xc60] sm:$0xff]
        %v974 = vld [vmem:[#allocation5 + $0xc68] sm:$0xff]
        %v975 = vld [vmem:[#allocation5 + $0xc70] sm:$0xff]
        %v976 = vld [vmem:[#allocation5 + $0xc78] sm:$0xff]
        %v977 = vld [vmem:[#allocation5 + $0xc80] sm:$0xff]
        %v978 = vld [vmem:[#allocation5 + $0xc88] sm:$0xff]
        %v979 = vld [vmem:[#allocation5 + $0xc90] sm:$0xff]
        %v980 = vld [vmem:[#allocation5 + $0xc98] sm:$0xff]
        %v981 = vld [vmem:[#allocation5 + $0xca0] sm:$0xff]
        %v982 = vld [vmem:[#allocation5 + $0xca8] sm:$0xff]
        %v983 = vld [vmem:[#allocation5 + $0xcb0] sm:$0xff]
        %v984 = vld [vmem:[#allocation5 + $0xcb8] sm:$0xff]
        %v985 = vld [vmem:[#allocation5 + $0xcc0] sm:$0xff]
        %v986 = vld [vmem:[#allocation5 + $0xcc8] sm:$0xff]
        %v987 = vld [vmem:[#allocation5 + $0xcd0] sm:$0xff]
        %v988 = vld [vmem:[#allocation5 + $0xcd8] sm:$0xff]
        %v989 = vld [vmem:[#allocation5 + $0xce0] sm:$0xff]
        %v990 = vld [vmem:[#allocation5 + $0xce8] sm:$0xff]
        %v991 = vld [vmem:[#allocation5 + $0xcf0] sm:$0xff]
        %v992 = vld [vmem:[#allocation5 + $0xcf8] sm:$0xff]
        %v993 = vld [vmem:[#allocation5 + $0xd00] sm:$0xff]
        %v994 = vld [vmem:[#allocation5 + $0xd08] sm:$0xff]
        %v995 = vld [vmem:[#allocation5 + $0xd10] sm:$0xff]
        %v996 = vld [vmem:[#allocation5 + $0xd18] sm:$0xff]
        %v997 = vld [vmem:[#allocation5 + $0xd20] sm:$0xff]
        %v998 = vld [vmem:[#allocation5 + $0xd28] sm:$0xff]
        %v999 = vld [vmem:[#allocation5 + $0xd30] sm:$0xff]
        %v1000 = vld [vmem:[#allocation5 + $0xd38] sm:$0xff]
        %v1001 = vld [vmem:[#allocation5 + $0xd40] sm:$0xff]
        %v1002 = vld [vmem:[#allocation5 + $0xd48] sm:$0xff]
        %v1003 = vld [vmem:[#allocation5 + $0xd50] sm:$0xff]
        %v1004 = vld [vmem:[#allocation5 + $0xd58] sm:$0xff]
        %v1005 = vld [vmem:[#allocation5 + $0xd60] sm:$0xff]
        %v1006 = vld [vmem:[#allocation5 + $0xd68] sm:$0xff]
        %v1007 = vld [vmem:[#allocation5 + $0xd70] sm:$0xff]
        %v1008 = vld [vmem:[#allocation5 + $0xd78] sm:$0xff]
        %v1009 = vld [vmem:[#allocation5 + $0xd80] sm:$0xff]
        %v1010 = vld [vmem:[#allocation5 + $0xd88] sm:$0xff]
        %v1011 = vld [vmem:[#allocation5 + $0xd90] sm:$0xff]
        %v1012 = vld [vmem:[#allocation5 + $0xd98] sm:$0xff]
        %v1013 = vld [vmem:[#allocation5 + $0xda0] sm:$0xff]
        %v1014 = vld [vmem:[#allocation5 + $0xda8] sm:$0xff]
        %v1015 = vld [vmem:[#allocation5 + $0xdb0] sm:$0xff]
        %v1016 = vld [vmem:[#allocation5 + $0xdb8] sm:$0xff]
        %v1017 = vld [vmem:[#allocation5 + $0xdc0] sm:$0xff]
        %v1018 = vld [vmem:[#allocation5 + $0xdc8] sm:$0xff]
        %v1019 = vld [vmem:[#allocation5 + $0xdd0] sm:$0xff]
        %v1020 = vld [vmem:[#allocation5 + $0xdd8] sm:$0xff]
        %v1021 = vld [vmem:[#allocation5 + $0xde0] sm:$0xff]
        %v1022 = vld [vmem:[#allocation5 + $0xde8] sm:$0xff]
        %v1023 = vld [vmem:[#allocation5 + $0xdf0] sm:$0xff]
        %v1024 = vld [vmem:[#allocation5 + $0xdf8] sm:$0xff]
        %v1025 = vld [vmem:[#allocation5 + $0xe00] sm:$0xff]
        %v1026 = vld [vmem:[#allocation5 + $0xe08] sm:$0xff]
        %v1027 = vld [vmem:[#allocation5 + $0xe10] sm:$0xff]
        %v1028 = vld [vmem:[#allocation5 + $0xe18] sm:$0xff]
        %v1029 = vld [vmem:[#allocation5 + $0xe20] sm:$0xff]
        %v1030 = vld [vmem:[#allocation5 + $0xe28] sm:$0xff]
        %v1031 = vld [vmem:[#allocation5 + $0xe30] sm:$0xff]
        %v1032 = vld [vmem:[#allocation5 + $0xe38] sm:$0xff]
        %v1033 = vld [vmem:[#allocation5 + $0xe40] sm:$0xff]
        %v1034 = vld [vmem:[#allocation5 + $0xe48] sm:$0xff]
        %v1035 = vld [vmem:[#allocation5 + $0xe50] sm:$0xff]
        %v1036 = vld [vmem:[#allocation5 + $0xe58] sm:$0xff]
        %v1037 = vld [vmem:[#allocation5 + $0xe60] sm:$0xff]
        %v1038 = vld [vmem:[#allocation5 + $0xe68] sm:$0xff]
        %v1039 = vld [vmem:[#allocation5 + $0xe70] sm:$0xff]
        %v1040 = vld [vmem:[#allocation5 + $0xe78] sm:$0xff]
        %v1041 = vld [vmem:[#allocation5 + $0xe80] sm:$0xff]
        %v1042 = vld [vmem:[#allocation5 + $0xe88] sm:$0xff]
        %v1043 = vld [vmem:[#allocation5 + $0xe90] sm:$0xff]
        %v1044 = vld [vmem:[#allocation5 + $0xe98] sm:$0xff]
        %v1045 = vld [vmem:[#allocation5 + $0xea0] sm:$0xff]
        %v1046 = vld [vmem:[#allocation5 + $0xea8] sm:$0xff]
        %v1047 = vld [vmem:[#allocation5 + $0xeb0] sm:$0xff]
        %v1048 = vld [vmem:[#allocation5 + $0xeb8] sm:$0xff]
        %v1049 = vld [vmem:[#allocation5 + $0xec0] sm:$0xff]
        %v1050 = vld [vmem:[#allocation5 + $0xec8] sm:$0xff]
        %v1051 = vld [vmem:[#allocation5 + $0xed0] sm:$0xff]
        %v1052 = vld [vmem:[#allocation5 + $0xed8] sm:$0xff]
        %v1053 = vld [vmem:[#allocation5 + $0xee0] sm:$0xff]
        %v1054 = vld [vmem:[#allocation5 + $0xee8] sm:$0xff]
        %v1055 = vld [vmem:[#allocation5 + $0xef0] sm:$0xff]
        %v1056 = vld [vmem:[#allocation5 + $0xef8] sm:$0xff]
        %v1057 = vld [vmem:[#allocation5 + $0xf00] sm:$0xff]
        %v1058 = vld [vmem:[#allocation5 + $0xf08] sm:$0xff]
        %v1059 = vld [vmem:[#allocation5 + $0xf10] sm:$0xff]
        %v1060 = vld [vmem:[#allocation5 + $0xf18] sm:$0xff]
        %v1061 = vld [vmem:[#allocation5 + $0xf20] sm:$0xff]
        %v1062 = vld [vmem:[#allocation5 + $0xf28] sm:$0xff]
        %v1063 = vld [vmem:[#allocation5 + $0xf30] sm:$0xff]
        %v1064 = vld [vmem:[#allocation5 + $0xf38] sm:$0xff]
        %v1065 = vld [vmem:[#allocation5 + $0xf40] sm:$0xff]
        %v1066 = vld [vmem:[#allocation5 + $0xf48] sm:$0xff]
        %v1067 = vld [vmem:[#allocation5 + $0xf50] sm:$0xff]
        %v1068 = vld [vmem:[#allocation5 + $0xf58] sm:$0xff]
        %v1069 = vld [vmem:[#allocation5 + $0xf60] sm:$0xff]
        %v1070 = vld [vmem:[#allocation5 + $0xf68] sm:$0xff]
        %v1071 = vld [vmem:[#allocation5 + $0xf70] sm:$0xff]
        %v1072 = vld [vmem:[#allocation5 + $0xf78] sm:$0xff]
        %v1073 = vld [vmem:[#allocation5 + $0xf80] sm:$0xff]
        %v1074 = vld [vmem:[#allocation5 + $0xf88] sm:$0xff]
        %v1075 = vld [vmem:[#allocation5 + $0xf90] sm:$0xff]
        %v1076 = vld [vmem:[#allocation5 + $0xf98] sm:$0xff]
        %v1077 = vld [vmem:[#allocation5 + $0xfa0] sm:$0xff]
        %v1078 = vld [vmem:[#allocation5 + $0xfa8] sm:$0xff]
        %v1079 = vld [vmem:[#allocation5 + $0xfb0] sm:$0xff]
        %v1080 = vld [vmem:[#allocation5 + $0xfb8] sm:$0xff]
        %v1081 = vld [vmem:[#allocation5 + $0xfc0] sm:$0xff]
        %v1082 = vld [vmem:[#allocation5 + $0xfc8] sm:$0xff]
        %v1083 = vld [vmem:[#allocation5 + $0xfd0] sm:$0xff]
        %v1084 = vld [vmem:[#allocation5 + $0xfd8] sm:$0xff]
        %v1085 = vld [vmem:[#allocation5 + $0xfe0] sm:$0xff]
        %v1086 = vld [vmem:[#allocation5 + $0xfe8] sm:$0xff]
        %v1087 = vld [vmem:[#allocation5 + $0xff0] sm:$0xff]
        %v1088 = vld [vmem:[#allocation5 + $0xff8] sm:$0xff]
        %v1089 = vld [vmem:[#allocation5 + $0x1000] sm:$0xff]
        %v1090 = vld [vmem:[#allocation5 + $0x1008] sm:$0xff]
        %v1091 = vld [vmem:[#allocation5 + $0x1010] sm:$0xff]
        %v1092 = vld [vmem:[#allocation5 + $0x1018] sm:$0xff]
        %v1093 = vld [vmem:[#allocation5 + $0x1020] sm:$0xff]
        %v1094 = vld [vmem:[#allocation5 + $0x1028] sm:$0xff]
        %v1095 = vld [vmem:[#allocation5 + $0x1030] sm:$0xff]
        %v1096 = vld [vmem:[#allocation5 + $0x1038] sm:$0xff]
        %v1097 = vld [vmem:[#allocation5 + $0x1040] sm:$0xff]
        %v1098 = vld [vmem:[#allocation5 + $0x1048] sm:$0xff]
        %v1099 = vld [vmem:[#allocation5 + $0x1050] sm:$0xff]
        %v1100 = vld [vmem:[#allocation5 + $0x1058] sm:$0xff]
        %v1101 = vld [vmem:[#allocation5 + $0x1060] sm:$0xff]
        %v1102 = vld [vmem:[#allocation5 + $0x1068] sm:$0xff]
        %v1103 = vld [vmem:[#allocation5 + $0x1070] sm:$0xff]
        %v1104 = vld [vmem:[#allocation5 + $0x1078] sm:$0xff]
        %v1105 = vld [vmem:[#allocation5 + $0x1080] sm:$0xff]
        %v1106 = vld [vmem:[#allocation5 + $0x1088] sm:$0xff]
        %v1107 = vld [vmem:[#allocation5 + $0x1090] sm:$0xff]
        %v1108 = vld [vmem:[#allocation5 + $0x1098] sm:$0xff]
        %v1109 = vld [vmem:[#allocation5 + $0x10a0] sm:$0xff]
        %v1110 = vld [vmem:[#allocation5 + $0x10a8] sm:$0xff]
        %v1111 = vld [vmem:[#allocation5 + $0x10b0] sm:$0xff]
        %v1112 = vld [vmem:[#allocation5 + $0x10b8] sm:$0xff]
        %v1113 = vld [vmem:[#allocation5 + $0x10c0] sm:$0xff]
        %v1114 = vld [vmem:[#allocation5 + $0x10c8] sm:$0xff]
        %v1115 = vld [vmem:[#allocation5 + $0x10d0] sm:$0xff]
        %v1116 = vld [vmem:[#allocation5 + $0x10d8] sm:$0xff]
        %v1117 = vld [vmem:[#allocation5 + $0x10e0] sm:$0xff]
        %v1118 = vld [vmem:[#allocation5 + $0x10e8] sm:$0xff]
        %v1119 = vld [vmem:[#allocation5 + $0x10f0] sm:$0xff]
        %v1120 = vld [vmem:[#allocation5 + $0x10f8] sm:$0xff]
        %v1121 = vld [vmem:[#allocation5 + $0x1100] sm:$0xff]
        %v1122 = vld [vmem:[#allocation5 + $0x1108] sm:$0xff]
        %v1123 = vld [vmem:[#allocation5 + $0x1110] sm:$0xff]
        %v1124 = vld [vmem:[#allocation5 + $0x1118] sm:$0xff]
        %v1125 = vld [vmem:[#allocation5 + $0x1120] sm:$0xff]
        %v1126 = vld [vmem:[#allocation5 + $0x1128] sm:$0xff]
        %v1127 = vld [vmem:[#allocation5 + $0x1130] sm:$0xff]
        %v1128 = vld [vmem:[#allocation5 + $0x1138] sm:$0xff]
        %v1129 = vld [vmem:[#allocation5 + $0x1140] sm:$0xff]
        %v1130 = vld [vmem:[#allocation5 + $0x1148] sm:$0xff]
        %v1131 = vld [vmem:[#allocation5 + $0x1150] sm:$0xff]
        %v1132 = vld [vmem:[#allocation5 + $0x1158] sm:$0xff]
        %v1133 = vld [vmem:[#allocation5 + $0x1160] sm:$0xff]
        %v1134 = vld [vmem:[#allocation5 + $0x1168] sm:$0xff]
        %v1135 = vld [vmem:[#allocation5 + $0x1170] sm:$0xff]
        %v1136 = vld [vmem:[#allocation5 + $0x1178] sm:$0xff]
        %v1137 = vld [vmem:[#allocation5 + $0x1180] sm:$0xff]
        %v1138 = vld [vmem:[#allocation5 + $0x1188] sm:$0xff]
        %v1139 = vld [vmem:[#allocation5 + $0x1190] sm:$0xff]
        %v1140 = vld [vmem:[#allocation5 + $0x1198] sm:$0xff]
        %v1141 = vld [vmem:[#allocation5 + $0x11a0] sm:$0xff]
        %v1142 = vld [vmem:[#allocation5 + $0x11a8] sm:$0xff]
        %v1143 = vld [vmem:[#allocation5 + $0x11b0] sm:$0xff]
        %v1144 = vld [vmem:[#allocation5 + $0x11b8] sm:$0xff]
        %v1145 = vld [vmem:[#allocation5 + $0x11c0] sm:$0xff]
        %v1146 = vld [vmem:[#allocation5 + $0x11c8] sm:$0xff]
        %v1147 = vld [vmem:[#allocation5 + $0x11d0] sm:$0xff]
        %v1148 = vld [vmem:[#allocation5 + $0x11d8] sm:$0xff]
        %v1149 = vld [vmem:[#allocation5 + $0x11e0] sm:$0xff]
        %v1150 = vld [vmem:[#allocation5 + $0x11e8] sm:$0xff]
        %v1151 = vld [vmem:[#allocation5 + $0x11f0] sm:$0xff]
        %v1152 = vld [vmem:[#allocation5 + $0x11f8] sm:$0xff]
        %v1153 = vld [vmem:[#allocation5 + $0x1200] sm:$0xff]
        %v1154 = vld [vmem:[#allocation5 + $0x1208] sm:$0xff]
        %v1155 = vld [vmem:[#allocation5 + $0x1210] sm:$0xff]
        %v1156 = vld [vmem:[#allocation5 + $0x1218] sm:$0xff]
        %v1157 = vld [vmem:[#allocation5 + $0x1220] sm:$0xff]
        %v1158 = vld [vmem:[#allocation5 + $0x1228] sm:$0xff]
        %v1159 = vld [vmem:[#allocation5 + $0x1230] sm:$0xff]
        %v1160 = vld [vmem:[#allocation5 + $0x1238] sm:$0xff]
        %v1161 = vld [vmem:[#allocation5 + $0x1240] sm:$0xff]
        %v1162 = vld [vmem:[#allocation5 + $0x1248] sm:$0xff]
        %v1163 = vld [vmem:[#allocation5 + $0x1250] sm:$0xff]
        %v1164 = vld [vmem:[#allocation5 + $0x1258] sm:$0xff]
        %v1165 = vld [vmem:[#allocation5 + $0x1260] sm:$0xff]
        %v1166 = vld [vmem:[#allocation5 + $0x1268] sm:$0xff]
        %v1167 = vld [vmem:[#allocation5 + $0x1270] sm:$0xff]
        %v1168 = vld [vmem:[#allocation5 + $0x1278] sm:$0xff]
        %v1169 = vld [vmem:[#allocation5 + $0x1280] sm:$0xff]
        %v1170 = vld [vmem:[#allocation5 + $0x1288] sm:$0xff]
        %v1171 = vld [vmem:[#allocation5 + $0x1290] sm:$0xff]
        %v1172 = vld [vmem:[#allocation5 + $0x1298] sm:$0xff]
        %v1173 = vld [vmem:[#allocation5 + $0x12a0] sm:$0xff]
        %v1174 = vld [vmem:[#allocation5 + $0x12a8] sm:$0xff]
        %v1175 = vld [vmem:[#allocation5 + $0x12b0] sm:$0xff]
        %v1176 = vld [vmem:[#allocation5 + $0x12b8] sm:$0xff]
        %v1177 = vld [vmem:[#allocation5 + $0x12c0] sm:$0xff]
        %v1178 = vld [vmem:[#allocation5 + $0x12c8] sm:$0xff]
        %v1179 = vld [vmem:[#allocation5 + $0x12d0] sm:$0xff]
        %v1180 = vld [vmem:[#allocation5 + $0x12d8] sm:$0xff]
        %v1181 = vld [vmem:[#allocation5 + $0x12e0] sm:$0xff]
        %v1182 = vld [vmem:[#allocation5 + $0x12e8] sm:$0xff]
        %v1183 = vld [vmem:[#allocation5 + $0x12f0] sm:$0xff]
        %v1184 = vld [vmem:[#allocation5 + $0x12f8] sm:$0xff]
        %v1185 = vld [vmem:[#allocation5 + $0x1300] sm:$0xff]
        %v1186 = vld [vmem:[#allocation5 + $0x1308] sm:$0xff]
        %v1187 = vld [vmem:[#allocation5 + $0x1310] sm:$0xff]
        %v1188 = vld [vmem:[#allocation5 + $0x1318] sm:$0xff]
        %v1189 = vld [vmem:[#allocation5 + $0x1320] sm:$0xff]
        %v1190 = vld [vmem:[#allocation5 + $0x1328] sm:$0xff]
        %v1191 = vld [vmem:[#allocation5 + $0x1330] sm:$0xff]
        %v1192 = vld [vmem:[#allocation5 + $0x1338] sm:$0xff]
        %v1193 = vld [vmem:[#allocation5 + $0x1340] sm:$0xff]
        %v1194 = vld [vmem:[#allocation5 + $0x1348] sm:$0xff]
        %v1195 = vld [vmem:[#allocation5 + $0x1350] sm:$0xff]
        %v1196 = vld [vmem:[#allocation5 + $0x1358] sm:$0xff]
        %v1197 = vld [vmem:[#allocation5 + $0x1360] sm:$0xff]
        %v1198 = vld [vmem:[#allocation5 + $0x1368] sm:$0xff]
        %v1199 = vld [vmem:[#allocation5 + $0x1370] sm:$0xff]
        %v1200 = vld [vmem:[#allocation5 + $0x1378] sm:$0xff]
        %v1201 = vld [vmem:[#allocation5 + $0x1380] sm:$0xff]
        %v1202 = vld [vmem:[#allocation5 + $0x1388] sm:$0xff]
        %v1203 = vld [vmem:[#allocation5 + $0x1390] sm:$0xff]
        %v1204 = vld [vmem:[#allocation5 + $0x1398] sm:$0xff]
        %v1205 = vld [vmem:[#allocation5 + $0x13a0] sm:$0xff]
        %v1206 = vld [vmem:[#allocation5 + $0x13a8] sm:$0xff]
        %v1207 = vld [vmem:[#allocation5 + $0x13b0] sm:$0xff]
        %v1208 = vld [vmem:[#allocation5 + $0x13b8] sm:$0xff]
        %v1209 = vld [vmem:[#allocation5 + $0x13c0] sm:$0xff]
        %v1210 = vld [vmem:[#allocation5 + $0x13c8] sm:$0xff]
        %v1211 = vld [vmem:[#allocation5 + $0x13d0] sm:$0xff]
        %v1212 = vld [vmem:[#allocation5 + $0x13d8] sm:$0xff]
        %v1213 = vld [vmem:[#allocation5 + $0x13e0] sm:$0xff]
        %v1214 = vld [vmem:[#allocation5 + $0x13e8] sm:$0xff]
        %v1215 = vld [vmem:[#allocation5 + $0x13f0] sm:$0xff]
        %v1216 = vld [vmem:[#allocation5 + $0x13f8] sm:$0xff]
        %v1217 = vld [vmem:[#allocation5 + $0x1400] sm:$0xff]
        %v1218 = vld [vmem:[#allocation5 + $0x1408] sm:$0xff]
        %v1219 = vld [vmem:[#allocation5 + $0x1410] sm:$0xff]
        %v1220 = vld [vmem:[#allocation5 + $0x1418] sm:$0xff]
        %v1221 = vld [vmem:[#allocation5 + $0x1420] sm:$0xff]
        %v1222 = vld [vmem:[#allocation5 + $0x1428] sm:$0xff]
        %v1223 = vld [vmem:[#allocation5 + $0x1430] sm:$0xff]
        %v1224 = vld [vmem:[#allocation5 + $0x1438] sm:$0xff]
        %v1225 = vld [vmem:[#allocation5 + $0x1440] sm:$0xff]
        %v1226 = vld [vmem:[#allocation5 + $0x1448] sm:$0xff]
        %v1227 = vld [vmem:[#allocation5 + $0x1450] sm:$0xff]
        %v1228 = vld [vmem:[#allocation5 + $0x1458] sm:$0xff]
        %v1229 = vld [vmem:[#allocation5 + $0x1460] sm:$0xff]
        %v1230 = vld [vmem:[#allocation5 + $0x1468] sm:$0xff]
        %v1231 = vld [vmem:[#allocation5 + $0x1470] sm:$0xff]
        %v1232 = vld [vmem:[#allocation5 + $0x1478] sm:$0xff]
        %v1233 = vld [vmem:[#allocation5 + $0x1480] sm:$0xff]
        %v1234 = vld [vmem:[#allocation5 + $0x1488] sm:$0xff]
        %v1235 = vld [vmem:[#allocation5 + $0x1490] sm:$0xff]
        %v1236 = vld [vmem:[#allocation5 + $0x1498] sm:$0xff]
        %v1237 = vld [vmem:[#allocation5 + $0x14a0] sm:$0xff]
        %v1238 = vld [vmem:[#allocation5 + $0x14a8] sm:$0xff]
        %v1239 = vld [vmem:[#allocation5 + $0x14b0] sm:$0xff]
        %v1240 = vld [vmem:[#allocation5 + $0x14b8] sm:$0xff]
        %v1241 = vld [vmem:[#allocation5 + $0x14c0] sm:$0xff]
        %v1242 = vld [vmem:[#allocation5 + $0x14c8] sm:$0xff]
        %v1243 = vld [vmem:[#allocation5 + $0x14d0] sm:$0xff]
        %v1244 = vld [vmem:[#allocation5 + $0x14d8] sm:$0xff]
        %v1245 = vld [vmem:[#allocation5 + $0x14e0] sm:$0xff]
        %v1246 = vld [vmem:[#allocation5 + $0x14e8] sm:$0xff]
        %v1247 = vld [vmem:[#allocation5 + $0x14f0] sm:$0xff]
        %v1248 = vld [vmem:[#allocation5 + $0x14f8] sm:$0xff]
        %v1249 = vld [vmem:[#allocation5 + $0x1500] sm:$0xff]
        %v1250 = vld [vmem:[#allocation5 + $0x1508] sm:$0xff]
        %v1251 = vld [vmem:[#allocation5 + $0x1510] sm:$0xff]
        %v1252 = vld [vmem:[#allocation5 + $0x1518] sm:$0xff]
        %v1253 = vld [vmem:[#allocation5 + $0x1520] sm:$0xff]
        %v1254 = vld [vmem:[#allocation5 + $0x1528] sm:$0xff]
        %v1255 = vld [vmem:[#allocation5 + $0x1530] sm:$0xff]
        %v1256 = vld [vmem:[#allocation5 + $0x1538] sm:$0xff]
        %v1257 = vld [vmem:[#allocation5 + $0x1540] sm:$0xff]
        %v1258 = vld [vmem:[#allocation5 + $0x1548] sm:$0xff]
        %v1259 = vld [vmem:[#allocation5 + $0x1550] sm:$0xff]
        %v1260 = vld [vmem:[#allocation5 + $0x1558] sm:$0xff]
        %v1261 = vld [vmem:[#allocation5 + $0x1560] sm:$0xff]
        %v1262 = vld [vmem:[#allocation5 + $0x1568] sm:$0xff]
        %v1263 = vld [vmem:[#allocation5 + $0x1570] sm:$0xff]
        %v1264 = vld [vmem:[#allocation5 + $0x1578] sm:$0xff]
        %v1265 = vld [vmem:[#allocation5 + $0x1580] sm:$0xff]
        %v1266 = vld [vmem:[#allocation5 + $0x1588] sm:$0xff]
        %v1267 = vld [vmem:[#allocation5 + $0x1590] sm:$0xff]
        %v1268 = vld [vmem:[#allocation5 + $0x1598] sm:$0xff]
        %v1269 = vld [vmem:[#allocation5 + $0x15a0] sm:$0xff]
        %v1270 = vld [vmem:[#allocation5 + $0x15a8] sm:$0xff]
        %v1271 = vld [vmem:[#allocation5 + $0x15b0] sm:$0xff]
        %v1272 = vld [vmem:[#allocation5 + $0x15b8] sm:$0xff]
        %v1273 = vld [vmem:[#allocation5 + $0x15c0] sm:$0xff]
        %v1274 = vld [vmem:[#allocation5 + $0x15c8] sm:$0xff]
        %v1275 = vld [vmem:[#allocation5 + $0x15d0] sm:$0xff]
        %v1276 = vld [vmem:[#allocation5 + $0x15d8] sm:$0xff]
        %v1277 = vld [vmem:[#allocation5 + $0x15e0] sm:$0xff]
        %v1278 = vld [vmem:[#allocation5 + $0x15e8] sm:$0xff]
        %v1279 = vld [vmem:[#allocation5 + $0x15f0] sm:$0xff]
        %v1280 = vld [vmem:[#allocation5 + $0x15f8] sm:$0xff]
        %v1281 = vld [vmem:[#allocation5 + $0x1600] sm:$0xff]
        %v1282 = vld [vmem:[#allocation5 + $0x1608] sm:$0xff]
        %v1283 = vld [vmem:[#allocation5 + $0x1610] sm:$0xff]
        %v1284 = vld [vmem:[#allocation5 + $0x1618] sm:$0xff]
        %v1285 = vld [vmem:[#allocation5 + $0x1620] sm:$0xff]
        %v1286 = vld [vmem:[#allocation5 + $0x1628] sm:$0xff]
        %v1287 = vld [vmem:[#allocation5 + $0x1630] sm:$0xff]
        %v1288 = vld [vmem:[#allocation5 + $0x1638] sm:$0xff]
        %v1289 = vld [vmem:[#allocation5 + $0x1640] sm:$0xff]
        %v1290 = vld [vmem:[#allocation5 + $0x1648] sm:$0xff]
        %v1291 = vld [vmem:[#allocation5 + $0x1650] sm:$0xff]
        %v1292 = vld [vmem:[#allocation5 + $0x1658] sm:$0xff]
        %v1293 = vld [vmem:[#allocation5 + $0x1660] sm:$0xff]
        %v1294 = vld [vmem:[#allocation5 + $0x1668] sm:$0xff]
        %v1295 = vld [vmem:[#allocation5 + $0x1670] sm:$0xff]
        %v1296 = vld [vmem:[#allocation5 + $0x1678] sm:$0xff]
        %v1297 = vld [vmem:[#allocation5 + $0x1680] sm:$0xff]
        %v1298 = vld [vmem:[#allocation5 + $0x1688] sm:$0xff]
        %v1299 = vld [vmem:[#allocation5 + $0x1690] sm:$0xff]
        %v1300 = vld [vmem:[#allocation5 + $0x1698] sm:$0xff]
        %v1301 = vld [vmem:[#allocation5 + $0x16a0] sm:$0xff]
        %v1302 = vld [vmem:[#allocation5 + $0x16a8] sm:$0xff]
        %v1303 = vld [vmem:[#allocation5 + $0x16b0] sm:$0xff]
        %v1304 = vld [vmem:[#allocation5 + $0x16b8] sm:$0xff]
        %v1305 = vld [vmem:[#allocation5 + $0x16c0] sm:$0xff]
        %v1306 = vld [vmem:[#allocation5 + $0x16c8] sm:$0xff]
        %v1307 = vld [vmem:[#allocation5 + $0x16d0] sm:$0xff]
        %v1308 = vld [vmem:[#allocation5 + $0x16d8] sm:$0xff]
        %v1309 = vld [vmem:[#allocation5 + $0x16e0] sm:$0xff]
        %v1310 = vld [vmem:[#allocation5 + $0x16e8] sm:$0xff]
        %v1311 = vld [vmem:[#allocation5 + $0x16f0] sm:$0xff]
        %v1312 = vld [vmem:[#allocation5 + $0x16f8] sm:$0xff]
        %v1313 = vld [vmem:[#allocation5 + $0x1700] sm:$0xff]
        %v1314 = vld [vmem:[#allocation5 + $0x1708] sm:$0xff]
        %v1315 = vld [vmem:[#allocation5 + $0x1710] sm:$0xff]
        %v1316 = vld [vmem:[#allocation5 + $0x1718] sm:$0xff]
        %v1317 = vld [vmem:[#allocation5 + $0x1720] sm:$0xff]
        %v1318 = vld [vmem:[#allocation5 + $0x1728] sm:$0xff]
        %v1319 = vld [vmem:[#allocation5 + $0x1730] sm:$0xff]
        %v1320 = vld [vmem:[#allocation5 + $0x1738] sm:$0xff]
        %v1321 = vld [vmem:[#allocation5 + $0x1740] sm:$0xff]
        %v1322 = vld [vmem:[#allocation5 + $0x1748] sm:$0xff]
        %v1323 = vld [vmem:[#allocation5 + $0x1750] sm:$0xff]
        %v1324 = vld [vmem:[#allocation5 + $0x1758] sm:$0xff]
        %v1325 = vld [vmem:[#allocation5 + $0x1760] sm:$0xff]
        %v1326 = vld [vmem:[#allocation5 + $0x1768] sm:$0xff]
        %v1327 = vld [vmem:[#allocation5 + $0x1770] sm:$0xff]
        %v1328 = vld [vmem:[#allocation5 + $0x1778] sm:$0xff]
        %v1329 = vld [vmem:[#allocation5 + $0x1780] sm:$0xff]
        %v1330 = vld [vmem:[#allocation5 + $0x1788] sm:$0xff]
        %v1331 = vld [vmem:[#allocation5 + $0x1790] sm:$0xff]
        %v1332 = vld [vmem:[#allocation5 + $0x1798] sm:$0xff]
        %v1333 = vld [vmem:[#allocation5 + $0x17a0] sm:$0xff]
        %v1334 = vld [vmem:[#allocation5 + $0x17a8] sm:$0xff]
        %v1335 = vld [vmem:[#allocation5 + $0x17b0] sm:$0xff]
        %v1336 = vld [vmem:[#allocation5 + $0x17b8] sm:$0xff]
        %v1337 = vld [vmem:[#allocation5 + $0x17c0] sm:$0xff]
        %v1338 = vld [vmem:[#allocation5 + $0x17c8] sm:$0xff]
        %v1339 = vld [vmem:[#allocation5 + $0x17d0] sm:$0xff]
        %v1340 = vld [vmem:[#allocation5 + $0x17d8] sm:$0xff]
        %v1341 = vld [vmem:[#allocation5 + $0x17e0] sm:$0xff]
        %v1342 = vld [vmem:[#allocation5 + $0x17e8] sm:$0xff]
        %v1343 = vld [vmem:[#allocation5 + $0x17f0] sm:$0xff]
        %v1344 = vld [vmem:[#allocation5 + $0x17f8] sm:$0xff]
        %v1345 = vld [vmem:[#allocation5 + $0x1800] sm:$0xff]
        %v1346 = vld [vmem:[#allocation5 + $0x1808] sm:$0xff]
        %v1347 = vld [vmem:[#allocation5 + $0x1810] sm:$0xff]
        %v1348 = vld [vmem:[#allocation5 + $0x1818] sm:$0xff]
        %v1349 = vld [vmem:[#allocation5 + $0x1820] sm:$0xff]
        %v1350 = vld [vmem:[#allocation5 + $0x1828] sm:$0xff]
        %v1351 = vld [vmem:[#allocation5 + $0x1830] sm:$0xff]
        %v1352 = vld [vmem:[#allocation5 + $0x1838] sm:$0xff]
        %v1353 = vld [vmem:[#allocation5 + $0x1840] sm:$0xff]
        %v1354 = vld [vmem:[#allocation5 + $0x1848] sm:$0xff]
        %v1355 = vld [vmem:[#allocation5 + $0x1850] sm:$0xff]
        %v1356 = vld [vmem:[#allocation5 + $0x1858] sm:$0xff]
        %v1357 = vld [vmem:[#allocation5 + $0x1860] sm:$0xff]
        %v1358 = vld [vmem:[#allocation5 + $0x1868] sm:$0xff]
        %v1359 = vld [vmem:[#allocation5 + $0x1870] sm:$0xff]
        %v1360 = vld [vmem:[#allocation5 + $0x1878] sm:$0xff]
        %v1361 = vld [vmem:[#allocation5 + $0x1880] sm:$0xff]
        %v1362 = vld [vmem:[#allocation5 + $0x1888] sm:$0xff]
        %v1363 = vld [vmem:[#allocation5 + $0x1890] sm:$0xff]
        %v1364 = vld [vmem:[#allocation5 + $0x1898] sm:$0xff]
        %v1365 = vld [vmem:[#allocation5 + $0x18a0] sm:$0xff]
        %v1366 = vld [vmem:[#allocation5 + $0x18a8] sm:$0xff]
        %v1367 = vld [vmem:[#allocation5 + $0x18b0] sm:$0xff]
        %v1368 = vld [vmem:[#allocation5 + $0x18b8] sm:$0xff]
        %v1369 = vld [vmem:[#allocation5 + $0x18c0] sm:$0xff]
        %v1370 = vld [vmem:[#allocation5 + $0x18c8] sm:$0xff]
        %v1371 = vld [vmem:[#allocation5 + $0x18d0] sm:$0xff]
        %v1372 = vld [vmem:[#allocation5 + $0x18d8] sm:$0xff]
        %v1373 = vld [vmem:[#allocation5 + $0x18e0] sm:$0xff]
        %v1374 = vld [vmem:[#allocation5 + $0x18e8] sm:$0xff]
        %v1375 = vld [vmem:[#allocation5 + $0x18f0] sm:$0xff]
        %v1376 = vld [vmem:[#allocation5 + $0x18f8] sm:$0xff]
        %v1377 = vld [vmem:[#allocation5 + $0x1900] sm:$0xff]
        %v1378 = vld [vmem:[#allocation5 + $0x1908] sm:$0xff]
        %v1379 = vld [vmem:[#allocation5 + $0x1910] sm:$0xff]
        %v1380 = vld [vmem:[#allocation5 + $0x1918] sm:$0xff]
        %v1381 = vld [vmem:[#allocation5 + $0x1920] sm:$0xff]
        %v1382 = vld [vmem:[#allocation5 + $0x1928] sm:$0xff]
        %v1383 = vld [vmem:[#allocation5 + $0x1930] sm:$0xff]
        %v1384 = vld [vmem:[#allocation5 + $0x1938] sm:$0xff]
        %v1385 = vld [vmem:[#allocation5 + $0x1940] sm:$0xff]
        %v1386 = vld [vmem:[#allocation5 + $0x1948] sm:$0xff]
        %v1387 = vld [vmem:[#allocation5 + $0x1950] sm:$0xff]
        %v1388 = vld [vmem:[#allocation5 + $0x1958] sm:$0xff]
        %v1389 = vld [vmem:[#allocation5 + $0x1960] sm:$0xff]
        %v1390 = vld [vmem:[#allocation5 + $0x1968] sm:$0xff]
        %v1391 = vld [vmem:[#allocation5 + $0x1970] sm:$0xff]
        %v1392 = vld [vmem:[#allocation5 + $0x1978] sm:$0xff]
        %v1393 = vld [vmem:[#allocation5 + $0x1980] sm:$0xff]
        %v1394 = vld [vmem:[#allocation5 + $0x1988] sm:$0xff]
        %v1395 = vld [vmem:[#allocation5 + $0x1990] sm:$0xff]
        %v1396 = vld [vmem:[#allocation5 + $0x1998] sm:$0xff]
        %v1397 = vld [vmem:[#allocation5 + $0x19a0] sm:$0xff]
        %v1398 = vld [vmem:[#allocation5 + $0x19a8] sm:$0xff]
        %v1399 = vld [vmem:[#allocation5 + $0x19b0] sm:$0xff]
        %v1400 = vld [vmem:[#allocation5 + $0x19b8] sm:$0xff]
        %v1401 = vld [vmem:[#allocation5 + $0x19c0] sm:$0xff]
        %v1402 = vld [vmem:[#allocation5 + $0x19c8] sm:$0xff]
        %v1403 = vld [vmem:[#allocation5 + $0x19d0] sm:$0xff]
        %v1404 = vld [vmem:[#allocation5 + $0x19d8] sm:$0xff]
        %v1405 = vld [vmem:[#allocation5 + $0x19e0] sm:$0xff]
        %v1406 = vld [vmem:[#allocation5 + $0x19e8] sm:$0xff]
        %v1407 = vld [vmem:[#allocation5 + $0x19f0] sm:$0xff]
        %v1408 = vld [vmem:[#allocation5 + $0x19f8] sm:$0xff]
        %v1409 = vld [vmem:[#allocation5 + $0x1a00] sm:$0xff]
        %v1410 = vld [vmem:[#allocation5 + $0x1a08] sm:$0xff]
        %v1411 = vld [vmem:[#allocation5 + $0x1a10] sm:$0xff]
        %v1412 = vld [vmem:[#allocation5 + $0x1a18] sm:$0xff]
        %v1413 = vld [vmem:[#allocation5 + $0x1a20] sm:$0xff]
        %v1414 = vld [vmem:[#allocation5 + $0x1a28] sm:$0xff]
        %v1415 = vld [vmem:[#allocation5 + $0x1a30] sm:$0xff]
        %v1416 = vld [vmem:[#allocation5 + $0x1a38] sm:$0xff]
        %v1417 = vld [vmem:[#allocation5 + $0x1a40] sm:$0xff]
        %v1418 = vld [vmem:[#allocation5 + $0x1a48] sm:$0xff]
        %v1419 = vld [vmem:[#allocation5 + $0x1a50] sm:$0xff]
        %v1420 = vld [vmem:[#allocation5 + $0x1a58] sm:$0xff]
        %v1421 = vld [vmem:[#allocation5 + $0x1a60] sm:$0xff]
        %v1422 = vld [vmem:[#allocation5 + $0x1a68] sm:$0xff]
        %v1423 = vld [vmem:[#allocation5 + $0x1a70] sm:$0xff]
        %v1424 = vld [vmem:[#allocation5 + $0x1a78] sm:$0xff]
        %v1425 = vld [vmem:[#allocation5 + $0x1a80] sm:$0xff]
        %v1426 = vld [vmem:[#allocation5 + $0x1a88] sm:$0xff]
        %v1427 = vld [vmem:[#allocation5 + $0x1a90] sm:$0xff]
        %v1428 = vld [vmem:[#allocation5 + $0x1a98] sm:$0xff]
        %v1429 = vld [vmem:[#allocation5 + $0x1aa0] sm:$0xff]
        %v1430 = vld [vmem:[#allocation5 + $0x1aa8] sm:$0xff]
        %v1431 = vld [vmem:[#allocation5 + $0x1ab0] sm:$0xff]
        %v1432 = vld [vmem:[#allocation5 + $0x1ab8] sm:$0xff]
        %v1433 = vld [vmem:[#allocation5 + $0x1ac0] sm:$0xff]
        %v1434 = vld [vmem:[#allocation5 + $0x1ac8] sm:$0xff]
        %v1435 = vld [vmem:[#allocation5 + $0x1ad0] sm:$0xff]
        %v1436 = vld [vmem:[#allocation5 + $0x1ad8] sm:$0xff]
        %v1437 = vld [vmem:[#allocation5 + $0x1ae0] sm:$0xff]
        %v1438 = vld [vmem:[#allocation5 + $0x1ae8] sm:$0xff]
        %v1439 = vld [vmem:[#allocation5 + $0x1af0] sm:$0xff]
        %v1440 = vld [vmem:[#allocation5 + $0x1af8] sm:$0xff]
        %v1441 = vld [vmem:[#allocation7] sm:$0xf]
        %v1443 = vlaneseq
        %v1444 = vshrl.u32 %v1443, 7
        %v1445 = vsub.s32 0, %v1444
        %v1446 = vrot.slane %v1441, %v1445
        %v1447 = vlaneseq
        %v1448 = vshrl.u32 %v1447, 7
        %v1449 = vsub.s32 1, %v1448
        %v1450 = vrot.slane %v1441, %v1449
        %v1451 = vlaneseq
        %v1452 = vshrl.u32 %v1451, 7
        %v1453 = vsub.s32 2, %v1452
        %v1454 = vrot.slane %v1441, %v1453
        %v1455 = vlaneseq
        %v1456 = vshrl.u32 %v1455, 7
        %v1457 = vsub.s32 3, %v1456
        %v1458 = vrot.slane %v1441, %v1457
        %v1470 = vcombine.high %v570, %v570
        %v1472 = vunpack.c.l.s4 1983009808
        %v1473 = vunpack.c.0.s8 %v1472
        %v1474 = vlaneseq
        %v1475 = vshrl.u32 %v1474, 7
        %v1476 = vsub.s32 %v1473, %v1475
        %v1477 = vrot.slane %v570, %v1476
        %v1479 = vunpack.c.l.s4 1983009808
        %v1480 = vunpack.c.0.s8 %v1479
        %v1481 = vlaneseq
        %v1482 = vshrl.u32 %v1481, 7
        %v1483 = vsub.s32 %v1480, %v1482
        %v1484 = vrot.slane %v1470, %v1483
        %v1485 = vcombine.high %v1477, %v1477
        %v1486 = vcombine.high %v1484, %v1484
        %v1487 = vcombine.high %v571, %v571
        %v1489 = vunpack.c.l.s4 1983009808
        %v1490 = vunpack.c.0.s8 %v1489
        %v1491 = vlaneseq
        %v1492 = vshrl.u32 %v1491, 7
        %v1493 = vsub.s32 %v1490, %v1492
        %v1494 = vrot.slane %v571, %v1493
        %v1496 = vunpack.c.l.s4 1983009808
        %v1497 = vunpack.c.0.s8 %v1496
        %v1498 = vlaneseq
        %v1499 = vshrl.u32 %v1498, 7
        %v1500 = vsub.s32 %v1497, %v1499
        %v1501 = vrot.slane %v1487, %v1500
        %v1502 = vcombine.high %v1494, %v1494
        %v1503 = vcombine.high %v1501, %v1501
        %v1504 = vcombine.high %v572, %v572
        %v1506 = vunpack.c.l.s4 1983009808
        %v1507 = vunpack.c.0.s8 %v1506
        %v1508 = vlaneseq
        %v1509 = vshrl.u32 %v1508, 7
        %v1510 = vsub.s32 %v1507, %v1509
        %v1511 = vrot.slane %v572, %v1510
        %v1513 = vunpack.c.l.s4 1983009808
        %v1514 = vunpack.c.0.s8 %v1513
        %v1515 = vlaneseq
        %v1516 = vshrl.u32 %v1515, 7
        %v1517 = vsub.s32 %v1514, %v1516
        %v1518 = vrot.slane %v1504, %v1517
        %v1519 = vcombine.high %v1511, %v1511
        %v1520 = vcombine.high %v1518, %v1518
        %v1521 = vcombine.high %v573, %v573
        %v1523 = vunpack.c.l.s4 1983009808
        %v1524 = vunpack.c.0.s8 %v1523
        %v1525 = vlaneseq
        %v1526 = vshrl.u32 %v1525, 7
        %v1527 = vsub.s32 %v1524, %v1526
        %v1528 = vrot.slane %v573, %v1527
        %v1530 = vunpack.c.l.s4 1983009808
        %v1531 = vunpack.c.0.s8 %v1530
        %v1532 = vlaneseq
        %v1533 = vshrl.u32 %v1532, 7
        %v1534 = vsub.s32 %v1531, %v1533
        %v1535 = vrot.slane %v1521, %v1534
        %v1536 = vcombine.high %v1528, %v1528
        %v1537 = vcombine.high %v1535, %v1535
        %v1538 = vcombine.high %v574, %v574
        %v1540 = vunpack.c.l.s4 1983009808
        %v1541 = vunpack.c.0.s8 %v1540
        %v1542 = vlaneseq
        %v1543 = vshrl.u32 %v1542, 7
        %v1544 = vsub.s32 %v1541, %v1543
        %v1545 = vrot.slane %v574, %v1544
        %v1547 = vunpack.c.l.s4 1983009808
        %v1548 = vunpack.c.0.s8 %v1547
        %v1549 = vlaneseq
        %v1550 = vshrl.u32 %v1549, 7
        %v1551 = vsub.s32 %v1548, %v1550
        %v1552 = vrot.slane %v1538, %v1551
        %v1553 = vcombine.high %v1545, %v1545
        %v1554 = vcombine.high %v1552, %v1552
        %v1555 = vcombine.high %v575, %v575
        %v1557 = vunpack.c.l.s4 1983009808
        %v1558 = vunpack.c.0.s8 %v1557
        %v1559 = vlaneseq
        %v1560 = vshrl.u32 %v1559, 7
        %v1561 = vsub.s32 %v1558, %v1560
        %v1562 = vrot.slane %v575, %v1561
        %v1564 = vunpack.c.l.s4 1983009808
        %v1565 = vunpack.c.0.s8 %v1564
        %v1566 = vlaneseq
        %v1567 = vshrl.u32 %v1566, 7
        %v1568 = vsub.s32 %v1565, %v1567
        %v1569 = vrot.slane %v1555, %v1568
        %v1570 = vcombine.high %v1562, %v1562
        %v1571 = vcombine.high %v1569, %v1569
        %v1572 = vcombine.high %v576, %v576
        %v1574 = vunpack.c.l.s4 1983009808
        %v1575 = vunpack.c.0.s8 %v1574
        %v1576 = vlaneseq
        %v1577 = vshrl.u32 %v1576, 7
        %v1578 = vsub.s32 %v1575, %v1577
        %v1579 = vrot.slane %v576, %v1578
        %v1581 = vunpack.c.l.s4 1983009808
        %v1582 = vunpack.c.0.s8 %v1581
        %v1583 = vlaneseq
        %v1584 = vshrl.u32 %v1583, 7
        %v1585 = vsub.s32 %v1582, %v1584
        %v1586 = vrot.slane %v1572, %v1585
        %v1587 = vcombine.high %v1579, %v1579
        %v2479 = vunpack.c.l.b16 %v577
        %v2480 = vunpack.c.h.b16 %v577
        %v2481 = vunpack.c.l.b16 %v578
        %v2482 = vunpack.c.h.b16 %v578
        %v2483 = vunpack.c.l.b16 %v579
        %v2484 = vunpack.c.h.b16 %v579
        %v2485 = vunpack.c.l.b16 %v580
        %v2486 = vunpack.c.h.b16 %v580
        %v2487 = vunpack.c.l.b16 %v581
        %v2488 = vunpack.c.h.b16 %v581
        %v2489 = vunpack.c.l.b16 %v582
        %v2490 = vunpack.c.h.b16 %v582
        %v2491 = vunpack.c.l.b16 %v583
        %v2492 = vunpack.c.h.b16 %v583
        %v2493 = vunpack.c.l.b16 %v584
        %v2494 = vunpack.c.h.b16 %v584
        %v2495 = vunpack.c.l.b16 %v585
        %v2496 = vunpack.c.h.b16 %v585
        %v2497 = vunpack.c.l.b16 %v586
        %v2498 = vunpack.c.h.b16 %v586
        %v2499 = vunpack.c.l.b16 %v587
        %v2500 = vunpack.c.h.b16 %v587
        %v2501 = vunpack.c.l.b16 %v588
        %v2502 = vunpack.c.h.b16 %v588
        %v2503 = vunpack.c.l.b16 %v589
        %v2504 = vunpack.c.h.b16 %v589
        %v2505 = vunpack.c.l.b16 %v590
        %v2506 = vunpack.c.h.b16 %v590
        %v2507 = vunpack.c.l.b16 %v591
        %v2508 = vunpack.c.h.b16 %v591
        %v2509 = vunpack.c.l.b16 %v592
        %v2510 = vunpack.c.h.b16 %v592
        %v2511 = vunpack.c.l.b16 %v593
        %v2512 = vunpack.c.h.b16 %v593
        %v2513 = vunpack.c.l.b16 %v594
        %v2514 = vunpack.c.h.b16 %v594
        %v2515 = vunpack.c.l.b16 %v595
        %v2516 = vunpack.c.h.b16 %v595
        %v2517 = vunpack.c.l.b16 %v596
        %v2518 = vunpack.c.h.b16 %v596
        %v2519 = vunpack.c.l.b16 %v597
        %v2520 = vunpack.c.h.b16 %v597
        %v2521 = vunpack.c.l.b16 %v598
        %v2522 = vunpack.c.h.b16 %v598
        %v2523 = vunpack.c.l.b16 %v599
        %v2524 = vunpack.c.h.b16 %v599
        %v2525 = vunpack.c.l.b16 %v600
        %v2526 = vunpack.c.h.b16 %v600
        %v2527 = vunpack.c.l.b16 %v601
        %v2528 = vunpack.c.h.b16 %v601
        %v2529 = vunpack.c.l.b16 %v602
        %v2530 = vunpack.c.h.b16 %v602
        %v2531 = vunpack.c.l.b16 %v603
        %v2532 = vunpack.c.h.b16 %v603
        %v2533 = vunpack.c.l.b16 %v604
        %v2534 = vunpack.c.h.b16 %v604
        %v2535 = vunpack.c.l.b16 %v605
        %v2536 = vunpack.c.h.b16 %v605
        %v2537 = vunpack.c.l.b16 %v606
        %v2538 = vunpack.c.h.b16 %v606
        %v2539 = vunpack.c.l.b16 %v607
        %v2540 = vunpack.c.h.b16 %v607
        %v2541 = vunpack.c.l.b16 %v608
        %v2542 = vunpack.c.h.b16 %v608
        %v2543 = vunpack.c.l.b16 %v609
        %v2544 = vunpack.c.h.b16 %v609
        %v2545 = vunpack.c.l.b16 %v610
        %v2546 = vunpack.c.h.b16 %v610
        %v2547 = vunpack.c.l.b16 %v611
        %v2548 = vunpack.c.h.b16 %v611
        %v2549 = vunpack.c.l.b16 %v612
        %v2550 = vunpack.c.h.b16 %v612
        %v2551 = vunpack.c.l.b16 %v613
        %v2552 = vunpack.c.h.b16 %v613
        %v2553 = vunpack.c.l.b16 %v614
        %v2554 = vunpack.c.h.b16 %v614
        %v2555 = vunpack.c.l.b16 %v615
        %v2556 = vunpack.c.h.b16 %v615
        %v2557 = vunpack.c.l.b16 %v616
        %v2558 = vunpack.c.h.b16 %v616
        %v2559 = vunpack.c.l.b16 %v617
        %v2560 = vunpack.c.h.b16 %v617
        %v2561 = vunpack.c.l.b16 %v618
        %v2562 = vunpack.c.h.b16 %v618
        %v2563 = vunpack.c.l.b16 %v619
        %v2564 = vunpack.c.h.b16 %v619
        %v2565 = vunpack.c.l.b16 %v620
        %v2566 = vunpack.c.h.b16 %v620
        %v2567 = vunpack.c.l.b16 %v621
        %v2568 = vunpack.c.h.b16 %v621
        %v2569 = vunpack.c.l.b16 %v622
        %v2570 = vunpack.c.h.b16 %v622
        %v2571 = vunpack.c.l.b16 %v623
        %v2572 = vunpack.c.h.b16 %v623
        %v2573 = vunpack.c.l.b16 %v624
        %v2574 = vunpack.c.h.b16 %v624
        %v2575 = vunpack.c.l.b16 %v625
        %v2576 = vunpack.c.h.b16 %v625
        %v2577 = vunpack.c.l.b16 %v626
        %v2578 = vunpack.c.h.b16 %v626
        %v2579 = vunpack.c.l.b16 %v627
        %v2580 = vunpack.c.h.b16 %v627
        %v2581 = vunpack.c.l.b16 %v628
        %v2582 = vunpack.c.h.b16 %v628
        %v2583 = vunpack.c.l.b16 %v629
        %v2584 = vunpack.c.h.b16 %v629
        %v2585 = vunpack.c.l.b16 %v630
        %v2586 = vunpack.c.h.b16 %v630
        %v2587 = vunpack.c.l.b16 %v631
        %v2588 = vunpack.c.h.b16 %v631
        %v2589 = vunpack.c.l.b16 %v632
        %v2590 = vunpack.c.h.b16 %v632
        %v2591 = vunpack.c.l.b16 %v633
        %v2592 = vunpack.c.h.b16 %v633
        %v2593 = vunpack.c.l.b16 %v634
        %v2594 = vunpack.c.h.b16 %v634
        %v2595 = vunpack.c.l.b16 %v635
        %v2596 = vunpack.c.h.b16 %v635
        %v2597 = vunpack.c.l.b16 %v636
        %v2598 = vunpack.c.h.b16 %v636
        %v2599 = vunpack.c.l.b16 %v637
        %v2600 = vunpack.c.h.b16 %v637
        %v2601 = vunpack.c.l.b16 %v638
        %v2602 = vunpack.c.h.b16 %v638
        %v2603 = vunpack.c.l.b16 %v639
        %v2604 = vunpack.c.h.b16 %v639
        %v2605 = vunpack.c.l.b16 %v640
        %v2606 = vunpack.c.h.b16 %v640
        %v2607 = vunpack.c.l.b16 %v641
        %v2608 = vunpack.c.h.b16 %v641
        %v2609 = vunpack.c.l.b16 %v642
        %v2610 = vunpack.c.h.b16 %v642
        %v2611 = vunpack.c.l.b16 %v643
        %v2612 = vunpack.c.h.b16 %v643
        %v2613 = vunpack.c.l.b16 %v644
        %v2614 = vunpack.c.h.b16 %v644
        %v2615 = vunpack.c.l.b16 %v645
        %v2616 = vunpack.c.h.b16 %v645
        %v2617 = vunpack.c.l.b16 %v646
        %v2618 = vunpack.c.h.b16 %v646
        %v2619 = vunpack.c.l.b16 %v647
        %v2620 = vunpack.c.h.b16 %v647
        %v2621 = vunpack.c.l.b16 %v648
        %v2622 = vunpack.c.h.b16 %v648
        %v2623 = vunpack.c.l.b16 %v649
        %v2624 = vunpack.c.h.b16 %v649
        %v2625 = vunpack.c.l.b16 %v650
        %v2626 = vunpack.c.h.b16 %v650
        %v2627 = vunpack.c.l.b16 %v651
        %v2628 = vunpack.c.h.b16 %v651
        %v2629 = vunpack.c.l.b16 %v652
        %v2630 = vunpack.c.h.b16 %v652
        %v2631 = vunpack.c.l.b16 %v653
        %v2632 = vunpack.c.h.b16 %v653
        %v2633 = vunpack.c.l.b16 %v654
        %v2634 = vunpack.c.h.b16 %v654
        %v2635 = vunpack.c.l.b16 %v655
        %v2636 = vunpack.c.h.b16 %v655
        %v2637 = vunpack.c.l.b16 %v656
        %v2638 = vunpack.c.h.b16 %v656
        %v2639 = vunpack.c.l.b16 %v657
        %v2640 = vunpack.c.h.b16 %v657
        %v2641 = vunpack.c.l.b16 %v658
        %v2642 = vunpack.c.h.b16 %v658
        %v2643 = vunpack.c.l.b16 %v659
        %v2644 = vunpack.c.h.b16 %v659
        %v2645 = vunpack.c.l.b16 %v660
        %v2646 = vunpack.c.h.b16 %v660
        %v2647 = vunpack.c.l.b16 %v661
        %v2648 = vunpack.c.h.b16 %v661
        %v2649 = vunpack.c.l.b16 %v662
        %v2650 = vunpack.c.h.b16 %v662
        %v2651 = vunpack.c.l.b16 %v663
        %v2652 = vunpack.c.h.b16 %v663
        %v2653 = vunpack.c.l.b16 %v664
        %v2654 = vunpack.c.h.b16 %v664
        %v2655 = vunpack.c.l.b16 %v665
        %v2656 = vunpack.c.h.b16 %v665
        %v2657 = vunpack.c.l.b16 %v666
        %v2658 = vunpack.c.h.b16 %v666
        %v2659 = vunpack.c.l.b16 %v667
        %v2660 = vunpack.c.h.b16 %v667
        %v2661 = vunpack.c.l.b16 %v668
        %v2662 = vunpack.c.h.b16 %v668
        %v2663 = vunpack.c.l.b16 %v669
        %v2664 = vunpack.c.h.b16 %v669
        %v2665 = vunpack.c.l.b16 %v670
        %v2666 = vunpack.c.h.b16 %v670
        %v2667 = vunpack.c.l.b16 %v671
        %v2668 = vunpack.c.h.b16 %v671
        %v2669 = vunpack.c.l.b16 %v672
        %v2670 = vunpack.c.h.b16 %v672
        %v2671 = vunpack.c.l.b16 %v673
        %v2672 = vunpack.c.h.b16 %v673
        %v2673 = vunpack.c.l.b16 %v674
        %v2674 = vunpack.c.h.b16 %v674
        %v2675 = vunpack.c.l.b16 %v675
        %v2676 = vunpack.c.h.b16 %v675
        %v2677 = vunpack.c.l.b16 %v676
        %v2678 = vunpack.c.h.b16 %v676
        %v2679 = vunpack.c.l.b16 %v677
        %v2680 = vunpack.c.h.b16 %v677
        %v2681 = vunpack.c.l.b16 %v678
        %v2682 = vunpack.c.h.b16 %v678
        %v2683 = vunpack.c.l.b16 %v679
        %v2684 = vunpack.c.h.b16 %v679
        %v2685 = vunpack.c.l.b16 %v680
        %v2686 = vunpack.c.h.b16 %v680
        %v2687 = vunpack.c.l.b16 %v681
        %v2688 = vunpack.c.h.b16 %v681
        %v2689 = vunpack.c.l.b16 %v682
        %v2690 = vunpack.c.h.b16 %v682
        %v2691 = vunpack.c.l.b16 %v683
        %v2692 = vunpack.c.h.b16 %v683
        %v2693 = vunpack.c.l.b16 %v684
        %v2694 = vunpack.c.h.b16 %v684
        %v2695 = vunpack.c.l.b16 %v685
        %v2696 = vunpack.c.h.b16 %v685
        %v2697 = vunpack.c.l.b16 %v686
        %v2698 = vunpack.c.h.b16 %v686
        %v2699 = vunpack.c.l.b16 %v687
        %v2700 = vunpack.c.h.b16 %v687
        %v2701 = vunpack.c.l.b16 %v688
        %v2702 = vunpack.c.h.b16 %v688
        %v2703 = vunpack.c.l.b16 %v689
        %v2704 = vunpack.c.h.b16 %v689
        %v2705 = vunpack.c.l.b16 %v690
        %v2706 = vunpack.c.h.b16 %v690
        %v2707 = vunpack.c.l.b16 %v691
        %v2708 = vunpack.c.h.b16 %v691
        %v2709 = vunpack.c.l.b16 %v692
        %v2710 = vunpack.c.h.b16 %v692
        %v2711 = vunpack.c.l.b16 %v693
        %v2712 = vunpack.c.h.b16 %v693
        %v2713 = vunpack.c.l.b16 %v694
        %v2714 = vunpack.c.h.b16 %v694
        %v2715 = vunpack.c.l.b16 %v695
        %v2716 = vunpack.c.h.b16 %v695
        %v2717 = vunpack.c.l.b16 %v696
        %v2718 = vunpack.c.h.b16 %v696
        %v2719 = vunpack.c.l.b16 %v697
        %v2720 = vunpack.c.h.b16 %v697
        %v2721 = vunpack.c.l.b16 %v698
        %v2722 = vunpack.c.h.b16 %v698
        %v2723 = vunpack.c.l.b16 %v699
        %v2724 = vunpack.c.h.b16 %v699
        %v2725 = vunpack.c.l.b16 %v700
        %v2726 = vunpack.c.h.b16 %v700
        %v2727 = vunpack.c.l.b16 %v701
        %v2728 = vunpack.c.h.b16 %v701
        %v2729 = vunpack.c.l.b16 %v702
        %v2730 = vunpack.c.h.b16 %v702
        %v2731 = vunpack.c.l.b16 %v703
        %v2732 = vunpack.c.h.b16 %v703
        %v2733 = vunpack.c.l.b16 %v704
        %v2734 = vunpack.c.h.b16 %v704
        %v2735 = vunpack.c.l.b16 %v705
        %v2736 = vunpack.c.h.b16 %v705
        %v2737 = vunpack.c.l.b16 %v706
        %v2738 = vunpack.c.h.b16 %v706
        %v2739 = vunpack.c.l.b16 %v707
        %v2740 = vunpack.c.h.b16 %v707
        %v2741 = vunpack.c.l.b16 %v708
        %v2742 = vunpack.c.h.b16 %v708
        %v2743 = vunpack.c.l.b16 %v709
        %v2744 = vunpack.c.h.b16 %v709
        %v2745 = vunpack.c.l.b16 %v710
        %v2746 = vunpack.c.h.b16 %v710
        %v2747 = vunpack.c.l.b16 %v711
        %v2748 = vunpack.c.h.b16 %v711
        %v2749 = vunpack.c.l.b16 %v712
        %v2750 = vunpack.c.h.b16 %v712
        %v2751 = vunpack.c.l.b16 %v713
        %v2752 = vunpack.c.h.b16 %v713
        %v2753 = vunpack.c.l.b16 %v714
        %v2754 = vunpack.c.h.b16 %v714
        %v2755 = vunpack.c.l.b16 %v715
        %v2756 = vunpack.c.h.b16 %v715
        %v2757 = vunpack.c.l.b16 %v716
        %v2758 = vunpack.c.h.b16 %v716
        %v2759 = vunpack.c.l.b16 %v717
        %v2760 = vunpack.c.h.b16 %v717
        %v2761 = vunpack.c.l.b16 %v718
        %v2762 = vunpack.c.h.b16 %v718
        %v2763 = vunpack.c.l.b16 %v719
        %v2764 = vunpack.c.h.b16 %v719
        %v2765 = vunpack.c.l.b16 %v720
        %v2766 = vunpack.c.h.b16 %v720
        %v2767 = vunpack.c.l.b16 %v721
        %v2768 = vunpack.c.h.b16 %v721
        %v2769 = vunpack.c.l.b16 %v722
        %v2770 = vunpack.c.h.b16 %v722
        %v2771 = vunpack.c.l.b16 %v723
        %v2772 = vunpack.c.h.b16 %v723
        %v2773 = vunpack.c.l.b16 %v724
        %v2774 = vunpack.c.h.b16 %v724
        %v2775 = vunpack.c.l.b16 %v725
        %v2776 = vunpack.c.h.b16 %v725
        %v2777 = vunpack.c.l.b16 %v726
        %v2778 = vunpack.c.h.b16 %v726
        %v2779 = vunpack.c.l.b16 %v727
        %v2780 = vunpack.c.h.b16 %v727
        %v2781 = vunpack.c.l.b16 %v728
        %v2782 = vunpack.c.h.b16 %v728
        %v2783 = vunpack.c.l.b16 %v729
        %v2784 = vunpack.c.h.b16 %v729
        %v2785 = vunpack.c.l.b16 %v730
        %v2786 = vunpack.c.h.b16 %v730
        %v2787 = vunpack.c.l.b16 %v731
        %v2788 = vunpack.c.h.b16 %v731
        %v2789 = vunpack.c.l.b16 %v732
        %v2790 = vunpack.c.h.b16 %v732
        %v2791 = vunpack.c.l.b16 %v733
        %v2792 = vunpack.c.h.b16 %v733
        %v2793 = vunpack.c.l.b16 %v734
        %v2794 = vunpack.c.h.b16 %v734
        %v2795 = vunpack.c.l.b16 %v735
        %v2796 = vunpack.c.h.b16 %v735
        %v2797 = vunpack.c.l.b16 %v736
        %v2798 = vunpack.c.h.b16 %v736
        %v2799 = vunpack.c.l.b16 %v737
        %v2800 = vunpack.c.h.b16 %v737
        %v2801 = vunpack.c.l.b16 %v738
        %v2802 = vunpack.c.h.b16 %v738
        %v2803 = vunpack.c.l.b16 %v739
        %v2804 = vunpack.c.h.b16 %v739
        %v2805 = vunpack.c.l.b16 %v740
        %v2806 = vunpack.c.h.b16 %v740
        %v2807 = vunpack.c.l.b16 %v741
        %v2808 = vunpack.c.h.b16 %v741
        %v2809 = vunpack.c.l.b16 %v742
        %v2810 = vunpack.c.h.b16 %v742
        %v2811 = vunpack.c.l.b16 %v743
        %v2812 = vunpack.c.h.b16 %v743
        %v2813 = vunpack.c.l.b16 %v744
        %v2814 = vunpack.c.h.b16 %v744
        %v2815 = vunpack.c.l.b16 %v745
        %v2816 = vunpack.c.h.b16 %v745
        %v2817 = vunpack.c.l.b16 %v746
        %v2818 = vunpack.c.h.b16 %v746
        %v2819 = vunpack.c.l.b16 %v747
        %v2820 = vunpack.c.h.b16 %v747
        %v2821 = vunpack.c.l.b16 %v748
        %v2822 = vunpack.c.h.b16 %v748
        %v2823 = vunpack.c.l.b16 %v749
        %v2824 = vunpack.c.h.b16 %v749
        %v2825 = vunpack.c.l.b16 %v750
        %v2826 = vunpack.c.h.b16 %v750
        %v2827 = vunpack.c.l.b16 %v751
        %v2828 = vunpack.c.h.b16 %v751
        %v2829 = vunpack.c.l.b16 %v752
        %v2830 = vunpack.c.h.b16 %v752
        %v2831 = vunpack.c.l.b16 %v753
        %v2832 = vunpack.c.h.b16 %v753
        %v2833 = vunpack.c.l.b16 %v754
        %v2834 = vunpack.c.h.b16 %v754
        %v2835 = vunpack.c.l.b16 %v755
        %v2836 = vunpack.c.h.b16 %v755
        %v2837 = vunpack.c.l.b16 %v756
        %v2838 = vunpack.c.h.b16 %v756
        %v2839 = vunpack.c.l.b16 %v757
        %v2840 = vunpack.c.h.b16 %v757
        %v2841 = vunpack.c.l.b16 %v758
        %v2842 = vunpack.c.h.b16 %v758
        %v2843 = vunpack.c.l.b16 %v759
        %v2844 = vunpack.c.h.b16 %v759
        %v2845 = vunpack.c.l.b16 %v760
        %v2846 = vunpack.c.h.b16 %v760
        %v2847 = vunpack.c.l.b16 %v761
        %v2848 = vunpack.c.h.b16 %v761
        %v2849 = vunpack.c.l.b16 %v762
        %v2850 = vunpack.c.h.b16 %v762
        %v2851 = vunpack.c.l.b16 %v763
        %v2852 = vunpack.c.h.b16 %v763
        %v2853 = vunpack.c.l.b16 %v764
        %v2854 = vunpack.c.h.b16 %v764
        %v2855 = vunpack.c.l.b16 %v765
        %v2856 = vunpack.c.h.b16 %v765
        %v2857 = vunpack.c.l.b16 %v766
        %v2858 = vunpack.c.h.b16 %v766
        %v2859 = vunpack.c.l.b16 %v767
        %v2860 = vunpack.c.h.b16 %v767
        %v2861 = vunpack.c.l.b16 %v768
        %v2862 = vunpack.c.h.b16 %v768
        %v2863 = vunpack.c.l.b16 %v769
        %v2864 = vunpack.c.h.b16 %v769
        %v2865 = vunpack.c.l.b16 %v770
        %v2866 = vunpack.c.h.b16 %v770
        %v2867 = vunpack.c.l.b16 %v771
        %v2868 = vunpack.c.h.b16 %v771
        %v2869 = vunpack.c.l.b16 %v772
        %v2870 = vunpack.c.h.b16 %v772
        %v2871 = vunpack.c.l.b16 %v773
        %v2872 = vunpack.c.h.b16 %v773
        %v2873 = vunpack.c.l.b16 %v774
        %v2874 = vunpack.c.h.b16 %v774
        %v2875 = vunpack.c.l.b16 %v775
        %v2876 = vunpack.c.h.b16 %v775
        %v2877 = vunpack.c.l.b16 %v776
        %v2878 = vunpack.c.h.b16 %v776
        %v2879 = vunpack.c.l.b16 %v777
        %v2880 = vunpack.c.h.b16 %v777
        %v2881 = vunpack.c.l.b16 %v778
        %v2882 = vunpack.c.h.b16 %v778
        %v2883 = vunpack.c.l.b16 %v779
        %v2884 = vunpack.c.h.b16 %v779
        %v2885 = vunpack.c.l.b16 %v780
        %v2886 = vunpack.c.h.b16 %v780
        %v2887 = vunpack.c.l.b16 %v781
        %v2888 = vunpack.c.h.b16 %v781
        %v2889 = vunpack.c.l.b16 %v782
        %v2890 = vunpack.c.h.b16 %v782
        %v2891 = vunpack.c.l.b16 %v783
        %v2892 = vunpack.c.h.b16 %v783
        %v2893 = vunpack.c.l.b16 %v784
        %v2894 = vunpack.c.h.b16 %v784
        %v2895 = vunpack.c.l.b16 %v785
        %v2896 = vunpack.c.h.b16 %v785
        %v2897 = vunpack.c.l.b16 %v786
        %v2898 = vunpack.c.h.b16 %v786
        %v2899 = vunpack.c.l.b16 %v787
        %v2900 = vunpack.c.h.b16 %v787
        %v2901 = vunpack.c.l.b16 %v788
        %v2902 = vunpack.c.h.b16 %v788
        %v2903 = vunpack.c.l.b16 %v789
        %v2904 = vunpack.c.h.b16 %v789
        %v2905 = vunpack.c.l.b16 %v790
        %v2906 = vunpack.c.h.b16 %v790
        %v2907 = vunpack.c.l.b16 %v791
        %v2908 = vunpack.c.h.b16 %v791
        %v2909 = vunpack.c.l.b16 %v792
        %v2910 = vunpack.c.h.b16 %v792
        %v2911 = vunpack.c.l.b16 %v793
        %v2912 = vunpack.c.h.b16 %v793
        %v2913 = vunpack.c.l.b16 %v794
        %v2914 = vunpack.c.h.b16 %v794
        %v2915 = vunpack.c.l.b16 %v795
        %v2916 = vunpack.c.h.b16 %v795
        %v2917 = vunpack.c.l.b16 %v796
        %v2918 = vunpack.c.h.b16 %v796
        %v2919 = vunpack.c.l.b16 %v797
        %v2920 = vunpack.c.h.b16 %v797
        %v2921 = vunpack.c.l.b16 %v798
        %v2922 = vunpack.c.h.b16 %v798
        %v2923 = vunpack.c.l.b16 %v799
        %v2924 = vunpack.c.h.b16 %v799
        %v2925 = vunpack.c.l.b16 %v800
        %v2926 = vunpack.c.h.b16 %v800
        %v2927 = vunpack.c.l.b16 %v801
        %v2928 = vunpack.c.h.b16 %v801
        %v2929 = vunpack.c.l.b16 %v802
        %v2930 = vunpack.c.h.b16 %v802
        %v2931 = vunpack.c.l.b16 %v803
        %v2932 = vunpack.c.h.b16 %v803
        %v2933 = vunpack.c.l.b16 %v804
        %v2934 = vunpack.c.h.b16 %v804
        %v2935 = vunpack.c.l.b16 %v805
        %v2936 = vunpack.c.h.b16 %v805
        %v2937 = vunpack.c.l.b16 %v806
        %v2938 = vunpack.c.h.b16 %v806
        %v2939 = vunpack.c.l.b16 %v807
        %v2940 = vunpack.c.h.b16 %v807
        %v2941 = vunpack.c.l.b16 %v808
        %v2942 = vunpack.c.h.b16 %v808
        %v2943 = vunpack.c.l.b16 %v809
        %v2944 = vunpack.c.h.b16 %v809
        %v2945 = vunpack.c.l.b16 %v810
        %v2946 = vunpack.c.h.b16 %v810
        %v2947 = vunpack.c.l.b16 %v811
        %v2948 = vunpack.c.h.b16 %v811
        %v2949 = vunpack.c.l.b16 %v812
        %v2950 = vunpack.c.h.b16 %v812
        %v2951 = vunpack.c.l.b16 %v813
        %v2952 = vunpack.c.h.b16 %v813
        %v2953 = vunpack.c.l.b16 %v814
        %v2954 = vunpack.c.h.b16 %v814
        %v2955 = vunpack.c.l.b16 %v815
        %v2956 = vunpack.c.h.b16 %v815
        %v2957 = vunpack.c.l.b16 %v816
        %v2958 = vunpack.c.h.b16 %v816
        %v2959 = vunpack.c.l.b16 %v817
        %v2960 = vunpack.c.h.b16 %v817
        %v2961 = vunpack.c.l.b16 %v818
        %v2962 = vunpack.c.h.b16 %v818
        %v2963 = vunpack.c.l.b16 %v819
        %v2964 = vunpack.c.h.b16 %v819
        %v2965 = vunpack.c.l.b16 %v820
        %v2966 = vunpack.c.h.b16 %v820
        %v2967 = vunpack.c.l.b16 %v821
        %v2968 = vunpack.c.h.b16 %v821
        %v2969 = vunpack.c.l.b16 %v822
        %v2970 = vunpack.c.h.b16 %v822
        %v2971 = vunpack.c.l.b16 %v823
        %v2972 = vunpack.c.h.b16 %v823
        %v2973 = vunpack.c.l.b16 %v824
        %v2974 = vunpack.c.h.b16 %v824
        %v2975 = vunpack.c.l.b16 %v825
        %v2976 = vunpack.c.h.b16 %v825
        %v2977 = vunpack.c.l.b16 %v826
        %v2978 = vunpack.c.h.b16 %v826
        %v2979 = vunpack.c.l.b16 %v827
        %v2980 = vunpack.c.h.b16 %v827
        %v2981 = vunpack.c.l.b16 %v828
        %v2982 = vunpack.c.h.b16 %v828
        %v2983 = vunpack.c.l.b16 %v829
        %v2984 = vunpack.c.h.b16 %v829
        %v2985 = vunpack.c.l.b16 %v830
        %v2986 = vunpack.c.h.b16 %v830
        %v2987 = vunpack.c.l.b16 %v831
        %v2988 = vunpack.c.h.b16 %v831
        %v2989 = vunpack.c.l.b16 %v832
        %v2990 = vunpack.c.h.b16 %v832
        %v2991 = vunpack.c.l.b16 %v833
        %v2992 = vunpack.c.h.b16 %v833
        %v2993 = vunpack.c.l.b16 %v834
        %v2994 = vunpack.c.h.b16 %v834
        %v2995 = vunpack.c.l.b16 %v835
        %v2996 = vunpack.c.h.b16 %v835
        %v2997 = vunpack.c.l.b16 %v836
        %v2998 = vunpack.c.h.b16 %v836
        %v2999 = vunpack.c.l.b16 %v837
        %v3000 = vunpack.c.h.b16 %v837
        %v3001 = vunpack.c.l.b16 %v838
        %v3002 = vunpack.c.h.b16 %v838
        %v3003 = vunpack.c.l.b16 %v839
        %v3004 = vunpack.c.h.b16 %v839
        %v3005 = vunpack.c.l.b16 %v840
        %v3006 = vunpack.c.h.b16 %v840
        %v3007 = vunpack.c.l.b16 %v841
        %v3008 = vunpack.c.h.b16 %v841
        %v3009 = vunpack.c.l.b16 %v842
        %v3010 = vunpack.c.h.b16 %v842
        %v3011 = vunpack.c.l.b16 %v843
        %v3012 = vunpack.c.h.b16 %v843
        %v3013 = vunpack.c.l.b16 %v844
        %v3014 = vunpack.c.h.b16 %v844
        %v3015 = vunpack.c.l.b16 %v845
        %v3016 = vunpack.c.h.b16 %v845
        %v3017 = vunpack.c.l.b16 %v846
        %v3018 = vunpack.c.h.b16 %v846
        %v3019 = vunpack.c.l.b16 %v847
        %v3020 = vunpack.c.h.b16 %v847
        %v3021 = vunpack.c.l.b16 %v848
        %v3022 = vunpack.c.h.b16 %v848
        %v3023 = vunpack.c.l.b16 %v849
        %v3024 = vunpack.c.h.b16 %v849
        %v3025 = vunpack.c.l.b16 %v850
        %v3026 = vunpack.c.h.b16 %v850
        %v3027 = vunpack.c.l.b16 %v851
        %v3028 = vunpack.c.h.b16 %v851
        %v3029 = vunpack.c.l.b16 %v852
        %v3030 = vunpack.c.h.b16 %v852
        %v3031 = vunpack.c.l.b16 %v853
        %v3032 = vunpack.c.h.b16 %v853
        %v3033 = vunpack.c.l.b16 %v854
        %v3034 = vunpack.c.h.b16 %v854
        %v3035 = vunpack.c.l.b16 %v855
        %v3036 = vunpack.c.h.b16 %v855
        %v3037 = vunpack.c.l.b16 %v856
        %v3038 = vunpack.c.h.b16 %v856
        %v3039 = vunpack.c.l.b16 %v857
        %v3040 = vunpack.c.h.b16 %v857
        %v3041 = vunpack.c.l.b16 %v858
        %v3042 = vunpack.c.h.b16 %v858
        %v3043 = vunpack.c.l.b16 %v859
        %v3044 = vunpack.c.h.b16 %v859
        %v3045 = vunpack.c.l.b16 %v860
        %v3046 = vunpack.c.h.b16 %v860
        %v3047 = vunpack.c.l.b16 %v861
        %v3048 = vunpack.c.h.b16 %v861
        %v3049 = vunpack.c.l.b16 %v862
        %v3050 = vunpack.c.h.b16 %v862
        %v3051 = vunpack.c.l.b16 %v863
        %v3052 = vunpack.c.h.b16 %v863
        %v3053 = vunpack.c.l.b16 %v864
        %v3054 = vunpack.c.h.b16 %v864
        %v3055 = vunpack.c.l.b16 %v865
        %v3056 = vunpack.c.h.b16 %v865
        %v3057 = vunpack.c.l.b16 %v866
        %v3058 = vunpack.c.h.b16 %v866
        %v3059 = vunpack.c.l.b16 %v867
        %v3060 = vunpack.c.h.b16 %v867
        %v3061 = vunpack.c.l.b16 %v868
        %v3062 = vunpack.c.h.b16 %v868
        %v3063 = vunpack.c.l.b16 %v869
        %v3064 = vunpack.c.h.b16 %v869
        %v3065 = vunpack.c.l.b16 %v870
        %v3066 = vunpack.c.h.b16 %v870
        %v3067 = vunpack.c.l.b16 %v871
        %v3068 = vunpack.c.h.b16 %v871
        %v3069 = vunpack.c.l.b16 %v872
        %v3070 = vunpack.c.h.b16 %v872
        %v3071 = vunpack.c.l.b16 %v873
        %v3072 = vunpack.c.h.b16 %v873
        %v3073 = vunpack.c.l.b16 %v874
        %v3074 = vunpack.c.h.b16 %v874
        %v3075 = vunpack.c.l.b16 %v875
        %v3076 = vunpack.c.h.b16 %v875
        %v3077 = vunpack.c.l.b16 %v876
        %v3078 = vunpack.c.h.b16 %v876
        %v3079 = vunpack.c.l.b16 %v877
        %v3080 = vunpack.c.h.b16 %v877
        %v3081 = vunpack.c.l.b16 %v878
        %v3082 = vunpack.c.h.b16 %v878
        %v3083 = vunpack.c.l.b16 %v879
        %v3084 = vunpack.c.h.b16 %v879
        %v3085 = vunpack.c.l.b16 %v880
        %v3086 = vunpack.c.h.b16 %v880
        %v3087 = vunpack.c.l.b16 %v881
        %v3088 = vunpack.c.h.b16 %v881
        %v3089 = vunpack.c.l.b16 %v882
        %v3090 = vunpack.c.h.b16 %v882
        %v3091 = vunpack.c.l.b16 %v883
        %v3092 = vunpack.c.h.b16 %v883
        %v3093 = vunpack.c.l.b16 %v884
        %v3094 = vunpack.c.h.b16 %v884
        %v3095 = vunpack.c.l.b16 %v885
        %v3096 = vunpack.c.h.b16 %v885
        %v3097 = vunpack.c.l.b16 %v886
        %v3098 = vunpack.c.h.b16 %v886
        %v3099 = vunpack.c.l.b16 %v887
        %v3100 = vunpack.c.h.b16 %v887
        %v3101 = vunpack.c.l.b16 %v888
        %v3102 = vunpack.c.h.b16 %v888
        %v3103 = vunpack.c.l.b16 %v889
        %v3104 = vunpack.c.h.b16 %v889
        %v3105 = vunpack.c.l.b16 %v890
        %v3106 = vunpack.c.h.b16 %v890
        %v3107 = vunpack.c.l.b16 %v891
        %v3108 = vunpack.c.h.b16 %v891
        %v3109 = vunpack.c.l.b16 %v892
        %v3110 = vunpack.c.h.b16 %v892
        %v3111 = vunpack.c.l.b16 %v893
        %v3112 = vunpack.c.h.b16 %v893
        %v3113 = vunpack.c.l.b16 %v894
        %v3114 = vunpack.c.h.b16 %v894
        %v3115 = vunpack.c.l.b16 %v895
        %v3116 = vunpack.c.h.b16 %v895
        %v3117 = vunpack.c.l.b16 %v896
        %v3118 = vunpack.c.h.b16 %v896
        %v3119 = vunpack.c.l.b16 %v897
        %v3120 = vunpack.c.h.b16 %v897
        %v3121 = vunpack.c.l.b16 %v898
        %v3122 = vunpack.c.h.b16 %v898
        %v3123 = vunpack.c.l.b16 %v899
        %v3124 = vunpack.c.h.b16 %v899
        %v3125 = vunpack.c.l.b16 %v900
        %v3126 = vunpack.c.h.b16 %v900
        %v3127 = vunpack.c.l.b16 %v901
        %v3128 = vunpack.c.h.b16 %v901
        %v3129 = vunpack.c.l.b16 %v902
        %v3130 = vunpack.c.h.b16 %v902
        %v3131 = vunpack.c.l.b16 %v903
        %v3132 = vunpack.c.h.b16 %v903
        %v3133 = vunpack.c.l.b16 %v904
        %v3134 = vunpack.c.h.b16 %v904
        %v3135 = vunpack.c.l.b16 %v905
        %v3136 = vunpack.c.h.b16 %v905
        %v3137 = vunpack.c.l.b16 %v906
        %v3138 = vunpack.c.h.b16 %v906
        %v3139 = vunpack.c.l.b16 %v907
        %v3140 = vunpack.c.h.b16 %v907
        %v3141 = vunpack.c.l.b16 %v908
        %v3142 = vunpack.c.h.b16 %v908
        %v3143 = vunpack.c.l.b16 %v909
        %v3144 = vunpack.c.h.b16 %v909
        %v3145 = vunpack.c.l.b16 %v910
        %v3146 = vunpack.c.h.b16 %v910
        %v3147 = vunpack.c.l.b16 %v911
        %v3148 = vunpack.c.h.b16 %v911
        %v3149 = vunpack.c.l.b16 %v912
        %v3150 = vunpack.c.h.b16 %v912
        %v3151 = vunpack.c.l.b16 %v913
        %v3152 = vunpack.c.h.b16 %v913
        %v3153 = vunpack.c.l.b16 %v914
        %v3154 = vunpack.c.h.b16 %v914
        %v3155 = vunpack.c.l.b16 %v915
        %v3156 = vunpack.c.h.b16 %v915
        %v3157 = vunpack.c.l.b16 %v916
        %v3158 = vunpack.c.h.b16 %v916
        %v3159 = vunpack.c.l.b16 %v917
        %v3160 = vunpack.c.h.b16 %v917
        %v3161 = vunpack.c.l.b16 %v918
        %v3162 = vunpack.c.h.b16 %v918
        %v3163 = vunpack.c.l.b16 %v919
        %v3164 = vunpack.c.h.b16 %v919
        %v3165 = vunpack.c.l.b16 %v920
        %v3166 = vunpack.c.h.b16 %v920
        %v3167 = vunpack.c.l.b16 %v921
        %v3168 = vunpack.c.h.b16 %v921
        %v3169 = vunpack.c.l.b16 %v922
        %v3170 = vunpack.c.h.b16 %v922
        %v3171 = vunpack.c.l.b16 %v923
        %v3172 = vunpack.c.h.b16 %v923
        %v3173 = vunpack.c.l.b16 %v924
        %v3174 = vunpack.c.h.b16 %v924
        %v3175 = vunpack.c.l.b16 %v925
        %v3176 = vunpack.c.h.b16 %v925
        %v3177 = vunpack.c.l.b16 %v926
        %v3178 = vunpack.c.h.b16 %v926
        %v3179 = vunpack.c.l.b16 %v927
        %v3180 = vunpack.c.h.b16 %v927
        %v3181 = vunpack.c.l.b16 %v928
        %v3182 = vunpack.c.h.b16 %v928
        %v3183 = vunpack.c.l.b16 %v929
        %v3184 = vunpack.c.h.b16 %v929
        %v3185 = vunpack.c.l.b16 %v930
        %v3186 = vunpack.c.h.b16 %v930
        %v3187 = vunpack.c.l.b16 %v931
        %v3188 = vunpack.c.h.b16 %v931
        %v3189 = vunpack.c.l.b16 %v932
        %v3190 = vunpack.c.h.b16 %v932
        %v3191 = vunpack.c.l.b16 %v933
        %v3192 = vunpack.c.h.b16 %v933
        %v3193 = vunpack.c.l.b16 %v934
        %v3194 = vunpack.c.h.b16 %v934
        %v3195 = vunpack.c.l.b16 %v935
        %v3196 = vunpack.c.h.b16 %v935
        %v3197 = vunpack.c.l.b16 %v936
        %v3198 = vunpack.c.h.b16 %v936
        %v3199 = vunpack.c.l.b16 %v937
        %v3200 = vunpack.c.h.b16 %v937
        %v3201 = vunpack.c.l.b16 %v938
        %v3202 = vunpack.c.h.b16 %v938
        %v3203 = vunpack.c.l.b16 %v939
        %v3204 = vunpack.c.h.b16 %v939
        %v3205 = vunpack.c.l.b16 %v940
        %v3206 = vunpack.c.h.b16 %v940
        %v3207 = vunpack.c.l.b16 %v941
        %v3208 = vunpack.c.h.b16 %v941
        %v3209 = vunpack.c.l.b16 %v942
        %v3210 = vunpack.c.h.b16 %v942
        %v3211 = vunpack.c.l.b16 %v943
        %v3212 = vunpack.c.h.b16 %v943
        %v3213 = vunpack.c.l.b16 %v944
        %v3214 = vunpack.c.h.b16 %v944
        %v3215 = vunpack.c.l.b16 %v945
        %v3216 = vunpack.c.h.b16 %v945
        %v3217 = vunpack.c.l.b16 %v946
        %v3218 = vunpack.c.h.b16 %v946
        %v3219 = vunpack.c.l.b16 %v947
        %v3220 = vunpack.c.h.b16 %v947
        %v3221 = vunpack.c.l.b16 %v948
        %v3222 = vunpack.c.h.b16 %v948
        %v3223 = vunpack.c.l.b16 %v949
        %v3224 = vunpack.c.h.b16 %v949
        %v3225 = vunpack.c.l.b16 %v950
        %v3226 = vunpack.c.h.b16 %v950
        %v3227 = vunpack.c.l.b16 %v951
        %v3228 = vunpack.c.h.b16 %v951
        %v3229 = vunpack.c.l.b16 %v952
        %v3230 = vunpack.c.h.b16 %v952
        %v3231 = vunpack.c.l.b16 %v953
        %v3232 = vunpack.c.h.b16 %v953
        %v3233 = vunpack.c.l.b16 %v954
        %v3234 = vunpack.c.h.b16 %v954
        %v3235 = vunpack.c.l.b16 %v955
        %v3236 = vunpack.c.h.b16 %v955
        %v3237 = vunpack.c.l.b16 %v956
        %v3238 = vunpack.c.h.b16 %v956
        %v3239 = vunpack.c.l.b16 %v957
        %v3240 = vunpack.c.h.b16 %v957
        %v3241 = vunpack.c.l.b16 %v958
        %v3242 = vunpack.c.h.b16 %v958
        %v3243 = vunpack.c.l.b16 %v959
        %v3244 = vunpack.c.h.b16 %v959
        %v3245 = vunpack.c.l.b16 %v960
        %v3246 = vunpack.c.h.b16 %v960
        %v3247 = vunpack.c.l.b16 %v961
        %v3248 = vunpack.c.h.b16 %v961
        %v3249 = vunpack.c.l.b16 %v962
        %v3250 = vunpack.c.h.b16 %v962
        %v3251 = vunpack.c.l.b16 %v963
        %v3252 = vunpack.c.h.b16 %v963
        %v3253 = vunpack.c.l.b16 %v964
        %v3254 = vunpack.c.h.b16 %v964
        %v3255 = vunpack.c.l.b16 %v965
        %v3256 = vunpack.c.h.b16 %v965
        %v3257 = vunpack.c.l.b16 %v966
        %v3258 = vunpack.c.h.b16 %v966
        %v3259 = vunpack.c.l.b16 %v967
        %v3260 = vunpack.c.h.b16 %v967
        %v3261 = vunpack.c.l.b16 %v968
        %v3262 = vunpack.c.h.b16 %v968
        %v3263 = vunpack.c.l.b16 %v969
        %v3264 = vunpack.c.h.b16 %v969
        %v3265 = vunpack.c.l.b16 %v970
        %v3266 = vunpack.c.h.b16 %v970
        %v3267 = vunpack.c.l.b16 %v971
        %v3268 = vunpack.c.h.b16 %v971
        %v3269 = vunpack.c.l.b16 %v972
        %v3270 = vunpack.c.h.b16 %v972
        %v3271 = vunpack.c.l.b16 %v973
        %v3272 = vunpack.c.h.b16 %v973
        %v3273 = vunpack.c.l.b16 %v974
        %v3274 = vunpack.c.h.b16 %v974
        %v3275 = vunpack.c.l.b16 %v975
        %v3276 = vunpack.c.h.b16 %v975
        %v3277 = vunpack.c.l.b16 %v976
        %v3278 = vunpack.c.h.b16 %v976
        %v3279 = vunpack.c.l.b16 %v977
        %v3280 = vunpack.c.h.b16 %v977
        %v3281 = vunpack.c.l.b16 %v978
        %v3282 = vunpack.c.h.b16 %v978
        %v3283 = vunpack.c.l.b16 %v979
        %v3284 = vunpack.c.h.b16 %v979
        %v3285 = vunpack.c.l.b16 %v980
        %v3286 = vunpack.c.h.b16 %v980
        %v3287 = vunpack.c.l.b16 %v981
        %v3288 = vunpack.c.h.b16 %v981
        %v3289 = vunpack.c.l.b16 %v982
        %v3290 = vunpack.c.h.b16 %v982
        %v3291 = vunpack.c.l.b16 %v983
        %v3292 = vunpack.c.h.b16 %v983
        %v3293 = vunpack.c.l.b16 %v984
        %v3294 = vunpack.c.h.b16 %v984
        %v3295 = vunpack.c.l.b16 %v985
        %v3296 = vunpack.c.h.b16 %v985
        %v3297 = vunpack.c.l.b16 %v986
        %v3298 = vunpack.c.h.b16 %v986
        %v3299 = vunpack.c.l.b16 %v987
        %v3300 = vunpack.c.h.b16 %v987
        %v3301 = vunpack.c.l.b16 %v988
        %v3302 = vunpack.c.h.b16 %v988
        %v3303 = vunpack.c.l.b16 %v989
        %v3304 = vunpack.c.h.b16 %v989
        %v3305 = vunpack.c.l.b16 %v990
        %v3306 = vunpack.c.h.b16 %v990
        %v3307 = vunpack.c.l.b16 %v991
        %v3308 = vunpack.c.h.b16 %v991
        %v3309 = vunpack.c.l.b16 %v992
        %v3310 = vunpack.c.h.b16 %v992
        %v3311 = vunpack.c.l.b16 %v993
        %v3312 = vunpack.c.h.b16 %v993
        %v3313 = vunpack.c.l.b16 %v994
        %v3314 = vunpack.c.h.b16 %v994
        %v3315 = vunpack.c.l.b16 %v995
        %v3316 = vunpack.c.h.b16 %v995
        %v3317 = vunpack.c.l.b16 %v996
        %v3318 = vunpack.c.h.b16 %v996
        %v3319 = vunpack.c.l.b16 %v997
        %v3320 = vunpack.c.h.b16 %v997
        %v3321 = vunpack.c.l.b16 %v998
        %v3322 = vunpack.c.h.b16 %v998
        %v3323 = vunpack.c.l.b16 %v999
        %v3324 = vunpack.c.h.b16 %v999
        %v3325 = vunpack.c.l.b16 %v1000
        %v3326 = vunpack.c.h.b16 %v1000
        %v3327 = vunpack.c.l.b16 %v1001
        %v3328 = vunpack.c.h.b16 %v1001
        %v3329 = vunpack.c.l.b16 %v1002
        %v3330 = vunpack.c.h.b16 %v1002
        %v3331 = vunpack.c.l.b16 %v1003
        %v3332 = vunpack.c.h.b16 %v1003
        %v3333 = vunpack.c.l.b16 %v1004
        %v3334 = vunpack.c.h.b16 %v1004
        %v3335 = vunpack.c.l.b16 %v1005
        %v3336 = vunpack.c.h.b16 %v1005
        %v3337 = vunpack.c.l.b16 %v1006
        %v3338 = vunpack.c.h.b16 %v1006
        %v3339 = vunpack.c.l.b16 %v1007
        %v3340 = vunpack.c.h.b16 %v1007
        %v3341 = vunpack.c.l.b16 %v1008
        %v3342 = vunpack.c.h.b16 %v1008
        %v3343 = vunpack.c.l.b16 %v1009
        %v3344 = vunpack.c.h.b16 %v1009
        %v3345 = vunpack.c.l.b16 %v1010
        %v3346 = vunpack.c.h.b16 %v1010
        %v3347 = vunpack.c.l.b16 %v1011
        %v3348 = vunpack.c.h.b16 %v1011
        %v3349 = vunpack.c.l.b16 %v1012
        %v3350 = vunpack.c.h.b16 %v1012
        %v3351 = vunpack.c.l.b16 %v1013
        %v3352 = vunpack.c.h.b16 %v1013
        %v3353 = vunpack.c.l.b16 %v1014
        %v3354 = vunpack.c.h.b16 %v1014
        %v3355 = vunpack.c.l.b16 %v1015
        %v3356 = vunpack.c.h.b16 %v1015
        %v3357 = vunpack.c.l.b16 %v1016
        %v3358 = vunpack.c.h.b16 %v1016
        %v3359 = vunpack.c.l.b16 %v1017
        %v3360 = vunpack.c.h.b16 %v1017
        %v3361 = vunpack.c.l.b16 %v1018
        %v3362 = vunpack.c.h.b16 %v1018
        %v3363 = vunpack.c.l.b16 %v1019
        %v3364 = vunpack.c.h.b16 %v1019
        %v3365 = vunpack.c.l.b16 %v1020
        %v3366 = vunpack.c.h.b16 %v1020
        %v3367 = vunpack.c.l.b16 %v1021
        %v3368 = vunpack.c.h.b16 %v1021
        %v3369 = vunpack.c.l.b16 %v1022
        %v3370 = vunpack.c.h.b16 %v1022
        %v3371 = vunpack.c.l.b16 %v1023
        %v3372 = vunpack.c.h.b16 %v1023
        %v3373 = vunpack.c.l.b16 %v1024
        %v3374 = vunpack.c.h.b16 %v1024
        %v3375 = vunpack.c.l.b16 %v1025
        %v3376 = vunpack.c.h.b16 %v1025
        %v3377 = vunpack.c.l.b16 %v1026
        %v3378 = vunpack.c.h.b16 %v1026
        %v3379 = vunpack.c.l.b16 %v1027
        %v3380 = vunpack.c.h.b16 %v1027
        %v3381 = vunpack.c.l.b16 %v1028
        %v3382 = vunpack.c.h.b16 %v1028
        %v3383 = vunpack.c.l.b16 %v1029
        %v3384 = vunpack.c.h.b16 %v1029
        %v3385 = vunpack.c.l.b16 %v1030
        %v3386 = vunpack.c.h.b16 %v1030
        %v3387 = vunpack.c.l.b16 %v1031
        %v3388 = vunpack.c.h.b16 %v1031
        %v3389 = vunpack.c.l.b16 %v1032
        %v3390 = vunpack.c.h.b16 %v1032
        %v3391 = vunpack.c.l.b16 %v1033
        %v3392 = vunpack.c.h.b16 %v1033
        %v3393 = vunpack.c.l.b16 %v1034
        %v3394 = vunpack.c.h.b16 %v1034
        %v3395 = vunpack.c.l.b16 %v1035
        %v3396 = vunpack.c.h.b16 %v1035
        %v3397 = vunpack.c.l.b16 %v1036
        %v3398 = vunpack.c.h.b16 %v1036
        %v3399 = vunpack.c.l.b16 %v1037
        %v3400 = vunpack.c.h.b16 %v1037
        %v3401 = vunpack.c.l.b16 %v1038
        %v3402 = vunpack.c.h.b16 %v1038
        %v3403 = vunpack.c.l.b16 %v1039
        %v3404 = vunpack.c.h.b16 %v1039
        %v3405 = vunpack.c.l.b16 %v1040
        %v3406 = vunpack.c.h.b16 %v1040
        %v3407 = vunpack.c.l.b16 %v1041
        %v3408 = vunpack.c.h.b16 %v1041
        %v3409 = vunpack.c.l.b16 %v1042
        %v3410 = vunpack.c.h.b16 %v1042
        %v3411 = vunpack.c.l.b16 %v1043
        %v3412 = vunpack.c.h.b16 %v1043
        %v3413 = vunpack.c.l.b16 %v1044
        %v3414 = vunpack.c.h.b16 %v1044
        %v3415 = vunpack.c.l.b16 %v1045
        %v3416 = vunpack.c.h.b16 %v1045
        %v3417 = vunpack.c.l.b16 %v1046
        %v3418 = vunpack.c.h.b16 %v1046
        %v3419 = vunpack.c.l.b16 %v1047
        %v3420 = vunpack.c.h.b16 %v1047
        %v3421 = vunpack.c.l.b16 %v1048
        %v3422 = vunpack.c.h.b16 %v1048
        %v3423 = vunpack.c.l.b16 %v1049
        %v3424 = vunpack.c.h.b16 %v1049
        %v3425 = vunpack.c.l.b16 %v1050
        %v3426 = vunpack.c.h.b16 %v1050
        %v3427 = vunpack.c.l.b16 %v1051
        %v3428 = vunpack.c.h.b16 %v1051
        %v3429 = vunpack.c.l.b16 %v1052
        %v3430 = vunpack.c.h.b16 %v1052
        %v3431 = vunpack.c.l.b16 %v1053
        %v3432 = vunpack.c.h.b16 %v1053
        %v3433 = vunpack.c.l.b16 %v1054
        %v3434 = vunpack.c.h.b16 %v1054
        %v3435 = vunpack.c.l.b16 %v1055
        %v3436 = vunpack.c.h.b16 %v1055
        %v3437 = vunpack.c.l.b16 %v1056
        %v3438 = vunpack.c.h.b16 %v1056
        %v3439 = vunpack.c.l.b16 %v1057
        %v3440 = vunpack.c.h.b16 %v1057
        %v3441 = vunpack.c.l.b16 %v1058
        %v3442 = vunpack.c.h.b16 %v1058
        %v3443 = vunpack.c.l.b16 %v1059
        %v3444 = vunpack.c.h.b16 %v1059
        %v3445 = vunpack.c.l.b16 %v1060
        %v3446 = vunpack.c.h.b16 %v1060
        %v3447 = vunpack.c.l.b16 %v1061
        %v3448 = vunpack.c.h.b16 %v1061
        %v3449 = vunpack.c.l.b16 %v1062
        %v3450 = vunpack.c.h.b16 %v1062
        %v3451 = vunpack.c.l.b16 %v1063
        %v3452 = vunpack.c.h.b16 %v1063
        %v3453 = vunpack.c.l.b16 %v1064
        %v3454 = vunpack.c.h.b16 %v1064
        %v3455 = vunpack.c.l.b16 %v1065
        %v3456 = vunpack.c.h.b16 %v1065
        %v3457 = vunpack.c.l.b16 %v1066
        %v3458 = vunpack.c.h.b16 %v1066
        %v3459 = vunpack.c.l.b16 %v1067
        %v3460 = vunpack.c.h.b16 %v1067
        %v3461 = vunpack.c.l.b16 %v1068
        %v3462 = vunpack.c.h.b16 %v1068
        %v3463 = vunpack.c.l.b16 %v1069
        %v3464 = vunpack.c.h.b16 %v1069
        %v3465 = vunpack.c.l.b16 %v1070
        %v3466 = vunpack.c.h.b16 %v1070
        %v3467 = vunpack.c.l.b16 %v1071
        %v3468 = vunpack.c.h.b16 %v1071
        %v3469 = vunpack.c.l.b16 %v1072
        %v3470 = vunpack.c.h.b16 %v1072
        %v3471 = vunpack.c.l.b16 %v1073
        %v3472 = vunpack.c.h.b16 %v1073
        %v3473 = vunpack.c.l.b16 %v1074
        %v3474 = vunpack.c.h.b16 %v1074
        %v3475 = vunpack.c.l.b16 %v1075
        %v3476 = vunpack.c.h.b16 %v1075
        %v3477 = vunpack.c.l.b16 %v1076
        %v3478 = vunpack.c.h.b16 %v1076
        %v3479 = vunpack.c.l.b16 %v1077
        %v3480 = vunpack.c.h.b16 %v1077
        %v3481 = vunpack.c.l.b16 %v1078
        %v3482 = vunpack.c.h.b16 %v1078
        %v3483 = vunpack.c.l.b16 %v1079
        %v3484 = vunpack.c.h.b16 %v1079
        %v3485 = vunpack.c.l.b16 %v1080
        %v3486 = vunpack.c.h.b16 %v1080
        %v3487 = vunpack.c.l.b16 %v1081
        %v3488 = vunpack.c.h.b16 %v1081
        %v3489 = vunpack.c.l.b16 %v1082
        %v3490 = vunpack.c.h.b16 %v1082
        %v3491 = vunpack.c.l.b16 %v1083
        %v3492 = vunpack.c.h.b16 %v1083
        %v3493 = vunpack.c.l.b16 %v1084
        %v3494 = vunpack.c.h.b16 %v1084
        %v3495 = vunpack.c.l.b16 %v1085
        %v3496 = vunpack.c.h.b16 %v1085
        %v3497 = vunpack.c.l.b16 %v1086
        %v3498 = vunpack.c.h.b16 %v1086
        %v3499 = vunpack.c.l.b16 %v1087
        %v3500 = vunpack.c.h.b16 %v1087
        %v3501 = vunpack.c.l.b16 %v1088
        %v3502 = vunpack.c.h.b16 %v1088
        %v3503 = vunpack.c.l.b16 %v1089
        %v3504 = vunpack.c.h.b16 %v1089
        %v3505 = vunpack.c.l.b16 %v1090
        %v3506 = vunpack.c.h.b16 %v1090
        %v3507 = vunpack.c.l.b16 %v1091
        %v3508 = vunpack.c.h.b16 %v1091
        %v3509 = vunpack.c.l.b16 %v1092
        %v3510 = vunpack.c.h.b16 %v1092
        %v3511 = vunpack.c.l.b16 %v1093
        %v3512 = vunpack.c.h.b16 %v1093
        %v3513 = vunpack.c.l.b16 %v1094
        %v3514 = vunpack.c.h.b16 %v1094
        %v3515 = vunpack.c.l.b16 %v1095
        %v3516 = vunpack.c.h.b16 %v1095
        %v3517 = vunpack.c.l.b16 %v1096
        %v3518 = vunpack.c.h.b16 %v1096
        %v3519 = vunpack.c.l.b16 %v1097
        %v3520 = vunpack.c.h.b16 %v1097
        %v3521 = vunpack.c.l.b16 %v1098
        %v3522 = vunpack.c.h.b16 %v1098
        %v3523 = vunpack.c.l.b16 %v1099
        %v3524 = vunpack.c.h.b16 %v1099
        %v3525 = vunpack.c.l.b16 %v1100
        %v3526 = vunpack.c.h.b16 %v1100
        %v3527 = vunpack.c.l.b16 %v1101
        %v3528 = vunpack.c.h.b16 %v1101
        %v3529 = vunpack.c.l.b16 %v1102
        %v3530 = vunpack.c.h.b16 %v1102
        %v3531 = vunpack.c.l.b16 %v1103
        %v3532 = vunpack.c.h.b16 %v1103
        %v3533 = vunpack.c.l.b16 %v1104
        %v3534 = vunpack.c.h.b16 %v1104
        %v3535 = vunpack.c.l.b16 %v1105
        %v3536 = vunpack.c.h.b16 %v1105
        %v3537 = vunpack.c.l.b16 %v1106
        %v3538 = vunpack.c.h.b16 %v1106
        %v3539 = vunpack.c.l.b16 %v1107
        %v3540 = vunpack.c.h.b16 %v1107
        %v3541 = vunpack.c.l.b16 %v1108
        %v3542 = vunpack.c.h.b16 %v1108
        %v3543 = vunpack.c.l.b16 %v1109
        %v3544 = vunpack.c.h.b16 %v1109
        %v3545 = vunpack.c.l.b16 %v1110
        %v3546 = vunpack.c.h.b16 %v1110
        %v3547 = vunpack.c.l.b16 %v1111
        %v3548 = vunpack.c.h.b16 %v1111
        %v3549 = vunpack.c.l.b16 %v1112
        %v3550 = vunpack.c.h.b16 %v1112
        %v3551 = vunpack.c.l.b16 %v1113
        %v3552 = vunpack.c.h.b16 %v1113
        %v3553 = vunpack.c.l.b16 %v1114
        %v3554 = vunpack.c.h.b16 %v1114
        %v3555 = vunpack.c.l.b16 %v1115
        %v3556 = vunpack.c.h.b16 %v1115
        %v3557 = vunpack.c.l.b16 %v1116
        %v3558 = vunpack.c.h.b16 %v1116
        %v3559 = vunpack.c.l.b16 %v1117
        %v3560 = vunpack.c.h.b16 %v1117
        %v3561 = vunpack.c.l.b16 %v1118
        %v3562 = vunpack.c.h.b16 %v1118
        %v3563 = vunpack.c.l.b16 %v1119
        %v3564 = vunpack.c.h.b16 %v1119
        %v3565 = vunpack.c.l.b16 %v1120
        %v3566 = vunpack.c.h.b16 %v1120
        %v3567 = vunpack.c.l.b16 %v1121
        %v3568 = vunpack.c.h.b16 %v1121
        %v3569 = vunpack.c.l.b16 %v1122
        %v3570 = vunpack.c.h.b16 %v1122
        %v3571 = vunpack.c.l.b16 %v1123
        %v3572 = vunpack.c.h.b16 %v1123
        %v3573 = vunpack.c.l.b16 %v1124
        %v3574 = vunpack.c.h.b16 %v1124
        %v3575 = vunpack.c.l.b16 %v1125
        %v3576 = vunpack.c.h.b16 %v1125
        %v3577 = vunpack.c.l.b16 %v1126
        %v3578 = vunpack.c.h.b16 %v1126
        %v3579 = vunpack.c.l.b16 %v1127
        %v3580 = vunpack.c.h.b16 %v1127
        %v3581 = vunpack.c.l.b16 %v1128
        %v3582 = vunpack.c.h.b16 %v1128
        %v3583 = vunpack.c.l.b16 %v1129
        %v3584 = vunpack.c.h.b16 %v1129
        %v3585 = vunpack.c.l.b16 %v1130
        %v3586 = vunpack.c.h.b16 %v1130
        %v3587 = vunpack.c.l.b16 %v1131
        %v3588 = vunpack.c.h.b16 %v1131
        %v3589 = vunpack.c.l.b16 %v1132
        %v3590 = vunpack.c.h.b16 %v1132
        %v3591 = vunpack.c.l.b16 %v1133
        %v3592 = vunpack.c.h.b16 %v1133
        %v3593 = vunpack.c.l.b16 %v1134
        %v3594 = vunpack.c.h.b16 %v1134
        %v3595 = vunpack.c.l.b16 %v1135
        %v3596 = vunpack.c.h.b16 %v1135
        %v3597 = vunpack.c.l.b16 %v1136
        %v3598 = vunpack.c.h.b16 %v1136
        %v3599 = vunpack.c.l.b16 %v1137
        %v3600 = vunpack.c.h.b16 %v1137
        %v3601 = vunpack.c.l.b16 %v1138
        %v3602 = vunpack.c.h.b16 %v1138
        %v3603 = vunpack.c.l.b16 %v1139
        %v3604 = vunpack.c.h.b16 %v1139
        %v3605 = vunpack.c.l.b16 %v1140
        %v3606 = vunpack.c.h.b16 %v1140
        %v3607 = vunpack.c.l.b16 %v1141
        %v3608 = vunpack.c.h.b16 %v1141
        %v3609 = vunpack.c.l.b16 %v1142
        %v3610 = vunpack.c.h.b16 %v1142
        %v3611 = vunpack.c.l.b16 %v1143
        %v3612 = vunpack.c.h.b16 %v1143
        %v3613 = vunpack.c.l.b16 %v1144
        %v3614 = vunpack.c.h.b16 %v1144
        %v3615 = vunpack.c.l.b16 %v1145
        %v3616 = vunpack.c.h.b16 %v1145
        %v3617 = vunpack.c.l.b16 %v1146
        %v3618 = vunpack.c.h.b16 %v1146
        %v3619 = vunpack.c.l.b16 %v1147
        %v3620 = vunpack.c.h.b16 %v1147
        %v3621 = vunpack.c.l.b16 %v1148
        %v3622 = vunpack.c.h.b16 %v1148
        %v3623 = vunpack.c.l.b16 %v1149
        %v3624 = vunpack.c.h.b16 %v1149
        %v3625 = vunpack.c.l.b16 %v1150
        %v3626 = vunpack.c.h.b16 %v1150
        %v3627 = vunpack.c.l.b16 %v1151
        %v3628 = vunpack.c.h.b16 %v1151
        %v3629 = vunpack.c.l.b16 %v1152
        %v3630 = vunpack.c.h.b16 %v1152
        %v3631 = vunpack.c.l.b16 %v1153
        %v3632 = vunpack.c.h.b16 %v1153
        %v3633 = vunpack.c.l.b16 %v1154
        %v3634 = vunpack.c.h.b16 %v1154
        %v3635 = vunpack.c.l.b16 %v1155
        %v3636 = vunpack.c.h.b16 %v1155
        %v3637 = vunpack.c.l.b16 %v1156
        %v3638 = vunpack.c.h.b16 %v1156
        %v3639 = vunpack.c.l.b16 %v1157
        %v3640 = vunpack.c.h.b16 %v1157
        %v3641 = vunpack.c.l.b16 %v1158
        %v3642 = vunpack.c.h.b16 %v1158
        %v3643 = vunpack.c.l.b16 %v1159
        %v3644 = vunpack.c.h.b16 %v1159
        %v3645 = vunpack.c.l.b16 %v1160
        %v3646 = vunpack.c.h.b16 %v1160
        %v3647 = vunpack.c.l.b16 %v1161
        %v3648 = vunpack.c.h.b16 %v1161
        %v3649 = vunpack.c.l.b16 %v1162
        %v3650 = vunpack.c.h.b16 %v1162
        %v3651 = vunpack.c.l.b16 %v1163
        %v3652 = vunpack.c.h.b16 %v1163
        %v3653 = vunpack.c.l.b16 %v1164
        %v3654 = vunpack.c.h.b16 %v1164
        %v3655 = vunpack.c.l.b16 %v1165
        %v3656 = vunpack.c.h.b16 %v1165
        %v3657 = vunpack.c.l.b16 %v1166
        %v3658 = vunpack.c.h.b16 %v1166
        %v3659 = vunpack.c.l.b16 %v1167
        %v3660 = vunpack.c.h.b16 %v1167
        %v3661 = vunpack.c.l.b16 %v1168
        %v3662 = vunpack.c.h.b16 %v1168
        %v3663 = vunpack.c.l.b16 %v1169
        %v3664 = vunpack.c.h.b16 %v1169
        %v3665 = vunpack.c.l.b16 %v1170
        %v3666 = vunpack.c.h.b16 %v1170
        %v3667 = vunpack.c.l.b16 %v1171
        %v3668 = vunpack.c.h.b16 %v1171
        %v3669 = vunpack.c.l.b16 %v1172
        %v3670 = vunpack.c.h.b16 %v1172
        %v3671 = vunpack.c.l.b16 %v1173
        %v3672 = vunpack.c.h.b16 %v1173
        %v3673 = vunpack.c.l.b16 %v1174
        %v3674 = vunpack.c.h.b16 %v1174
        %v3675 = vunpack.c.l.b16 %v1175
        %v3676 = vunpack.c.h.b16 %v1175
        %v3677 = vunpack.c.l.b16 %v1176
        %v3678 = vunpack.c.h.b16 %v1176
        %v3679 = vunpack.c.l.b16 %v1177
        %v3680 = vunpack.c.h.b16 %v1177
        %v3681 = vunpack.c.l.b16 %v1178
        %v3682 = vunpack.c.h.b16 %v1178
        %v3683 = vunpack.c.l.b16 %v1179
        %v3684 = vunpack.c.h.b16 %v1179
        %v3685 = vunpack.c.l.b16 %v1180
        %v3686 = vunpack.c.h.b16 %v1180
        %v3687 = vunpack.c.l.b16 %v1181
        %v3688 = vunpack.c.h.b16 %v1181
        %v3689 = vunpack.c.l.b16 %v1182
        %v3690 = vunpack.c.h.b16 %v1182
        %v3691 = vunpack.c.l.b16 %v1183
        %v3692 = vunpack.c.h.b16 %v1183
        %v3693 = vunpack.c.l.b16 %v1184
        %v3694 = vunpack.c.h.b16 %v1184
        %v3695 = vunpack.c.l.b16 %v1185
        %v3696 = vunpack.c.h.b16 %v1185
        %v3697 = vunpack.c.l.b16 %v1186
        %v3698 = vunpack.c.h.b16 %v1186
        %v3699 = vunpack.c.l.b16 %v1187
        %v3700 = vunpack.c.h.b16 %v1187
        %v3701 = vunpack.c.l.b16 %v1188
        %v3702 = vunpack.c.h.b16 %v1188
        %v3703 = vunpack.c.l.b16 %v1189
        %v3704 = vunpack.c.h.b16 %v1189
        %v3705 = vunpack.c.l.b16 %v1190
        %v3706 = vunpack.c.h.b16 %v1190
        %v3707 = vunpack.c.l.b16 %v1191
        %v3708 = vunpack.c.h.b16 %v1191
        %v3709 = vunpack.c.l.b16 %v1192
        %v3710 = vunpack.c.h.b16 %v1192
        %v3711 = vunpack.c.l.b16 %v1193
        %v3712 = vunpack.c.h.b16 %v1193
        %v3713 = vunpack.c.l.b16 %v1194
        %v3714 = vunpack.c.h.b16 %v1194
        %v3715 = vunpack.c.l.b16 %v1195
        %v3716 = vunpack.c.h.b16 %v1195
        %v3717 = vunpack.c.l.b16 %v1196
        %v3718 = vunpack.c.h.b16 %v1196
        %v3719 = vunpack.c.l.b16 %v1197
        %v3720 = vunpack.c.h.b16 %v1197
        %v3721 = vunpack.c.l.b16 %v1198
        %v3722 = vunpack.c.h.b16 %v1198
        %v3723 = vunpack.c.l.b16 %v1199
        %v3724 = vunpack.c.h.b16 %v1199
        %v3725 = vunpack.c.l.b16 %v1200
        %v3726 = vunpack.c.h.b16 %v1200
        %v3727 = vunpack.c.l.b16 %v1201
        %v3728 = vunpack.c.h.b16 %v1201
        %v3729 = vunpack.c.l.b16 %v1202
        %v3730 = vunpack.c.h.b16 %v1202
        %v3731 = vunpack.c.l.b16 %v1203
        %v3732 = vunpack.c.h.b16 %v1203
        %v3733 = vunpack.c.l.b16 %v1204
        %v3734 = vunpack.c.h.b16 %v1204
        %v3735 = vunpack.c.l.b16 %v1205
        %v3736 = vunpack.c.h.b16 %v1205
        %v3737 = vunpack.c.l.b16 %v1206
        %v3738 = vunpack.c.h.b16 %v1206
        %v3739 = vunpack.c.l.b16 %v1207
        %v3740 = vunpack.c.h.b16 %v1207
        %v3741 = vunpack.c.l.b16 %v1208
        %v3742 = vunpack.c.h.b16 %v1208
        %v3743 = vunpack.c.l.b16 %v1209
        %v3744 = vunpack.c.h.b16 %v1209
        %v3745 = vunpack.c.l.b16 %v1210
        %v3746 = vunpack.c.h.b16 %v1210
        %v3747 = vunpack.c.l.b16 %v1211
        %v3748 = vunpack.c.h.b16 %v1211
        %v3749 = vunpack.c.l.b16 %v1212
        %v3750 = vunpack.c.h.b16 %v1212
        %v3751 = vunpack.c.l.b16 %v1213
        %v3752 = vunpack.c.h.b16 %v1213
        %v3753 = vunpack.c.l.b16 %v1214
        %v3754 = vunpack.c.h.b16 %v1214
        %v3755 = vunpack.c.l.b16 %v1215
        %v3756 = vunpack.c.h.b16 %v1215
        %v3757 = vunpack.c.l.b16 %v1216
        %v3758 = vunpack.c.h.b16 %v1216
        %v3759 = vunpack.c.l.b16 %v1217
        %v3760 = vunpack.c.h.b16 %v1217
        %v3761 = vunpack.c.l.b16 %v1218
        %v3762 = vunpack.c.h.b16 %v1218
        %v3763 = vunpack.c.l.b16 %v1219
        %v3764 = vunpack.c.h.b16 %v1219
        %v3765 = vunpack.c.l.b16 %v1220
        %v3766 = vunpack.c.h.b16 %v1220
        %v3767 = vunpack.c.l.b16 %v1221
        %v3768 = vunpack.c.h.b16 %v1221
        %v3769 = vunpack.c.l.b16 %v1222
        %v3770 = vunpack.c.h.b16 %v1222
        %v3771 = vunpack.c.l.b16 %v1223
        %v3772 = vunpack.c.h.b16 %v1223
        %v3773 = vunpack.c.l.b16 %v1224
        %v3774 = vunpack.c.h.b16 %v1224
        %v3775 = vunpack.c.l.b16 %v1225
        %v3776 = vunpack.c.h.b16 %v1225
        %v3777 = vunpack.c.l.b16 %v1226
        %v3778 = vunpack.c.h.b16 %v1226
        %v3779 = vunpack.c.l.b16 %v1227
        %v3780 = vunpack.c.h.b16 %v1227
        %v3781 = vunpack.c.l.b16 %v1228
        %v3782 = vunpack.c.h.b16 %v1228
        %v3783 = vunpack.c.l.b16 %v1229
        %v3784 = vunpack.c.h.b16 %v1229
        %v3785 = vunpack.c.l.b16 %v1230
        %v3786 = vunpack.c.h.b16 %v1230
        %v3787 = vunpack.c.l.b16 %v1231
        %v3788 = vunpack.c.h.b16 %v1231
        %v3789 = vunpack.c.l.b16 %v1232
        %v3790 = vunpack.c.h.b16 %v1232
        %v3791 = vunpack.c.l.b16 %v1233
        %v3792 = vunpack.c.h.b16 %v1233
        %v3793 = vunpack.c.l.b16 %v1234
        %v3794 = vunpack.c.h.b16 %v1234
        %v3795 = vunpack.c.l.b16 %v1235
        %v3796 = vunpack.c.h.b16 %v1235
        %v3797 = vunpack.c.l.b16 %v1236
        %v3798 = vunpack.c.h.b16 %v1236
        %v3799 = vunpack.c.l.b16 %v1237
        %v3800 = vunpack.c.h.b16 %v1237
        %v3801 = vunpack.c.l.b16 %v1238
        %v3802 = vunpack.c.h.b16 %v1238
        %v3803 = vunpack.c.l.b16 %v1239
        %v3804 = vunpack.c.h.b16 %v1239
        %v3805 = vunpack.c.l.b16 %v1240
        %v3806 = vunpack.c.h.b16 %v1240
        %v3807 = vunpack.c.l.b16 %v1241
        %v3808 = vunpack.c.h.b16 %v1241
        %v3809 = vunpack.c.l.b16 %v1242
        %v3810 = vunpack.c.h.b16 %v1242
        %v3811 = vunpack.c.l.b16 %v1243
        %v3812 = vunpack.c.h.b16 %v1243
        %v3813 = vunpack.c.l.b16 %v1244
        %v3814 = vunpack.c.h.b16 %v1244
        %v3815 = vunpack.c.l.b16 %v1245
        %v3816 = vunpack.c.h.b16 %v1245
        %v3817 = vunpack.c.l.b16 %v1246
        %v3818 = vunpack.c.h.b16 %v1246
        %v3819 = vunpack.c.l.b16 %v1247
        %v3820 = vunpack.c.h.b16 %v1247
        %v3821 = vunpack.c.l.b16 %v1248
        %v3822 = vunpack.c.h.b16 %v1248
        %v3823 = vunpack.c.l.b16 %v1249
        %v3824 = vunpack.c.h.b16 %v1249
        %v3825 = vunpack.c.l.b16 %v1250
        %v3826 = vunpack.c.h.b16 %v1250
        %v3827 = vunpack.c.l.b16 %v1251
        %v3828 = vunpack.c.h.b16 %v1251
        %v3829 = vunpack.c.l.b16 %v1252
        %v3830 = vunpack.c.h.b16 %v1252
        %v3831 = vunpack.c.l.b16 %v1253
        %v3832 = vunpack.c.h.b16 %v1253
        %v3833 = vunpack.c.l.b16 %v1254
        %v3834 = vunpack.c.h.b16 %v1254
        %v3835 = vunpack.c.l.b16 %v1255
        %v3836 = vunpack.c.h.b16 %v1255
        %v3837 = vunpack.c.l.b16 %v1256
        %v3838 = vunpack.c.h.b16 %v1256
        %v3839 = vunpack.c.l.b16 %v1257
        %v3840 = vunpack.c.h.b16 %v1257
        %v3841 = vunpack.c.l.b16 %v1258
        %v3842 = vunpack.c.h.b16 %v1258
        %v3843 = vunpack.c.l.b16 %v1259
        %v3844 = vunpack.c.h.b16 %v1259
        %v3845 = vunpack.c.l.b16 %v1260
        %v3846 = vunpack.c.h.b16 %v1260
        %v3847 = vunpack.c.l.b16 %v1261
        %v3848 = vunpack.c.h.b16 %v1261
        %v3849 = vunpack.c.l.b16 %v1262
        %v3850 = vunpack.c.h.b16 %v1262
        %v3851 = vunpack.c.l.b16 %v1263
        %v3852 = vunpack.c.h.b16 %v1263
        %v3853 = vunpack.c.l.b16 %v1264
        %v3854 = vunpack.c.h.b16 %v1264
        %v3855 = vunpack.c.l.b16 %v1265
        %v3856 = vunpack.c.h.b16 %v1265
        %v3857 = vunpack.c.l.b16 %v1266
        %v3858 = vunpack.c.h.b16 %v1266
        %v3859 = vunpack.c.l.b16 %v1267
        %v3860 = vunpack.c.h.b16 %v1267
        %v3861 = vunpack.c.l.b16 %v1268
        %v3862 = vunpack.c.h.b16 %v1268
        %v3863 = vunpack.c.l.b16 %v1269
        %v3864 = vunpack.c.h.b16 %v1269
        %v3865 = vunpack.c.l.b16 %v1270
        %v3866 = vunpack.c.h.b16 %v1270
        %v3867 = vunpack.c.l.b16 %v1271
        %v3868 = vunpack.c.h.b16 %v1271
        %v3869 = vunpack.c.l.b16 %v1272
        %v3870 = vunpack.c.h.b16 %v1272
        %v3871 = vunpack.c.l.b16 %v1273
        %v3872 = vunpack.c.h.b16 %v1273
        %v3873 = vunpack.c.l.b16 %v1274
        %v3874 = vunpack.c.h.b16 %v1274
        %v3875 = vunpack.c.l.b16 %v1275
        %v3876 = vunpack.c.h.b16 %v1275
        %v3877 = vunpack.c.l.b16 %v1276
        %v3878 = vunpack.c.h.b16 %v1276
        %v3879 = vunpack.c.l.b16 %v1277
        %v3880 = vunpack.c.h.b16 %v1277
        %v3881 = vunpack.c.l.b16 %v1278
        %v3882 = vunpack.c.h.b16 %v1278
        %v3883 = vunpack.c.l.b16 %v1279
        %v3884 = vunpack.c.h.b16 %v1279
        %v3885 = vunpack.c.l.b16 %v1280
        %v3886 = vunpack.c.h.b16 %v1280
        %v3887 = vunpack.c.l.b16 %v1281
        %v3888 = vunpack.c.h.b16 %v1281
        %v3889 = vunpack.c.l.b16 %v1282
        %v3890 = vunpack.c.h.b16 %v1282
        %v3891 = vunpack.c.l.b16 %v1283
        %v3892 = vunpack.c.h.b16 %v1283
        %v3893 = vunpack.c.l.b16 %v1284
        %v3894 = vunpack.c.h.b16 %v1284
        %v3895 = vunpack.c.l.b16 %v1285
        %v3896 = vunpack.c.h.b16 %v1285
        %v3897 = vunpack.c.l.b16 %v1286
        %v3898 = vunpack.c.h.b16 %v1286
        %v3899 = vunpack.c.l.b16 %v1287
        %v3900 = vunpack.c.h.b16 %v1287
        %v3901 = vunpack.c.l.b16 %v1288
        %v3902 = vunpack.c.h.b16 %v1288
        %v3903 = vunpack.c.l.b16 %v1289
        %v3904 = vunpack.c.h.b16 %v1289
        %v3905 = vunpack.c.l.b16 %v1290
        %v3906 = vunpack.c.h.b16 %v1290
        %v3907 = vunpack.c.l.b16 %v1291
        %v3908 = vunpack.c.h.b16 %v1291
        %v3909 = vunpack.c.l.b16 %v1292
        %v3910 = vunpack.c.h.b16 %v1292
        %v3911 = vunpack.c.l.b16 %v1293
        %v3912 = vunpack.c.h.b16 %v1293
        %v3913 = vunpack.c.l.b16 %v1294
        %v3914 = vunpack.c.h.b16 %v1294
        %v3915 = vunpack.c.l.b16 %v1295
        %v3916 = vunpack.c.h.b16 %v1295
        %v3917 = vunpack.c.l.b16 %v1296
        %v3918 = vunpack.c.h.b16 %v1296
        %v3919 = vunpack.c.l.b16 %v1297
        %v3920 = vunpack.c.h.b16 %v1297
        %v3921 = vunpack.c.l.b16 %v1298
        %v3922 = vunpack.c.h.b16 %v1298
        %v3923 = vunpack.c.l.b16 %v1299
        %v3924 = vunpack.c.h.b16 %v1299
        %v3925 = vunpack.c.l.b16 %v1300
        %v3926 = vunpack.c.h.b16 %v1300
        %v3927 = vunpack.c.l.b16 %v1301
        %v3928 = vunpack.c.h.b16 %v1301
        %v3929 = vunpack.c.l.b16 %v1302
        %v3930 = vunpack.c.h.b16 %v1302
        %v3931 = vunpack.c.l.b16 %v1303
        %v3932 = vunpack.c.h.b16 %v1303
        %v3933 = vunpack.c.l.b16 %v1304
        %v3934 = vunpack.c.h.b16 %v1304
        %v3935 = vunpack.c.l.b16 %v1305
        %v3936 = vunpack.c.h.b16 %v1305
        %v3937 = vunpack.c.l.b16 %v1306
        %v3938 = vunpack.c.h.b16 %v1306
        %v3939 = vunpack.c.l.b16 %v1307
        %v3940 = vunpack.c.h.b16 %v1307
        %v3941 = vunpack.c.l.b16 %v1308
        %v3942 = vunpack.c.h.b16 %v1308
        %v3943 = vunpack.c.l.b16 %v1309
        %v3944 = vunpack.c.h.b16 %v1309
        %v3945 = vunpack.c.l.b16 %v1310
        %v3946 = vunpack.c.h.b16 %v1310
        %v3947 = vunpack.c.l.b16 %v1311
        %v3948 = vunpack.c.h.b16 %v1311
        %v3949 = vunpack.c.l.b16 %v1312
        %v3950 = vunpack.c.h.b16 %v1312
        %v3951 = vunpack.c.l.b16 %v1313
        %v3952 = vunpack.c.h.b16 %v1313
        %v3953 = vunpack.c.l.b16 %v1314
        %v3954 = vunpack.c.h.b16 %v1314
        %v3955 = vunpack.c.l.b16 %v1315
        %v3956 = vunpack.c.h.b16 %v1315
        %v3957 = vunpack.c.l.b16 %v1316
        %v3958 = vunpack.c.h.b16 %v1316
        %v3959 = vunpack.c.l.b16 %v1317
        %v3960 = vunpack.c.h.b16 %v1317
        %v3961 = vunpack.c.l.b16 %v1318
        %v3962 = vunpack.c.h.b16 %v1318
        %v3963 = vunpack.c.l.b16 %v1319
        %v3964 = vunpack.c.h.b16 %v1319
        %v3965 = vunpack.c.l.b16 %v1320
        %v3966 = vunpack.c.h.b16 %v1320
        %v3967 = vunpack.c.l.b16 %v1321
        %v3968 = vunpack.c.h.b16 %v1321
        %v3969 = vunpack.c.l.b16 %v1322
        %v3970 = vunpack.c.h.b16 %v1322
        %v3971 = vunpack.c.l.b16 %v1323
        %v3972 = vunpack.c.h.b16 %v1323
        %v3973 = vunpack.c.l.b16 %v1324
        %v3974 = vunpack.c.h.b16 %v1324
        %v3975 = vunpack.c.l.b16 %v1325
        %v3976 = vunpack.c.h.b16 %v1325
        %v3977 = vunpack.c.l.b16 %v1326
        %v3978 = vunpack.c.h.b16 %v1326
        %v3979 = vunpack.c.l.b16 %v1327
        %v3980 = vunpack.c.h.b16 %v1327
        %v3981 = vunpack.c.l.b16 %v1328
        %v3982 = vunpack.c.h.b16 %v1328
        %v3983 = vunpack.c.l.b16 %v1329
        %v3984 = vunpack.c.h.b16 %v1329
        %v3985 = vunpack.c.l.b16 %v1330
        %v3986 = vunpack.c.h.b16 %v1330
        %v3987 = vunpack.c.l.b16 %v1331
        %v3988 = vunpack.c.h.b16 %v1331
        %v3989 = vunpack.c.l.b16 %v1332
        %v3990 = vunpack.c.h.b16 %v1332
        %v3991 = vunpack.c.l.b16 %v1333
        %v3992 = vunpack.c.h.b16 %v1333
        %v3993 = vunpack.c.l.b16 %v1334
        %v3994 = vunpack.c.h.b16 %v1334
        %v3995 = vunpack.c.l.b16 %v1335
        %v3996 = vunpack.c.h.b16 %v1335
        %v3997 = vunpack.c.l.b16 %v1336
        %v3998 = vunpack.c.h.b16 %v1336
        %v3999 = vunpack.c.l.b16 %v1337
        %v4000 = vunpack.c.h.b16 %v1337
        %v4001 = vunpack.c.l.b16 %v1338
        %v4002 = vunpack.c.h.b16 %v1338
        %v4003 = vunpack.c.l.b16 %v1339
        %v4004 = vunpack.c.h.b16 %v1339
        %v4005 = vunpack.c.l.b16 %v1340
        %v4006 = vunpack.c.h.b16 %v1340
        %v4007 = vunpack.c.l.b16 %v1341
        %v4008 = vunpack.c.h.b16 %v1341
        %v4009 = vunpack.c.l.b16 %v1342
        %v4010 = vunpack.c.h.b16 %v1342
        %v4011 = vunpack.c.l.b16 %v1343
        %v4012 = vunpack.c.h.b16 %v1343
        %v4013 = vunpack.c.l.b16 %v1344
        %v4014 = vunpack.c.h.b16 %v1344
        %v4015 = vunpack.c.l.b16 %v1345
        %v4016 = vunpack.c.h.b16 %v1345
        %v4017 = vunpack.c.l.b16 %v1346
        %v4018 = vunpack.c.h.b16 %v1346
        %v4019 = vunpack.c.l.b16 %v1347
        %v4020 = vunpack.c.h.b16 %v1347
        %v4021 = vunpack.c.l.b16 %v1348
        %v4022 = vunpack.c.h.b16 %v1348
        %v4023 = vunpack.c.l.b16 %v1349
        %v4024 = vunpack.c.h.b16 %v1349
        %v4025 = vunpack.c.l.b16 %v1350
        %v4026 = vunpack.c.h.b16 %v1350
        %v4027 = vunpack.c.l.b16 %v1351
        %v4028 = vunpack.c.h.b16 %v1351
        %v4029 = vunpack.c.l.b16 %v1352
        %v4030 = vunpack.c.h.b16 %v1352
        %v4031 = vunpack.c.l.b16 %v1353
        %v4032 = vunpack.c.h.b16 %v1353
        %v4033 = vunpack.c.l.b16 %v1354
        %v4034 = vunpack.c.h.b16 %v1354
        %v4035 = vunpack.c.l.b16 %v1355
        %v4036 = vunpack.c.h.b16 %v1355
        %v4037 = vunpack.c.l.b16 %v1356
        %v4038 = vunpack.c.h.b16 %v1356
        %v4039 = vunpack.c.l.b16 %v1357
        %v4040 = vunpack.c.h.b16 %v1357
        %v4041 = vunpack.c.l.b16 %v1358
        %v4042 = vunpack.c.h.b16 %v1358
        %v4043 = vunpack.c.l.b16 %v1359
        %v4044 = vunpack.c.h.b16 %v1359
        %v4045 = vunpack.c.l.b16 %v1360
        %v4046 = vunpack.c.h.b16 %v1360
        %v4047 = vunpack.c.l.b16 %v1361
        %v4048 = vunpack.c.h.b16 %v1361
        %v4049 = vunpack.c.l.b16 %v1362
        %v4050 = vunpack.c.h.b16 %v1362
        %v4051 = vunpack.c.l.b16 %v1363
        %v4052 = vunpack.c.h.b16 %v1363
        %v4053 = vunpack.c.l.b16 %v1364
        %v4054 = vunpack.c.h.b16 %v1364
        %v4055 = vunpack.c.l.b16 %v1365
        %v4056 = vunpack.c.h.b16 %v1365
        %v4057 = vunpack.c.l.b16 %v1366
        %v4058 = vunpack.c.h.b16 %v1366
        %v4059 = vunpack.c.l.b16 %v1367
        %v4060 = vunpack.c.h.b16 %v1367
        %v4061 = vunpack.c.l.b16 %v1368
        %v4062 = vunpack.c.h.b16 %v1368
        %v4063 = vunpack.c.l.b16 %v1369
        %v4064 = vunpack.c.h.b16 %v1369
        %v4065 = vunpack.c.l.b16 %v1370
        %v4066 = vunpack.c.h.b16 %v1370
        %v4067 = vunpack.c.l.b16 %v1371
        %v4068 = vunpack.c.h.b16 %v1371
        %v4069 = vunpack.c.l.b16 %v1372
        %v4070 = vunpack.c.h.b16 %v1372
        %v4071 = vunpack.c.l.b16 %v1373
        %v4072 = vunpack.c.h.b16 %v1373
        %v4073 = vunpack.c.l.b16 %v1374
        %v4074 = vunpack.c.h.b16 %v1374
        %v4075 = vunpack.c.l.b16 %v1375
        %v4076 = vunpack.c.h.b16 %v1375
        %v4077 = vunpack.c.l.b16 %v1376
        %v4078 = vunpack.c.h.b16 %v1376
        %v4079 = vunpack.c.l.b16 %v1377
        %v4080 = vunpack.c.h.b16 %v1377
        %v4081 = vunpack.c.l.b16 %v1378
        %v4082 = vunpack.c.h.b16 %v1378
        %v4083 = vunpack.c.l.b16 %v1379
        %v4084 = vunpack.c.h.b16 %v1379
        %v4085 = vunpack.c.l.b16 %v1380
        %v4086 = vunpack.c.h.b16 %v1380
        %v4087 = vunpack.c.l.b16 %v1381
        %v4088 = vunpack.c.h.b16 %v1381
        %v4089 = vunpack.c.l.b16 %v1382
        %v4090 = vunpack.c.h.b16 %v1382
        %v4091 = vunpack.c.l.b16 %v1383
        %v4092 = vunpack.c.h.b16 %v1383
        %v4093 = vunpack.c.l.b16 %v1384
        %v4094 = vunpack.c.h.b16 %v1384
        %v4095 = vunpack.c.l.b16 %v1385
        %v4096 = vunpack.c.h.b16 %v1385
        %v4097 = vunpack.c.l.b16 %v1386
        %v4098 = vunpack.c.h.b16 %v1386
        %v4099 = vunpack.c.l.b16 %v1387
        %v4100 = vunpack.c.h.b16 %v1387
        %v4101 = vunpack.c.l.b16 %v1388
        %v4102 = vunpack.c.h.b16 %v1388
        %v4103 = vunpack.c.l.b16 %v1389
        %v4104 = vunpack.c.h.b16 %v1389
        %v4105 = vunpack.c.l.b16 %v1390
        %v4106 = vunpack.c.h.b16 %v1390
        %v4107 = vunpack.c.l.b16 %v1391
        %v4108 = vunpack.c.h.b16 %v1391
        %v4109 = vunpack.c.l.b16 %v1392
        %v4110 = vunpack.c.h.b16 %v1392
        %v4111 = vunpack.c.l.b16 %v1393
        %v4112 = vunpack.c.h.b16 %v1393
        %v4113 = vunpack.c.l.b16 %v1394
        %v4114 = vunpack.c.h.b16 %v1394
        %v4115 = vunpack.c.l.b16 %v1395
        %v4116 = vunpack.c.h.b16 %v1395
        %v4117 = vunpack.c.l.b16 %v1396
        %v4118 = vunpack.c.h.b16 %v1396
        %v4119 = vunpack.c.l.b16 %v1397
        %v4120 = vunpack.c.h.b16 %v1397
        %v4121 = vunpack.c.l.b16 %v1398
        %v4122 = vunpack.c.h.b16 %v1398
        %v4123 = vunpack.c.l.b16 %v1399
        %v4124 = vunpack.c.h.b16 %v1399
        %v4125 = vunpack.c.l.b16 %v1400
        %v4126 = vunpack.c.h.b16 %v1400
        %v4127 = vunpack.c.l.b16 %v1401
        %v4128 = vunpack.c.h.b16 %v1401
        %v4129 = vunpack.c.l.b16 %v1402
        %v4130 = vunpack.c.h.b16 %v1402
        %v4131 = vunpack.c.l.b16 %v1403
        %v4132 = vunpack.c.h.b16 %v1403
        %v4133 = vunpack.c.l.b16 %v1404
        %v4134 = vunpack.c.h.b16 %v1404
        %v4135 = vunpack.c.l.b16 %v1405
        %v4136 = vunpack.c.h.b16 %v1405
        %v4137 = vunpack.c.l.b16 %v1406
        %v4138 = vunpack.c.h.b16 %v1406
        %v4139 = vunpack.c.l.b16 %v1407
        %v4140 = vunpack.c.h.b16 %v1407
        %v4141 = vunpack.c.l.b16 %v1408
        %v4142 = vunpack.c.h.b16 %v1408
        %v4143 = vunpack.c.l.b16 %v1409
        %v4144 = vunpack.c.h.b16 %v1409
        %v4145 = vunpack.c.l.b16 %v1410
        %v4146 = vunpack.c.h.b16 %v1410
        %v4147 = vunpack.c.l.b16 %v1411
        %v4148 = vunpack.c.h.b16 %v1411
        %v4149 = vunpack.c.l.b16 %v1412
        %v4150 = vunpack.c.h.b16 %v1412
        %v4151 = vunpack.c.l.b16 %v1413
        %v4152 = vunpack.c.h.b16 %v1413
        %v4153 = vunpack.c.l.b16 %v1414
        %v4154 = vunpack.c.h.b16 %v1414
        %v4155 = vunpack.c.l.b16 %v1415
        %v4156 = vunpack.c.h.b16 %v1415
        %v4157 = vunpack.c.l.b16 %v1416
        %v4158 = vunpack.c.h.b16 %v1416
        %v4159 = vunpack.c.l.b16 %v1417
        %v4160 = vunpack.c.h.b16 %v1417
        %v4161 = vunpack.c.l.b16 %v1418
        %v4162 = vunpack.c.h.b16 %v1418
        %v4163 = vunpack.c.l.b16 %v1419
        %v4164 = vunpack.c.h.b16 %v1419
        %v4165 = vunpack.c.l.b16 %v1420
        %v4166 = vunpack.c.h.b16 %v1420
        %v4167 = vunpack.c.l.b16 %v1421
        %v4168 = vunpack.c.h.b16 %v1421
        %v4169 = vunpack.c.l.b16 %v1422
        %v4170 = vunpack.c.h.b16 %v1422
        %v4171 = vunpack.c.l.b16 %v1423
        %v4172 = vunpack.c.h.b16 %v1423
        %v4173 = vunpack.c.l.b16 %v1424
        %v4174 = vunpack.c.h.b16 %v1424
        %v4175 = vunpack.c.l.b16 %v1425
        %v4176 = vunpack.c.h.b16 %v1425
        %v4177 = vunpack.c.l.b16 %v1426
        %v4178 = vunpack.c.h.b16 %v1426
        %v4179 = vunpack.c.l.b16 %v1427
        %v4180 = vunpack.c.h.b16 %v1427
        %v4181 = vunpack.c.l.b16 %v1428
        %v4182 = vunpack.c.h.b16 %v1428
        %v4183 = vunpack.c.l.b16 %v1429
        %v4184 = vunpack.c.h.b16 %v1429
        %v4185 = vunpack.c.l.b16 %v1430
        %v4186 = vunpack.c.h.b16 %v1430
        %v4187 = vunpack.c.l.b16 %v1431
        %v4188 = vunpack.c.h.b16 %v1431
        %v4189 = vunpack.c.l.b16 %v1432
        %v4190 = vunpack.c.h.b16 %v1432
        %v4191 = vunpack.c.l.b16 %v1433
        %v4192 = vunpack.c.h.b16 %v1433
        %v4193 = vunpack.c.l.b16 %v1434
        %v4194 = vunpack.c.h.b16 %v1434
        %v4195 = vunpack.c.l.b16 %v1435
        %v4196 = vunpack.c.h.b16 %v1435
        %v4197 = vunpack.c.l.b16 %v1436
        %v4198 = vunpack.c.h.b16 %v1436
        %v4199 = vunpack.c.l.b16 %v1437
        %v4200 = vunpack.c.h.b16 %v1437
        %v4201 = vunpack.c.l.b16 %v1438
        %v4202 = vunpack.c.h.b16 %v1438
        %v4203 = vunpack.c.l.b16 %v1439
        %v4204 = vunpack.c.h.b16 %v1439
        %v4205 = vunpack.c.l.b16 %v1440
        %v4206 = vunpack.c.h.b16 %v1440
        %v4207 = vpack.c.b16 %v2483, %v2479
        %v4208 = vpack.c.b16 %v2484, %v2480
        %v4209 = vpack.c.b16 %v2485, %v2481
        %v4210 = vpack.c.b16 %v2486, %v2482
        %v4211 = vpack.c.b16 %v2491, %v2487
        %v4212 = vpack.c.b16 %v2492, %v2488
        %v4213 = vpack.c.b16 %v2493, %v2489
        %v4214 = vpack.c.b16 %v2494, %v2490
        %v4215 = vpack.c.b16 %v2499, %v2495
        %v4216 = vpack.c.b16 %v2500, %v2496
        %v4217 = vpack.c.b16 %v2501, %v2497
        %v4218 = vpack.c.b16 %v2502, %v2498
        %v4219 = vpack.c.b16 %v2507, %v2503
        %v4220 = vpack.c.b16 %v2508, %v2504
        %v4221 = vpack.c.b16 %v2509, %v2505
        %v4222 = vpack.c.b16 %v2510, %v2506
        %v4223 = vpack.c.b16 %v2515, %v2511
        %v4224 = vpack.c.b16 %v2516, %v2512
        %v4225 = vpack.c.b16 %v2517, %v2513
        %v4226 = vpack.c.b16 %v2518, %v2514
        %v4227 = vpack.c.b16 %v2523, %v2519
        %v4228 = vpack.c.b16 %v2524, %v2520
        %v4229 = vpack.c.b16 %v2525, %v2521
        %v4230 = vpack.c.b16 %v2526, %v2522
        %v4231 = vpack.c.b16 %v2531, %v2527
        %v4232 = vpack.c.b16 %v2532, %v2528
        %v4233 = vpack.c.b16 %v2533, %v2529
        %v4234 = vpack.c.b16 %v2534, %v2530
        %v4235 = vpack.c.b16 %v2539, %v2535
        %v4236 = vpack.c.b16 %v2540, %v2536
        %v4237 = vpack.c.b16 %v2541, %v2537
        %v4238 = vpack.c.b16 %v2542, %v2538
        %v4239 = vpack.c.b16 %v2547, %v2543
        %v4240 = vpack.c.b16 %v2548, %v2544
        %v4241 = vpack.c.b16 %v2549, %v2545
        %v4242 = vpack.c.b16 %v2550, %v2546
        %v4243 = vpack.c.b16 %v2555, %v2551
        %v4244 = vpack.c.b16 %v2556, %v2552
        %v4245 = vpack.c.b16 %v2557, %v2553
        %v4246 = vpack.c.b16 %v2558, %v2554
        %v4247 = vpack.c.b16 %v2563, %v2559
        %v4248 = vpack.c.b16 %v2564, %v2560
        %v4249 = vpack.c.b16 %v2565, %v2561
        %v4250 = vpack.c.b16 %v2566, %v2562
        %v4251 = vpack.c.b16 %v2571, %v2567
        %v4252 = vpack.c.b16 %v2572, %v2568
        %v4253 = vpack.c.b16 %v2573, %v2569
        %v4254 = vpack.c.b16 %v2574, %v2570
        %v4255 = vpack.c.b16 %v2579, %v2575
        %v4256 = vpack.c.b16 %v2580, %v2576
        %v4257 = vpack.c.b16 %v2581, %v2577
        %v4258 = vpack.c.b16 %v2582, %v2578
        %v4259 = vpack.c.b16 %v2587, %v2583
        %v4260 = vpack.c.b16 %v2588, %v2584
        %v4261 = vpack.c.b16 %v2589, %v2585
        %v4262 = vpack.c.b16 %v2590, %v2586
        %v4263 = vpack.c.b16 %v2595, %v2591
        %v4264 = vpack.c.b16 %v2596, %v2592
        %v4265 = vpack.c.b16 %v2597, %v2593
        %v4266 = vpack.c.b16 %v2598, %v2594
        %v4267 = vpack.c.b16 %v2603, %v2599
        %v4268 = vpack.c.b16 %v2604, %v2600
        %v4269 = vpack.c.b16 %v2605, %v2601
        %v4270 = vpack.c.b16 %v2606, %v2602
        %v4271 = vpack.c.b16 %v2611, %v2607
        %v4272 = vpack.c.b16 %v2612, %v2608
        %v4273 = vpack.c.b16 %v2613, %v2609
        %v4274 = vpack.c.b16 %v2614, %v2610
        %v4275 = vpack.c.b16 %v2619, %v2615
        %v4276 = vpack.c.b16 %v2620, %v2616
        %v4277 = vpack.c.b16 %v2621, %v2617
        %v4278 = vpack.c.b16 %v2622, %v2618
        %v4279 = vpack.c.b16 %v2627, %v2623
        %v4280 = vpack.c.b16 %v2628, %v2624
        %v4281 = vpack.c.b16 %v2629, %v2625
        %v4282 = vpack.c.b16 %v2630, %v2626
        %v4283 = vpack.c.b16 %v2635, %v2631
        %v4284 = vpack.c.b16 %v2636, %v2632
        %v4285 = vpack.c.b16 %v2637, %v2633
        %v4286 = vpack.c.b16 %v2638, %v2634
        %v4287 = vpack.c.b16 %v2643, %v2639
        %v4288 = vpack.c.b16 %v2644, %v2640
        %v4289 = vpack.c.b16 %v2645, %v2641
        %v4290 = vpack.c.b16 %v2646, %v2642
        %v4291 = vpack.c.b16 %v2651, %v2647
        %v4292 = vpack.c.b16 %v2652, %v2648
        %v4293 = vpack.c.b16 %v2653, %v2649
        %v4294 = vpack.c.b16 %v2654, %v2650
        %v4295 = vpack.c.b16 %v2659, %v2655
        %v4296 = vpack.c.b16 %v2660, %v2656
        %v4297 = vpack.c.b16 %v2661, %v2657
        %v4298 = vpack.c.b16 %v2662, %v2658
        %v4299 = vpack.c.b16 %v2667, %v2663
        %v4300 = vpack.c.b16 %v2668, %v2664
        %v4301 = vpack.c.b16 %v2669, %v2665
        %v4302 = vpack.c.b16 %v2670, %v2666
        %v4303 = vpack.c.b16 %v2675, %v2671
        %v4304 = vpack.c.b16 %v2676, %v2672
        %v4305 = vpack.c.b16 %v2677, %v2673
        %v4306 = vpack.c.b16 %v2678, %v2674
        %v4307 = vpack.c.b16 %v2683, %v2679
        %v4308 = vpack.c.b16 %v2684, %v2680
        %v4309 = vpack.c.b16 %v2685, %v2681
        %v4310 = vpack.c.b16 %v2686, %v2682
        %v4311 = vpack.c.b16 %v2691, %v2687
        %v4312 = vpack.c.b16 %v2692, %v2688
        %v4313 = vpack.c.b16 %v2693, %v2689
        %v4314 = vpack.c.b16 %v2694, %v2690
        %v4315 = vpack.c.b16 %v2699, %v2695
        %v4316 = vpack.c.b16 %v2700, %v2696
        %v4317 = vpack.c.b16 %v2701, %v2697
        %v4318 = vpack.c.b16 %v2702, %v2698
        %v4319 = vpack.c.b16 %v2707, %v2703
        %v4320 = vpack.c.b16 %v2708, %v2704
        %v4321 = vpack.c.b16 %v2709, %v2705
        %v4322 = vpack.c.b16 %v2710, %v2706
        %v4323 = vpack.c.b16 %v2715, %v2711
        %v4324 = vpack.c.b16 %v2716, %v2712
        %v4325 = vpack.c.b16 %v2717, %v2713
        %v4326 = vpack.c.b16 %v2718, %v2714
        %v4327 = vpack.c.b16 %v2723, %v2719
        %v4328 = vpack.c.b16 %v2724, %v2720
        %v4329 = vpack.c.b16 %v2725, %v2721
        %v4330 = vpack.c.b16 %v2726, %v2722
        %v4331 = vpack.c.b16 %v2731, %v2727
        %v4332 = vpack.c.b16 %v2732, %v2728
        %v4333 = vpack.c.b16 %v2733, %v2729
        %v4334 = vpack.c.b16 %v2734, %v2730
        %v4335 = vpack.c.b16 %v2739, %v2735
        %v4336 = vpack.c.b16 %v2740, %v2736
        %v4337 = vpack.c.b16 %v2741, %v2737
        %v4338 = vpack.c.b16 %v2742, %v2738
        %v4339 = vpack.c.b16 %v2747, %v2743
        %v4340 = vpack.c.b16 %v2748, %v2744
        %v4341 = vpack.c.b16 %v2749, %v2745
        %v4342 = vpack.c.b16 %v2750, %v2746
        %v4343 = vpack.c.b16 %v2755, %v2751
        %v4344 = vpack.c.b16 %v2756, %v2752
        %v4345 = vpack.c.b16 %v2757, %v2753
        %v4346 = vpack.c.b16 %v2758, %v2754
        %v4347 = vpack.c.b16 %v2763, %v2759
        %v4348 = vpack.c.b16 %v2764, %v2760
        %v4349 = vpack.c.b16 %v2765, %v2761
        %v4350 = vpack.c.b16 %v2766, %v2762
        %v4351 = vpack.c.b16 %v2771, %v2767
        %v4352 = vpack.c.b16 %v2772, %v2768
        %v4353 = vpack.c.b16 %v2773, %v2769
        %v4354 = vpack.c.b16 %v2774, %v2770
        %v4355 = vpack.c.b16 %v2779, %v2775
        %v4356 = vpack.c.b16 %v2780, %v2776
        %v4357 = vpack.c.b16 %v2781, %v2777
        %v4358 = vpack.c.b16 %v2782, %v2778
        %v4359 = vpack.c.b16 %v2787, %v2783
        %v4360 = vpack.c.b16 %v2788, %v2784
        %v4361 = vpack.c.b16 %v2789, %v2785
        %v4362 = vpack.c.b16 %v2790, %v2786
        %v4363 = vpack.c.b16 %v2795, %v2791
        %v4364 = vpack.c.b16 %v2796, %v2792
        %v4365 = vpack.c.b16 %v2797, %v2793
        %v4366 = vpack.c.b16 %v2798, %v2794
        %v4367 = vpack.c.b16 %v2803, %v2799
        %v4368 = vpack.c.b16 %v2804, %v2800
        %v4369 = vpack.c.b16 %v2805, %v2801
        %v4370 = vpack.c.b16 %v2806, %v2802
        %v4371 = vpack.c.b16 %v2811, %v2807
        %v4372 = vpack.c.b16 %v2812, %v2808
        %v4373 = vpack.c.b16 %v2813, %v2809
        %v4374 = vpack.c.b16 %v2814, %v2810
        %v4375 = vpack.c.b16 %v2819, %v2815
        %v4376 = vpack.c.b16 %v2820, %v2816
        %v4377 = vpack.c.b16 %v2821, %v2817
        %v4378 = vpack.c.b16 %v2822, %v2818
        %v4379 = vpack.c.b16 %v2827, %v2823
        %v4380 = vpack.c.b16 %v2828, %v2824
        %v4381 = vpack.c.b16 %v2829, %v2825
        %v4382 = vpack.c.b16 %v2830, %v2826
        %v4383 = vpack.c.b16 %v2835, %v2831
        %v4384 = vpack.c.b16 %v2836, %v2832
        %v4385 = vpack.c.b16 %v2837, %v2833
        %v4386 = vpack.c.b16 %v2838, %v2834
        %v4387 = vpack.c.b16 %v2843, %v2839
        %v4388 = vpack.c.b16 %v2844, %v2840
        %v4389 = vpack.c.b16 %v2845, %v2841
        %v4390 = vpack.c.b16 %v2846, %v2842
        %v4391 = vpack.c.b16 %v2851, %v2847
        %v4392 = vpack.c.b16 %v2852, %v2848
        %v4393 = vpack.c.b16 %v2853, %v2849
        %v4394 = vpack.c.b16 %v2854, %v2850
        %v4395 = vpack.c.b16 %v2859, %v2855
        %v4396 = vpack.c.b16 %v2860, %v2856
        %v4397 = vpack.c.b16 %v2861, %v2857
        %v4398 = vpack.c.b16 %v2862, %v2858
        %v4399 = vpack.c.b16 %v2867, %v2863
        %v4400 = vpack.c.b16 %v2868, %v2864
        %v4401 = vpack.c.b16 %v2869, %v2865
        %v4402 = vpack.c.b16 %v2870, %v2866
        %v4403 = vpack.c.b16 %v2875, %v2871
        %v4404 = vpack.c.b16 %v2876, %v2872
        %v4405 = vpack.c.b16 %v2877, %v2873
        %v4406 = vpack.c.b16 %v2878, %v2874
        %v4407 = vpack.c.b16 %v2883, %v2879
        %v4408 = vpack.c.b16 %v2884, %v2880
        %v4409 = vpack.c.b16 %v2885, %v2881
        %v4410 = vpack.c.b16 %v2886, %v2882
        %v4411 = vpack.c.b16 %v2891, %v2887
        %v4412 = vpack.c.b16 %v2892, %v2888
        %v4413 = vpack.c.b16 %v2893, %v2889
        %v4414 = vpack.c.b16 %v2894, %v2890
        %v4415 = vpack.c.b16 %v2899, %v2895
        %v4416 = vpack.c.b16 %v2900, %v2896
        %v4417 = vpack.c.b16 %v2901, %v2897
        %v4418 = vpack.c.b16 %v2902, %v2898
        %v4419 = vpack.c.b16 %v2907, %v2903
        %v4420 = vpack.c.b16 %v2908, %v2904
        %v4421 = vpack.c.b16 %v2909, %v2905
        %v4422 = vpack.c.b16 %v2910, %v2906
        %v4423 = vpack.c.b16 %v2915, %v2911
        %v4424 = vpack.c.b16 %v2916, %v2912
        %v4425 = vpack.c.b16 %v2917, %v2913
        %v4426 = vpack.c.b16 %v2918, %v2914
        %v4427 = vpack.c.b16 %v2923, %v2919
        %v4428 = vpack.c.b16 %v2924, %v2920
        %v4429 = vpack.c.b16 %v2925, %v2921
        %v4430 = vpack.c.b16 %v2926, %v2922
        %v4431 = vpack.c.b16 %v2931, %v2927
        %v4432 = vpack.c.b16 %v2932, %v2928
        %v4433 = vpack.c.b16 %v2933, %v2929
        %v4434 = vpack.c.b16 %v2934, %v2930
        %v4435 = vpack.c.b16 %v2939, %v2935
        %v4436 = vpack.c.b16 %v2940, %v2936
        %v4437 = vpack.c.b16 %v2941, %v2937
        %v4438 = vpack.c.b16 %v2942, %v2938
        %v4439 = vpack.c.b16 %v2947, %v2943
        %v4440 = vpack.c.b16 %v2948, %v2944
        %v4441 = vpack.c.b16 %v2949, %v2945
        %v4442 = vpack.c.b16 %v2950, %v2946
        %v4443 = vpack.c.b16 %v2955, %v2951
        %v4444 = vpack.c.b16 %v2956, %v2952
        %v4445 = vpack.c.b16 %v2957, %v2953
        %v4446 = vpack.c.b16 %v2958, %v2954
        %v4447 = vpack.c.b16 %v2963, %v2959
        %v4448 = vpack.c.b16 %v2964, %v2960
        %v4449 = vpack.c.b16 %v2965, %v2961
        %v4450 = vpack.c.b16 %v2966, %v2962
        %v4451 = vpack.c.b16 %v2971, %v2967
        %v4452 = vpack.c.b16 %v2972, %v2968
        %v4453 = vpack.c.b16 %v2973, %v2969
        %v4454 = vpack.c.b16 %v2974, %v2970
        %v4455 = vpack.c.b16 %v2979, %v2975
        %v4456 = vpack.c.b16 %v2980, %v2976
        %v4457 = vpack.c.b16 %v2981, %v2977
        %v4458 = vpack.c.b16 %v2982, %v2978
        %v4459 = vpack.c.b16 %v2987, %v2983
        %v4460 = vpack.c.b16 %v2988, %v2984
        %v4461 = vpack.c.b16 %v2989, %v2985
        %v4462 = vpack.c.b16 %v2990, %v2986
        %v4463 = vpack.c.b16 %v2995, %v2991
        %v4464 = vpack.c.b16 %v2996, %v2992
        %v4465 = vpack.c.b16 %v2997, %v2993
        %v4466 = vpack.c.b16 %v2998, %v2994
        %v4467 = vpack.c.b16 %v3003, %v2999
        %v4468 = vpack.c.b16 %v3004, %v3000
        %v4469 = vpack.c.b16 %v3005, %v3001
        %v4470 = vpack.c.b16 %v3006, %v3002
        %v4471 = vpack.c.b16 %v3011, %v3007
        %v4472 = vpack.c.b16 %v3012, %v3008
        %v4473 = vpack.c.b16 %v3013, %v3009
        %v4474 = vpack.c.b16 %v3014, %v3010
        %v4475 = vpack.c.b16 %v3019, %v3015
        %v4476 = vpack.c.b16 %v3020, %v3016
        %v4477 = vpack.c.b16 %v3021, %v3017
        %v4478 = vpack.c.b16 %v3022, %v3018
        %v4479 = vpack.c.b16 %v3027, %v3023
        %v4480 = vpack.c.b16 %v3028, %v3024
        %v4481 = vpack.c.b16 %v3029, %v3025
        %v4482 = vpack.c.b16 %v3030, %v3026
        %v4483 = vpack.c.b16 %v3035, %v3031
        %v4484 = vpack.c.b16 %v3036, %v3032
        %v4485 = vpack.c.b16 %v3037, %v3033
        %v4486 = vpack.c.b16 %v3038, %v3034
        %v4487 = vpack.c.b16 %v3043, %v3039
        %v4488 = vpack.c.b16 %v3044, %v3040
        %v4489 = vpack.c.b16 %v3045, %v3041
        %v4490 = vpack.c.b16 %v3046, %v3042
        %v4491 = vpack.c.b16 %v3051, %v3047
        %v4492 = vpack.c.b16 %v3052, %v3048
        %v4493 = vpack.c.b16 %v3053, %v3049
        %v4494 = vpack.c.b16 %v3054, %v3050
        %v4495 = vpack.c.b16 %v3059, %v3055
        %v4496 = vpack.c.b16 %v3060, %v3056
        %v4497 = vpack.c.b16 %v3061, %v3057
        %v4498 = vpack.c.b16 %v3062, %v3058
        %v4499 = vpack.c.b16 %v3067, %v3063
        %v4500 = vpack.c.b16 %v3068, %v3064
        %v4501 = vpack.c.b16 %v3069, %v3065
        %v4502 = vpack.c.b16 %v3070, %v3066
        %v4503 = vpack.c.b16 %v3075, %v3071
        %v4504 = vpack.c.b16 %v3076, %v3072
        %v4505 = vpack.c.b16 %v3077, %v3073
        %v4506 = vpack.c.b16 %v3078, %v3074
        %v4507 = vpack.c.b16 %v3083, %v3079
        %v4508 = vpack.c.b16 %v3084, %v3080
        %v4509 = vpack.c.b16 %v3085, %v3081
        %v4510 = vpack.c.b16 %v3086, %v3082
        %v4511 = vpack.c.b16 %v3091, %v3087
        %v4512 = vpack.c.b16 %v3092, %v3088
        %v4513 = vpack.c.b16 %v3093, %v3089
        %v4514 = vpack.c.b16 %v3094, %v3090
        %v4515 = vpack.c.b16 %v3099, %v3095
        %v4516 = vpack.c.b16 %v3100, %v3096
        %v4517 = vpack.c.b16 %v3101, %v3097
        %v4518 = vpack.c.b16 %v3102, %v3098
        %v4519 = vpack.c.b16 %v3107, %v3103
        %v4520 = vpack.c.b16 %v3108, %v3104
        %v4521 = vpack.c.b16 %v3109, %v3105
        %v4522 = vpack.c.b16 %v3110, %v3106
        %v4523 = vpack.c.b16 %v3115, %v3111
        %v4524 = vpack.c.b16 %v3116, %v3112
        %v4525 = vpack.c.b16 %v3117, %v3113
        %v4526 = vpack.c.b16 %v3118, %v3114
        %v4527 = vpack.c.b16 %v3123, %v3119
        %v4528 = vpack.c.b16 %v3124, %v3120
        %v4529 = vpack.c.b16 %v3125, %v3121
        %v4530 = vpack.c.b16 %v3126, %v3122
        %v4531 = vpack.c.b16 %v3131, %v3127
        %v4532 = vpack.c.b16 %v3132, %v3128
        %v4533 = vpack.c.b16 %v3133, %v3129
        %v4534 = vpack.c.b16 %v3134, %v3130
        %v4535 = vpack.c.b16 %v3139, %v3135
        %v4536 = vpack.c.b16 %v3140, %v3136
        %v4537 = vpack.c.b16 %v3141, %v3137
        %v4538 = vpack.c.b16 %v3142, %v3138
        %v4539 = vpack.c.b16 %v3147, %v3143
        %v4540 = vpack.c.b16 %v3148, %v3144
        %v4541 = vpack.c.b16 %v3149, %v3145
        %v4542 = vpack.c.b16 %v3150, %v3146
        %v4543 = vpack.c.b16 %v3155, %v3151
        %v4544 = vpack.c.b16 %v3156, %v3152
        %v4545 = vpack.c.b16 %v3157, %v3153
        %v4546 = vpack.c.b16 %v3158, %v3154
        %v4547 = vpack.c.b16 %v3163, %v3159
        %v4548 = vpack.c.b16 %v3164, %v3160
        %v4549 = vpack.c.b16 %v3165, %v3161
        %v4550 = vpack.c.b16 %v3166, %v3162
        %v4551 = vpack.c.b16 %v3171, %v3167
        %v4552 = vpack.c.b16 %v3172, %v3168
        %v4553 = vpack.c.b16 %v3173, %v3169
        %v4554 = vpack.c.b16 %v3174, %v3170
        %v4555 = vpack.c.b16 %v3179, %v3175
        %v4556 = vpack.c.b16 %v3180, %v3176
        %v4557 = vpack.c.b16 %v3181, %v3177
        %v4558 = vpack.c.b16 %v3182, %v3178
        %v4559 = vpack.c.b16 %v3187, %v3183
        %v4560 = vpack.c.b16 %v3188, %v3184
        %v4561 = vpack.c.b16 %v3189, %v3185
        %v4562 = vpack.c.b16 %v3190, %v3186
        %v4563 = vpack.c.b16 %v3195, %v3191
        %v4564 = vpack.c.b16 %v3196, %v3192
        %v4565 = vpack.c.b16 %v3197, %v3193
        %v4566 = vpack.c.b16 %v3198, %v3194
        %v4567 = vpack.c.b16 %v3203, %v3199
        %v4568 = vpack.c.b16 %v3204, %v3200
        %v4569 = vpack.c.b16 %v3205, %v3201
        %v4570 = vpack.c.b16 %v3206, %v3202
        %v4571 = vpack.c.b16 %v3211, %v3207
        %v4572 = vpack.c.b16 %v3212, %v3208
        %v4573 = vpack.c.b16 %v3213, %v3209
        %v4574 = vpack.c.b16 %v3214, %v3210
        %v4575 = vpack.c.b16 %v3219, %v3215
        %v4576 = vpack.c.b16 %v3220, %v3216
        %v4577 = vpack.c.b16 %v3221, %v3217
        %v4578 = vpack.c.b16 %v3222, %v3218
        %v4579 = vpack.c.b16 %v3227, %v3223
        %v4580 = vpack.c.b16 %v3228, %v3224
        %v4581 = vpack.c.b16 %v3229, %v3225
        %v4582 = vpack.c.b16 %v3230, %v3226
        %v4583 = vpack.c.b16 %v3235, %v3231
        %v4584 = vpack.c.b16 %v3236, %v3232
        %v4585 = vpack.c.b16 %v3237, %v3233
        %v4586 = vpack.c.b16 %v3238, %v3234
        %v4587 = vpack.c.b16 %v3243, %v3239
        %v4588 = vpack.c.b16 %v3244, %v3240
        %v4589 = vpack.c.b16 %v3245, %v3241
        %v4590 = vpack.c.b16 %v3246, %v3242
        %v4591 = vpack.c.b16 %v3251, %v3247
        %v4592 = vpack.c.b16 %v3252, %v3248
        %v4593 = vpack.c.b16 %v3253, %v3249
        %v4594 = vpack.c.b16 %v3254, %v3250
        %v4595 = vpack.c.b16 %v3259, %v3255
        %v4596 = vpack.c.b16 %v3260, %v3256
        %v4597 = vpack.c.b16 %v3261, %v3257
        %v4598 = vpack.c.b16 %v3262, %v3258
        %v4599 = vpack.c.b16 %v3267, %v3263
        %v4600 = vpack.c.b16 %v3268, %v3264
        %v4601 = vpack.c.b16 %v3269, %v3265
        %v4602 = vpack.c.b16 %v3270, %v3266
        %v4603 = vpack.c.b16 %v3275, %v3271
        %v4604 = vpack.c.b16 %v3276, %v3272
        %v4605 = vpack.c.b16 %v3277, %v3273
        %v4606 = vpack.c.b16 %v3278, %v3274
        %v4607 = vpack.c.b16 %v3283, %v3279
        %v4608 = vpack.c.b16 %v3284, %v3280
        %v4609 = vpack.c.b16 %v3285, %v3281
        %v4610 = vpack.c.b16 %v3286, %v3282
        %v4611 = vpack.c.b16 %v3291, %v3287
        %v4612 = vpack.c.b16 %v3292, %v3288
        %v4613 = vpack.c.b16 %v3293, %v3289
        %v4614 = vpack.c.b16 %v3294, %v3290
        %v4615 = vpack.c.b16 %v3299, %v3295
        %v4616 = vpack.c.b16 %v3300, %v3296
        %v4617 = vpack.c.b16 %v3301, %v3297
        %v4618 = vpack.c.b16 %v3302, %v3298
        %v4619 = vpack.c.b16 %v3307, %v3303
        %v4620 = vpack.c.b16 %v3308, %v3304
        %v4621 = vpack.c.b16 %v3309, %v3305
        %v4622 = vpack.c.b16 %v3310, %v3306
        %v4623 = vpack.c.b16 %v3315, %v3311
        %v4624 = vpack.c.b16 %v3316, %v3312
        %v4625 = vpack.c.b16 %v3317, %v3313
        %v4626 = vpack.c.b16 %v3318, %v3314
        %v4627 = vpack.c.b16 %v3323, %v3319
        %v4628 = vpack.c.b16 %v3324, %v3320
        %v4629 = vpack.c.b16 %v3325, %v3321
        %v4630 = vpack.c.b16 %v3326, %v3322
        %v4631 = vpack.c.b16 %v3331, %v3327
        %v4632 = vpack.c.b16 %v3332, %v3328
        %v4633 = vpack.c.b16 %v3333, %v3329
        %v4634 = vpack.c.b16 %v3334, %v3330
        %v4635 = vpack.c.b16 %v3339, %v3335
        %v4636 = vpack.c.b16 %v3340, %v3336
        %v4637 = vpack.c.b16 %v3341, %v3337
        %v4638 = vpack.c.b16 %v3342, %v3338
        %v4639 = vpack.c.b16 %v3347, %v3343
        %v4640 = vpack.c.b16 %v3348, %v3344
        %v4641 = vpack.c.b16 %v3349, %v3345
        %v4642 = vpack.c.b16 %v3350, %v3346
        %v4643 = vpack.c.b16 %v3355, %v3351
        %v4644 = vpack.c.b16 %v3356, %v3352
        %v4645 = vpack.c.b16 %v3357, %v3353
        %v4646 = vpack.c.b16 %v3358, %v3354
        %v4647 = vpack.c.b16 %v3363, %v3359
        %v4648 = vpack.c.b16 %v3364, %v3360
        %v4649 = vpack.c.b16 %v3365, %v3361
        %v4650 = vpack.c.b16 %v3366, %v3362
        %v4651 = vpack.c.b16 %v3371, %v3367
        %v4652 = vpack.c.b16 %v3372, %v3368
        %v4653 = vpack.c.b16 %v3373, %v3369
        %v4654 = vpack.c.b16 %v3374, %v3370
        %v4655 = vpack.c.b16 %v3379, %v3375
        %v4656 = vpack.c.b16 %v3380, %v3376
        %v4657 = vpack.c.b16 %v3381, %v3377
        %v4658 = vpack.c.b16 %v3382, %v3378
        %v4659 = vpack.c.b16 %v3387, %v3383
        %v4660 = vpack.c.b16 %v3388, %v3384
        %v4661 = vpack.c.b16 %v3389, %v3385
        %v4662 = vpack.c.b16 %v3390, %v3386
        %v4663 = vpack.c.b16 %v3395, %v3391
        %v4664 = vpack.c.b16 %v3396, %v3392
        %v4665 = vpack.c.b16 %v3397, %v3393
        %v4666 = vpack.c.b16 %v3398, %v3394
        %v4667 = vpack.c.b16 %v3403, %v3399
        %v4668 = vpack.c.b16 %v3404, %v3400
        %v4669 = vpack.c.b16 %v3405, %v3401
        %v4670 = vpack.c.b16 %v3406, %v3402
        %v4671 = vpack.c.b16 %v3411, %v3407
        %v4672 = vpack.c.b16 %v3412, %v3408
        %v4673 = vpack.c.b16 %v3413, %v3409
        %v4674 = vpack.c.b16 %v3414, %v3410
        %v4675 = vpack.c.b16 %v3419, %v3415
        %v4676 = vpack.c.b16 %v3420, %v3416
        %v4677 = vpack.c.b16 %v3421, %v3417
        %v4678 = vpack.c.b16 %v3422, %v3418
        %v4679 = vpack.c.b16 %v3427, %v3423
        %v4680 = vpack.c.b16 %v3428, %v3424
        %v4681 = vpack.c.b16 %v3429, %v3425
        %v4682 = vpack.c.b16 %v3430, %v3426
        %v4683 = vpack.c.b16 %v3435, %v3431
        %v4684 = vpack.c.b16 %v3436, %v3432
        %v4685 = vpack.c.b16 %v3437, %v3433
        %v4686 = vpack.c.b16 %v3438, %v3434
        %v4687 = vpack.c.b16 %v3443, %v3439
        %v4688 = vpack.c.b16 %v3444, %v3440
        %v4689 = vpack.c.b16 %v3445, %v3441
        %v4690 = vpack.c.b16 %v3446, %v3442
        %v4691 = vpack.c.b16 %v3451, %v3447
        %v4692 = vpack.c.b16 %v3452, %v3448
        %v4693 = vpack.c.b16 %v3453, %v3449
        %v4694 = vpack.c.b16 %v3454, %v3450
        %v4695 = vpack.c.b16 %v3459, %v3455
        %v4696 = vpack.c.b16 %v3460, %v3456
        %v4697 = vpack.c.b16 %v3461, %v3457
        %v4698 = vpack.c.b16 %v3462, %v3458
        %v4699 = vpack.c.b16 %v3467, %v3463
        %v4700 = vpack.c.b16 %v3468, %v3464
        %v4701 = vpack.c.b16 %v3469, %v3465
        %v4702 = vpack.c.b16 %v3470, %v3466
        %v4703 = vpack.c.b16 %v3475, %v3471
        %v4704 = vpack.c.b16 %v3476, %v3472
        %v4705 = vpack.c.b16 %v3477, %v3473
        %v4706 = vpack.c.b16 %v3478, %v3474
        %v4707 = vpack.c.b16 %v3483, %v3479
        %v4708 = vpack.c.b16 %v3484, %v3480
        %v4709 = vpack.c.b16 %v3485, %v3481
        %v4710 = vpack.c.b16 %v3486, %v3482
        %v4711 = vpack.c.b16 %v3491, %v3487
        %v4712 = vpack.c.b16 %v3492, %v3488
        %v4713 = vpack.c.b16 %v3493, %v3489
        %v4714 = vpack.c.b16 %v3494, %v3490
        %v4715 = vpack.c.b16 %v3499, %v3495
        %v4716 = vpack.c.b16 %v3500, %v3496
        %v4717 = vpack.c.b16 %v3501, %v3497
        %v4718 = vpack.c.b16 %v3502, %v3498
        %v4719 = vpack.c.b16 %v3507, %v3503
        %v4720 = vpack.c.b16 %v3508, %v3504
        %v4721 = vpack.c.b16 %v3509, %v3505
        %v4722 = vpack.c.b16 %v3510, %v3506
        %v4723 = vpack.c.b16 %v3515, %v3511
        %v4724 = vpack.c.b16 %v3516, %v3512
        %v4725 = vpack.c.b16 %v3517, %v3513
        %v4726 = vpack.c.b16 %v3518, %v3514
        %v4727 = vpack.c.b16 %v3523, %v3519
        %v4728 = vpack.c.b16 %v3524, %v3520
        %v4729 = vpack.c.b16 %v3525, %v3521
        %v4730 = vpack.c.b16 %v3526, %v3522
        %v4731 = vpack.c.b16 %v3531, %v3527
        %v4732 = vpack.c.b16 %v3532, %v3528
        %v4733 = vpack.c.b16 %v3533, %v3529
        %v4734 = vpack.c.b16 %v3534, %v3530
        %v4735 = vpack.c.b16 %v3539, %v3535
        %v4736 = vpack.c.b16 %v3540, %v3536
        %v4737 = vpack.c.b16 %v3541, %v3537
        %v4738 = vpack.c.b16 %v3542, %v3538
        %v4739 = vpack.c.b16 %v3547, %v3543
        %v4740 = vpack.c.b16 %v3548, %v3544
        %v4741 = vpack.c.b16 %v3549, %v3545
        %v4742 = vpack.c.b16 %v3550, %v3546
        %v4743 = vpack.c.b16 %v3555, %v3551
        %v4744 = vpack.c.b16 %v3556, %v3552
        %v4745 = vpack.c.b16 %v3557, %v3553
        %v4746 = vpack.c.b16 %v3558, %v3554
        %v4747 = vpack.c.b16 %v3563, %v3559
        %v4748 = vpack.c.b16 %v3564, %v3560
        %v4749 = vpack.c.b16 %v3565, %v3561
        %v4750 = vpack.c.b16 %v3566, %v3562
        %v4751 = vpack.c.b16 %v3571, %v3567
        %v4752 = vpack.c.b16 %v3572, %v3568
        %v4753 = vpack.c.b16 %v3573, %v3569
        %v4754 = vpack.c.b16 %v3574, %v3570
        %v4755 = vpack.c.b16 %v3579, %v3575
        %v4756 = vpack.c.b16 %v3580, %v3576
        %v4757 = vpack.c.b16 %v3581, %v3577
        %v4758 = vpack.c.b16 %v3582, %v3578
        %v4759 = vpack.c.b16 %v3587, %v3583
        %v4760 = vpack.c.b16 %v3588, %v3584
        %v4761 = vpack.c.b16 %v3589, %v3585
        %v4762 = vpack.c.b16 %v3590, %v3586
        %v4763 = vpack.c.b16 %v3595, %v3591
        %v4764 = vpack.c.b16 %v3596, %v3592
        %v4765 = vpack.c.b16 %v3597, %v3593
        %v4766 = vpack.c.b16 %v3598, %v3594
        %v4767 = vpack.c.b16 %v3603, %v3599
        %v4768 = vpack.c.b16 %v3604, %v3600
        %v4769 = vpack.c.b16 %v3605, %v3601
        %v4770 = vpack.c.b16 %v3606, %v3602
        %v4771 = vpack.c.b16 %v3611, %v3607
        %v4772 = vpack.c.b16 %v3612, %v3608
        %v4773 = vpack.c.b16 %v3613, %v3609
        %v4774 = vpack.c.b16 %v3614, %v3610
        %v4775 = vpack.c.b16 %v3619, %v3615
        %v4776 = vpack.c.b16 %v3620, %v3616
        %v4777 = vpack.c.b16 %v3621, %v3617
        %v4778 = vpack.c.b16 %v3622, %v3618
        %v4779 = vpack.c.b16 %v3627, %v3623
        %v4780 = vpack.c.b16 %v3628, %v3624
        %v4781 = vpack.c.b16 %v3629, %v3625
        %v4782 = vpack.c.b16 %v3630, %v3626
        %v4783 = vpack.c.b16 %v3635, %v3631
        %v4784 = vpack.c.b16 %v3636, %v3632
        %v4785 = vpack.c.b16 %v3637, %v3633
        %v4786 = vpack.c.b16 %v3638, %v3634
        %v4787 = vpack.c.b16 %v3643, %v3639
        %v4788 = vpack.c.b16 %v3644, %v3640
        %v4789 = vpack.c.b16 %v3645, %v3641
        %v4790 = vpack.c.b16 %v3646, %v3642
        %v4791 = vpack.c.b16 %v3651, %v3647
        %v4792 = vpack.c.b16 %v3652, %v3648
        %v4793 = vpack.c.b16 %v3653, %v3649
        %v4794 = vpack.c.b16 %v3654, %v3650
        %v4795 = vpack.c.b16 %v3659, %v3655
        %v4796 = vpack.c.b16 %v3660, %v3656
        %v4797 = vpack.c.b16 %v3661, %v3657
        %v4798 = vpack.c.b16 %v3662, %v3658
        %v4799 = vpack.c.b16 %v3667, %v3663
        %v4800 = vpack.c.b16 %v3668, %v3664
        %v4801 = vpack.c.b16 %v3669, %v3665
        %v4802 = vpack.c.b16 %v3670, %v3666
        %v4803 = vpack.c.b16 %v3675, %v3671
        %v4804 = vpack.c.b16 %v3676, %v3672
        %v4805 = vpack.c.b16 %v3677, %v3673
        %v4806 = vpack.c.b16 %v3678, %v3674
        %v4807 = vpack.c.b16 %v3683, %v3679
        %v4808 = vpack.c.b16 %v3684, %v3680
        %v4809 = vpack.c.b16 %v3685, %v3681
        %v4810 = vpack.c.b16 %v3686, %v3682
        %v4811 = vpack.c.b16 %v3691, %v3687
        %v4812 = vpack.c.b16 %v3692, %v3688
        %v4813 = vpack.c.b16 %v3693, %v3689
        %v4814 = vpack.c.b16 %v3694, %v3690
        %v4815 = vpack.c.b16 %v3699, %v3695
        %v4816 = vpack.c.b16 %v3700, %v3696
        %v4817 = vpack.c.b16 %v3701, %v3697
        %v4818 = vpack.c.b16 %v3702, %v3698
        %v4819 = vpack.c.b16 %v3707, %v3703
        %v4820 = vpack.c.b16 %v3708, %v3704
        %v4821 = vpack.c.b16 %v3709, %v3705
        %v4822 = vpack.c.b16 %v3710, %v3706
        %v4823 = vpack.c.b16 %v3715, %v3711
        %v4824 = vpack.c.b16 %v3716, %v3712
        %v4825 = vpack.c.b16 %v3717, %v3713
        %v4826 = vpack.c.b16 %v3718, %v3714
        %v4827 = vpack.c.b16 %v3723, %v3719
        %v4828 = vpack.c.b16 %v3724, %v3720
        %v4829 = vpack.c.b16 %v3725, %v3721
        %v4830 = vpack.c.b16 %v3726, %v3722
        %v4831 = vpack.c.b16 %v3731, %v3727
        %v4832 = vpack.c.b16 %v3732, %v3728
        %v4833 = vpack.c.b16 %v3733, %v3729
        %v4834 = vpack.c.b16 %v3734, %v3730
        %v4835 = vpack.c.b16 %v3739, %v3735
        %v4836 = vpack.c.b16 %v3740, %v3736
        %v4837 = vpack.c.b16 %v3741, %v3737
        %v4838 = vpack.c.b16 %v3742, %v3738
        %v4839 = vpack.c.b16 %v3747, %v3743
        %v4840 = vpack.c.b16 %v3748, %v3744
        %v4841 = vpack.c.b16 %v3749, %v3745
        %v4842 = vpack.c.b16 %v3750, %v3746
        %v4843 = vpack.c.b16 %v3755, %v3751
        %v4844 = vpack.c.b16 %v3756, %v3752
        %v4845 = vpack.c.b16 %v3757, %v3753
        %v4846 = vpack.c.b16 %v3758, %v3754
        %v4847 = vpack.c.b16 %v3763, %v3759
        %v4848 = vpack.c.b16 %v3764, %v3760
        %v4849 = vpack.c.b16 %v3765, %v3761
        %v4850 = vpack.c.b16 %v3766, %v3762
        %v4851 = vpack.c.b16 %v3771, %v3767
        %v4852 = vpack.c.b16 %v3772, %v3768
        %v4853 = vpack.c.b16 %v3773, %v3769
        %v4854 = vpack.c.b16 %v3774, %v3770
        %v4855 = vpack.c.b16 %v3779, %v3775
        %v4856 = vpack.c.b16 %v3780, %v3776
        %v4857 = vpack.c.b16 %v3781, %v3777
        %v4858 = vpack.c.b16 %v3782, %v3778
        %v4859 = vpack.c.b16 %v3787, %v3783
        %v4860 = vpack.c.b16 %v3788, %v3784
        %v4861 = vpack.c.b16 %v3789, %v3785
        %v4862 = vpack.c.b16 %v3790, %v3786
        %v4863 = vpack.c.b16 %v3795, %v3791
        %v4864 = vpack.c.b16 %v3796, %v3792
        %v4865 = vpack.c.b16 %v3797, %v3793
        %v4866 = vpack.c.b16 %v3798, %v3794
        %v4867 = vpack.c.b16 %v3803, %v3799
        %v4868 = vpack.c.b16 %v3804, %v3800
        %v4869 = vpack.c.b16 %v3805, %v3801
        %v4870 = vpack.c.b16 %v3806, %v3802
        %v4871 = vpack.c.b16 %v3811, %v3807
        %v4872 = vpack.c.b16 %v3812, %v3808
        %v4873 = vpack.c.b16 %v3813, %v3809
        %v4874 = vpack.c.b16 %v3814, %v3810
        %v4875 = vpack.c.b16 %v3819, %v3815
        %v4876 = vpack.c.b16 %v3820, %v3816
        %v4877 = vpack.c.b16 %v3821, %v3817
        %v4878 = vpack.c.b16 %v3822, %v3818
        %v4879 = vpack.c.b16 %v3827, %v3823
        %v4880 = vpack.c.b16 %v3828, %v3824
        %v4881 = vpack.c.b16 %v3829, %v3825
        %v4882 = vpack.c.b16 %v3830, %v3826
        %v4883 = vpack.c.b16 %v3835, %v3831
        %v4884 = vpack.c.b16 %v3836, %v3832
        %v4885 = vpack.c.b16 %v3837, %v3833
        %v4886 = vpack.c.b16 %v3838, %v3834
        %v4887 = vpack.c.b16 %v3843, %v3839
        %v4888 = vpack.c.b16 %v3844, %v3840
        %v4889 = vpack.c.b16 %v3845, %v3841
        %v4890 = vpack.c.b16 %v3846, %v3842
        %v4891 = vpack.c.b16 %v3851, %v3847
        %v4892 = vpack.c.b16 %v3852, %v3848
        %v4893 = vpack.c.b16 %v3853, %v3849
        %v4894 = vpack.c.b16 %v3854, %v3850
        %v4895 = vpack.c.b16 %v3859, %v3855
        %v4896 = vpack.c.b16 %v3860, %v3856
        %v4897 = vpack.c.b16 %v3861, %v3857
        %v4898 = vpack.c.b16 %v3862, %v3858
        %v4899 = vpack.c.b16 %v3867, %v3863
        %v4900 = vpack.c.b16 %v3868, %v3864
        %v4901 = vpack.c.b16 %v3869, %v3865
        %v4902 = vpack.c.b16 %v3870, %v3866
        %v4903 = vpack.c.b16 %v3875, %v3871
        %v4904 = vpack.c.b16 %v3876, %v3872
        %v4905 = vpack.c.b16 %v3877, %v3873
        %v4906 = vpack.c.b16 %v3878, %v3874
        %v4907 = vpack.c.b16 %v3883, %v3879
        %v4908 = vpack.c.b16 %v3884, %v3880
        %v4909 = vpack.c.b16 %v3885, %v3881
        %v4910 = vpack.c.b16 %v3886, %v3882
        %v4911 = vpack.c.b16 %v3891, %v3887
        %v4912 = vpack.c.b16 %v3892, %v3888
        %v4913 = vpack.c.b16 %v3893, %v3889
        %v4914 = vpack.c.b16 %v3894, %v3890
        %v4915 = vpack.c.b16 %v3899, %v3895
        %v4916 = vpack.c.b16 %v3900, %v3896
        %v4917 = vpack.c.b16 %v3901, %v3897
        %v4918 = vpack.c.b16 %v3902, %v3898
        %v4919 = vpack.c.b16 %v3907, %v3903
        %v4920 = vpack.c.b16 %v3908, %v3904
        %v4921 = vpack.c.b16 %v3909, %v3905
        %v4922 = vpack.c.b16 %v3910, %v3906
        %v4923 = vpack.c.b16 %v3915, %v3911
        %v4924 = vpack.c.b16 %v3916, %v3912
        %v4925 = vpack.c.b16 %v3917, %v3913
        %v4926 = vpack.c.b16 %v3918, %v3914
        %v4927 = vpack.c.b16 %v3923, %v3919
        %v4928 = vpack.c.b16 %v3924, %v3920
        %v4929 = vpack.c.b16 %v3925, %v3921
        %v4930 = vpack.c.b16 %v3926, %v3922
        %v4931 = vpack.c.b16 %v3931, %v3927
        %v4932 = vpack.c.b16 %v3932, %v3928
        %v4933 = vpack.c.b16 %v3933, %v3929
        %v4934 = vpack.c.b16 %v3934, %v3930
        %v4935 = vpack.c.b16 %v3939, %v3935
        %v4936 = vpack.c.b16 %v3940, %v3936
        %v4937 = vpack.c.b16 %v3941, %v3937
        %v4938 = vpack.c.b16 %v3942, %v3938
        %v4939 = vpack.c.b16 %v3947, %v3943
        %v4940 = vpack.c.b16 %v3948, %v3944
        %v4941 = vpack.c.b16 %v3949, %v3945
        %v4942 = vpack.c.b16 %v3950, %v3946
        %v4943 = vpack.c.b16 %v3955, %v3951
        %v4944 = vpack.c.b16 %v3956, %v3952
        %v4945 = vpack.c.b16 %v3957, %v3953
        %v4946 = vpack.c.b16 %v3958, %v3954
        %v4947 = vpack.c.b16 %v3963, %v3959
        %v4948 = vpack.c.b16 %v3964, %v3960
        %v4949 = vpack.c.b16 %v3965, %v3961
        %v4950 = vpack.c.b16 %v3966, %v3962
        %v4951 = vpack.c.b16 %v3971, %v3967
        %v4952 = vpack.c.b16 %v3972, %v3968
        %v4953 = vpack.c.b16 %v3973, %v3969
        %v4954 = vpack.c.b16 %v3974, %v3970
        %v4955 = vpack.c.b16 %v3979, %v3975
        %v4956 = vpack.c.b16 %v3980, %v3976
        %v4957 = vpack.c.b16 %v3981, %v3977
        %v4958 = vpack.c.b16 %v3982, %v3978
        %v4959 = vpack.c.b16 %v3987, %v3983
        %v4960 = vpack.c.b16 %v3988, %v3984
        %v4961 = vpack.c.b16 %v3989, %v3985
        %v4962 = vpack.c.b16 %v3990, %v3986
        %v4963 = vpack.c.b16 %v3995, %v3991
        %v4964 = vpack.c.b16 %v3996, %v3992
        %v4965 = vpack.c.b16 %v3997, %v3993
        %v4966 = vpack.c.b16 %v3998, %v3994
        %v4967 = vpack.c.b16 %v4003, %v3999
        %v4968 = vpack.c.b16 %v4004, %v4000
        %v4969 = vpack.c.b16 %v4005, %v4001
        %v4970 = vpack.c.b16 %v4006, %v4002
        %v4971 = vpack.c.b16 %v4011, %v4007
        %v4972 = vpack.c.b16 %v4012, %v4008
        %v4973 = vpack.c.b16 %v4013, %v4009
        %v4974 = vpack.c.b16 %v4014, %v4010
        %v4975 = vpack.c.b16 %v4019, %v4015
        %v4976 = vpack.c.b16 %v4020, %v4016
        %v4977 = vpack.c.b16 %v4021, %v4017
        %v4978 = vpack.c.b16 %v4022, %v4018
        %v4979 = vpack.c.b16 %v4027, %v4023
        %v4980 = vpack.c.b16 %v4028, %v4024
        %v4981 = vpack.c.b16 %v4029, %v4025
        %v4982 = vpack.c.b16 %v4030, %v4026
        %v4983 = vpack.c.b16 %v4035, %v4031
        %v4984 = vpack.c.b16 %v4036, %v4032
        %v4985 = vpack.c.b16 %v4037, %v4033
        %v4986 = vpack.c.b16 %v4038, %v4034
        %v4987 = vpack.c.b16 %v4043, %v4039
        %v4988 = vpack.c.b16 %v4044, %v4040
        %v4989 = vpack.c.b16 %v4045, %v4041
        %v4990 = vpack.c.b16 %v4046, %v4042
        %v4991 = vpack.c.b16 %v4051, %v4047
        %v4992 = vpack.c.b16 %v4052, %v4048
        %v4993 = vpack.c.b16 %v4053, %v4049
        %v4994 = vpack.c.b16 %v4054, %v4050
        %v4995 = vpack.c.b16 %v4059, %v4055
        %v4996 = vpack.c.b16 %v4060, %v4056
        %v4997 = vpack.c.b16 %v4061, %v4057
        %v4998 = vpack.c.b16 %v4062, %v4058
        %v4999 = vpack.c.b16 %v4067, %v4063
        %v5000 = vpack.c.b16 %v4068, %v4064
        %v5001 = vpack.c.b16 %v4069, %v4065
        %v5002 = vpack.c.b16 %v4070, %v4066
        %v5003 = vpack.c.b16 %v4075, %v4071
        %v5004 = vpack.c.b16 %v4076, %v4072
        %v5005 = vpack.c.b16 %v4077, %v4073
        %v5006 = vpack.c.b16 %v4078, %v4074
        %v5007 = vpack.c.b16 %v4083, %v4079
        %v5008 = vpack.c.b16 %v4084, %v4080
        %v5009 = vpack.c.b16 %v4085, %v4081
        %v5010 = vpack.c.b16 %v4086, %v4082
        %v5011 = vpack.c.b16 %v4091, %v4087
        %v5012 = vpack.c.b16 %v4092, %v4088
        %v5013 = vpack.c.b16 %v4093, %v4089
        %v5014 = vpack.c.b16 %v4094, %v4090
        %v5015 = vpack.c.b16 %v4099, %v4095
        %v5016 = vpack.c.b16 %v4100, %v4096
        %v5017 = vpack.c.b16 %v4101, %v4097
        %v5018 = vpack.c.b16 %v4102, %v4098
        %v5019 = vpack.c.b16 %v4107, %v4103
        %v5020 = vpack.c.b16 %v4108, %v4104
        %v5021 = vpack.c.b16 %v4109, %v4105
        %v5022 = vpack.c.b16 %v4110, %v4106
        %v5023 = vpack.c.b16 %v4115, %v4111
        %v5024 = vpack.c.b16 %v4116, %v4112
        %v5025 = vpack.c.b16 %v4117, %v4113
        %v5026 = vpack.c.b16 %v4118, %v4114
        %v5027 = vpack.c.b16 %v4123, %v4119
        %v5028 = vpack.c.b16 %v4124, %v4120
        %v5029 = vpack.c.b16 %v4125, %v4121
        %v5030 = vpack.c.b16 %v4126, %v4122
        %v5031 = vpack.c.b16 %v4131, %v4127
        %v5032 = vpack.c.b16 %v4132, %v4128
        %v5033 = vpack.c.b16 %v4133, %v4129
        %v5034 = vpack.c.b16 %v4134, %v4130
        %v5035 = vpack.c.b16 %v4139, %v4135
        %v5036 = vpack.c.b16 %v4140, %v4136
        %v5037 = vpack.c.b16 %v4141, %v4137
        %v5038 = vpack.c.b16 %v4142, %v4138
        %v5039 = vpack.c.b16 %v4147, %v4143
        %v5040 = vpack.c.b16 %v4148, %v4144
        %v5041 = vpack.c.b16 %v4149, %v4145
        %v5042 = vpack.c.b16 %v4150, %v4146
        %v5043 = vpack.c.b16 %v4155, %v4151
        %v5044 = vpack.c.b16 %v4156, %v4152
        %v5045 = vpack.c.b16 %v4157, %v4153
        %v5046 = vpack.c.b16 %v4158, %v4154
        %v5047 = vpack.c.b16 %v4163, %v4159
        %v5048 = vpack.c.b16 %v4164, %v4160
        %v5049 = vpack.c.b16 %v4165, %v4161
        %v5050 = vpack.c.b16 %v4166, %v4162
        %v5051 = vpack.c.b16 %v4171, %v4167
        %v5052 = vpack.c.b16 %v4172, %v4168
        %v5053 = vpack.c.b16 %v4173, %v4169
        %v5054 = vpack.c.b16 %v4174, %v4170
        %v5055 = vpack.c.b16 %v4179, %v4175
        %v5056 = vpack.c.b16 %v4180, %v4176
        %v5057 = vpack.c.b16 %v4181, %v4177
        %v5058 = vpack.c.b16 %v4182, %v4178
        %v5059 = vpack.c.b16 %v4187, %v4183
        %v5060 = vpack.c.b16 %v4188, %v4184
        %v5061 = vpack.c.b16 %v4189, %v4185
        %v5062 = vpack.c.b16 %v4190, %v4186
        %v5063 = vpack.c.b16 %v4195, %v4191
        %v5064 = vpack.c.b16 %v4196, %v4192
        %v5065 = vpack.c.b16 %v4197, %v4193
        %v5066 = vpack.c.b16 %v4198, %v4194
        %v5067 = vpack.c.b16 %v4203, %v4199
        %v5068 = vpack.c.b16 %v4204, %v4200
        %v5069 = vpack.c.b16 %v4205, %v4201
        %v5070 = vpack.c.b16 %v4206, %v4202
        %5935 = vmatprep.subr.bf16.mxu0 %v4208
        %5936 = vmatpush1.bf16.msra.mxu0 %v4207
        %5937 = vmatprep.subr.bf16.mxu0 %v4212
        %5938 = vmatpush1.bf16.msra.mxu0 %v4211
        %5939 = vmatprep.subr.bf16.mxu0 %v4216
        %5940 = vmatpush1.bf16.msra.mxu0 %v4215
        %5941 = vmatprep.subr.bf16.mxu0 %v4220
        %5942 = vmatpush1.bf16.msra.mxu0 %v4219
        %5943 = vmatprep.subr.bf16.mxu0 %v4224
        %5944 = vmatpush1.bf16.msra.mxu0 %v4223
        %5945 = vmatprep.subr.bf16.mxu0 %v4228
        %5946 = vmatpush1.bf16.msra.mxu0 %v4227
        %5947 = vmatprep.subr.bf16.mxu0 %v4232
        %5948 = vmatpush1.bf16.msra.mxu0 %v4231
        %5949 = vmatprep.subr.bf16.mxu0 %v4236
        %5950 = vmatpush1.bf16.msra.mxu0 %v4235
        %5951 = vmatprep.subr.bf16.mxu0 %v4240
        %5952 = vmatpush1.bf16.msra.mxu0 %v4239
        %5953 = vmatprep.subr.bf16.mxu0 %v4244
        %5954 = vmatpush1.bf16.msra.mxu0 %v4243
        %5955 = vmatprep.subr.bf16.mxu0 %v4248
        %5956 = vmatpush1.bf16.msra.mxu0 %v4247
        %5957 = vmatprep.subr.bf16.mxu0 %v4252
        %5958 = vmatpush1.bf16.msra.mxu0 %v4251
        %5959 = vmatprep.subr.bf16.mxu0 %v4256
        %5960 = vmatpush1.bf16.msra.mxu0 %v4255
        %5961 = vmatprep.subr.bf16.mxu0 %v4260
        %5962 = vmatpush1.bf16.msra.mxu0 %v4259
        %5963 = vmatprep.subr.bf16.mxu0 %v4264
        %5964 = vmatpush1.bf16.msra.mxu0 %v4263
        %5965 = vmatprep.subr.bf16.mxu0 %v4268
        %5966 = vmatpush1.bf16.msra.mxu0 %v4267
        %5967 = vmatprep.mubr.bf16.mxu0 %v1485
        %5968 = vmatmul.mubr.bf16.gmra.mrb[0].mxu0 %v1477
        %v5969 = vpop.f32.mrb[0].mxu0
        %v5970 = vadd.f32 %v1446, %v5969
        %v5971 = vpop.f32.mrb[0].mxu0
        %v5972 = vadd.f32 %v1450, %v5971
        %v5973 = vpop.f32.mrb[0].mxu0
        %v5974 = vpop.f32.mrb[0].mxu0
        %5975 = vdwg.mxu0
        %5976 = vmatprep.subr.bf16.mxu0 %v4272
        %5977 = vmatpush1.bf16.msra.mxu0 %v4271
        %5978 = vmatprep.subr.bf16.mxu0 %v4276
        %5979 = vmatpush1.bf16.msra.mxu0 %v4275
        %5980 = vmatprep.subr.bf16.mxu0 %v4280
        %5981 = vmatpush1.bf16.msra.mxu0 %v4279
        %5982 = vmatprep.subr.bf16.mxu0 %v4284
        %5983 = vmatpush1.bf16.msra.mxu0 %v4283
        %5984 = vmatprep.subr.bf16.mxu0 %v4288
        %5985 = vmatpush1.bf16.msra.mxu0 %v4287
        %5986 = vmatprep.subr.bf16.mxu0 %v4292
        %5987 = vmatpush1.bf16.msra.mxu0 %v4291
        %5988 = vmatprep.subr.bf16.mxu0 %v4296
        %5989 = vmatpush1.bf16.msra.mxu0 %v4295
        %5990 = vmatprep.subr.bf16.mxu0 %v4300
        %5991 = vmatpush1.bf16.msra.mxu0 %v4299
        %5992 = vmatprep.subr.bf16.mxu0 %v4304
        %5993 = vmatpush1.bf16.msra.mxu0 %v4303
        %5994 = vmatprep.subr.bf16.mxu0 %v4308
        %5995 = vmatpush1.bf16.msra.mxu0 %v4307
        %5996 = vmatprep.subr.bf16.mxu0 %v4312
        %5997 = vmatpush1.bf16.msra.mxu0 %v4311
        %5998 = vmatprep.subr.bf16.mxu0 %v4316
        %5999 = vmatpush1.bf16.msra.mxu0 %v4315
        %6000 = vmatprep.subr.bf16.mxu0 %v4320
        %6001 = vmatpush1.bf16.msra.mxu0 %v4319
        %6002 = vmatprep.subr.bf16.mxu0 %v4324
        %6003 = vmatpush1.bf16.msra.mxu0 %v4323
        %6004 = vmatprep.subr.bf16.mxu0 %v4328
        %6005 = vmatpush1.bf16.msra.mxu0 %v4327
        %6006 = vmatprep.subr.bf16.mxu0 %v4332
        %6007 = vmatpush1.bf16.msra.mxu0 %v4331
        %6008 = vmatprep.mubr.bf16.mxu0 %v1486
        %6009 = vmatmul.mubr.bf16.gmra.mrb[0].mxu0 %v1484
        %v6010 = vpop.f32.mrb[0].mxu0
        %v6011 = vadd.f32 %v5970, %v6010
        %v6012 = vpop.f32.mrb[0].mxu0
        %v6013 = vadd.f32 %v5972, %v6012
        %v6014 = vpop.f32.mrb[0].mxu0
        %v6015 = vpop.f32.mrb[0].mxu0
        %6016 = vdwg.mxu0
        %6017 = vmatprep.subr.bf16.mxu0 %v4336
        %6018 = vmatpush1.bf16.msra.mxu0 %v4335
        %6019 = vmatprep.subr.bf16.mxu0 %v4340
        %6020 = vmatpush1.bf16.msra.mxu0 %v4339
        %6021 = vmatprep.subr.bf16.mxu0 %v4344
        %6022 = vmatpush1.bf16.msra.mxu0 %v4343
        %6023 = vmatprep.subr.bf16.mxu0 %v4348
        %6024 = vmatpush1.bf16.msra.mxu0 %v4347
        %6025 = vmatprep.subr.bf16.mxu0 %v4352
        %6026 = vmatpush1.bf16.msra.mxu0 %v4351
        %6027 = vmatprep.subr.bf16.mxu0 %v4356
        %6028 = vmatpush1.bf16.msra.mxu0 %v4355
        %6029 = vmatprep.subr.bf16.mxu0 %v4360
        %6030 = vmatpush1.bf16.msra.mxu0 %v4359
        %6031 = vmatprep.subr.bf16.mxu0 %v4364
        %6032 = vmatpush1.bf16.msra.mxu0 %v4363
        %6033 = vmatprep.subr.bf16.mxu0 %v4368
        %6034 = vmatpush1.bf16.msra.mxu0 %v4367
        %6035 = vmatprep.subr.bf16.mxu0 %v4372
        %6036 = vmatpush1.bf16.msra.mxu0 %v4371
        %6037 = vmatprep.subr.bf16.mxu0 %v4376
        %6038 = vmatpush1.bf16.msra.mxu0 %v4375
        %6039 = vmatprep.subr.bf16.mxu0 %v4380
        %6040 = vmatpush1.bf16.msra.mxu0 %v4379
        %6041 = vmatprep.subr.bf16.mxu0 %v4384
        %6042 = vmatpush1.bf16.msra.mxu0 %v4383
        %6043 = vmatprep.subr.bf16.mxu0 %v4388
        %6044 = vmatpush1.bf16.msra.mxu0 %v4387
        %6045 = vmatprep.subr.bf16.mxu0 %v4392
        %6046 = vmatpush1.bf16.msra.mxu0 %v4391
        %6047 = vmatprep.subr.bf16.mxu0 %v4396
        %6048 = vmatpush1.bf16.msra.mxu0 %v4395
        %6049 = vmatprep.mubr.bf16.mxu0 %v1502
        %6050 = vmatmul.mubr.bf16.gmra.mrb[0].mxu0 %v1494
        %v6051 = vpop.f32.mrb[0].mxu0
        %v6052 = vadd.f32 %v6011, %v6051
        %v6053 = vpop.f32.mrb[0].mxu0
        %v6054 = vadd.f32 %v6013, %v6053
        %v6055 = vpop.f32.mrb[0].mxu0
        %v6056 = vpop.f32.mrb[0].mxu0
        %6057 = vdwg.mxu0
        %6058 = vmatprep.subr.bf16.mxu0 %v4400
        %6059 = vmatpush1.bf16.msra.mxu0 %v4399
        %6060 = vmatprep.subr.bf16.mxu0 %v4404
        %6061 = vmatpush1.bf16.msra.mxu0 %v4403
        %6062 = vmatprep.subr.bf16.mxu0 %v4408
        %6063 = vmatpush1.bf16.msra.mxu0 %v4407
        %6064 = vmatprep.subr.bf16.mxu0 %v4412
        %6065 = vmatpush1.bf16.msra.mxu0 %v4411
        %6066 = vmatprep.subr.bf16.mxu0 %v4416
        %6067 = vmatpush1.bf16.msra.mxu0 %v4415
        %6068 = vmatprep.subr.bf16.mxu0 %v4420
        %6069 = vmatpush1.bf16.msra.mxu0 %v4419
        %6070 = vmatprep.subr.bf16.mxu0 %v4424
        %6071 = vmatpush1.bf16.msra.mxu0 %v4423
        %6072 = vmatprep.subr.bf16.mxu0 %v4428
        %6073 = vmatpush1.bf16.msra.mxu0 %v4427
        %6074 = vmatprep.subr.bf16.mxu0 %v4432
        %6075 = vmatpush1.bf16.msra.mxu0 %v4431
        %6076 = vmatprep.subr.bf16.mxu0 %v4436
        %6077 = vmatpush1.bf16.msra.mxu0 %v4435
        %6078 = vmatprep.subr.bf16.mxu0 %v4440
        %6079 = vmatpush1.bf16.msra.mxu0 %v4439
        %6080 = vmatprep.subr.bf16.mxu0 %v4444
        %6081 = vmatpush1.bf16.msra.mxu0 %v4443
        %6082 = vmatprep.subr.bf16.mxu0 %v4448
        %6083 = vmatpush1.bf16.msra.mxu0 %v4447
        %6084 = vmatprep.subr.bf16.mxu0 %v4452
        %6085 = vmatpush1.bf16.msra.mxu0 %v4451
        %6086 = vmatprep.subr.bf16.mxu0 %v4456
        %6087 = vmatpush1.bf16.msra.mxu0 %v4455
        %6088 = vmatprep.subr.bf16.mxu0 %v4460
        %6089 = vmatpush1.bf16.msra.mxu0 %v4459
        %6090 = vmatprep.mubr.bf16.mxu0 %v1503
        %6091 = vmatmul.mubr.bf16.gmra.mrb[0].mxu0 %v1501
        %v6092 = vpop.f32.mrb[0].mxu0
        %v6093 = vadd.f32 %v6052, %v6092
        %v6094 = vpop.f32.mrb[0].mxu0
        %v6095 = vadd.f32 %v6054, %v6094
        %v6096 = vpop.f32.mrb[0].mxu0
        %v6097 = vpop.f32.mrb[0].mxu0
        %6098 = vdwg.mxu0
        %6099 = vmatprep.subr.bf16.mxu0 %v4464
        %6100 = vmatpush1.bf16.msra.mxu0 %v4463
        %6101 = vmatprep.subr.bf16.mxu0 %v4468
        %6102 = vmatpush1.bf16.msra.mxu0 %v4467
        %6103 = vmatprep.subr.bf16.mxu0 %v4472
        %6104 = vmatpush1.bf16.msra.mxu0 %v4471
        %6105 = vmatprep.subr.bf16.mxu0 %v4476
        %6106 = vmatpush1.bf16.msra.mxu0 %v4475
        %6107 = vmatprep.subr.bf16.mxu0 %v4480
        %6108 = vmatpush1.bf16.msra.mxu0 %v4479
        %6109 = vmatprep.subr.bf16.mxu0 %v4484
        %6110 = vmatpush1.bf16.msra.mxu0 %v4483
        %6111 = vmatprep.subr.bf16.mxu0 %v4488
        %6112 = vmatpush1.bf16.msra.mxu0 %v4487
        %6113 = vmatprep.subr.bf16.mxu0 %v4492
        %6114 = vmatpush1.bf16.msra.mxu0 %v4491
        %6115 = vmatprep.subr.bf16.mxu0 %v4496
        %6116 = vmatpush1.bf16.msra.mxu0 %v4495
        %6117 = vmatprep.subr.bf16.mxu0 %v4500
        %6118 = vmatpush1.bf16.msra.mxu0 %v4499
        %6119 = vmatprep.subr.bf16.mxu0 %v4504
        %6120 = vmatpush1.bf16.msra.mxu0 %v4503
        %6121 = vmatprep.subr.bf16.mxu0 %v4508
        %6122 = vmatpush1.bf16.msra.mxu0 %v4507
        %6123 = vmatprep.subr.bf16.mxu0 %v4512
        %6124 = vmatpush1.bf16.msra.mxu0 %v4511
        %6125 = vmatprep.subr.bf16.mxu0 %v4516
        %6126 = vmatpush1.bf16.msra.mxu0 %v4515
        %6127 = vmatprep.subr.bf16.mxu0 %v4520
        %6128 = vmatpush1.bf16.msra.mxu0 %v4519
        %6129 = vmatprep.subr.bf16.mxu0 %v4524
        %6130 = vmatpush1.bf16.msra.mxu0 %v4523
        %6131 = vmatprep.mubr.bf16.mxu0 %v1519
        %6132 = vmatmul.mubr.bf16.gmra.mrb[0].mxu0 %v1511
        %v6133 = vpop.f32.mrb[0].mxu0
        %v6134 = vadd.f32 %v6093, %v6133
        %v6135 = vpop.f32.mrb[0].mxu0
        %v6136 = vadd.f32 %v6095, %v6135
        %v6137 = vpop.f32.mrb[0].mxu0
        %v6138 = vpop.f32.mrb[0].mxu0
        %6139 = vdwg.mxu0
        %6140 = vmatprep.subr.bf16.mxu0 %v4528
        %6141 = vmatpush1.bf16.msra.mxu0 %v4527
        %6142 = vmatprep.subr.bf16.mxu0 %v4532
        %6143 = vmatpush1.bf16.msra.mxu0 %v4531
        %6144 = vmatprep.subr.bf16.mxu0 %v4536
        %6145 = vmatpush1.bf16.msra.mxu0 %v4535
        %6146 = vmatprep.subr.bf16.mxu0 %v4540
        %6147 = vmatpush1.bf16.msra.mxu0 %v4539
        %6148 = vmatprep.subr.bf16.mxu0 %v4544
        %6149 = vmatpush1.bf16.msra.mxu0 %v4543
        %6150 = vmatprep.subr.bf16.mxu0 %v4548
        %6151 = vmatpush1.bf16.msra.mxu0 %v4547
        %6152 = vmatprep.subr.bf16.mxu0 %v4552
        %6153 = vmatpush1.bf16.msra.mxu0 %v4551
        %6154 = vmatprep.subr.bf16.mxu0 %v4556
        %6155 = vmatpush1.bf16.msra.mxu0 %v4555
        %6156 = vmatprep.subr.bf16.mxu0 %v4560
        %6157 = vmatpush1.bf16.msra.mxu0 %v4559
        %6158 = vmatprep.subr.bf16.mxu0 %v4564
        %6159 = vmatpush1.bf16.msra.mxu0 %v4563
        %6160 = vmatprep.subr.bf16.mxu0 %v4568
        %6161 = vmatpush1.bf16.msra.mxu0 %v4567
        %6162 = vmatprep.subr.bf16.mxu0 %v4572
        %6163 = vmatpush1.bf16.msra.mxu0 %v4571
        %6164 = vmatprep.subr.bf16.mxu0 %v4576
        %6165 = vmatpush1.bf16.msra.mxu0 %v4575
        %6166 = vmatprep.subr.bf16.mxu0 %v4580
        %6167 = vmatpush1.bf16.msra.mxu0 %v4579
        %6168 = vmatprep.subr.bf16.mxu0 %v4584
        %6169 = vmatpush1.bf16.msra.mxu0 %v4583
        %6170 = vmatprep.subr.bf16.mxu0 %v4588
        %6171 = vmatpush1.bf16.msra.mxu0 %v4587
        %6172 = vmatprep.mubr.bf16.mxu0 %v1520
        %6173 = vmatmul.mubr.bf16.gmra.mrb[0].mxu0 %v1518
        %v6174 = vpop.f32.mrb[0].mxu0
        %v6175 = vadd.f32 %v6134, %v6174
        %v6176 = vpop.f32.mrb[0].mxu0
        %v6177 = vadd.f32 %v6136, %v6176
        %v6178 = vpop.f32.mrb[0].mxu0
        %v6179 = vpop.f32.mrb[0].mxu0
        %6180 = vdwg.mxu0
        %6181 = vmatprep.subr.bf16.mxu0 %v4592
        %6182 = vmatpush1.bf16.msra.mxu0 %v4591
        %6183 = vmatprep.subr.bf16.mxu0 %v4596
        %6184 = vmatpush1.bf16.msra.mxu0 %v4595
        %6185 = vmatprep.subr.bf16.mxu0 %v4600
        %6186 = vmatpush1.bf16.msra.mxu0 %v4599
        %6187 = vmatprep.subr.bf16.mxu0 %v4604
        %6188 = vmatpush1.bf16.msra.mxu0 %v4603
        %6189 = vmatprep.subr.bf16.mxu0 %v4608
        %6190 = vmatpush1.bf16.msra.mxu0 %v4607
        %6191 = vmatprep.subr.bf16.mxu0 %v4612
        %6192 = vmatpush1.bf16.msra.mxu0 %v4611
        %6193 = vmatprep.subr.bf16.mxu0 %v4616
        %6194 = vmatpush1.bf16.msra.mxu0 %v4615
        %6195 = vmatprep.subr.bf16.mxu0 %v4620
        %6196 = vmatpush1.bf16.msra.mxu0 %v4619
        %6197 = vmatprep.subr.bf16.mxu0 %v4624
        %6198 = vmatpush1.bf16.msra.mxu0 %v4623
        %6199 = vmatprep.subr.bf16.mxu0 %v4628
        %6200 = vmatpush1.bf16.msra.mxu0 %v4627
        %6201 = vmatprep.subr.bf16.mxu0 %v4632
        %6202 = vmatpush1.bf16.msra.mxu0 %v4631
        %6203 = vmatprep.subr.bf16.mxu0 %v4636
        %6204 = vmatpush1.bf16.msra.mxu0 %v4635
        %6205 = vmatprep.subr.bf16.mxu0 %v4640
        %6206 = vmatpush1.bf16.msra.mxu0 %v4639
        %6207 = vmatprep.subr.bf16.mxu0 %v4644
        %6208 = vmatpush1.bf16.msra.mxu0 %v4643
        %6209 = vmatprep.subr.bf16.mxu0 %v4648
        %6210 = vmatpush1.bf16.msra.mxu0 %v4647
        %6211 = vmatprep.subr.bf16.mxu0 %v4652
        %6212 = vmatpush1.bf16.msra.mxu0 %v4651
        %6213 = vmatprep.mubr.bf16.mxu0 %v1536
        %6214 = vmatmul.mubr.bf16.gmra.mrb[0].mxu0 %v1528
        %v6215 = vpop.f32.mrb[0].mxu0
        %v6216 = vadd.f32 %v6175, %v6215
        %v6217 = vpop.f32.mrb[0].mxu0
        %v6218 = vadd.f32 %v6177, %v6217
        %v6219 = vpop.f32.mrb[0].mxu0
        %v6220 = vpop.f32.mrb[0].mxu0
        %6221 = vdwg.mxu0
        %6222 = vmatprep.subr.bf16.mxu0 %v4656
        %6223 = vmatpush1.bf16.msra.mxu0 %v4655
        %6224 = vmatprep.subr.bf16.mxu0 %v4660
        %6225 = vmatpush1.bf16.msra.mxu0 %v4659
        %6226 = vmatprep.subr.bf16.mxu0 %v4664
        %6227 = vmatpush1.bf16.msra.mxu0 %v4663
        %6228 = vmatprep.subr.bf16.mxu0 %v4668
        %6229 = vmatpush1.bf16.msra.mxu0 %v4667
        %6230 = vmatprep.subr.bf16.mxu0 %v4672
        %6231 = vmatpush1.bf16.msra.mxu0 %v4671
        %6232 = vmatprep.subr.bf16.mxu0 %v4676
        %6233 = vmatpush1.bf16.msra.mxu0 %v4675
        %6234 = vmatprep.subr.bf16.mxu0 %v4680
        %6235 = vmatpush1.bf16.msra.mxu0 %v4679
        %6236 = vmatprep.subr.bf16.mxu0 %v4684
        %6237 = vmatpush1.bf16.msra.mxu0 %v4683
        %6238 = vmatprep.subr.bf16.mxu0 %v4688
        %6239 = vmatpush1.bf16.msra.mxu0 %v4687
        %6240 = vmatprep.subr.bf16.mxu0 %v4692
        %6241 = vmatpush1.bf16.msra.mxu0 %v4691
        %6242 = vmatprep.subr.bf16.mxu0 %v4696
        %6243 = vmatpush1.bf16.msra.mxu0 %v4695
        %6244 = vmatprep.subr.bf16.mxu0 %v4700
        %6245 = vmatpush1.bf16.msra.mxu0 %v4699
        %6246 = vmatprep.subr.bf16.mxu0 %v4704
        %6247 = vmatpush1.bf16.msra.mxu0 %v4703
        %6248 = vmatprep.subr.bf16.mxu0 %v4708
        %6249 = vmatpush1.bf16.msra.mxu0 %v4707
        %6250 = vmatprep.subr.bf16.mxu0 %v4712
        %6251 = vmatpush1.bf16.msra.mxu0 %v4711
        %6252 = vmatprep.subr.bf16.mxu0 %v4716
        %6253 = vmatpush1.bf16.msra.mxu0 %v4715
        %6254 = vmatprep.mubr.bf16.mxu0 %v1537
        %6255 = vmatmul.mubr.bf16.gmra.mrb[0].mxu0 %v1535
        %v6256 = vpop.f32.mrb[0].mxu0
        %v6257 = vadd.f32 %v6216, %v6256
        %v6258 = vpop.f32.mrb[0].mxu0
        %v6259 = vadd.f32 %v6218, %v6258
        %v6260 = vpop.f32.mrb[0].mxu0
        %v6261 = vpop.f32.mrb[0].mxu0
        %6262 = vdwg.mxu0
        %6263 = vmatprep.subr.bf16.mxu0 %v4720
        %6264 = vmatpush1.bf16.msra.mxu0 %v4719
        %6265 = vmatprep.subr.bf16.mxu0 %v4724
        %6266 = vmatpush1.bf16.msra.mxu0 %v4723
        %6267 = vmatprep.subr.bf16.mxu0 %v4728
        %6268 = vmatpush1.bf16.msra.mxu0 %v4727
        %6269 = vmatprep.subr.bf16.mxu0 %v4732
        %6270 = vmatpush1.bf16.msra.mxu0 %v4731
        %6271 = vmatprep.subr.bf16.mxu0 %v4736
        %6272 = vmatpush1.bf16.msra.mxu0 %v4735
        %6273 = vmatprep.subr.bf16.mxu0 %v4740
        %6274 = vmatpush1.bf16.msra.mxu0 %v4739
        %6275 = vmatprep.subr.bf16.mxu0 %v4744
        %6276 = vmatpush1.bf16.msra.mxu0 %v4743
        %6277 = vmatprep.subr.bf16.mxu0 %v4748
        %6278 = vmatpush1.bf16.msra.mxu0 %v4747
        %6279 = vmatprep.subr.bf16.mxu0 %v4752
        %6280 = vmatpush1.bf16.msra.mxu0 %v4751
        %6281 = vmatprep.subr.bf16.mxu0 %v4756
        %6282 = vmatpush1.bf16.msra.mxu0 %v4755
        %6283 = vmatprep.subr.bf16.mxu0 %v4760
        %6284 = vmatpush1.bf16.msra.mxu0 %v4759
        %6285 = vmatprep.subr.bf16.mxu0 %v4764
        %6286 = vmatpush1.bf16.msra.mxu0 %v4763
        %6287 = vmatprep.subr.bf16.mxu0 %v4768
        %6288 = vmatpush1.bf16.msra.mxu0 %v4767
        %6289 = vmatprep.subr.bf16.mxu0 %v4772
        %6290 = vmatpush1.bf16.msra.mxu0 %v4771
        %6291 = vmatprep.subr.bf16.mxu0 %v4776
        %6292 = vmatpush1.bf16.msra.mxu0 %v4775
        %6293 = vmatprep.subr.bf16.mxu0 %v4780
        %6294 = vmatpush1.bf16.msra.mxu0 %v4779
        %6295 = vmatprep.mubr.bf16.mxu0 %v1553
        %6296 = vmatmul.mubr.bf16.gmra.mrb[0].mxu0 %v1545
        %v6297 = vpop.f32.mrb[0].mxu0
        %v6298 = vadd.f32 %v6257, %v6297
        %v6299 = vpop.f32.mrb[0].mxu0
        %v6300 = vadd.f32 %v6259, %v6299
        %v6301 = vpop.f32.mrb[0].mxu0
        %v6302 = vpop.f32.mrb[0].mxu0
        %6303 = vdwg.mxu0
        %6304 = vmatprep.subr.bf16.mxu0 %v4784
        %6305 = vmatpush1.bf16.msra.mxu0 %v4783
        %6306 = vmatprep.subr.bf16.mxu0 %v4788
        %6307 = vmatpush1.bf16.msra.mxu0 %v4787
        %6308 = vmatprep.subr.bf16.mxu0 %v4792
        %6309 = vmatpush1.bf16.msra.mxu0 %v4791
        %6310 = vmatprep.subr.bf16.mxu0 %v4796
        %6311 = vmatpush1.bf16.msra.mxu0 %v4795
        %6312 = vmatprep.subr.bf16.mxu0 %v4800
        %6313 = vmatpush1.bf16.msra.mxu0 %v4799
        %6314 = vmatprep.subr.bf16.mxu0 %v4804
        %6315 = vmatpush1.bf16.msra.mxu0 %v4803
        %6316 = vmatprep.subr.bf16.mxu0 %v4808
        %6317 = vmatpush1.bf16.msra.mxu0 %v4807
        %6318 = vmatprep.subr.bf16.mxu0 %v4812
        %6319 = vmatpush1.bf16.msra.mxu0 %v4811
        %6320 = vmatprep.subr.bf16.mxu0 %v4816
        %6321 = vmatpush1.bf16.msra.mxu0 %v4815
        %6322 = vmatprep.subr.bf16.mxu0 %v4820
        %6323 = vmatpush1.bf16.msra.mxu0 %v4819
        %6324 = vmatprep.subr.bf16.mxu0 %v4824
        %6325 = vmatpush1.bf16.msra.mxu0 %v4823
        %6326 = vmatprep.subr.bf16.mxu0 %v4828
        %6327 = vmatpush1.bf16.msra.mxu0 %v4827
        %6328 = vmatprep.subr.bf16.mxu0 %v4832
        %6329 = vmatpush1.bf16.msra.mxu0 %v4831
        %6330 = vmatprep.subr.bf16.mxu0 %v4836
        %6331 = vmatpush1.bf16.msra.mxu0 %v4835
        %6332 = vmatprep.subr.bf16.mxu0 %v4840
        %6333 = vmatpush1.bf16.msra.mxu0 %v4839
        %6334 = vmatprep.subr.bf16.mxu0 %v4844
        %6335 = vmatpush1.bf16.msra.mxu0 %v4843
        %6336 = vmatprep.mubr.bf16.mxu0 %v1554
        %6337 = vmatmul.mubr.bf16.gmra.mrb[0].mxu0 %v1552
        %v6338 = vpop.f32.mrb[0].mxu0
        %v6339 = vadd.f32 %v6298, %v6338
        %v6340 = vpop.f32.mrb[0].mxu0
        %v6341 = vadd.f32 %v6300, %v6340
        %v6342 = vpop.f32.mrb[0].mxu0
        %v6343 = vpop.f32.mrb[0].mxu0
        %6344 = vdwg.mxu0
        %6345 = vmatprep.subr.bf16.mxu0 %v4848
        %6346 = vmatpush1.bf16.msra.mxu0 %v4847
        %6347 = vmatprep.subr.bf16.mxu0 %v4852
        %6348 = vmatpush1.bf16.msra.mxu0 %v4851
        %6349 = vmatprep.subr.bf16.mxu0 %v4856
        %6350 = vmatpush1.bf16.msra.mxu0 %v4855
        %6351 = vmatprep.subr.bf16.mxu0 %v4860
        %6352 = vmatpush1.bf16.msra.mxu0 %v4859
        %6353 = vmatprep.subr.bf16.mxu0 %v4864
        %6354 = vmatpush1.bf16.msra.mxu0 %v4863
        %6355 = vmatprep.subr.bf16.mxu0 %v4868
        %6356 = vmatpush1.bf16.msra.mxu0 %v4867
        %6357 = vmatprep.subr.bf16.mxu0 %v4872
        %6358 = vmatpush1.bf16.msra.mxu0 %v4871
        %6359 = vmatprep.subr.bf16.mxu0 %v4876
        %6360 = vmatpush1.bf16.msra.mxu0 %v4875
        %6361 = vmatprep.subr.bf16.mxu0 %v4880
        %6362 = vmatpush1.bf16.msra.mxu0 %v4879
        %6363 = vmatprep.subr.bf16.mxu0 %v4884
        %6364 = vmatpush1.bf16.msra.mxu0 %v4883
        %6365 = vmatprep.subr.bf16.mxu0 %v4888
        %6366 = vmatpush1.bf16.msra.mxu0 %v4887
        %6367 = vmatprep.subr.bf16.mxu0 %v4892
        %6368 = vmatpush1.bf16.msra.mxu0 %v4891
        %6369 = vmatprep.subr.bf16.mxu0 %v4896
        %6370 = vmatpush1.bf16.msra.mxu0 %v4895
        %6371 = vmatprep.subr.bf16.mxu0 %v4900
        %6372 = vmatpush1.bf16.msra.mxu0 %v4899
        %6373 = vmatprep.subr.bf16.mxu0 %v4904
        %6374 = vmatpush1.bf16.msra.mxu0 %v4903
        %6375 = vmatprep.subr.bf16.mxu0 %v4908
        %6376 = vmatpush1.bf16.msra.mxu0 %v4907
        %6377 = vmatprep.mubr.bf16.mxu0 %v1570
        %6378 = vmatmul.mubr.bf16.gmra.mrb[0].mxu0 %v1562
        %v6379 = vpop.f32.mrb[0].mxu0
        %v6380 = vadd.f32 %v6339, %v6379
        %v6381 = vpop.f32.mrb[0].mxu0
        %v6382 = vadd.f32 %v6341, %v6381
        %v6383 = vpop.f32.mrb[0].mxu0
        %v6384 = vpop.f32.mrb[0].mxu0
        %6385 = vdwg.mxu0
        %6386 = vmatprep.subr.bf16.mxu0 %v4912
        %6387 = vmatpush1.bf16.msra.mxu0 %v4911
        %6388 = vmatprep.subr.bf16.mxu0 %v4916
        %6389 = vmatpush1.bf16.msra.mxu0 %v4915
        %6390 = vmatprep.subr.bf16.mxu0 %v4920
        %6391 = vmatpush1.bf16.msra.mxu0 %v4919
        %6392 = vmatprep.subr.bf16.mxu0 %v4924
        %6393 = vmatpush1.bf16.msra.mxu0 %v4923
        %6394 = vmatprep.subr.bf16.mxu0 %v4928
        %6395 = vmatpush1.bf16.msra.mxu0 %v4927
        %6396 = vmatprep.subr.bf16.mxu0 %v4932
        %6397 = vmatpush1.bf16.msra.mxu0 %v4931
        %6398 = vmatprep.subr.bf16.mxu0 %v4936
        %6399 = vmatpush1.bf16.msra.mxu0 %v4935
        %6400 = vmatprep.subr.bf16.mxu0 %v4940
        %6401 = vmatpush1.bf16.msra.mxu0 %v4939
        %6402 = vmatprep.subr.bf16.mxu0 %v4944
        %6403 = vmatpush1.bf16.msra.mxu0 %v4943
        %6404 = vmatprep.subr.bf16.mxu0 %v4948
        %6405 = vmatpush1.bf16.msra.mxu0 %v4947
        %6406 = vmatprep.subr.bf16.mxu0 %v4952
        %6407 = vmatpush1.bf16.msra.mxu0 %v4951
        %6408 = vmatprep.subr.bf16.mxu0 %v4956
        %6409 = vmatpush1.bf16.msra.mxu0 %v4955
        %6410 = vmatprep.subr.bf16.mxu0 %v4960
        %6411 = vmatpush1.bf16.msra.mxu0 %v4959
        %6412 = vmatprep.subr.bf16.mxu0 %v4964
        %6413 = vmatpush1.bf16.msra.mxu0 %v4963
        %6414 = vmatprep.subr.bf16.mxu0 %v4968
        %6415 = vmatpush1.bf16.msra.mxu0 %v4967
        %6416 = vmatprep.subr.bf16.mxu0 %v4972
        %6417 = vmatpush1.bf16.msra.mxu0 %v4971
        %6418 = vmatprep.mubr.bf16.mxu0 %v1571
        %6419 = vmatmul.mubr.bf16.gmra.mrb[0].mxu0 %v1569
        %v6420 = vpop.f32.mrb[0].mxu0
        %v6421 = vadd.f32 %v6380, %v6420
        %v6422 = vpop.f32.mrb[0].mxu0
        %v6423 = vadd.f32 %v6382, %v6422
        %v6424 = vpop.f32.mrb[0].mxu0
        %v6425 = vpop.f32.mrb[0].mxu0
        %6426 = vdwg.mxu0
        %6427 = vmatprep.subr.bf16.mxu0 %v4976
        %6428 = vmatpush1.bf16.msra.mxu0 %v4975
        %6429 = vmatprep.subr.bf16.mxu0 %v4980
        %6430 = vmatpush1.bf16.msra.mxu0 %v4979
        %6431 = vmatprep.subr.bf16.mxu0 %v4984
        %6432 = vmatpush1.bf16.msra.mxu0 %v4983
        %6433 = vmatprep.subr.bf16.mxu0 %v4988
        %6434 = vmatpush1.bf16.msra.mxu0 %v4987
        %6435 = vmatprep.subr.bf16.mxu0 %v4992
        %6436 = vmatpush1.bf16.msra.mxu0 %v4991
        %6437 = vmatprep.subr.bf16.mxu0 %v4996
        %6438 = vmatpush1.bf16.msra.mxu0 %v4995
        %6439 = vmatprep.subr.bf16.mxu0 %v5000
        %6440 = vmatpush1.bf16.msra.mxu0 %v4999
        %6441 = vmatprep.subr.bf16.mxu0 %v5004
        %6442 = vmatpush1.bf16.msra.mxu0 %v5003
        %6443 = vmatprep.subr.bf16.mxu0 %v5008
        %6444 = vmatpush1.bf16.msra.mxu0 %v5007
        %6445 = vmatprep.subr.bf16.mxu0 %v5012
        %6446 = vmatpush1.bf16.msra.mxu0 %v5011
        %6447 = vmatprep.subr.bf16.mxu0 %v5016
        %6448 = vmatpush1.bf16.msra.mxu0 %v5015
        %6449 = vmatprep.subr.bf16.mxu0 %v5020
        %6450 = vmatpush1.bf16.msra.mxu0 %v5019
        %6451 = vmatprep.subr.bf16.mxu0 %v5024
        %6452 = vmatpush1.bf16.msra.mxu0 %v5023
        %6453 = vmatprep.subr.bf16.mxu0 %v5028
        %6454 = vmatpush1.bf16.msra.mxu0 %v5027
        %6455 = vmatprep.subr.bf16.mxu0 %v5032
        %6456 = vmatpush1.bf16.msra.mxu0 %v5031
        %6457 = vmatprep.subr.bf16.mxu0 %v5036
        %6458 = vmatpush1.bf16.msra.mxu0 %v5035
        %6459 = vmatprep.mubr.bf16.mxu0 %v1587
        %6460 = vmatmul.mubr.bf16.gmra.mrb[0].mxu0 %v1579
        %v6461 = vpop.f32.mrb[0].mxu0
        %v6462 = vadd.f32 %v6421, %v6461
        %v6463 = vpop.f32.mrb[0].mxu0
        %v6464 = vadd.f32 %v6423, %v6463
        %v6465 = vpop.f32.mrb[0].mxu0
        %v6466 = vpop.f32.mrb[0].mxu0
        %6467 = vdwg.mxu0
        %6468 = vmatprep.subr.bf16.mxu0 %v5040
        %6469 = vmatpush1.bf16.msra.mxu0 %v5039
        %6470 = vmatprep.subr.bf16.mxu0 %v5044
        %6471 = vmatpush1.bf16.msra.mxu0 %v5043
        %6472 = vmatprep.subr.bf16.mxu0 %v5048
        %6473 = vmatpush1.bf16.msra.mxu0 %v5047
        %6474 = vmatprep.subr.bf16.mxu0 %v5052
        %6475 = vmatpush1.bf16.msra.mxu0 %v5051
        %6476 = vmatprep.subr.bf16.mxu0 %v5056
        %6477 = vmatpush1.bf16.msra.mxu0 %v5055
        %6478 = vmatprep.subr.bf16.mxu0 %v5060
        %6479 = vmatpush1.bf16.msra.mxu0 %v5059
        %6480 = vmatprep.subr.bf16.mxu0 %v5064
        %6481 = vmatpush1.bf16.msra.mxu0 %v5063
        %6482 = vmatprep.subr.bf16.mxu0 %v5068
        %6483 = vmatpush1.bf16.msra.mxu0 %v5067
        %6484 = vmatprep.subr.bf16.mxu0 0
        %6485 = vmatpush1.bf16.msra.mxu0 0
        %6486 = vmatprep.subr.bf16.mxu0 0
        %6487 = vmatpush1.bf16.msra.mxu0 0
        %6488 = vmatprep.subr.bf16.mxu0 0
        %6489 = vmatpush1.bf16.msra.mxu0 0
        %6490 = vmatprep.subr.bf16.mxu0 0
        %6491 = vmatpush1.bf16.msra.mxu0 0
        %6492 = vmatprep.subr.bf16.mxu0 0
        %6493 = vmatpush1.bf16.msra.mxu0 0
        %6494 = vmatprep.subr.bf16.mxu0 0
        %6495 = vmatpush1.bf16.msra.mxu0 0
        %6496 = vmatprep.subr.bf16.mxu0 0
        %6497 = vmatpush1.bf16.msra.mxu0 0
        %6498 = vmatprep.subr.bf16.mxu0 0
        %6499 = vmatpush1.bf16.msra.mxu0 0
        %6500 = vmatprep.mubr.bf16.mxu0 0
        %6501 = vmatmul.mubr.bf16.gmra.mrb[0].mxu0 %v1586
        %v6502 = vpop.f32.mrb[0].mxu0
        %v6503 = vadd.f32 %v6462, %v6502
        %v6504 = vpop.f32.mrb[0].mxu0
        %v6505 = vadd.f32 %v6464, %v6504
        %v6506 = vpop.f32.mrb[0].mxu0
        %v6507 = vpop.f32.mrb[0].mxu0
        %6508 = vdwg.mxu0
        %6509 = vmatprep.subr.bf16.mxu0 %v4210
        %6510 = vmatpush1.bf16.msra.mxu0 %v4209
        %6511 = vmatprep.subr.bf16.mxu0 %v4214
        %6512 = vmatpush1.bf16.msra.mxu0 %v4213
        %6513 = vmatprep.subr.bf16.mxu0 %v4218
        %6514 = vmatpush1.bf16.msra.mxu0 %v4217
        %6515 = vmatprep.subr.bf16.mxu0 %v4222
        %6516 = vmatpush1.bf16.msra.mxu0 %v4221
        %6517 = vmatprep.subr.bf16.mxu0 %v4226
        %6518 = vmatpush1.bf16.msra.mxu0 %v4225
        %6519 = vmatprep.subr.bf16.mxu0 %v4230
        %6520 = vmatpush1.bf16.msra.mxu0 %v4229
        %6521 = vmatprep.subr.bf16.mxu0 %v4234
        %6522 = vmatpush1.bf16.msra.mxu0 %v4233
        %6523 = vmatprep.subr.bf16.mxu0 %v4238
        %6524 = vmatpush1.bf16.msra.mxu0 %v4237
        %6525 = vmatprep.subr.bf16.mxu0 %v4242
        %6526 = vmatpush1.bf16.msra.mxu0 %v4241
        %6527 = vmatprep.subr.bf16.mxu0 %v4246
        %6528 = vmatpush1.bf16.msra.mxu0 %v4245
        %6529 = vmatprep.subr.bf16.mxu0 %v4250
        %6530 = vmatpush1.bf16.msra.mxu0 %v4249
        %6531 = vmatprep.subr.bf16.mxu0 %v4254
        %6532 = vmatpush1.bf16.msra.mxu0 %v4253
        %6533 = vmatprep.subr.bf16.mxu0 %v4258
        %6534 = vmatpush1.bf16.msra.mxu0 %v4257
        %6535 = vmatprep.subr.bf16.mxu0 %v4262
        %6536 = vmatpush1.bf16.msra.mxu0 %v4261
        %6537 = vmatprep.subr.bf16.mxu0 %v4266
        %6538 = vmatpush1.bf16.msra.mxu0 %v4265
        %6539 = vmatprep.subr.bf16.mxu0 %v4270
        %6540 = vmatpush1.bf16.msra.mxu0 %v4269
        %6541 = vmatprep.mubr.bf16.mxu0 %v1485
        %6542 = vmatmul.mubr.bf16.gmra.mrb[0].mxu0 %v1477
        %v6543 = vpop.f32.mrb[0].mxu0
        %v6544 = vadd.f32 %v1454, %v6543
        %v6545 = vpop.f32.mrb[0].mxu0
        %v6546 = vadd.f32 %v1458, %v6545
        %v6547 = vpop.f32.mrb[0].mxu0
        %v6548 = vpop.f32.mrb[0].mxu0
        %6549 = vdwg.mxu0
        %6550 = vmatprep.subr.bf16.mxu0 %v4274
        %6551 = vmatpush1.bf16.msra.mxu0 %v4273
        %6552 = vmatprep.subr.bf16.mxu0 %v4278
        %6553 = vmatpush1.bf16.msra.mxu0 %v4277
        %6554 = vmatprep.subr.bf16.mxu0 %v4282
        %6555 = vmatpush1.bf16.msra.mxu0 %v4281
        %6556 = vmatprep.subr.bf16.mxu0 %v4286
        %6557 = vmatpush1.bf16.msra.mxu0 %v4285
        %6558 = vmatprep.subr.bf16.mxu0 %v4290
        %6559 = vmatpush1.bf16.msra.mxu0 %v4289
        %6560 = vmatprep.subr.bf16.mxu0 %v4294
        %6561 = vmatpush1.bf16.msra.mxu0 %v4293
        %6562 = vmatprep.subr.bf16.mxu0 %v4298
        %6563 = vmatpush1.bf16.msra.mxu0 %v4297
        %6564 = vmatprep.subr.bf16.mxu0 %v4302
        %6565 = vmatpush1.bf16.msra.mxu0 %v4301
        %6566 = vmatprep.subr.bf16.mxu0 %v4306
        %6567 = vmatpush1.bf16.msra.mxu0 %v4305
        %6568 = vmatprep.subr.bf16.mxu0 %v4310
        %6569 = vmatpush1.bf16.msra.mxu0 %v4309
        %6570 = vmatprep.subr.bf16.mxu0 %v4314
        %6571 = vmatpush1.bf16.msra.mxu0 %v4313
        %6572 = vmatprep.subr.bf16.mxu0 %v4318
        %6573 = vmatpush1.bf16.msra.mxu0 %v4317
        %6574 = vmatprep.subr.bf16.mxu0 %v4322
        %6575 = vmatpush1.bf16.msra.mxu0 %v4321
        %6576 = vmatprep.subr.bf16.mxu0 %v4326
        %6577 = vmatpush1.bf16.msra.mxu0 %v4325
        %6578 = vmatprep.subr.bf16.mxu0 %v4330
        %6579 = vmatpush1.bf16.msra.mxu0 %v4329
        %6580 = vmatprep.subr.bf16.mxu0 %v4334
        %6581 = vmatpush1.bf16.msra.mxu0 %v4333
        %6582 = vmatprep.mubr.bf16.mxu0 %v1486
        %6583 = vmatmul.mubr.bf16.gmra.mrb[0].mxu0 %v1484
        %v6584 = vpop.f32.mrb[0].mxu0
        %v6585 = vadd.f32 %v6544, %v6584
        %v6586 = vpop.f32.mrb[0].mxu0
        %v6587 = vadd.f32 %v6546, %v6586
        %v6588 = vpop.f32.mrb[0].mxu0
        %v6589 = vpop.f32.mrb[0].mxu0
        %6590 = vdwg.mxu0
        %6591 = vmatprep.subr.bf16.mxu0 %v4338
        %6592 = vmatpush1.bf16.msra.mxu0 %v4337
        %6593 = vmatprep.subr.bf16.mxu0 %v4342
        %6594 = vmatpush1.bf16.msra.mxu0 %v4341
        %6595 = vmatprep.subr.bf16.mxu0 %v4346
        %6596 = vmatpush1.bf16.msra.mxu0 %v4345
        %6597 = vmatprep.subr.bf16.mxu0 %v4350
        %6598 = vmatpush1.bf16.msra.mxu0 %v4349
        %6599 = vmatprep.subr.bf16.mxu0 %v4354
        %6600 = vmatpush1.bf16.msra.mxu0 %v4353
        %6601 = vmatprep.subr.bf16.mxu0 %v4358
        %6602 = vmatpush1.bf16.msra.mxu0 %v4357
        %6603 = vmatprep.subr.bf16.mxu0 %v4362
        %6604 = vmatpush1.bf16.msra.mxu0 %v4361
        %6605 = vmatprep.subr.bf16.mxu0 %v4366
        %6606 = vmatpush1.bf16.msra.mxu0 %v4365
        %6607 = vmatprep.subr.bf16.mxu0 %v4370
        %6608 = vmatpush1.bf16.msra.mxu0 %v4369
        %6609 = vmatprep.subr.bf16.mxu0 %v4374
        %6610 = vmatpush1.bf16.msra.mxu0 %v4373
        %6611 = vmatprep.subr.bf16.mxu0 %v4378
        %6612 = vmatpush1.bf16.msra.mxu0 %v4377
        %6613 = vmatprep.subr.bf16.mxu0 %v4382
        %6614 = vmatpush1.bf16.msra.mxu0 %v4381
        %6615 = vmatprep.subr.bf16.mxu0 %v4386
        %6616 = vmatpush1.bf16.msra.mxu0 %v4385
        %6617 = vmatprep.subr.bf16.mxu0 %v4390
        %6618 = vmatpush1.bf16.msra.mxu0 %v4389
        %6619 = vmatprep.subr.bf16.mxu0 %v4394
        %6620 = vmatpush1.bf16.msra.mxu0 %v4393
        %6621 = vmatprep.subr.bf16.mxu0 %v4398
        %6622 = vmatpush1.bf16.msra.mxu0 %v4397
        %6623 = vmatprep.mubr.bf16.mxu0 %v1502
        %6624 = vmatmul.mubr.bf16.gmra.mrb[0].mxu0 %v1494
        %v6625 = vpop.f32.mrb[0].mxu0
        %v6626 = vadd.f32 %v6585, %v6625
        %v6627 = vpop.f32.mrb[0].mxu0
        %v6628 = vadd.f32 %v6587, %v6627
        %v6629 = vpop.f32.mrb[0].mxu0
        %v6630 = vpop.f32.mrb[0].mxu0
        %6631 = vdwg.mxu0
        %6632 = vmatprep.subr.bf16.mxu0 %v4402
        %6633 = vmatpush1.bf16.msra.mxu0 %v4401
        %6634 = vmatprep.subr.bf16.mxu0 %v4406
        %6635 = vmatpush1.bf16.msra.mxu0 %v4405
        %6636 = vmatprep.subr.bf16.mxu0 %v4410
        %6637 = vmatpush1.bf16.msra.mxu0 %v4409
        %6638 = vmatprep.subr.bf16.mxu0 %v4414
        %6639 = vmatpush1.bf16.msra.mxu0 %v4413
        %6640 = vmatprep.subr.bf16.mxu0 %v4418
        %6641 = vmatpush1.bf16.msra.mxu0 %v4417
        %6642 = vmatprep.subr.bf16.mxu0 %v4422
        %6643 = vmatpush1.bf16.msra.mxu0 %v4421
        %6644 = vmatprep.subr.bf16.mxu0 %v4426
        %6645 = vmatpush1.bf16.msra.mxu0 %v4425
        %6646 = vmatprep.subr.bf16.mxu0 %v4430
        %6647 = vmatpush1.bf16.msra.mxu0 %v4429
        %6648 = vmatprep.subr.bf16.mxu0 %v4434
        %6649 = vmatpush1.bf16.msra.mxu0 %v4433
        %6650 = vmatprep.subr.bf16.mxu0 %v4438
        %6651 = vmatpush1.bf16.msra.mxu0 %v4437
        %6652 = vmatprep.subr.bf16.mxu0 %v4442
        %6653 = vmatpush1.bf16.msra.mxu0 %v4441
        %6654 = vmatprep.subr.bf16.mxu0 %v4446
        %6655 = vmatpush1.bf16.msra.mxu0 %v4445
        %6656 = vmatprep.subr.bf16.mxu0 %v4450
        %6657 = vmatpush1.bf16.msra.mxu0 %v4449
        %6658 = vmatprep.subr.bf16.mxu0 %v4454
        %6659 = vmatpush1.bf16.msra.mxu0 %v4453
        %6660 = vmatprep.subr.bf16.mxu0 %v4458
        %6661 = vmatpush1.bf16.msra.mxu0 %v4457
        %6662 = vmatprep.subr.bf16.mxu0 %v4462
        %6663 = vmatpush1.bf16.msra.mxu0 %v4461
        %6664 = vmatprep.mubr.bf16.mxu0 %v1503
        %6665 = vmatmul.mubr.bf16.gmra.mrb[0].mxu0 %v1501
        %v6666 = vpop.f32.mrb[0].mxu0
        %v6667 = vadd.f32 %v6626, %v6666
        %v6668 = vpop.f32.mrb[0].mxu0
        %v6669 = vadd.f32 %v6628, %v6668
        %v6670 = vpop.f32.mrb[0].mxu0
        %v6671 = vpop.f32.mrb[0].mxu0
        %6672 = vdwg.mxu0
        %6673 = vmatprep.subr.bf16.mxu0 %v4466
        %6674 = vmatpush1.bf16.msra.mxu0 %v4465
        %6675 = vmatprep.subr.bf16.mxu0 %v4470
        %6676 = vmatpush1.bf16.msra.mxu0 %v4469
        %6677 = vmatprep.subr.bf16.mxu0 %v4474
        %6678 = vmatpush1.bf16.msra.mxu0 %v4473
        %6679 = vmatprep.subr.bf16.mxu0 %v4478
        %6680 = vmatpush1.bf16.msra.mxu0 %v4477
        %6681 = vmatprep.subr.bf16.mxu0 %v4482
        %6682 = vmatpush1.bf16.msra.mxu0 %v4481
        %6683 = vmatprep.subr.bf16.mxu0 %v4486
        %6684 = vmatpush1.bf16.msra.mxu0 %v4485
        %6685 = vmatprep.subr.bf16.mxu0 %v4490
        %6686 = vmatpush1.bf16.msra.mxu0 %v4489
        %6687 = vmatprep.subr.bf16.mxu0 %v4494
        %6688 = vmatpush1.bf16.msra.mxu0 %v4493
        %6689 = vmatprep.subr.bf16.mxu0 %v4498
        %6690 = vmatpush1.bf16.msra.mxu0 %v4497
        %6691 = vmatprep.subr.bf16.mxu0 %v4502
        %6692 = vmatpush1.bf16.msra.mxu0 %v4501
        %6693 = vmatprep.subr.bf16.mxu0 %v4506
        %6694 = vmatpush1.bf16.msra.mxu0 %v4505
        %6695 = vmatprep.subr.bf16.mxu0 %v4510
        %6696 = vmatpush1.bf16.msra.mxu0 %v4509
        %6697 = vmatprep.subr.bf16.mxu0 %v4514
        %6698 = vmatpush1.bf16.msra.mxu0 %v4513
        %6699 = vmatprep.subr.bf16.mxu0 %v4518
        %6700 = vmatpush1.bf16.msra.mxu0 %v4517
        %6701 = vmatprep.subr.bf16.mxu0 %v4522
        %6702 = vmatpush1.bf16.msra.mxu0 %v4521
        %6703 = vmatprep.subr.bf16.mxu0 %v4526
        %6704 = vmatpush1.bf16.msra.mxu0 %v4525
        %6705 = vmatprep.mubr.bf16.mxu0 %v1519
        %6706 = vmatmul.mubr.bf16.gmra.mrb[0].mxu0 %v1511
        %v6707 = vpop.f32.mrb[0].mxu0
        %v6708 = vadd.f32 %v6667, %v6707
        %v6709 = vpop.f32.mrb[0].mxu0
        %v6710 = vadd.f32 %v6669, %v6709
        %v6711 = vpop.f32.mrb[0].mxu0
        %v6712 = vpop.f32.mrb[0].mxu0
        %6713 = vdwg.mxu0
        %6714 = vmatprep.subr.bf16.mxu0 %v4530
        %6715 = vmatpush1.bf16.msra.mxu0 %v4529
        %6716 = vmatprep.subr.bf16.mxu0 %v4534
        %6717 = vmatpush1.bf16.msra.mxu0 %v4533
        %6718 = vmatprep.subr.bf16.mxu0 %v4538
        %6719 = vmatpush1.bf16.msra.mxu0 %v4537
        %6720 = vmatprep.subr.bf16.mxu0 %v4542
        %6721 = vmatpush1.bf16.msra.mxu0 %v4541
        %6722 = vmatprep.subr.bf16.mxu0 %v4546
        %6723 = vmatpush1.bf16.msra.mxu0 %v4545
        %6724 = vmatprep.subr.bf16.mxu0 %v4550
        %6725 = vmatpush1.bf16.msra.mxu0 %v4549
        %6726 = vmatprep.subr.bf16.mxu0 %v4554
        %6727 = vmatpush1.bf16.msra.mxu0 %v4553
        %6728 = vmatprep.subr.bf16.mxu0 %v4558
        %6729 = vmatpush1.bf16.msra.mxu0 %v4557
        %6730 = vmatprep.subr.bf16.mxu0 %v4562
        %6731 = vmatpush1.bf16.msra.mxu0 %v4561
        %6732 = vmatprep.subr.bf16.mxu0 %v4566
        %6733 = vmatpush1.bf16.msra.mxu0 %v4565
        %6734 = vmatprep.subr.bf16.mxu0 %v4570
        %6735 = vmatpush1.bf16.msra.mxu0 %v4569
        %6736 = vmatprep.subr.bf16.mxu0 %v4574
        %6737 = vmatpush1.bf16.msra.mxu0 %v4573
        %6738 = vmatprep.subr.bf16.mxu0 %v4578
        %6739 = vmatpush1.bf16.msra.mxu0 %v4577
        %6740 = vmatprep.subr.bf16.mxu0 %v4582
        %6741 = vmatpush1.bf16.msra.mxu0 %v4581
        %6742 = vmatprep.subr.bf16.mxu0 %v4586
        %6743 = vmatpush1.bf16.msra.mxu0 %v4585
        %6744 = vmatprep.subr.bf16.mxu0 %v4590
        %6745 = vmatpush1.bf16.msra.mxu0 %v4589
        %6746 = vmatprep.mubr.bf16.mxu0 %v1520
        %6747 = vmatmul.mubr.bf16.gmra.mrb[0].mxu0 %v1518
        %v6748 = vpop.f32.mrb[0].mxu0
        %v6749 = vadd.f32 %v6708, %v6748
        %v6750 = vpop.f32.mrb[0].mxu0
        %v6751 = vadd.f32 %v6710, %v6750
        %v6752 = vpop.f32.mrb[0].mxu0
        %v6753 = vpop.f32.mrb[0].mxu0
        %6754 = vdwg.mxu0
        %6755 = vmatprep.subr.bf16.mxu0 %v4594
        %6756 = vmatpush1.bf16.msra.mxu0 %v4593
        %6757 = vmatprep.subr.bf16.mxu0 %v4598
        %6758 = vmatpush1.bf16.msra.mxu0 %v4597
        %6759 = vmatprep.subr.bf16.mxu0 %v4602
        %6760 = vmatpush1.bf16.msra.mxu0 %v4601
        %6761 = vmatprep.subr.bf16.mxu0 %v4606
        %6762 = vmatpush1.bf16.msra.mxu0 %v4605
        %6763 = vmatprep.subr.bf16.mxu0 %v4610
        %6764 = vmatpush1.bf16.msra.mxu0 %v4609
        %6765 = vmatprep.subr.bf16.mxu0 %v4614
        %6766 = vmatpush1.bf16.msra.mxu0 %v4613
        %6767 = vmatprep.subr.bf16.mxu0 %v4618
        %6768 = vmatpush1.bf16.msra.mxu0 %v4617
        %6769 = vmatprep.subr.bf16.mxu0 %v4622
        %6770 = vmatpush1.bf16.msra.mxu0 %v4621
        %6771 = vmatprep.subr.bf16.mxu0 %v4626
        %6772 = vmatpush1.bf16.msra.mxu0 %v4625
        %6773 = vmatprep.subr.bf16.mxu0 %v4630
        %6774 = vmatpush1.bf16.msra.mxu0 %v4629
        %6775 = vmatprep.subr.bf16.mxu0 %v4634
        %6776 = vmatpush1.bf16.msra.mxu0 %v4633
        %6777 = vmatprep.subr.bf16.mxu0 %v4638
        %6778 = vmatpush1.bf16.msra.mxu0 %v4637
        %6779 = vmatprep.subr.bf16.mxu0 %v4642
        %6780 = vmatpush1.bf16.msra.mxu0 %v4641
        %6781 = vmatprep.subr.bf16.mxu0 %v4646
        %6782 = vmatpush1.bf16.msra.mxu0 %v4645
        %6783 = vmatprep.subr.bf16.mxu0 %v4650
        %6784 = vmatpush1.bf16.msra.mxu0 %v4649
        %6785 = vmatprep.subr.bf16.mxu0 %v4654
        %6786 = vmatpush1.bf16.msra.mxu0 %v4653
        %6787 = vmatprep.mubr.bf16.mxu0 %v1536
        %6788 = vmatmul.mubr.bf16.gmra.mrb[0].mxu0 %v1528
        %v6789 = vpop.f32.mrb[0].mxu0
        %v6790 = vadd.f32 %v6749, %v6789
        %v6791 = vpop.f32.mrb[0].mxu0
        %v6792 = vadd.f32 %v6751, %v6791
        %v6793 = vpop.f32.mrb[0].mxu0
        %v6794 = vpop.f32.mrb[0].mxu0
        %6795 = vdwg.mxu0
        %6796 = vmatprep.subr.bf16.mxu0 %v4658
        %6797 = vmatpush1.bf16.msra.mxu0 %v4657
        %6798 = vmatprep.subr.bf16.mxu0 %v4662
        %6799 = vmatpush1.bf16.msra.mxu0 %v4661
        %6800 = vmatprep.subr.bf16.mxu0 %v4666
        %6801 = vmatpush1.bf16.msra.mxu0 %v4665
        %6802 = vmatprep.subr.bf16.mxu0 %v4670
        %6803 = vmatpush1.bf16.msra.mxu0 %v4669
        %6804 = vmatprep.subr.bf16.mxu0 %v4674
        %6805 = vmatpush1.bf16.msra.mxu0 %v4673
        %6806 = vmatprep.subr.bf16.mxu0 %v4678
        %6807 = vmatpush1.bf16.msra.mxu0 %v4677
        %6808 = vmatprep.subr.bf16.mxu0 %v4682
        %6809 = vmatpush1.bf16.msra.mxu0 %v4681
        %6810 = vmatprep.subr.bf16.mxu0 %v4686
        %6811 = vmatpush1.bf16.msra.mxu0 %v4685
        %6812 = vmatprep.subr.bf16.mxu0 %v4690
        %6813 = vmatpush1.bf16.msra.mxu0 %v4689
        %6814 = vmatprep.subr.bf16.mxu0 %v4694
        %6815 = vmatpush1.bf16.msra.mxu0 %v4693
        %6816 = vmatprep.subr.bf16.mxu0 %v4698
        %6817 = vmatpush1.bf16.msra.mxu0 %v4697
        %6818 = vmatprep.subr.bf16.mxu0 %v4702
        %6819 = vmatpush1.bf16.msra.mxu0 %v4701
        %6820 = vmatprep.subr.bf16.mxu0 %v4706
        %6821 = vmatpush1.bf16.msra.mxu0 %v4705
        %6822 = vmatprep.subr.bf16.mxu0 %v4710
        %6823 = vmatpush1.bf16.msra.mxu0 %v4709
        %6824 = vmatprep.subr.bf16.mxu0 %v4714
        %6825 = vmatpush1.bf16.msra.mxu0 %v4713
        %6826 = vmatprep.subr.bf16.mxu0 %v4718
        %6827 = vmatpush1.bf16.msra.mxu0 %v4717
        %6828 = vmatprep.mubr.bf16.mxu0 %v1537
        %6829 = vmatmul.mubr.bf16.gmra.mrb[0].mxu0 %v1535
        %v6830 = vpop.f32.mrb[0].mxu0
        %v6831 = vadd.f32 %v6790, %v6830
        %v6832 = vpop.f32.mrb[0].mxu0
        %v6833 = vadd.f32 %v6792, %v6832
        %v6834 = vpop.f32.mrb[0].mxu0
        %v6835 = vpop.f32.mrb[0].mxu0
        %6836 = vdwg.mxu0
        %6837 = vmatprep.subr.bf16.mxu0 %v4722
        %6838 = vmatpush1.bf16.msra.mxu0 %v4721
        %6839 = vmatprep.subr.bf16.mxu0 %v4726
        %6840 = vmatpush1.bf16.msra.mxu0 %v4725
        %6841 = vmatprep.subr.bf16.mxu0 %v4730
        %6842 = vmatpush1.bf16.msra.mxu0 %v4729
        %6843 = vmatprep.subr.bf16.mxu0 %v4734
        %6844 = vmatpush1.bf16.msra.mxu0 %v4733
        %6845 = vmatprep.subr.bf16.mxu0 %v4738
        %6846 = vmatpush1.bf16.msra.mxu0 %v4737
        %6847 = vmatprep.subr.bf16.mxu0 %v4742
        %6848 = vmatpush1.bf16.msra.mxu0 %v4741
        %6849 = vmatprep.subr.bf16.mxu0 %v4746
        %6850 = vmatpush1.bf16.msra.mxu0 %v4745
        %6851 = vmatprep.subr.bf16.mxu0 %v4750
        %6852 = vmatpush1.bf16.msra.mxu0 %v4749
        %6853 = vmatprep.subr.bf16.mxu0 %v4754
        %6854 = vmatpush1.bf16.msra.mxu0 %v4753
        %6855 = vmatprep.subr.bf16.mxu0 %v4758
        %6856 = vmatpush1.bf16.msra.mxu0 %v4757
        %6857 = vmatprep.subr.bf16.mxu0 %v4762
        %6858 = vmatpush1.bf16.msra.mxu0 %v4761
        %6859 = vmatprep.subr.bf16.mxu0 %v4766
        %6860 = vmatpush1.bf16.msra.mxu0 %v4765
        %6861 = vmatprep.subr.bf16.mxu0 %v4770
        %6862 = vmatpush1.bf16.msra.mxu0 %v4769
        %6863 = vmatprep.subr.bf16.mxu0 %v4774
        %6864 = vmatpush1.bf16.msra.mxu0 %v4773
        %6865 = vmatprep.subr.bf16.mxu0 %v4778
        %6866 = vmatpush1.bf16.msra.mxu0 %v4777
        %6867 = vmatprep.subr.bf16.mxu0 %v4782
        %6868 = vmatpush1.bf16.msra.mxu0 %v4781
        %6869 = vmatprep.mubr.bf16.mxu0 %v1553
        %6870 = vmatmul.mubr.bf16.gmra.mrb[0].mxu0 %v1545
        %v6871 = vpop.f32.mrb[0].mxu0
        %v6872 = vadd.f32 %v6831, %v6871
        %v6873 = vpop.f32.mrb[0].mxu0
        %v6874 = vadd.f32 %v6833, %v6873
        %v6875 = vpop.f32.mrb[0].mxu0
        %v6876 = vpop.f32.mrb[0].mxu0
        %6877 = vdwg.mxu0
        %6878 = vmatprep.subr.bf16.mxu0 %v4786
        %6879 = vmatpush1.bf16.msra.mxu0 %v4785
        %6880 = vmatprep.subr.bf16.mxu0 %v4790
        %6881 = vmatpush1.bf16.msra.mxu0 %v4789
        %6882 = vmatprep.subr.bf16.mxu0 %v4794
        %6883 = vmatpush1.bf16.msra.mxu0 %v4793
        %6884 = vmatprep.subr.bf16.mxu0 %v4798
        %6885 = vmatpush1.bf16.msra.mxu0 %v4797
        %6886 = vmatprep.subr.bf16.mxu0 %v4802
        %6887 = vmatpush1.bf16.msra.mxu0 %v4801
        %6888 = vmatprep.subr.bf16.mxu0 %v4806
        %6889 = vmatpush1.bf16.msra.mxu0 %v4805
        %6890 = vmatprep.subr.bf16.mxu0 %v4810
        %6891 = vmatpush1.bf16.msra.mxu0 %v4809
        %6892 = vmatprep.subr.bf16.mxu0 %v4814
        %6893 = vmatpush1.bf16.msra.mxu0 %v4813
        %6894 = vmatprep.subr.bf16.mxu0 %v4818
        %6895 = vmatpush1.bf16.msra.mxu0 %v4817
        %6896 = vmatprep.subr.bf16.mxu0 %v4822
        %6897 = vmatpush1.bf16.msra.mxu0 %v4821
        %6898 = vmatprep.subr.bf16.mxu0 %v4826
        %6899 = vmatpush1.bf16.msra.mxu0 %v4825
        %6900 = vmatprep.subr.bf16.mxu0 %v4830
        %6901 = vmatpush1.bf16.msra.mxu0 %v4829
        %6902 = vmatprep.subr.bf16.mxu0 %v4834
        %6903 = vmatpush1.bf16.msra.mxu0 %v4833
        %6904 = vmatprep.subr.bf16.mxu0 %v4838
        %6905 = vmatpush1.bf16.msra.mxu0 %v4837
        %6906 = vmatprep.subr.bf16.mxu0 %v4842
        %6907 = vmatpush1.bf16.msra.mxu0 %v4841
        %6908 = vmatprep.subr.bf16.mxu0 %v4846
        %6909 = vmatpush1.bf16.msra.mxu0 %v4845
        %6910 = vmatprep.mubr.bf16.mxu0 %v1554
        %6911 = vmatmul.mubr.bf16.gmra.mrb[0].mxu0 %v1552
        %v6912 = vpop.f32.mrb[0].mxu0
        %v6913 = vadd.f32 %v6872, %v6912
        %v6914 = vpop.f32.mrb[0].mxu0
        %v6915 = vadd.f32 %v6874, %v6914
        %v6916 = vpop.f32.mrb[0].mxu0
        %v6917 = vpop.f32.mrb[0].mxu0
        %6918 = vdwg.mxu0
        %6919 = vmatprep.subr.bf16.mxu0 %v4850
        %6920 = vmatpush1.bf16.msra.mxu0 %v4849
        %6921 = vmatprep.subr.bf16.mxu0 %v4854
        %6922 = vmatpush1.bf16.msra.mxu0 %v4853
        %6923 = vmatprep.subr.bf16.mxu0 %v4858
        %6924 = vmatpush1.bf16.msra.mxu0 %v4857
        %6925 = vmatprep.subr.bf16.mxu0 %v4862
        %6926 = vmatpush1.bf16.msra.mxu0 %v4861
        %6927 = vmatprep.subr.bf16.mxu0 %v4866
        %6928 = vmatpush1.bf16.msra.mxu0 %v4865
        %6929 = vmatprep.subr.bf16.mxu0 %v4870
        %6930 = vmatpush1.bf16.msra.mxu0 %v4869
        %6931 = vmatprep.subr.bf16.mxu0 %v4874
        %6932 = vmatpush1.bf16.msra.mxu0 %v4873
        %6933 = vmatprep.subr.bf16.mxu0 %v4878
        %6934 = vmatpush1.bf16.msra.mxu0 %v4877
        %6935 = vmatprep.subr.bf16.mxu0 %v4882
        %6936 = vmatpush1.bf16.msra.mxu0 %v4881
        %6937 = vmatprep.subr.bf16.mxu0 %v4886
        %6938 = vmatpush1.bf16.msra.mxu0 %v4885
        %6939 = vmatprep.subr.bf16.mxu0 %v4890
        %6940 = vmatpush1.bf16.msra.mxu0 %v4889
        %6941 = vmatprep.subr.bf16.mxu0 %v4894
        %6942 = vmatpush1.bf16.msra.mxu0 %v4893
        %6943 = vmatprep.subr.bf16.mxu0 %v4898
        %6944 = vmatpush1.bf16.msra.mxu0 %v4897
        %6945 = vmatprep.subr.bf16.mxu0 %v4902
        %6946 = vmatpush1.bf16.msra.mxu0 %v4901
        %6947 = vmatprep.subr.bf16.mxu0 %v4906
        %6948 = vmatpush1.bf16.msra.mxu0 %v4905
        %6949 = vmatprep.subr.bf16.mxu0 %v4910
        %6950 = vmatpush1.bf16.msra.mxu0 %v4909
        %6951 = vmatprep.mubr.bf16.mxu0 %v1570
        %6952 = vmatmul.mubr.bf16.gmra.mrb[0].mxu0 %v1562
        %v6953 = vpop.f32.mrb[0].mxu0
        %v6954 = vadd.f32 %v6913, %v6953
        %v6955 = vpop.f32.mrb[0].mxu0
        %v6956 = vadd.f32 %v6915, %v6955
        %v6957 = vpop.f32.mrb[0].mxu0
        %v6958 = vpop.f32.mrb[0].mxu0
        %6959 = vdwg.mxu0
        %6960 = vmatprep.subr.bf16.mxu0 %v4914
        %6961 = vmatpush1.bf16.msra.mxu0 %v4913
        %6962 = vmatprep.subr.bf16.mxu0 %v4918
        %6963 = vmatpush1.bf16.msra.mxu0 %v4917
        %6964 = vmatprep.subr.bf16.mxu0 %v4922
        %6965 = vmatpush1.bf16.msra.mxu0 %v4921
        %6966 = vmatprep.subr.bf16.mxu0 %v4926
        %6967 = vmatpush1.bf16.msra.mxu0 %v4925
        %6968 = vmatprep.subr.bf16.mxu0 %v4930
        %6969 = vmatpush1.bf16.msra.mxu0 %v4929
        %6970 = vmatprep.subr.bf16.mxu0 %v4934
        %6971 = vmatpush1.bf16.msra.mxu0 %v4933
        %6972 = vmatprep.subr.bf16.mxu0 %v4938
        %6973 = vmatpush1.bf16.msra.mxu0 %v4937
        %6974 = vmatprep.subr.bf16.mxu0 %v4942
        %6975 = vmatpush1.bf16.msra.mxu0 %v4941
        %6976 = vmatprep.subr.bf16.mxu0 %v4946
        %6977 = vmatpush1.bf16.msra.mxu0 %v4945
        %6978 = vmatprep.subr.bf16.mxu0 %v4950
        %6979 = vmatpush1.bf16.msra.mxu0 %v4949
        %6980 = vmatprep.subr.bf16.mxu0 %v4954
        %6981 = vmatpush1.bf16.msra.mxu0 %v4953
        %6982 = vmatprep.subr.bf16.mxu0 %v4958
        %6983 = vmatpush1.bf16.msra.mxu0 %v4957
        %6984 = vmatprep.subr.bf16.mxu0 %v4962
        %6985 = vmatpush1.bf16.msra.mxu0 %v4961
        %6986 = vmatprep.subr.bf16.mxu0 %v4966
        %6987 = vmatpush1.bf16.msra.mxu0 %v4965
        %6988 = vmatprep.subr.bf16.mxu0 %v4970
        %6989 = vmatpush1.bf16.msra.mxu0 %v4969
        %6990 = vmatprep.subr.bf16.mxu0 %v4974
        %6991 = vmatpush1.bf16.msra.mxu0 %v4973
        %6992 = vmatprep.mubr.bf16.mxu0 %v1571
        %6993 = vmatmul.mubr.bf16.gmra.mrb[0].mxu0 %v1569
        %v6994 = vpop.f32.mrb[0].mxu0
        %v6995 = vadd.f32 %v6954, %v6994
        %v6996 = vpop.f32.mrb[0].mxu0
        %v6997 = vadd.f32 %v6956, %v6996
        %v6998 = vpop.f32.mrb[0].mxu0
        %v6999 = vpop.f32.mrb[0].mxu0
        %7000 = vdwg.mxu0
        %7001 = vmatprep.subr.bf16.mxu0 %v4978
        %7002 = vmatpush1.bf16.msra.mxu0 %v4977
        %7003 = vmatprep.subr.bf16.mxu0 %v4982
        %7004 = vmatpush1.bf16.msra.mxu0 %v4981
        %7005 = vmatprep.subr.bf16.mxu0 %v4986
        %7006 = vmatpush1.bf16.msra.mxu0 %v4985
        %7007 = vmatprep.subr.bf16.mxu0 %v4990
        %7008 = vmatpush1.bf16.msra.mxu0 %v4989
        %7009 = vmatprep.subr.bf16.mxu0 %v4994
        %7010 = vmatpush1.bf16.msra.mxu0 %v4993
        %7011 = vmatprep.subr.bf16.mxu0 %v4998
        %7012 = vmatpush1.bf16.msra.mxu0 %v4997
        %7013 = vmatprep.subr.bf16.mxu0 %v5002
        %7014 = vmatpush1.bf16.msra.mxu0 %v5001
        %7015 = vmatprep.subr.bf16.mxu0 %v5006
        %7016 = vmatpush1.bf16.msra.mxu0 %v5005
        %7017 = vmatprep.subr.bf16.mxu0 %v5010
        %7018 = vmatpush1.bf16.msra.mxu0 %v5009
        %7019 = vmatprep.subr.bf16.mxu0 %v5014
        %7020 = vmatpush1.bf16.msra.mxu0 %v5013
        %7021 = vmatprep.subr.bf16.mxu0 %v5018
        %7022 = vmatpush1.bf16.msra.mxu0 %v5017
        %7023 = vmatprep.subr.bf16.mxu0 %v5022
        %7024 = vmatpush1.bf16.msra.mxu0 %v5021
        %7025 = vmatprep.subr.bf16.mxu0 %v5026
        %7026 = vmatpush1.bf16.msra.mxu0 %v5025
        %7027 = vmatprep.subr.bf16.mxu0 %v5030
        %7028 = vmatpush1.bf16.msra.mxu0 %v5029
        %7029 = vmatprep.subr.bf16.mxu0 %v5034
        %7030 = vmatpush1.bf16.msra.mxu0 %v5033
        %7031 = vmatprep.subr.bf16.mxu0 %v5038
        %7032 = vmatpush1.bf16.msra.mxu0 %v5037
        %7033 = vmatprep.mubr.bf16.mxu0 %v1587
        %7034 = vmatmul.mubr.bf16.gmra.mrb[0].mxu0 %v1579
        %v7035 = vpop.f32.mrb[0].mxu0
        %v7036 = vadd.f32 %v6995, %v7035
        %v7037 = vpop.f32.mrb[0].mxu0
        %v7038 = vadd.f32 %v6997, %v7037
        %v7039 = vpop.f32.mrb[0].mxu0
        %v7040 = vpop.f32.mrb[0].mxu0
        %7041 = vdwg.mxu0
        %7042 = vmatprep.subr.bf16.mxu0 %v5042
        %7043 = vmatpush1.bf16.msra.mxu0 %v5041
        %7044 = vmatprep.subr.bf16.mxu0 %v5046
        %7045 = vmatpush1.bf16.msra.mxu0 %v5045
        %7046 = vmatprep.subr.bf16.mxu0 %v5050
        %7047 = vmatpush1.bf16.msra.mxu0 %v5049
        %7048 = vmatprep.subr.bf16.mxu0 %v5054
        %7049 = vmatpush1.bf16.msra.mxu0 %v5053
        %7050 = vmatprep.subr.bf16.mxu0 %v5058
        %7051 = vmatpush1.bf16.msra.mxu0 %v5057
        %7052 = vmatprep.subr.bf16.mxu0 %v5062
        %7053 = vmatpush1.bf16.msra.mxu0 %v5061
        %7054 = vmatprep.subr.bf16.mxu0 %v5066
        %7055 = vmatpush1.bf16.msra.mxu0 %v5065
        %7056 = vmatprep.subr.bf16.mxu0 %v5070
        %7057 = vmatpush1.bf16.msra.mxu0 %v5069
        %7058 = vmatprep.subr.bf16.mxu0 0
        %7059 = vmatpush1.bf16.msra.mxu0 0
        %7060 = vmatprep.subr.bf16.mxu0 0
        %7061 = vmatpush1.bf16.msra.mxu0 0
        %7062 = vmatprep.subr.bf16.mxu0 0
        %7063 = vmatpush1.bf16.msra.mxu0 0
        %7064 = vmatprep.subr.bf16.mxu0 0
        %7065 = vmatpush1.bf16.msra.mxu0 0
        %7066 = vmatprep.subr.bf16.mxu0 0
        %7067 = vmatpush1.bf16.msra.mxu0 0
        %7068 = vmatprep.subr.bf16.mxu0 0
        %7069 = vmatpush1.bf16.msra.mxu0 0
        %7070 = vmatprep.subr.bf16.mxu0 0
        %7071 = vmatpush1.bf16.msra.mxu0 0
        %7072 = vmatprep.subr.bf16.mxu0 0
        %7073 = vmatpush1.bf16.msra.mxu0 0
        %7074 = vmatprep.mubr.bf16.mxu0 0
        %7075 = vmatmul.mubr.bf16.gmra.mrb[0].mxu0 %v1586
        %v7076 = vpop.f32.mrb[0].mxu0
        %v7077 = vadd.f32 %v7036, %v7076
        %v7078 = vpop.f32.mrb[0].mxu0
        %v7079 = vadd.f32 %v7038, %v7078
        %v7080 = vpop.f32.mrb[0].mxu0
        %v7081 = vpop.f32.mrb[0].mxu0
        %7082 = vdwg.mxu0
        %vm7083 = vcmask 1043456
        %v7084 = vsel %vm7083, %v6503, 0.0
        %v7085 = vrot.slane %v7084, 4
        %v7086 = vadd.f32 %v7084, %v7085
        %v7087 = vrot.slane %v7086, 2
        %v7088 = vadd.f32 %v7086, %v7087
        %v7089 = vrot.slane %v7088, 1
        %v7090 = vadd.f32 %v7088, %v7089
        %v7091 = vsel %vm7083, %v6505, 0.0
        %v7092 = vrot.slane %v7091, 4
        %v7093 = vadd.f32 %v7091, %v7092
        %v7094 = vrot.slane %v7093, 2
        %v7095 = vadd.f32 %v7093, %v7094
        %v7096 = vrot.slane %v7095, 1
        %v7097 = vadd.f32 %v7095, %v7096
        %v7098 = vsel %vm7083, %v7077, 0.0
        %v7099 = vrot.slane %v7098, 4
        %v7100 = vadd.f32 %v7098, %v7099
        %v7101 = vrot.slane %v7100, 2
        %v7102 = vadd.f32 %v7100, %v7101
        %v7103 = vrot.slane %v7102, 1
        %v7104 = vadd.f32 %v7102, %v7103
        %v7105 = vsel %vm7083, %v7079, 0.0
        %v7106 = vrot.slane %v7105, 4
        %v7107 = vadd.f32 %v7105, %v7106
        %v7108 = vrot.slane %v7107, 2
        %v7109 = vadd.f32 %v7107, %v7108
        %v7110 = vrot.slane %v7109, 1
        %v7111 = vadd.f32 %v7109, %v7110
        %v7112 = vrcp.pop 4.0
        %v7113 = vmul.f32 %v7090, %v7112
        %v7114 = vmul.f32 %v7097, %v7112
        %v7115 = vmul.f32 %v7104, %v7112
        %v7116 = vmul.f32 %v7111, %v7112
        %v7117 = vsub.f32 %v6503, %v7113
        %v7118 = vsub.f32 %v6505, %v7114
        %v7119 = vsub.f32 %v7077, %v7115
        %v7120 = vsub.f32 %v7079, %v7116
        %v7121 = vmul.f32 %v7117, %v7117
        %v7122 = vmul.f32 %v7118, %v7118
        %v7123 = vmul.f32 %v7119, %v7119
        %v7124 = vmul.f32 %v7120, %v7120
        %v7125 = vsel %vm7083, %v7121, 0.0
        %v7126 = vrot.slane %v7125, 4
        %v7127 = vadd.f32 %v7125, %v7126
        %v7128 = vrot.slane %v7127, 2
        %v7129 = vadd.f32 %v7127, %v7128
        %v7130 = vrot.slane %v7129, 1
        %v7131 = vadd.f32 %v7129, %v7130
        %v7132 = vsel %vm7083, %v7122, 0.0
        %v7133 = vrot.slane %v7132, 4
        %v7134 = vadd.f32 %v7132, %v7133
        %v7135 = vrot.slane %v7134, 2
        %v7136 = vadd.f32 %v7134, %v7135
        %v7137 = vrot.slane %v7136, 1
        %v7138 = vadd.f32 %v7136, %v7137
        %v7139 = vsel %vm7083, %v7123, 0.0
        %v7140 = vrot.slane %v7139, 4
        %v7141 = vadd.f32 %v7139, %v7140
        %v7142 = vrot.slane %v7141, 2
        %v7143 = vadd.f32 %v7141, %v7142
        %v7144 = vrot.slane %v7143, 1
        %v7145 = vadd.f32 %v7143, %v7144
        %v7146 = vsel %vm7083, %v7124, 0.0
        %v7147 = vrot.slane %v7146, 4
        %v7148 = vadd.f32 %v7146, %v7147
        %v7149 = vrot.slane %v7148, 2
        %v7150 = vadd.f32 %v7148, %v7149
        %v7151 = vrot.slane %v7150, 1
        %v7152 = vadd.f32 %v7150, %v7151
        %v7153 = vmul.f32 %v7131, %v7112
        %v7154 = vmul.f32 %v7138, %v7112
        %v7155 = vmul.f32 %v7145, %v7112
        %v7156 = vmul.f32 %v7152, %v7112
        %v7157 = vadd.f32 %v7153, 1e-05
        %v7158 = vadd.f32 %v7154, 1e-05
        %v7159 = vadd.f32 %v7155, 1e-05
        %v7160 = vadd.f32 %v7156, 1e-05
        %v7161 = vrsqrt.pop %v7157
        %v7162 = vrsqrt.pop %v7158
        %v7163 = vrsqrt.pop %v7159
        %v7164 = vrsqrt.pop %v7160
        %v7165 = vmul.f32 %v7117, %v7161
        %v7166 = vmul.f32 %v7118, %v7162
        %v7167 = vmul.f32 %v7119, %v7163
        %v7168 = vmul.f32 %v7120, %v7164
        %vm7169 = vcmp.gt.f32.partialorder %v7165, 0.0
        %vm7170 = vcmp.gt.f32.partialorder %v7166, 0.0
        %vm7171 = vcmp.gt.f32.partialorder %v7167, 0.0
        %vm7172 = vcmp.gt.f32.partialorder %v7168, 0.0
        %v7173 = vmul.f32 %v7165, 0.2
        %v7174 = vmul.f32 %v7166, 0.2
        %v7175 = vmul.f32 %v7167, 0.2
        %v7176 = vmul.f32 %v7168, 0.2
        %v7177 = vsel %vm7169, %v7165, %v7173
        %v7178 = vsel %vm7170, %v7166, %v7174
        %v7179 = vsel %vm7171, %v7167, %v7175
        %v7180 = vsel %vm7172, %v7168, %v7176
        %v7181 = vld [vmem:[#allocation13] sm:$0xff]
        %v7182 = vld [vmem:[#allocation13 + $0x8] sm:$0xff]
        %v7183 = vld [vmem:[#allocation13 + $0x10] sm:$0xff]
        %v7184 = vld [vmem:[#allocation13 + $0x18] sm:$0xff]
        %v7185 = vld [vmem:[%s568] sm:$0xff]
        %v7186 = vld [vmem:[%s568 + $0x8] sm:$0xff]
        %v7187 = vld [vmem:[%s568 + $0x10] sm:$0xff]
        %v7188 = vld [vmem:[%s568 + $0x18] sm:$0xff]
        %v7189 = vld [vmem:[%s568 + $0x20] sm:$0xff]
        %v7190 = vld [vmem:[%s568 + $0x28] sm:$0xff]
        %v7191 = vld [vmem:[%s568 + $0x30] sm:$0xff]
        %v7192 = vld [vmem:[%s568 + $0x38] sm:$0xff]
        %v7193 = vld [vmem:[%s568 + $0x40] sm:$0xff]
        %v7194 = vld [vmem:[%s568 + $0x48] sm:$0xff]
        %v7195 = vld [vmem:[%s568 + $0x50] sm:$0xff]
        %v7196 = vld [vmem:[%s568 + $0x58] sm:$0xff]
        %v7197 = vld [vmem:[%s568 + $0x60] sm:$0xff]
        %v7198 = vld [vmem:[%s568 + $0x68] sm:$0xff]
        %v7199 = vld [vmem:[%s568 + $0x70] sm:$0xff]
        %v7200 = vld [vmem:[%s568 + $0x78] sm:$0xff]
        %v7201 = vld [vmem:[%s568 + $0x80] sm:$0xff]
        %v7202 = vld [vmem:[%s568 + $0x88] sm:$0xff]
        %v7203 = vld [vmem:[%s568 + $0x90] sm:$0xff]
        %v7204 = vld [vmem:[%s568 + $0x98] sm:$0xff]
        %v7205 = vld [vmem:[%s568 + $0xa0] sm:$0xff]
        %v7206 = vld [vmem:[%s568 + $0xa8] sm:$0xff]
        %v7207 = vld [vmem:[%s568 + $0xb0] sm:$0xff]
        %v7208 = vld [vmem:[%s568 + $0xb8] sm:$0xff]
        %v7209 = vld [vmem:[%s568 + $0xc0] sm:$0xff]
        %v7210 = vld [vmem:[%s568 + $0xc8] sm:$0xff]
        %v7211 = vld [vmem:[%s568 + $0xd0] sm:$0xff]
        %v7212 = vld [vmem:[%s568 + $0xd8] sm:$0xff]
        %v7213 = vld [vmem:[%s568 + $0xe0] sm:$0xff]
        %v7214 = vld [vmem:[%s568 + $0xe8] sm:$0xff]
        %v7215 = vld [vmem:[%s568 + $0xf0] sm:$0xff]
        %v7216 = vld [vmem:[%s568 + $0xf8] sm:$0xff]
        %7217 = vmatprep.subr.mxu0 0.0
        %7218 = vmatpush1.msra.mxu0 %v7185
        %7219 = vmatprep.subr.mxu0 0.0
        %7220 = vmatpush1.msra.mxu0 %v7186
        %7221 = vmatprep.subr.mxu0 0.0
        %7222 = vmatpush1.msra.mxu0 %v7187
        %7223 = vmatprep.subr.mxu0 0.0
        %7224 = vmatpush1.msra.mxu0 %v7188
        %7225 = vmatprep.subr.mxu0 0.0
        %7226 = vmatpush1.msra.mxu0 %v7189
        %7227 = vmatprep.subr.mxu0 0.0
        %7228 = vmatpush1.msra.mxu0 %v7190
        %7229 = vmatprep.subr.mxu0 0.0
        %7230 = vmatpush1.msra.mxu0 %v7191
        %7231 = vmatprep.subr.mxu0 0.0
        %7232 = vmatpush1.msra.mxu0 %v7192
        %7233 = vmatprep.subr.mxu0 0.0
        %7234 = vmatpush1.msra.mxu0 %v7193
        %7235 = vmatprep.subr.mxu0 0.0
        %7236 = vmatpush1.msra.mxu0 %v7194
        %7237 = vmatprep.subr.mxu0 0.0
        %7238 = vmatpush1.msra.mxu0 %v7195
        %7239 = vmatprep.subr.mxu0 0.0
        %7240 = vmatpush1.msra.mxu0 %v7196
        %7241 = vmatprep.subr.mxu0 0.0
        %7242 = vmatpush1.msra.mxu0 %v7197
        %7243 = vmatprep.subr.mxu0 0.0
        %7244 = vmatpush1.msra.mxu0 %v7198
        %7245 = vmatprep.subr.mxu0 0.0
        %7246 = vmatpush1.msra.mxu0 %v7199
        %7247 = vmatprep.subr.mxu0 0.0
        %7248 = vmatpush1.msra.mxu0 %v7200
        %7249 = vmatprep.subr.mxu0 0.0
        %7250 = vmatpush1.msra.mxu0 %v7201
        %7251 = vmatprep.subr.mxu0 0.0
        %7252 = vmatpush1.msra.mxu0 %v7202
        %7253 = vmatprep.subr.mxu0 0.0
        %7254 = vmatpush1.msra.mxu0 %v7203
        %7255 = vmatprep.subr.mxu0 0.0
        %7256 = vmatpush1.msra.mxu0 %v7204
        %7257 = vmatprep.subr.mxu0 0.0
        %7258 = vmatpush1.msra.mxu0 %v7205
        %7259 = vmatprep.subr.mxu0 0.0
        %7260 = vmatpush1.msra.mxu0 %v7206
        %7261 = vmatprep.subr.mxu0 0.0
        %7262 = vmatpush1.msra.mxu0 %v7207
        %7263 = vmatprep.subr.mxu0 0.0
        %7264 = vmatpush1.msra.mxu0 %v7208
        %7265 = vmatprep.subr.mxu0 0.0
        %7266 = vmatpush1.msra.mxu0 %v7209
        %7267 = vmatprep.subr.mxu0 0.0
        %7268 = vmatpush1.msra.mxu0 %v7210
        %7269 = vmatprep.subr.mxu0 0.0
        %7270 = vmatpush1.msra.mxu0 %v7211
        %7271 = vmatprep.subr.mxu0 0.0
        %7272 = vmatpush1.msra.mxu0 %v7212
        %7273 = vmatprep.subr.mxu0 0.0
        %7274 = vmatpush1.msra.mxu0 %v7213
        %7275 = vmatprep.subr.mxu0 0.0
        %7276 = vmatpush1.msra.mxu0 %v7214
        %7277 = vmatprep.subr.mxu0 0.0
        %7278 = vmatpush1.msra.mxu0 %v7215
        %7279 = vmatprep.subr.mxu0 0.0
        %7280 = vmatpush1.msra.mxu0 %v7216
        %7281 = vmatprep.mubr.f32.mxu0 %v7182
        %7282 = vmatmul.mubr.f32.gmra.mrb[0].mxu0 %v7181
        %v7283 = vpop.f32.mrb[0].mxu0
        %v7284 = vadd.f32 0.0, %v7283
        %v7285 = vpop.f32.mrb[0].mxu0
        %7286 = vmatprep.mubr.f32.mxu0 %v7184
        %7287 = vmatmul.mubr.f32.gmra.mrb[0].mxu0 %v7183
        %v7288 = vpop.f32.mrb[0].mxu0
        %v7289 = vadd.f32 0.0, %v7288
        %v7290 = vpop.f32.mrb[0].mxu0
        %7291 = vdwg.mxu0
        %v7292 = vld [vmem:[#allocation14] sm:$0xff]
        %v7293 = vld [vmem:[#allocation14 + $0x8] sm:$0xff]
        %v7294 = vld [vmem:[%s481] sm:$0xff]
        %v7295 = vld [vmem:[%s481 + $0x8] sm:$0xff]
        %v7296 = vld [vmem:[%s481 + $0x10] sm:$0xff]
        %v7297 = vld [vmem:[%s481 + $0x18] sm:$0xff]
        %v7298 = vld [vmem:[%s481 + $0x20] sm:$0xff]
        %v7299 = vld [vmem:[%s481 + $0x28] sm:$0xff]
        %v7300 = vld [vmem:[%s481 + $0x30] sm:$0xff]
        %v7301 = vld [vmem:[%s481 + $0x38] sm:$0xff]
        %vm7302 = vcmask 523264
        %v7304 = vsel %vm7302, %v7292, 0
        %v7307 = vsel %vm7302, %v7293, 0
        %7309 = vmatprep.subr.mxu0 0.0
        %7310 = vmatpush1.msra.mxu0 %v7294
        %7311 = vmatprep.subr.mxu0 0.0
        %7312 = vmatpush1.msra.mxu0 %v7295
        %7313 = vmatprep.subr.mxu0 0.0
        %7314 = vmatpush1.msra.mxu0 %v7296
        %7315 = vmatprep.subr.mxu0 0.0
        %7316 = vmatpush1.msra.mxu0 %v7297
        %7317 = vmatprep.subr.mxu0 0.0
        %7318 = vmatpush1.msra.mxu0 %v7298
        %7319 = vmatprep.subr.mxu0 0.0
        %7320 = vmatpush1.msra.mxu0 %v7299
        %7321 = vmatprep.subr.mxu0 0.0
        %7322 = vmatpush1.msra.mxu0 %v7300
        %7323 = vmatprep.subr.mxu0 0.0
        %7324 = vmatpush1.msra.mxu0 %v7301
        %7325 = vmatprep.subr.mxu0 0.0
        %7326 = vmatpush1.msra.mxu0 0.0
        %7327 = vmatprep.subr.mxu0 0.0
        %7328 = vmatpush1.msra.mxu0 0.0
        %7329 = vmatprep.subr.mxu0 0.0
        %7330 = vmatpush1.msra.mxu0 0.0
        %7331 = vmatprep.subr.mxu0 0.0
        %7332 = vmatpush1.msra.mxu0 0.0
        %7333 = vmatprep.subr.mxu0 0.0
        %7334 = vmatpush1.msra.mxu0 0.0
        %7335 = vmatprep.subr.mxu0 0.0
        %7336 = vmatpush1.msra.mxu0 0.0
        %7337 = vmatprep.subr.mxu0 0.0
        %7338 = vmatpush1.msra.mxu0 0.0
        %7339 = vmatprep.subr.mxu0 0.0
        %7340 = vmatpush1.msra.mxu0 0.0
        %7341 = vmatprep.subr.mxu0 0.0
        %7342 = vmatpush1.msra.mxu0 0.0
        %7343 = vmatprep.subr.mxu0 0.0
        %7344 = vmatpush1.msra.mxu0 0.0
        %7345 = vmatprep.subr.mxu0 0.0
        %7346 = vmatpush1.msra.mxu0 0.0
        %7347 = vmatprep.subr.mxu0 0.0
        %7348 = vmatpush1.msra.mxu0 0.0
        %7349 = vmatprep.subr.mxu0 0.0
        %7350 = vmatpush1.msra.mxu0 0.0
        %7351 = vmatprep.subr.mxu0 0.0
        %7352 = vmatpush1.msra.mxu0 0.0
        %7353 = vmatprep.subr.mxu0 0.0
        %7354 = vmatpush1.msra.mxu0 0.0
        %7355 = vmatprep.subr.mxu0 0.0
        %7356 = vmatpush1.msra.mxu0 0.0
        %7357 = vmatprep.subr.mxu0 0.0
        %7358 = vmatpush1.msra.mxu0 0.0
        %7359 = vmatprep.subr.mxu0 0.0
        %7360 = vmatpush1.msra.mxu0 0.0
        %7361 = vmatprep.subr.mxu0 0.0
        %7362 = vmatpush1.msra.mxu0 0.0
        %7363 = vmatprep.subr.mxu0 0.0
        %7364 = vmatpush1.msra.mxu0 0.0
        %7365 = vmatprep.subr.mxu0 0.0
        %7366 = vmatpush1.msra.mxu0 0.0
        %7367 = vmatprep.subr.mxu0 0.0
        %7368 = vmatpush1.msra.mxu0 0.0
        %7369 = vmatprep.subr.mxu0 0.0
        %7370 = vmatpush1.msra.mxu0 0.0
        %7371 = vmatprep.subr.mxu0 0.0
        %7372 = vmatpush1.msra.mxu0 0.0
        %7373 = vmatprep.mubr.f32.mxu0 0.0
        %7374 = vmatmul.mubr.f32.gmra.mrb[0].mxu0 %v7304
        %v7375 = vpop.f32.mrb[0].mxu0
        %v7376 = vadd.f32 0.0, %v7375
        %v7377 = vpop.f32.mrb[0].mxu0
        %7378 = vmatprep.mubr.f32.mxu0 0.0
        %7379 = vmatmul.mubr.f32.gmra.mrb[0].mxu0 %v7307
        %v7380 = vpop.f32.mrb[0].mxu0
        %v7381 = vadd.f32 0.0, %v7380
        %v7382 = vpop.f32.mrb[0].mxu0
        %7383 = vdwg.mxu0
        %v7384 = vld [vmem:[%s9] sm:$0xff]
        %v7385 = vld [vmem:[%s9 + $0x8] sm:$0xff]
        %vm7386 = vcmask 31744
        %v7388 = vsel %vm7386, %v7384, 0
        %v7391 = vsel %vm7386, %v7385, 0
        %v7394 = vsel %vm7083, %v7177, 0
        %v7397 = vsel %vm7083, %v7178, 0
        %v7400 = vsel %vm7083, %v7179, 0
        %v7403 = vsel %vm7083, %v7180, 0
        %7405 = vmatprep.subr.mxu0 %v7397
        %7406 = vmatpush1.msra.mxu0 %v7394
        %7407 = vmatprep.subr.mxu0 0.0
        %7408 = vmatpush1.msra.mxu0 0.0
        %7409 = vmatprep.subr.mxu0 0.0
        %7410 = vmatpush1.msra.mxu0 0.0
        %7411 = vmatprep.subr.mxu0 0.0
        %7412 = vmatpush1.msra.mxu0 0.0
        %7413 = vmatprep.subr.mxu0 0.0
        %7414 = vmatpush1.msra.mxu0 0.0
        %7415 = vmatprep.subr.mxu0 0.0
        %7416 = vmatpush1.msra.mxu0 0.0
        %7417 = vmatprep.subr.mxu0 0.0
        %7418 = vmatpush1.msra.mxu0 0.0
        %7419 = vmatprep.subr.mxu0 0.0
        %7420 = vmatpush1.msra.mxu0 0.0
        %7421 = vmatprep.subr.mxu0 0.0
        %7422 = vmatpush1.msra.mxu0 0.0
        %7423 = vmatprep.subr.mxu0 0.0
        %7424 = vmatpush1.msra.mxu0 0.0
        %7425 = vmatprep.subr.mxu0 0.0
        %7426 = vmatpush1.msra.mxu0 0.0
        %7427 = vmatprep.subr.mxu0 0.0
        %7428 = vmatpush1.msra.mxu0 0.0
        %7429 = vmatprep.subr.mxu0 0.0
        %7430 = vmatpush1.msra.mxu0 0.0
        %7431 = vmatprep.subr.mxu0 0.0
        %7432 = vmatpush1.msra.mxu0 0.0
        %7433 = vmatprep.subr.mxu0 0.0
        %7434 = vmatpush1.msra.mxu0 0.0
        %7435 = vmatprep.subr.mxu0 0.0
        %7436 = vmatpush1.msra.mxu0 0.0
        %7437 = vmatprep.subr.mxu0 0.0
        %7438 = vmatpush1.msra.mxu0 0.0
        %7439 = vmatprep.subr.mxu0 0.0
        %7440 = vmatpush1.msra.mxu0 0.0
        %7441 = vmatprep.subr.mxu0 0.0
        %7442 = vmatpush1.msra.mxu0 0.0
        %7443 = vmatprep.subr.mxu0 0.0
        %7444 = vmatpush1.msra.mxu0 0.0
        %7445 = vmatprep.subr.mxu0 0.0
        %7446 = vmatpush1.msra.mxu0 0.0
        %7447 = vmatprep.subr.mxu0 0.0
        %7448 = vmatpush1.msra.mxu0 0.0
        %7449 = vmatprep.subr.mxu0 0.0
        %7450 = vmatpush1.msra.mxu0 0.0
        %7451 = vmatprep.subr.mxu0 0.0
        %7452 = vmatpush1.msra.mxu0 0.0
        %7453 = vmatprep.subr.mxu0 0.0
        %7454 = vmatpush1.msra.mxu0 0.0
        %7455 = vmatprep.subr.mxu0 0.0
        %7456 = vmatpush1.msra.mxu0 0.0
        %7457 = vmatprep.subr.mxu0 0.0
        %7458 = vmatpush1.msra.mxu0 0.0
        %7459 = vmatprep.subr.mxu0 0.0
        %7460 = vmatpush1.msra.mxu0 0.0
        %7461 = vmatprep.subr.mxu0 0.0
        %7462 = vmatpush1.msra.mxu0 0.0
        %7463 = vmatprep.subr.mxu0 0.0
        %7464 = vmatpush1.msra.mxu0 0.0
        %7465 = vmatprep.subr.mxu0 0.0
        %7466 = vmatpush1.msra.mxu0 0.0
        %7467 = vmatprep.subr.mxu0 0.0
        %7468 = vmatpush1.msra.mxu0 0.0
        %7469 = vmatprep.mubr.f32.mxu0 0.0
        %7470 = vmatmul.mubr.f32.gmra.mrb[0].mxu0 %v7388
        %v7471 = vpop.f32.mrb[0].mxu0
        %v7472 = vadd.f32 0.0, %v7471
        %v7473 = vpop.f32.mrb[0].mxu0
        %v7474 = vadd.f32 0.0, %v7473
        %7475 = vmatprep.mubr.f32.mxu0 0.0
        %7476 = vmatmul.mubr.f32.gmra.mrb[0].mxu0 %v7391
        %v7477 = vpop.f32.mrb[0].mxu0
        %v7478 = vadd.f32 0.0, %v7477
        %v7479 = vpop.f32.mrb[0].mxu0
        %v7480 = vadd.f32 0.0, %v7479
        %7481 = vdwg.mxu0
        %7482 = vmatprep.subr.mxu0 %v7403
        %7483 = vmatpush1.msra.mxu0 %v7400
        %7484 = vmatprep.subr.mxu0 0.0
        %7485 = vmatpush1.msra.mxu0 0.0
        %7486 = vmatprep.subr.mxu0 0.0
        %7487 = vmatpush1.msra.mxu0 0.0
        %7488 = vmatprep.subr.mxu0 0.0
        %7489 = vmatpush1.msra.mxu0 0.0
        %7490 = vmatprep.subr.mxu0 0.0
        %7491 = vmatpush1.msra.mxu0 0.0
        %7492 = vmatprep.subr.mxu0 0.0
        %7493 = vmatpush1.msra.mxu0 0.0
        %7494 = vmatprep.subr.mxu0 0.0
        %7495 = vmatpush1.msra.mxu0 0.0
        %7496 = vmatprep.subr.mxu0 0.0
        %7497 = vmatpush1.msra.mxu0 0.0
        %7498 = vmatprep.subr.mxu0 0.0
        %7499 = vmatpush1.msra.mxu0 0.0
        %7500 = vmatprep.subr.mxu0 0.0
        %7501 = vmatpush1.msra.mxu0 0.0
        %7502 = vmatprep.subr.mxu0 0.0
        %7503 = vmatpush1.msra.mxu0 0.0
        %7504 = vmatprep.subr.mxu0 0.0
        %7505 = vmatpush1.msra.mxu0 0.0
        %7506 = vmatprep.subr.mxu0 0.0
        %7507 = vmatpush1.msra.mxu0 0.0
        %7508 = vmatprep.subr.mxu0 0.0
        %7509 = vmatpush1.msra.mxu0 0.0
        %7510 = vmatprep.subr.mxu0 0.0
        %7511 = vmatpush1.msra.mxu0 0.0
        %7512 = vmatprep.subr.mxu0 0.0
        %7513 = vmatpush1.msra.mxu0 0.0
        %7514 = vmatprep.subr.mxu0 0.0
        %7515 = vmatpush1.msra.mxu0 0.0
        %7516 = vmatprep.subr.mxu0 0.0
        %7517 = vmatpush1.msra.mxu0 0.0
        %7518 = vmatprep.subr.mxu0 0.0
        %7519 = vmatpush1.msra.mxu0 0.0
        %7520 = vmatprep.subr.mxu0 0.0
        %7521 = vmatpush1.msra.mxu0 0.0
        %7522 = vmatprep.subr.mxu0 0.0
        %7523 = vmatpush1.msra.mxu0 0.0
        %7524 = vmatprep.subr.mxu0 0.0
        %7525 = vmatpush1.msra.mxu0 0.0
        %7526 = vmatprep.subr.mxu0 0.0
        %7527 = vmatpush1.msra.mxu0 0.0
        %7528 = vmatprep.subr.mxu0 0.0
        %7529 = vmatpush1.msra.mxu0 0.0
        %7530 = vmatprep.subr.mxu0 0.0
        %7531 = vmatpush1.msra.mxu0 0.0
        %7532 = vmatprep.subr.mxu0 0.0
        %7533 = vmatpush1.msra.mxu0 0.0
        %7534 = vmatprep.subr.mxu0 0.0
        %7535 = vmatpush1.msra.mxu0 0.0
        %7536 = vmatprep.subr.mxu0 0.0
        %7537 = vmatpush1.msra.mxu0 0.0
        %7538 = vmatprep.subr.mxu0 0.0
        %7539 = vmatpush1.msra.mxu0 0.0
        %7540 = vmatprep.subr.mxu0 0.0
        %7541 = vmatpush1.msra.mxu0 0.0
        %7542 = vmatprep.subr.mxu0 0.0
        %7543 = vmatpush1.msra.mxu0 0.0
        %7544 = vmatprep.subr.mxu0 0.0
        %7545 = vmatpush1.msra.mxu0 0.0
        %7546 = vmatprep.mubr.f32.mxu0 0.0
        %7547 = vmatmul.mubr.f32.gmra.mrb[0].mxu0 %v7388
        %v7548 = vpop.f32.mrb[0].mxu0
        %v7549 = vadd.f32 0.0, %v7548
        %v7550 = vpop.f32.mrb[0].mxu0
        %v7551 = vadd.f32 0.0, %v7550
        %7552 = vmatprep.mubr.f32.mxu0 0.0
        %7553 = vmatmul.mubr.f32.gmra.mrb[0].mxu0 %v7391
        %v7554 = vpop.f32.mrb[0].mxu0
        %v7555 = vadd.f32 0.0, %v7554
        %v7556 = vpop.f32.mrb[0].mxu0
        %v7557 = vadd.f32 0.0, %v7556
        %7558 = vdwg.mxu0
        %v7559 = vld [vmem:[%s490] sm:$0xff]
        %v7560 = vld [vmem:[%s490 + $0x8] sm:$0xff]
        %v7561 = vld [vmem:[%s499] sm:$0xff]
        %v7562 = vld [vmem:[%s499 + $0x8] sm:$0xff]
        %v7563 = vld [vmem:[%s499 + $0x10] sm:$0xff]
        %v7564 = vld [vmem:[%s499 + $0x18] sm:$0xff]
        %7567 = vrot.lane.b32.xlu0 %v7376, 64
        %v7568 = vpop.permute.xlu0 %7567
        %7569 = vrot.lane.b32.xlu0 %v7381, 64
        %v7570 = vpop.permute.xlu0 %7569
        %7575 = vrot.lane.b32.xlu0 %v7559, 64
        %v7576 = vpop.permute.xlu0 %7575
        %7577 = vrot.lane.b32.xlu0 %v7560, 64
        %v7578 = vpop.permute.xlu0 %7577
        %7589 = vrot.lane.b32.xlu0 %v7472, 64
        %v7590 = vpop.permute.xlu0 %7589
        %7591 = vrot.lane.b32.xlu0 %v7474, 64
        %v7592 = vpop.permute.xlu0 %7591
        %7593 = vrot.lane.b32.xlu0 %v7549, 64
        %v7594 = vpop.permute.xlu0 %7593
        %7595 = vrot.lane.b32.xlu0 %v7551, 64
        %v7596 = vpop.permute.xlu0 %7595
        %7597 = vrot.lane.b32.xlu0 %v7478, 64
        %v7598 = vpop.permute.xlu0 %7597
        %7599 = vrot.lane.b32.xlu0 %v7480, 64
        %v7600 = vpop.permute.xlu0 %7599
        %7601 = vrot.lane.b32.xlu0 %v7555, 64
        %v7602 = vpop.permute.xlu0 %7601
        %7603 = vrot.lane.b32.xlu0 %v7557, 64
        %v7604 = vpop.permute.xlu0 %7603
        %v7605 = vsel %vm7302, %v7590, %v7592
        %v7606 = vsel %vm7302, %v7592, %v7594
        %v7607 = vsel %vm7302, %v7594, %v7596
        %v7608 = vsel %vm7302, %v7598, %v7600
        %v7609 = vsel %vm7302, %v7600, %v7602
        %v7610 = vsel %vm7302, %v7602, %v7604
        %7625 = vrot.lane.b32.xlu0 %v7561, 64
        %v7626 = vpop.permute.xlu0 %7625
        %7627 = vrot.lane.b32.xlu0 %v7562, 64
        %v7628 = vpop.permute.xlu0 %7627
        %7629 = vrot.lane.b32.xlu0 %v7563, 64
        %v7630 = vpop.permute.xlu0 %7629
        %7631 = vrot.lane.b32.xlu0 %v7564, 64
        %v7632 = vpop.permute.xlu0 %7631
        %v7633 = vsel %vm7302, %v7626, %v7628
        %v7634 = vsel %vm7302, %v7630, %v7632
        %v7641 = vsel %vm7302, %v7284, %v7568
        %v7642 = vsel %vm7302, %v7289, %v7570
        %v7643 = vsel %vm7302, %v7568, %v7576
        %v7644 = vsel %vm7302, %v7570, %v7578
        %v7645 = vsel %vm7302, %v7576, %v7590
        %v7646 = vsel %vm7302, %v7578, %v7598
        %v7647 = vsel %vm7302, %v7596, %v7626
        %v7648 = vsel %vm7302, %v7604, %v7630
        %7649 = vst [vmem:[%s563] sm:$0xff] %v7641
        %7650 = vst [vmem:[%s563 + $0x8] sm:$0xff] %v7643
        %7651 = vst [vmem:[%s563 + $0x10] sm:$0xff] %v7645
        %7652 = vst [vmem:[%s563 + $0x18] sm:$0xff] %v7605
        %7653 = vst [vmem:[%s563 + $0x20] sm:$0xff] %v7606
        %7654 = vst [vmem:[%s563 + $0x28] sm:$0xff] %v7607
        %7655 = vst [vmem:[%s563 + $0x30] sm:$0xff] %v7647
        %7656 = vst [vmem:[%s563 + $0x38] sm:$0xff] %v7633
        %7657 = vst.msk [vmem:[%s563 + $0x40] sm:$0xff] %vm7302, %v7628
        %7658 = vst [vmem:[%s563 + $0x48] sm:$0xff] %v7642
        %7659 = vst [vmem:[%s563 + $0x50] sm:$0xff] %v7644
        %7660 = vst [vmem:[%s563 + $0x58] sm:$0xff] %v7646
        %7661 = vst [vmem:[%s563 + $0x60] sm:$0xff] %v7608
        %7662 = vst [vmem:[%s563 + $0x68] sm:$0xff] %v7609
        %7663 = vst [vmem:[%s563 + $0x70] sm:$0xff] %v7610
        %7664 = vst [vmem:[%s563 + $0x78] sm:$0xff] %v7648
        %7665 = vst [vmem:[%s563 + $0x80] sm:$0xff] %v7634
        %7666 = vst.msk [vmem:[%s563 + $0x88] sm:$0xff] %vm7302, %v7632
        %s7667 = sand.u32 %s278, 1
        %s7668 = scalar_lea.sflag [#allocation4], %s7667
        %s7669 = sand.u32 %s278, 1
        %s7670 = smul.addr %s7669, 144
        %s7671 = scalar_lea.vmem [#allocation16], %s7670
        // Predicated region
        $region93: #{tpu_custom_call.1} parent=59 // pred_check
          %p7672 = pneg %p288
        $region94: #{tpu_custom_call.1} parent=59 // pred_check_branch
          %7674 = sbr.rel (%p7672) target = $region96
        $region95: #{tpu_custom_call.1} parent=59 // pred_region
          %s7676 = ssub.s32 2304, 2304
          %7677 = vsyncadd %s7668, %s7676
          %s7678 = smul.addr %s35, 18
          %s7679 = smul.addr %s7678, 128
          %s7680 = scalar_lea.hbm %s10, %s7679
          %s7681 = sshll.u32 %s7671, 4
          %s7682 = int_to_ptr.vmem [resolvable:$true] %s7681
          %7687 = dma.vmem_to_hbm [thread:$0]  %s7682, 2304, %s7680, %s7668, 1152, 1152, 72
        $region96: #{tpu_custom_call.1} parent=59 // pred_fallthru
          _
      $region60: #{tpu_custom_call.1} parent=5 // pred_fallthru
        _
      %p7688 = scmp.le.s32.totalorder 2, %s30
      // Predicated region
      $region97: #{tpu_custom_call.1} parent=5 // pred_check
        %p7689 = pneg %p7688
      $region98: #{tpu_custom_call.1} parent=5 // pred_check_branch
        %7691 = sbr.rel (%p7689) target = $region100
      $region99: #{tpu_custom_call.1} parent=5 // pred_region
        %s7692 = ssub.s32 %s30, 2
        // Predicated region
        $region101: #{tpu_custom_call.1} parent=99 // pred_check
          %p7693 = pneg %p294
        $region102: #{tpu_custom_call.1} parent=99 // pred_check_branch
          %7695 = sbr.rel (%p7693) target = $region104
        $region103: #{tpu_custom_call.1} parent=99 // pred_region
          %s7696 = sand.u32 %s279, 1
          %s7697 = scalar_lea.sflag [#allocation4], %s7696
          %s7698 = sand.u32 %s279, 1
          %s7699 = smul.addr %s7698, 144
          %s7700 = scalar_lea.vmem [#allocation16], %s7699
          %7701 = dma.done %s7697, 2304
        $region104: #{tpu_custom_call.1} parent=99 // pred_fallthru
          _
      $region100: #{tpu_custom_call.1} parent=5 // pred_fallthru
        _
    $region6: #{tpu_custom_call.1} parent=1 // loop_footer
      %s34 = sadd.s32 1, %s30
    $region7: #{tpu_custom_call.1} parent=1 // loop_footer_branch
      %29 = sbr.rel target = $region3
    $region8: #{tpu_custom_call.1} parent=1 // loop_exit
      _
    %7702 = vsyncpa [#allocation3], 1
    %s7703 = scalar_lea.sflag [#allocation3], 1
    %7704 = vsyncpa %s7703, 1
    %7705 = vsyncpa [#allocation6], 1
    %7706 = vsyncpa [#allocation9], 1
    %s7707 = scalar_lea.sflag [#allocation9], 1
    %7708 = vsyncpa %s7707, 1
    %7709 = vsyncpa [#allocation12], 1
    %s7710 = scalar_lea.sflag [#allocation12], 1
    %7711 = vsyncpa %s7710, 1
    %7712 = vsyncpa [#allocation15], 1
    %7713 = vsyncpa [#allocation4], 1
    %s7714 = scalar_lea.sflag [#allocation4], 1
    %7715 = vsyncpa %s7714, 1

</llo_original>
